<compile_context>
chip_gen: v6e
topology: v6e:2x2x1
jax: 0.10.0
libtpu: 0.0.40
codegen_flags: <defaults>
</compile_context>

<pallas_src>
import jax
import jax.numpy as jnp
from jax import lax
from jax.experimental import pallas as pl
from jax.experimental.pallas import tpu as pltpu

LATENT_DIM = 32
C0, H0, W0 = 16, 63, 24          # feature map after fc + view (NCHW)
C1, C2 = 8, 1                    # deconv1 / deconv2 out channels

# Zero-padded "parity friendly" geometry (one extra row & column of zeros).
R1, P1 = H0 + 1, W0 + 1          # 64, 25  -> deconv1 input grid (padded)
L1 = R1 * P1                     # 1600
R2, P2 = 2 * R1, 2 * P1          # 128, 50 -> deconv1 output / deconv2 input grid
L2 = R2 * P2                     # 6400    (deconv2 output grid is 256 x 100)


# ----------------------------- fc (Linear + ReLU) -----------------------------
def _fc_kernel(x_ref, w_ref, b_ref, o_ref):
    y = jnp.dot(x_ref[...], w_ref[...], preferred_element_type=jnp.float32)
    o_ref[...] = jnp.maximum(y + b_ref[...], 0.0)


def fc_relu_padded(x, w_pad, b_pad, *, n_tiles=4):
    """x: (B, L); w_pad: (L, N); b_pad: (N,).  Output (B, N), N = 16*64*25."""
    B, L = x.shape
    N = w_pad.shape[1]
    assert N % n_tiles == 0
    TN = N // n_tiles
    return pl.pallas_call(
        _fc_kernel,
        out_shape=jax.ShapeDtypeStruct((B, N), jnp.float32),
        grid=(n_tiles,),
        in_specs=[pl.BlockSpec((B, L), lambda i: (0, 0)),
                  pl.BlockSpec((L, TN), lambda i: (0, i)),
                  pl.BlockSpec((1, TN), lambda i: (0, i))],
        out_specs=pl.BlockSpec((B, TN), lambda i: (0, i)),
        compiler_params=pltpu.CompilerParams(dimension_semantics=("parallel",)),
    )(x, w_pad, b_pad.reshape(1, N))


# --------------------- fused ConvTranspose2d (k=3, s=2, p=0) ------------------
def _make_deconv_kernel(cout, pitch, apply_relu, masked):
    """Fused kernel: tap matmul + parity-plane accumulation + bias/relu/mask."""

    def kernel(*refs):
        if masked:
            x_ref, w_ref, b_ref, rowok_ref, colok_ref, o_ref, taps_ref = refs
        else:
            x_ref, w_ref, b_ref, o_ref, taps_ref = refs
            rowok_ref = colok_ref = None
        L = x_ref.shape[-1]

        # Stage A: all 9 kernel-tap channel contractions in one MXU matmul.
        # x is zero padded (extra row & column), so taps are zero there too.
        taps_ref[...] = jnp.dot(w_ref[...], x_ref[...],
                                preferred_element_type=jnp.float32)

        def tap(kh, kw):
            r0 = (kh * 3 + kw) * cout
            return taps_ref[r0:r0 + cout, :]          # (cout, L)

        def shift(v, s):
            # v[:, i] -> i + s (zero fill from the left); thanks to the zero
            # pad row/column this implements the kh/kw spatial offsets exactly.
            return jnp.concatenate(
                [jnp.zeros((cout, s), jnp.float32), v[:, :L - s]], axis=1)

        bias = b_ref[...]                             # (cout, 1) lane-broadcasts

        def finish(p, use_row_mask, use_col_mask):
            v = p + bias
            if apply_relu:
                v = jnp.maximum(v, 0.0)
            if masked and use_row_mask:
                v = v * rowok_ref[...]                # zero the padding row
            if masked and use_col_mask:
                v = v * colok_ref[...]                # zero the padding column
            return v

        # Stage B: each parity plane accumulated in registers, stored once.
        o_ref[0] = finish(tap(0, 0) + shift(tap(0, 2), 1)
                          + shift(tap(2, 0), pitch) + shift(tap(2, 2), pitch + 1),
                          False, False)               # (even row, even col)
        o_ref[1] = finish(tap(0, 1) + shift(tap(2, 1), pitch), False, True)
        o_ref[2] = finish(tap(1, 0) + shift(tap(1, 2), 1), True, False)
        o_ref[3] = finish(tap(1, 1), True, True)

    return kernel


def deconv_fused(x_pad_flat, w, b, *, rows, pitch, apply_relu, mask_edges):
    """ConvTranspose2d(k=3, s=2, p=0) on a zero-padded flat input.

    x_pad_flat: (B, Cin, rows*pitch) with x[ci, m*pitch+n] = input[ci, m, n]
                for m < rows-1, n < pitch-1 and 0 on the padded row/column.
    w: (Cin, Cout, 3, 3) (PyTorch layout); b: (Cout,)
    Returns (B, Cout, 2*rows, 2*pitch). If mask_edges, the last output row and
    column are forced to zero (they are the next layer's zero padding);
    otherwise they carry bias only (== output_padding=1 semantics).
    """
    B, Cin, L = x_pad_flat.shape
    assert L == rows * pitch
    Cout = w.shape[1]
    w9 = jnp.transpose(w, (2, 3, 1, 0)).reshape(9 * Cout, Cin)

    in_arrays = [x_pad_flat, w9, b.reshape(Cout, 1)]
    in_specs = [pl.BlockSpec((None, Cin, L), lambda i: (i, 0, 0)),
                pl.BlockSpec((9 * Cout, Cin), lambda i: (0, 0)),
                pl.BlockSpec((Cout, 1), lambda i: (0, 0))]
    if mask_edges:
        idx = jnp.arange(L, dtype=jnp.int32)
        row_ok = (idx < (rows - 1) * pitch).astype(jnp.float32).reshape(1, L)
        col_ok = ((idx % pitch) < (pitch - 1)).astype(jnp.float32).reshape(1, L)
        in_arrays += [row_ok, col_ok]
        in_specs += [pl.BlockSpec((1, L), lambda i: (0, 0)),
                     pl.BlockSpec((1, L), lambda i: (0, 0))]

    planes = pl.pallas_call(
        _make_deconv_kernel(Cout, pitch, apply_relu, mask_edges),
        out_shape=jax.ShapeDtypeStruct((B, 4, Cout, L), jnp.float32),
        grid=(B,),
        in_specs=in_specs,
        out_specs=pl.BlockSpec((None, 4, Cout, L), lambda i: (i, 0, 0, 0)),
        scratch_shapes=[pltpu.VMEM((9 * Cout, L), jnp.float32)],
        compiler_params=pltpu.CompilerParams(dimension_semantics=("parallel",)),
    )(*in_arrays)

    # Interleave the 4 parity planes -> NCHW grid (bitcast reshapes + one small
    # XLA transpose; no strided scatter writes inside the kernel).
    planes = planes.reshape(B, 2, 2, Cout, rows, pitch)
    out = planes.transpose(0, 3, 4, 1, 5, 2).reshape(B, Cout, 2 * rows, 2 * pitch)
    return out


# -------------------------------- full decoder --------------------------------
def prepare_params(params):
    """One-time re-arrangement of PyTorch-layout params into kernel layouts."""
    w_t = params["fc_w"].T.reshape(LATENT_DIM, C0, H0, W0)           # (32,16,63,24)
    w_pad = jnp.pad(w_t, ((0, 0), (0, 0), (0, 1), (0, 1)))           # (32,16,64,25)
    b_pad = jnp.pad(params["fc_b"].reshape(C0, H0, W0),
                    ((0, 0), (0, 1), (0, 1)))                        # (16,64,25)
    return dict(
        fc_w_pad=w_pad.reshape(LATENT_DIM, C0 * L1),
        fc_b_pad=b_pad.reshape(C0 * L1),
        deconv1_w=params["deconv1_w"], deconv1_b=params["deconv1_b"],
        deconv2_w=params["deconv2_w"], deconv2_b=params["deconv2_b"],
    )


def decoder_forward(x, kp):
    """x: (B, latent_dim) -> (B, 1, 256, 100) (NCHW, matches PyTorch)."""
    B = x.shape[0]
    h = fc_relu_padded(x, kp["fc_w_pad"], kp["fc_b_pad"])            # (B, 16*1600)
    h = h.reshape(B, C0, L1)                                         # free bitcast
    y1 = deconv_fused(h, kp["deconv1_w"], kp["deconv1_b"],
                      rows=R1, pitch=P1, apply_relu=True, mask_edges=True)
    # y1: (B, 8, 128, 50) = relu(deconv1) zero-padded to deconv2's padded grid
    y1 = y1.reshape(B, C1, L2)                                       # free bitcast
    y2 = deconv_fused(y1, kp["deconv2_w"], kp["deconv2_b"],
                      rows=R2, pitch=P2, apply_relu=False, mask_edges=False)
    return y2                                                        # (B, 1, 256, 100)


def init_params(key, latent_dim):
    ks = jax.random.split(key, 6)
    N = C0 * H0 * W0
    s = 0.05
    return dict(
        fc_w=s * jax.random.normal(ks[0], (N, latent_dim), jnp.float32),
        fc_b=s * jax.random.normal(ks[1], (N,), jnp.float32),
        deconv1_w=s * jax.random.normal(ks[2], (C0, C1, 3, 3), jnp.float32),
        deconv1_b=s * jax.random.normal(ks[3], (C1,), jnp.float32),
        deconv2_w=s * jax.random.normal(ks[4], (C1, C2, 3, 3), jnp.float32),
        deconv2_b=s * jax.random.normal(ks[5], (C2,), jnp.float32),
    )


# ------------------------------ pure-JAX reference -----------------------------
def _conv_transpose_ref(x, w, b, output_padding=0):
    # ConvTranspose2d(k=3, s=2, p=0) == dilated conv with flipped/transposed kernel.
    k = jnp.transpose(w, (1, 0, 2, 3))[:, :, ::-1, ::-1]             # (Cout, Cin, 3, 3)
    y = lax.conv_general_dilated(
        x, k, window_strides=(1, 1),
        padding=((2, 2 + output_padding), (2, 2 + output_padding)),
        lhs_dilation=(2, 2),
        dimension_numbers=("NCHW", "OIHW", "NCHW"),
        precision=lax.Precision.HIGHEST)
    return y + b.reshape(1, -1, 1, 1)


def decoder_ref(x, params):
    h = jnp.maximum(
        jnp.dot(x, params["fc_w"].T, precision=lax.Precision.HIGHEST)
        + params["fc_b"], 0.0)
    h = h.reshape(x.shape[0], C0, H0, W0)
    h = jnp.maximum(_conv_transpose_ref(h, params["deconv1_w"], params["deconv1_b"]), 0.0)
    return _conv_transpose_ref(h, params["deconv2_w"], params["deconv2_b"], output_padding=1)


if __name__ == "__main__":
    key = jax.random.PRNGKey(0)
    kx, kp = jax.random.split(key)
    B = 2
    params = init_params(kp, LATENT_DIM)
    kparams = prepare_params(params)
    x = jax.random.normal(kx, (B, LATENT_DIM), jnp.float32)

    fwd = jax.jit(decoder_forward)
    out = jax.block_until_ready(fwd(x, kparams))
    assert out.shape == (B, 1, 256, 100), out.shape

    ref = jax.block_until_ready(decoder_ref(x, params))
    err = float(jnp.max(jnp.abs(out - ref)))
    assert jnp.allclose(out, ref, atol=1e-2, rtol=1e-2), f"max abs err {err}"

    print("KERNEL_OK")
</pallas_src>

<mosaic_0001>
module attributes {stable_mosaic.version = 11 : i64} {
  func.func @_fc_kernel(%arg0: i32, %arg1: memref<2x32xf32, #tpu.memory_space<vmem>>, %arg2: memref<32x6400xf32, #tpu.memory_space<vmem>>, %arg3: memref<1x6400xf32, #tpu.memory_space<vmem>>, %arg4: memref<2x6400xf32, #tpu.memory_space<vmem>>) attributes {dimension_semantics = [#tpu.dimension_semantics<parallel>], iteration_bounds = array<i64: 4>, scalar_prefetch = 0 : i64, scratch_operands = 0 : i64, tpu.core_type = #tpu.core_type<tc>, window_params = [{pipeline_mode = #tpu.pipeline_mode<synchronous>, transform_indices = @transform_0, window_bounds = array<i64: 2, 32>}, {transform_indices = @transform_1, window_bounds = array<i64: 32, 6400>}, {transform_indices = @transform_2, window_bounds = array<i64: 1, 6400>}, {transform_indices = @transform_3, window_bounds = array<i64: 2, 6400>}]} {
    %c0 = arith.constant 0 : index
    %c0_0 = arith.constant 0 : index
    %0 = vector.load %arg1[%c0, %c0_0] : memref<2x32xf32, #tpu.memory_space<vmem>>, vector<2x32xf32>
    %c0_1 = arith.constant 0 : index
    %c0_2 = arith.constant 0 : index
    %1 = vector.load %arg2[%c0_1, %c0_2] : memref<32x6400xf32, #tpu.memory_space<vmem>>, vector<32x6400xf32>
    %cst = arith.constant dense<0.000000e+00> : vector<2x6400xf32>
    %2 = tpu.matmul %0, %1, %cst {dimension_numbers = #tpu.dot_dimension_numbers<[1], [0], [0], [1], [0, 0, 1, 1], [], []>} : vector<2x32xf32>, vector<32x6400xf32>, vector<2x6400xf32> -> vector<2x6400xf32>
    %c0_3 = arith.constant 0 : index
    %c0_4 = arith.constant 0 : index
    %3 = vector.load %arg3[%c0_3, %c0_4] : memref<1x6400xf32, #tpu.memory_space<vmem>>, vector<1x6400xf32>
    %4 = vector.broadcast %3 : vector<1x6400xf32> to vector<2x6400xf32>
    %5 = arith.addf %2, %4 : vector<2x6400xf32>
    %cst_5 = arith.constant 0.000000e+00 : f32
    %6 = vector.broadcast %cst_5 : f32 to vector<2x6400xf32>
    %7 = arith.maximumf %5, %6 : vector<2x6400xf32>
    %c0_6 = arith.constant 0 : index
    %c0_7 = arith.constant 0 : index
    %8 = vector.load %arg4[%c0_6, %c0_7] : memref<2x6400xf32, #tpu.memory_space<vmem>>, vector<2x6400xf32>
    tpu.vector_store %arg4[%c0_6, %c0_7], %7 {strides = array<i32>} : memref<2x6400xf32, #tpu.memory_space<vmem>>, vector<2x6400xf32>,
    return
  }
  func.func @transform_0(%arg0: i32) -> (i32, i32) {
    %c0_i32 = arith.constant 0 : i32
    %c0_i32_0 = arith.constant 0 : i32
    %c0_i32_1 = arith.constant 0 : i32
    return %c0_i32, %c0_i32_0 : i32, i32
  }
  func.func @transform_1(%arg0: i32) -> (i32, i32) {
    %c0_i32 = arith.constant 0 : i32
    %c0_i32_0 = arith.constant 0 : i32
    return %c0_i32, %arg0 : i32, i32
  }
  func.func @transform_2(%arg0: i32) -> (i32, i32) {
    %c0_i32 = arith.constant 0 : i32
    %c0_i32_0 = arith.constant 0 : i32
    return %c0_i32, %arg0 : i32, i32
  }
  func.func @transform_3(%arg0: i32) -> (i32, i32) {
    %c0_i32 = arith.constant 0 : i32
    %c0_i32_0 = arith.constant 0 : i32
    return %c0_i32, %arg0 : i32, i32
  }
}

module attributes {stable_mosaic.version = 11 : i64} {
  func.func @kernel(%arg0: i32, %arg1: memref<1x16x1600xf32, #tpu.memory_space<vmem>>, %arg2: memref<72x16xf32, #tpu.memory_space<vmem>>, %arg3: memref<8x1xf32, #tpu.memory_space<vmem>>, %arg4: memref<1x1600xf32, #tpu.memory_space<vmem>>, %arg5: memref<1x1600xf32, #tpu.memory_space<vmem>>, %arg6: memref<1x4x8x1600xf32, #tpu.memory_space<vmem>>, %arg7: memref<72x1600xf32, #tpu.memory_space<vmem>>) attributes {dimension_semantics = [#tpu.dimension_semantics<parallel>], iteration_bounds = array<i64: 2>, scalar_prefetch = 0 : i64, scratch_operands = 1 : i64, tpu.core_type = #tpu.core_type<tc>, window_params = [{transform_indices = @transform_0, window_bounds = array<i64: 1, 16, 1600>}, {pipeline_mode = #tpu.pipeline_mode<synchronous>, transform_indices = @transform_1, window_bounds = array<i64: 72, 16>}, {pipeline_mode = #tpu.pipeline_mode<synchronous>, transform_indices = @transform_2, window_bounds = array<i64: 8, 1>}, {pipeline_mode = #tpu.pipeline_mode<synchronous>, transform_indices = @transform_3, window_bounds = array<i64: 1, 1600>}, {pipeline_mode = #tpu.pipeline_mode<synchronous>, transform_indices = @transform_4, window_bounds = array<i64: 1, 1600>}, {transform_indices = @transform_5, window_bounds = array<i64: 1, 4, 8, 1600>}]} {
    %c0 = arith.constant 0 : index
    %c0_0 = arith.constant 0 : index
    %0 = vector.load %arg2[%c0, %c0_0] : memref<72x16xf32, #tpu.memory_space<vmem>>, vector<72x16xf32>
    %c0_1 = arith.constant 0 : index
    %c0_2 = arith.constant 0 : index
    %c0_3 = arith.constant 0 : index
    %1 = vector.load %arg1[%c0_1, %c0_2, %c0_3] : memref<1x16x1600xf32, #tpu.memory_space<vmem>>, vector<1x16x1600xf32>
    %2 = vector.shape_cast %1 : vector<1x16x1600xf32> to vector<16x1600xf32>
    %cst = arith.constant dense<0.000000e+00> : vector<72x1600xf32>
    %3 = tpu.matmul %0, %2, %cst {dimension_numbers = #tpu.dot_dimension_numbers<[1], [0], [0], [1], [0, 0, 1, 1], [], []>} : vector<72x16xf32>, vector<16x1600xf32>, vector<72x1600xf32> -> vector<72x1600xf32>
    %c0_4 = arith.constant 0 : index
    %c0_5 = arith.constant 0 : index
    %4 = vector.load %arg7[%c0_4, %c0_5] : memref<72x1600xf32, #tpu.memory_space<vmem>>, vector<72x1600xf32>
    tpu.vector_store %arg7[%c0_4, %c0_5], %3 {strides = array<i32>} : memref<72x1600xf32, #tpu.memory_space<vmem>>, vector<72x1600xf32>,
    %c0_6 = arith.constant 0 : index
    %c0_7 = arith.constant 0 : index
    %5 = vector.load %arg3[%c0_6, %c0_7] : memref<8x1xf32, #tpu.memory_space<vmem>>, vector<8x1xf32>
    %c0_8 = arith.constant 0 : index
    %c0_9 = arith.constant 0 : index
    %6 = vector.load %arg7[%c0_8, %c0_9] : memref<72x1600xf32, #tpu.memory_space<vmem>>, vector<8x1600xf32>
    %c16 = arith.constant 16 : index
    %c0_10 = arith.constant 0 : index
    %7 = vector.load %arg7[%c16, %c0_10] : memref<72x1600xf32, #tpu.memory_space<vmem>>, vector<8x1600xf32>
    %cst_11 = arith.constant 0.000000e+00 : f32
    %8 = vector.broadcast %cst_11 : f32 to vector<8x1xf32>
    %9 = vector.extract_strided_slice %7 {offsets = [0, 0], sizes = [8, 1599], strides = [1, 1]} : vector<8x1600xf32> to vector<8x1599xf32>
    %10 = tpu.concatenate %8, %9 in 1 : vector<8x1xf32>, vector<8x1599xf32> -> vector<8x1600xf32>
    %11 = arith.addf %6, %10 : vector<8x1600xf32>
    %c48 = arith.constant 48 : index
    %c0_12 = arith.constant 0 : index
    %12 = vector.load %arg7[%c48, %c0_12] : memref<72x1600xf32, #tpu.memory_space<vmem>>, vector<8x1600xf32>
    %cst_13 = arith.constant 0.000000e+00 : f32
    %13 = vector.broadcast %cst_13 : f32 to vector<8x25xf32>
    %14 = vector.extract_strided_slice %12 {offsets = [0, 0], sizes = [8, 1575], strides = [1, 1]} : vector<8x1600xf32> to vector<8x1575xf32>
    %15 = tpu.concatenate %13, %14 in 1 : vector<8x25xf32>, vector<8x1575xf32> -> vector<8x1600xf32>
    %16 = arith.addf %11, %15 : vector<8x1600xf32>
    %c64 = arith.constant 64 : index
    %c0_14 = arith.constant 0 : index
    %17 = vector.load %arg7[%c64, %c0_14] : memref<72x1600xf32, #tpu.memory_space<vmem>>, vector<8x1600xf32>
    %cst_15 = arith.constant 0.000000e+00 : f32
    %18 = vector.broadcast %cst_15 : f32 to vector<8x26xf32>
    %19 = vector.extract_strided_slice %17 {offsets = [0, 0], sizes = [8, 1574], strides = [1, 1]} : vector<8x1600xf32> to vector<8x1574xf32>
    %20 = tpu.concatenate %18, %19 in 1 : vector<8x26xf32>, vector<8x1574xf32> -> vector<8x1600xf32>
    %21 = arith.addf %16, %20 : vector<8x1600xf32>
    %22 = vector.broadcast %5 : vector<8x1xf32> to vector<8x1600xf32>
    %23 = arith.addf %21, %22 : vector<8x1600xf32>
    %cst_16 = arith.constant 0.000000e+00 : f32
    %24 = vector.broadcast %cst_16 : f32 to vector<8x1600xf32>
    %25 = arith.maximumf %23, %24 : vector<8x1600xf32>
    %c0_17 = arith.constant 0 : index
    %c0_18 = arith.constant 0 : index
    %c0_19 = arith.constant 0 : index
    %c0_20 = arith.constant 0 : index
    %26 = vector.load %arg6[%c0_17, %c0_18, %c0_19, %c0_20] : memref<1x4x8x1600xf32, #tpu.memory_space<vmem>>, vector<1x1x8x1600xf32>
    %27 = vector.shape_cast %26 : vector<1x1x8x1600xf32> to vector<8x1600xf32>
    %28 = vector.shape_cast %25 : vector<8x1600xf32> to vector<1x1x8x1600xf32>
    tpu.vector_store %arg6[%c0_17, %c0_18, %c0_19, %c0_20], %28 {strides = array<i32>} : memref<1x4x8x1600xf32, #tpu.memory_space<vmem>>, vector<1x1x8x1600xf32>,
    %c8 = arith.constant 8 : index
    %c0_21 = arith.constant 0 : index
    %29 = vector.load %arg7[%c8, %c0_21] : memref<72x1600xf32, #tpu.memory_space<vmem>>, vector<8x1600xf32>
    %c56 = arith.constant 56 : index
    %c0_22 = arith.constant 0 : index
    %30 = vector.load %arg7[%c56, %c0_22] : memref<72x1600xf32, #tpu.memory_space<vmem>>, vector<8x1600xf32>
    %cst_23 = arith.constant 0.000000e+00 : f32
    %31 = vector.broadcast %cst_23 : f32 to vector<8x25xf32>
    %32 = vector.extract_strided_slice %30 {offsets = [0, 0], sizes = [8, 1575], strides = [1, 1]} : vector<8x1600xf32> to vector<8x1575xf32>
    %33 = tpu.concatenate %31, %32 in 1 : vector<8x25xf32>, vector<8x1575xf32> -> vector<8x1600xf32>
    %34 = arith.addf %29, %33 : vector<8x1600xf32>
    %35 = vector.broadcast %5 : vector<8x1xf32> to vector<8x1600xf32>
    %36 = arith.addf %34, %35 : vector<8x1600xf32>
    %cst_24 = arith.constant 0.000000e+00 : f32
    %37 = vector.broadcast %cst_24 : f32 to vector<8x1600xf32>
    %38 = arith.maximumf %36, %37 : vector<8x1600xf32>
    %c0_25 = arith.constant 0 : index
    %c0_26 = arith.constant 0 : index
    %39 = vector.load %arg5[%c0_25, %c0_26] : memref<1x1600xf32, #tpu.memory_space<vmem>>, vector<1x1600xf32>
    %40 = vector.broadcast %39 : vector<1x1600xf32> to vector<8x1600xf32>
    %41 = arith.mulf %38, %40 : vector<8x1600xf32>
    %c0_27 = arith.constant 0 : index
    %c1 = arith.constant 1 : index
    %c0_28 = arith.constant 0 : index
    %c0_29 = arith.constant 0 : index
    %42 = vector.load %arg6[%c0_27, %c1, %c0_28, %c0_29] : memref<1x4x8x1600xf32, #tpu.memory_space<vmem>>, vector<1x1x8x1600xf32>
    %43 = vector.shape_cast %42 : vector<1x1x8x1600xf32> to vector<8x1600xf32>
    %44 = vector.shape_cast %41 : vector<8x1600xf32> to vector<1x1x8x1600xf32>
    tpu.vector_store %arg6[%c0_27, %c1, %c0_28, %c0_29], %44 {strides = array<i32>} : memref<1x4x8x1600xf32, #tpu.memory_space<vmem>>, vector<1x1x8x1600xf32>,
    %c24 = arith.constant 24 : index
    %c0_30 = arith.constant 0 : index
    %45 = vector.load %arg7[%c24, %c0_30] : memref<72x1600xf32, #tpu.memory_space<vmem>>, vector<8x1600xf32>
    %c40 = arith.constant 40 : index
    %c0_31 = arith.constant 0 : index
    %46 = vector.load %arg7[%c40, %c0_31] : memref<72x1600xf32, #tpu.memory_space<vmem>>, vector<8x1600xf32>
    %cst_32 = arith.constant 0.000000e+00 : f32
    %47 = vector.broadcast %cst_32 : f32 to vector<8x1xf32>
    %48 = vector.extract_strided_slice %46 {offsets = [0, 0], sizes = [8, 1599], strides = [1, 1]} : vector<8x1600xf32> to vector<8x1599xf32>
    %49 = tpu.concatenate %47, %48 in 1 : vector<8x1xf32>, vector<8x1599xf32> -> vector<8x1600xf32>
    %50 = arith.addf %45, %49 : vector<8x1600xf32>
    %51 = vector.broadcast %5 : vector<8x1xf32> to vector<8x1600xf32>
    %52 = arith.addf %50, %51 : vector<8x1600xf32>
    %cst_33 = arith.constant 0.000000e+00 : f32
    %53 = vector.broadcast %cst_33 : f32 to vector<8x1600xf32>
    %54 = arith.maximumf %52, %53 : vector<8x1600xf32>
    %c0_34 = arith.constant 0 : index
    %c0_35 = arith.constant 0 : index
    %55 = vector.load %arg4[%c0_34, %c0_35] : memref<1x1600xf32, #tpu.memory_space<vmem>>, vector<1x1600xf32>
    %56 = vector.broadcast %55 : vector<1x1600xf32> to vector<8x1600xf32>
    %57 = arith.mulf %54, %56 : vector<8x1600xf32>
    %c0_36 = arith.constant 0 : index
    %c2 = arith.constant 2 : index
    %c0_37 = arith.constant 0 : index
    %c0_38 = arith.constant 0 : index
    %58 = vector.load %arg6[%c0_36, %c2, %c0_37, %c0_38] : memref<1x4x8x1600xf32, #tpu.memory_space<vmem>>, vector<1x1x8x1600xf32>
    %59 = vector.shape_cast %58 : vector<1x1x8x1600xf32> to vector<8x1600xf32>
    %60 = vector.shape_cast %57 : vector<8x1600xf32> to vector<1x1x8x1600xf32>
    tpu.vector_store %arg6[%c0_36, %c2, %c0_37, %c0_38], %60 {strides = array<i32>} : memref<1x4x8x1600xf32, #tpu.memory_space<vmem>>, vector<1x1x8x1600xf32>,
    %c32 = arith.constant 32 : index
    %c0_39 = arith.constant 0 : index
    %61 = vector.load %arg7[%c32, %c0_39] : memref<72x1600xf32, #tpu.memory_space<vmem>>, vector<8x1600xf32>
    %62 = vector.broadcast %5 : vector<8x1xf32> to vector<8x1600xf32>
    %63 = arith.addf %61, %62 : vector<8x1600xf32>
    %cst_40 = arith.constant 0.000000e+00 : f32
    %64 = vector.broadcast %cst_40 : f32 to vector<8x1600xf32>
    %65 = arith.maximumf %63, %64 : vector<8x1600xf32>
    %c0_41 = arith.constant 0 : index
    %c0_42 = arith.constant 0 : index
    %66 = vector.load %arg4[%c0_41, %c0_42] : memref<1x1600xf32, #tpu.memory_space<vmem>>, vector<1x1600xf32>
    %67 = vector.broadcast %66 : vector<1x1600xf32> to vector<8x1600xf32>
    %68 = arith.mulf %65, %67 : vector<8x1600xf32>
    %c0_43 = arith.constant 0 : index
    %c0_44 = arith.constant 0 : index
    %69 = vector.load %arg5[%c0_43, %c0_44] : memref<1x1600xf32, #tpu.memory_space<vmem>>, vector<1x1600xf32>
    %70 = vector.broadcast %69 : vector<1x1600xf32> to vector<8x1600xf32>
    %71 = arith.mulf %68, %70 : vector<8x1600xf32>
    %c0_45 = arith.constant 0 : index
    %c3 = arith.constant 3 : index
    %c0_46 = arith.constant 0 : index
    %c0_47 = arith.constant 0 : index
    %72 = vector.load %arg6[%c0_45, %c3, %c0_46, %c0_47] : memref<1x4x8x1600xf32, #tpu.memory_space<vmem>>, vector<1x1x8x1600xf32>
    %73 = vector.shape_cast %72 : vector<1x1x8x1600xf32> to vector<8x1600xf32>
    %74 = vector.shape_cast %71 : vector<8x1600xf32> to vector<1x1x8x1600xf32>
    tpu.vector_store %arg6[%c0_45, %c3, %c0_46, %c0_47], %74 {strides = array<i32>} : memref<1x4x8x1600xf32, #tpu.memory_space<vmem>>, vector<1x1x8x1600xf32>,
    return
  }
  func.func @transform_0(%arg0: i32) -> (i32, i32, i32) {
    %c0_i32 = arith.constant 0 : i32
    %c0_i32_0 = arith.constant 0 : i32
    %c0_i32_1 = arith.constant 0 : i32
    return %arg0, %c0_i32, %c0_i32_0 : i32, i32, i32
  }
  func.func @transform_1(%arg0: i32) -> (i32, i32) {
    %c0_i32 = arith.constant 0 : i32
    %c0_i32_0 = arith.constant 0 : i32
    %c0_i32_1 = arith.constant 0 : i32
    return %c0_i32, %c0_i32_0 : i32, i32
  }
  func.func @transform_2(%arg0: i32) -> (i32, i32) {
    %c0_i32 = arith.constant 0 : i32
    %c0_i32_0 = arith.constant 0 : i32
    %c0_i32_1 = arith.constant 0 : i32
    return %c0_i32, %c0_i32_0 : i32, i32
  }
  func.func @transform_3(%arg0: i32) -> (i32, i32) {
    %c0_i32 = arith.constant 0 : i32
    %c0_i32_0 = arith.constant 0 : i32
    %c0_i32_1 = arith.constant 0 : i32
    return %c0_i32, %c0_i32_0 : i32, i32
  }
  func.func @transform_4(%arg0: i32) -> (i32, i32) {
    %c0_i32 = arith.constant 0 : i32
    %c0_i32_0 = arith.constant 0 : i32
    %c0_i32_1 = arith.constant 0 : i32
    return %c0_i32, %c0_i32_0 : i32, i32
  }
  func.func @transform_5(%arg0: i32) -> (i32, i32, i32, i32) {
    %c0_i32 = arith.constant 0 : i32
    %c0_i32_0 = arith.constant 0 : i32
    %c0_i32_1 = arith.constant 0 : i32
    %c0_i32_2 = arith.constant 0 : i32
    return %arg0, %c0_i32, %c0_i32_0, %c0_i32_1 : i32, i32, i32, i32
  }
}

module attributes {stable_mosaic.version = 11 : i64} {
  func.func @kernel(%arg0: i32, %arg1: memref<1x8x6400xf32, #tpu.memory_space<vmem>>, %arg2: memref<9x8xf32, #tpu.memory_space<vmem>>, %arg3: memref<1x1xf32, #tpu.memory_space<vmem>>, %arg4: memref<1x4x1x6400xf32, #tpu.memory_space<vmem>>, %arg5: memref<9x6400xf32, #tpu.memory_space<vmem>>) attributes {dimension_semantics = [#tpu.dimension_semantics<parallel>], iteration_bounds = array<i64: 2>, scalar_prefetch = 0 : i64, scratch_operands = 1 : i64, tpu.core_type = #tpu.core_type<tc>, window_params = [{transform_indices = @transform_0, window_bounds = array<i64: 1, 8, 6400>}, {pipeline_mode = #tpu.pipeline_mode<synchronous>, transform_indices = @transform_1, window_bounds = array<i64: 9, 8>}, {pipeline_mode = #tpu.pipeline_mode<synchronous>, transform_indices = @transform_2, window_bounds = array<i64: 1, 1>}, {transform_indices = @transform_3, window_bounds = array<i64: 1, 4, 1, 6400>}]} {
    %c0 = arith.constant 0 : index
    %c0_0 = arith.constant 0 : index
    %0 = vector.load %arg2[%c0, %c0_0] : memref<9x8xf32, #tpu.memory_space<vmem>>, vector<9x8xf32>
    %c0_1 = arith.constant 0 : index
    %c0_2 = arith.constant 0 : index
    %c0_3 = arith.constant 0 : index
    %1 = vector.load %arg1[%c0_1, %c0_2, %c0_3] : memref<1x8x6400xf32, #tpu.memory_space<vmem>>, vector<1x8x6400xf32>
    %2 = vector.shape_cast %1 : vector<1x8x6400xf32> to vector<8x6400xf32>
    %cst = arith.constant dense<0.000000e+00> : vector<9x6400xf32>
    %3 = tpu.matmul %0, %2, %cst {dimension_numbers = #tpu.dot_dimension_numbers<[1], [0], [0], [1], [0, 0, 1, 1], [], []>} : vector<9x8xf32>, vector<8x6400xf32>, vector<9x6400xf32> -> vector<9x6400xf32>
    %c0_4 = arith.constant 0 : index
    %c0_5 = arith.constant 0 : index
    %4 = vector.load %arg5[%c0_4, %c0_5] : memref<9x6400xf32, #tpu.memory_space<vmem>>, vector<9x6400xf32>
    tpu.vector_store %arg5[%c0_4, %c0_5], %3 {strides = array<i32>} : memref<9x6400xf32, #tpu.memory_space<vmem>>, vector<9x6400xf32>,
    %c0_6 = arith.constant 0 : index
    %c0_7 = arith.constant 0 : index
    %5 = vector.load %arg3[%c0_6, %c0_7] : memref<1x1xf32, #tpu.memory_space<vmem>>, vector<1x1xf32>
    %c0_8 = arith.constant 0 : index
    %c0_9 = arith.constant 0 : index
    %6 = vector.load %arg5[%c0_8, %c0_9] : memref<9x6400xf32, #tpu.memory_space<vmem>>, vector<1x6400xf32>
    %c2 = arith.constant 2 : index
    %c0_10 = arith.constant 0 : index
    %7 = vector.load %arg5[%c2, %c0_10] : memref<9x6400xf32, #tpu.memory_space<vmem>>, vector<1x6400xf32>
    %cst_11 = arith.constant 0.000000e+00 : f32
    %8 = vector.broadcast %cst_11 : f32 to vector<1x1xf32>
    %9 = vector.extract_strided_slice %7 {offsets = [0, 0], sizes = [1, 6399], strides = [1, 1]} : vector<1x6400xf32> to vector<1x6399xf32>
    %10 = tpu.concatenate %8, %9 in 1 : vector<1x1xf32>, vector<1x6399xf32> -> vector<1x6400xf32>
    %11 = arith.addf %6, %10 : vector<1x6400xf32>
    %c6 = arith.constant 6 : index
    %c0_12 = arith.constant 0 : index
    %12 = vector.load %arg5[%c6, %c0_12] : memref<9x6400xf32, #tpu.memory_space<vmem>>, vector<1x6400xf32>
    %cst_13 = arith.constant 0.000000e+00 : f32
    %13 = vector.broadcast %cst_13 : f32 to vector<1x50xf32>
    %14 = vector.extract_strided_slice %12 {offsets = [0, 0], sizes = [1, 6350], strides = [1, 1]} : vector<1x6400xf32> to vector<1x6350xf32>
    %15 = tpu.concatenate %13, %14 in 1 : vector<1x50xf32>, vector<1x6350xf32> -> vector<1x6400xf32>
    %16 = arith.addf %11, %15 : vector<1x6400xf32>
    %c8 = arith.constant 8 : index
    %c0_14 = arith.constant 0 : index
    %17 = vector.load %arg5[%c8, %c0_14] : memref<9x6400xf32, #tpu.memory_space<vmem>>, vector<1x6400xf32>
    %cst_15 = arith.constant 0.000000e+00 : f32
    %18 = vector.broadcast %cst_15 : f32 to vector<1x51xf32>
    %19 = vector.extract_strided_slice %17 {offsets = [0, 0], sizes = [1, 6349], strides = [1, 1]} : vector<1x6400xf32> to vector<1x6349xf32>
    %20 = tpu.concatenate %18, %19 in 1 : vector<1x51xf32>, vector<1x6349xf32> -> vector<1x6400xf32>
    %21 = arith.addf %16, %20 : vector<1x6400xf32>
    %22 = vector.broadcast %5 : vector<1x1xf32> to vector<1x6400xf32>
    %23 = arith.addf %21, %22 : vector<1x6400xf32>
    %c0_16 = arith.constant 0 : index
    %c0_17 = arith.constant 0 : index
    %c0_18 = arith.constant 0 : index
    %c0_19 = arith.constant 0 : index
    %24 = vector.load %arg4[%c0_16, %c0_17, %c0_18, %c0_19] : memref<1x4x1x6400xf32, #tpu.memory_space<vmem>>, vector<1x1x1x6400xf32>
    %25 = vector.shape_cast %24 : vector<1x1x1x6400xf32> to vector<1x6400xf32>
    %26 = vector.shape_cast %23 : vector<1x6400xf32> to vector<1x1x1x6400xf32>
    tpu.vector_store %arg4[%c0_16, %c0_17, %c0_18, %c0_19], %26 {strides = array<i32>} : memref<1x4x1x6400xf32, #tpu.memory_space<vmem>>, vector<1x1x1x6400xf32>,
    %c1 = arith.constant 1 : index
    %c0_20 = arith.constant 0 : index
    %27 = vector.load %arg5[%c1, %c0_20] : memref<9x6400xf32, #tpu.memory_space<vmem>>, vector<1x6400xf32>
    %c7 = arith.constant 7 : index
    %c0_21 = arith.constant 0 : index
    %28 = vector.load %arg5[%c7, %c0_21] : memref<9x6400xf32, #tpu.memory_space<vmem>>, vector<1x6400xf32>
    %cst_22 = arith.constant 0.000000e+00 : f32
    %29 = vector.broadcast %cst_22 : f32 to vector<1x50xf32>
    %30 = vector.extract_strided_slice %28 {offsets = [0, 0], sizes = [1, 6350], strides = [1, 1]} : vector<1x6400xf32> to vector<1x6350xf32>
    %31 = tpu.concatenate %29, %30 in 1 : vector<1x50xf32>, vector<1x6350xf32> -> vector<1x6400xf32>
    %32 = arith.addf %27, %31 : vector<1x6400xf32>
    %33 = vector.broadcast %5 : vector<1x1xf32> to vector<1x6400xf32>
    %34 = arith.addf %32, %33 : vector<1x6400xf32>
    %c0_23 = arith.constant 0 : index
    %c1_24 = arith.constant 1 : index
    %c0_25 = arith.constant 0 : index
    %c0_26 = arith.constant 0 : index
    %35 = vector.load %arg4[%c0_23, %c1_24, %c0_25, %c0_26] : memref<1x4x1x6400xf32, #tpu.memory_space<vmem>>, vector<1x1x1x6400xf32>
    %36 = vector.shape_cast %35 : vector<1x1x1x6400xf32> to vector<1x6400xf32>
    %37 = vector.shape_cast %34 : vector<1x6400xf32> to vector<1x1x1x6400xf32>
    tpu.vector_store %arg4[%c0_23, %c1_24, %c0_25, %c0_26], %37 {strides = array<i32>} : memref<1x4x1x6400xf32, #tpu.memory_space<vmem>>, vector<1x1x1x6400xf32>,
    %c3 = arith.constant 3 : index
    %c0_27 = arith.constant 0 : index
    %38 = vector.load %arg5[%c3, %c0_27] : memref<9x6400xf32, #tpu.memory_space<vmem>>, vector<1x6400xf32>
    %c5 = arith.constant 5 : index
    %c0_28 = arith.constant 0 : index
    %39 = vector.load %arg5[%c5, %c0_28] : memref<9x6400xf32, #tpu.memory_space<vmem>>, vector<1x6400xf32>
    %cst_29 = arith.constant 0.000000e+00 : f32
    %40 = vector.broadcast %cst_29 : f32 to vector<1x1xf32>
    %41 = vector.extract_strided_slice %39 {offsets = [0, 0], sizes = [1, 6399], strides = [1, 1]} : vector<1x6400xf32> to vector<1x6399xf32>
    %42 = tpu.concatenate %40, %41 in 1 : vector<1x1xf32>, vector<1x6399xf32> -> vector<1x6400xf32>
    %43 = arith.addf %38, %42 : vector<1x6400xf32>
    %44 = vector.broadcast %5 : vector<1x1xf32> to vector<1x6400xf32>
    %45 = arith.addf %43, %44 : vector<1x6400xf32>
    %c0_30 = arith.constant 0 : index
    %c2_31 = arith.constant 2 : index
    %c0_32 = arith.constant 0 : index
    %c0_33 = arith.constant 0 : index
    %46 = vector.load %arg4[%c0_30, %c2_31, %c0_32, %c0_33] : memref<1x4x1x6400xf32, #tpu.memory_space<vmem>>, vector<1x1x1x6400xf32>
    %47 = vector.shape_cast %46 : vector<1x1x1x6400xf32> to vector<1x6400xf32>
    %48 = vector.shape_cast %45 : vector<1x6400xf32> to vector<1x1x1x6400xf32>
    tpu.vector_store %arg4[%c0_30, %c2_31, %c0_32, %c0_33], %48 {strides = array<i32>} : memref<1x4x1x6400xf32, #tpu.memory_space<vmem>>, vector<1x1x1x6400xf32>,
    %c4 = arith.constant 4 : index
    %c0_34 = arith.constant 0 : index
    %49 = vector.load %arg5[%c4, %c0_34] : memref<9x6400xf32, #tpu.memory_space<vmem>>, vector<1x6400xf32>
    %50 = vector.broadcast %5 : vector<1x1xf32> to vector<1x6400xf32>
    %51 = arith.addf %49, %50 : vector<1x6400xf32>
    %c0_35 = arith.constant 0 : index
    %c3_36 = arith.constant 3 : index
    %c0_37 = arith.constant 0 : index
    %c0_38 = arith.constant 0 : index
    %52 = vector.load %arg4[%c0_35, %c3_36, %c0_37, %c0_38] : memref<1x4x1x6400xf32, #tpu.memory_space<vmem>>, vector<1x1x1x6400xf32>
    %53 = vector.shape_cast %52 : vector<1x1x1x6400xf32> to vector<1x6400xf32>
    %54 = vector.shape_cast %51 : vector<1x6400xf32> to vector<1x1x1x6400xf32>
    tpu.vector_store %arg4[%c0_35, %c3_36, %c0_37, %c0_38], %54 {strides = array<i32>} : memref<1x4x1x6400xf32, #tpu.memory_space<vmem>>, vector<1x1x1x6400xf32>,
    return
  }
  func.func @transform_0(%arg0: i32) -> (i32, i32, i32) {
    %c0_i32 = arith.constant 0 : i32
    %c0_i32_0 = arith.constant 0 : i32
    %c0_i32_1 = arith.constant 0 : i32
    return %arg0, %c0_i32, %c0_i32_0 : i32, i32, i32
  }
  func.func @transform_1(%arg0: i32) -> (i32, i32) {
    %c0_i32 = arith.constant 0 : i32
    %c0_i32_0 = arith.constant 0 : i32
    %c0_i32_1 = arith.constant 0 : i32
    return %c0_i32, %c0_i32_0 : i32, i32
  }
  func.func @transform_2(%arg0: i32) -> (i32, i32) {
    %c0_i32 = arith.constant 0 : i32
    %c0_i32_0 = arith.constant 0 : i32
    %c0_i32_1 = arith.constant 0 : i32
    return %c0_i32, %c0_i32_0 : i32, i32
  }
  func.func @transform_3(%arg0: i32) -> (i32, i32, i32, i32) {
    %c0_i32 = arith.constant 0 : i32
    %c0_i32_0 = arith.constant 0 : i32
    %c0_i32_1 = arith.constant 0 : i32
    %c0_i32_2 = arith.constant 0 : i32
    return %arg0, %c0_i32, %c0_i32_0, %c0_i32_1 : i32, i32, i32, i32
  }
}

</mosaic_0001>

<llo_original>
// kernel: decoder_forward.4
$region0: #{decoder_forward.4}
  #allocation0 [shape = 'u32[]', space=smem, size = 0x4, offset = 0x4, fixed_abs, tag = 'smem constant byte address 0x4 - core index']
  #allocation1 [shape = 'u32[144,128]{1,0:T(1,128)}', space=vmem, size = 0x12000, scoped, tag = 'internal scratch']
  #allocation2 [shape = 'f32[72,1600]{1,0:T(8,128)}', space=vmem, size = 0x75000, scoped, tag = 'scratch operand']
  %s0 = inlined_call_operand.vmem [shape: f32[2,16,1600], index: 0, kind: input, shape index: {}]
  %s1 = inlined_call_operand.hbm [shape: f32[72,16], index: 1, kind: input, shape index: {}]
  %s2 = inlined_call_operand.vmem [shape: f32[8,1], index: 2, kind: input, shape index: {}]
  %s3 = inlined_call_operand.vmem [shape: f32[1,1600], index: 3, kind: input, shape index: {}]
  %s4 = inlined_call_operand.vmem [shape: f32[1,1600], index: 4, kind: input, shape index: {}]
  %s5 = inlined_call_operand.vmem [shape: f32[2,4,8,1600], index: 5, kind: output, shape index: {}]
  %s6 = sld [smem:[#allocation0]]
  $region57: #{decoder_forward.4} parent=0
    _
  %s8 = ssub.s32 1, %s6
  %s9 = scalar_select 0, %s8, %s6
  $region1: #{decoder_forward.4} parent=0
    #allocation3 [shape = 'u8[36864]{0}', space=vmem, size = 0x9000, scoped, tag = 'input window, operand 1, single buffered']
    #allocation4 [shape = 's32[2]{0}', space=sflag, size = 0x8, scoped, tag = 'scoped memory for decoder_forward.4']
    %10 = vsyncpa [#allocation4], 0
    loop: start=0, step=1, limit=4
    $region2: #{decoder_forward.4} parent=1 // loop_pre_header
      _
    $region3: #{decoder_forward.4} parent=1 // loop_header
      %s12 = sphi 0, %s16
      %p13 = scmp.ge.s32.totalorder %s12, 4
      %s22 = sphi 0, %s24
      %s25 = sphi 0, %s22
      %s26 = sphi 0, %s25
      %s42 = sphi 0, %s26
      %s46 = sphi 0, %s46
      %s48 = sphi 0, %s46
      %s49 = sphi 0, %s48
      %s63 = sphi 0, %s49
      %s67 = sphi 0, %s67
      %s69 = sphi 0, %s67
      %s70 = sphi 0, %s69
      %s84 = sphi 0, %s70
      %s88 = sphi 0, %s88
      %s90 = sphi 0, %s88
      %s91 = sphi 0, %s90
      %s105 = sphi 0, %s91
      %s109 = sphi 0, %s109
      %s111 = sphi 0, %s109
      %s112 = sphi 0, %s111
      %s126 = sphi 0, %s112
      %s132 = sphi 0, %s134
      %s135 = sphi 0, %s132
      %s136 = sphi 0, %s135
      %s152 = sphi 0, %s136
    $region4: #{decoder_forward.4} parent=1 // loop_header_branch
      %15 = sbr.rel (%p13) target = $region8
    $region5: #{decoder_forward.4} parent=1 // loop_body
      %s17 = ssub.s32 %s12, 1
      %s18 = ssub.s32 %s12, 2
      %s19 = sadd.s32 %s12, 1
      %s20 = ssub.s32 %s12, %s19
      %p21 = scmp.eq.s32.totalorder %s20, 0
      %s23 = sadd.s32 %s22, 1
      %s24 = scalar_select %p21, %s22, %s23
      %p27 = pneg %p21
      %p28 = scmp.eq.s32.totalorder %s12, 1
      %p29 = por %p27, %p28
      %p30 = scmp.ne.s32.totalorder %s22, %s25
      %p31 = scmp.eq.s32.totalorder %s12, 0
      %p32 = por %p30, %p31
      %p33 = scmp.ne.s32.totalorder %s22, %s25
      %p34 = scmp.eq.s32.totalorder %s17, 1
      %p35 = por %p33, %p34
      %p36 = scmp.ne.s32.totalorder %s25, %s26
      %p37 = scmp.eq.s32.totalorder %s17, 0
      %p38 = por %p36, %p37
      %p39 = scmp.ne.s32.totalorder %s25, %s26
      %p40 = scmp.eq.s32.totalorder %s18, 1
      %p41 = por %p39, %p40
      %p43 = scmp.ne.s32.totalorder %s26, %s42
      %p44 = scmp.eq.s32.totalorder %s18, 0
      %p45 = por %p43, %p44
      %s47 = sadd.s32 %s46, 1
      %p50 = scmp.eq.s32.totalorder %s12, 1
      %p51 = scmp.ne.s32.totalorder %s46, %s48
      %p52 = scmp.eq.s32.totalorder %s12, 0
      %p53 = por %p51, %p52
      %p54 = scmp.ne.s32.totalorder %s46, %s48
      %p55 = scmp.eq.s32.totalorder %s17, 1
      %p56 = por %p54, %p55
      %p57 = scmp.ne.s32.totalorder %s48, %s49
      %p58 = scmp.eq.s32.totalorder %s17, 0
      %p59 = por %p57, %p58
      %p60 = scmp.ne.s32.totalorder %s48, %s49
      %p61 = scmp.eq.s32.totalorder %s18, 1
      %p62 = por %p60, %p61
      %p64 = scmp.ne.s32.totalorder %s49, %s63
      %p65 = scmp.eq.s32.totalorder %s18, 0
      %p66 = por %p64, %p65
      %s68 = sadd.s32 %s67, 1
      %p71 = scmp.eq.s32.totalorder %s12, 1
      %p72 = scmp.ne.s32.totalorder %s67, %s69
      %p73 = scmp.eq.s32.totalorder %s12, 0
      %p74 = por %p72, %p73
      %p75 = scmp.ne.s32.totalorder %s67, %s69
      %p76 = scmp.eq.s32.totalorder %s17, 1
      %p77 = por %p75, %p76
      %p78 = scmp.ne.s32.totalorder %s69, %s70
      %p79 = scmp.eq.s32.totalorder %s17, 0
      %p80 = por %p78, %p79
      %p81 = scmp.ne.s32.totalorder %s69, %s70
      %p82 = scmp.eq.s32.totalorder %s18, 1
      %p83 = por %p81, %p82
      %p85 = scmp.ne.s32.totalorder %s70, %s84
      %p86 = scmp.eq.s32.totalorder %s18, 0
      %p87 = por %p85, %p86
      %s89 = sadd.s32 %s88, 1
      %p92 = scmp.eq.s32.totalorder %s12, 1
      %p93 = scmp.ne.s32.totalorder %s88, %s90
      %p94 = scmp.eq.s32.totalorder %s12, 0
      %p95 = por %p93, %p94
      %p96 = scmp.ne.s32.totalorder %s88, %s90
      %p97 = scmp.eq.s32.totalorder %s17, 1
      %p98 = por %p96, %p97
      %p99 = scmp.ne.s32.totalorder %s90, %s91
      %p100 = scmp.eq.s32.totalorder %s17, 0
      %p101 = por %p99, %p100
      %p102 = scmp.ne.s32.totalorder %s90, %s91
      %p103 = scmp.eq.s32.totalorder %s18, 1
      %p104 = por %p102, %p103
      %p106 = scmp.ne.s32.totalorder %s91, %s105
      %p107 = scmp.eq.s32.totalorder %s18, 0
      %p108 = por %p106, %p107
      %s110 = sadd.s32 %s109, 1
      %p113 = scmp.eq.s32.totalorder %s12, 1
      %p114 = scmp.ne.s32.totalorder %s109, %s111
      %p115 = scmp.eq.s32.totalorder %s12, 0
      %p116 = por %p114, %p115
      %p117 = scmp.ne.s32.totalorder %s109, %s111
      %p118 = scmp.eq.s32.totalorder %s17, 1
      %p119 = por %p117, %p118
      %p120 = scmp.ne.s32.totalorder %s111, %s112
      %p121 = scmp.eq.s32.totalorder %s17, 0
      %p122 = por %p120, %p121
      %p123 = scmp.ne.s32.totalorder %s111, %s112
      %p124 = scmp.eq.s32.totalorder %s18, 1
      %p125 = por %p123, %p124
      %p127 = scmp.ne.s32.totalorder %s112, %s126
      %p128 = scmp.eq.s32.totalorder %s18, 0
      %p129 = por %p127, %p128
      %s130 = ssub.s32 %s12, %s19
      %p131 = scmp.eq.s32.totalorder %s130, 0
      %s133 = sadd.s32 %s132, 1
      %s134 = scalar_select %p131, %s132, %s133
      %p137 = pneg %p131
      %p138 = scmp.eq.s32.totalorder %s12, 1
      %p139 = por %p137, %p138
      %p140 = scmp.ne.s32.totalorder %s132, %s135
      %p141 = scmp.eq.s32.totalorder %s12, 0
      %p142 = por %p140, %p141
      %p143 = scmp.ne.s32.totalorder %s132, %s135
      %p144 = scmp.eq.s32.totalorder %s17, 1
      %p145 = por %p143, %p144
      %p146 = scmp.ne.s32.totalorder %s135, %s136
      %p147 = scmp.eq.s32.totalorder %s17, 0
      %p148 = por %p146, %p147
      %p149 = scmp.ne.s32.totalorder %s135, %s136
      %p150 = scmp.eq.s32.totalorder %s18, 1
      %p151 = por %p149, %p150
      %p153 = scmp.ne.s32.totalorder %s136, %s152
      %p154 = scmp.eq.s32.totalorder %s18, 0
      %p155 = por %p153, %p154
      %p156 = scmp.le.s32.totalorder 1, %s12
      %p157 = scmp.lt.s32.totalorder %s12, 3
      %p158 = pnand %p156, %p157
      %p159 = pneg %p158
      // Predicated region
      $region9: #{decoder_forward.4} parent=5 // pred_check
        _
      $region10: #{decoder_forward.4} parent=5 // pred_check_branch
        %161 = sbr.rel (%p158) target = $region12
      $region11: #{decoder_forward.4} parent=5 // pred_region
        %s162 = ssub.s32 %s12, 1
        // Predicated region
        $region13: #{decoder_forward.4} parent=11 // pred_check
          %p163 = pneg %p59
        $region14: #{decoder_forward.4} parent=11 // pred_check_branch
          %165 = sbr.rel (%p163) target = $region16
        $region15: #{decoder_forward.4} parent=11 // pred_region
          %s167 = ssub.s32 1152, 1152
          %168 = vsyncadd [#allocation4], %s167
          %s169 = sshll.u32 [#allocation3], 4
          %s170 = int_to_ptr.vmem [resolvable:$true] %s169
          %175 = dma.hbm_to_vmem [thread:$0]  %s1, 1152, %s170, [#allocation4], 128, 128, 8
        $region16: #{decoder_forward.4} parent=11 // pred_fallthru
          _
        // Predicated region
        $region17: #{decoder_forward.4} parent=11 // pred_check
          %p176 = pneg %p80
        $region18: #{decoder_forward.4} parent=11 // pred_check_branch
          %178 = sbr.rel (%p176) target = $region20
        $region19: #{decoder_forward.4} parent=11 // pred_region
          _
        $region20: #{decoder_forward.4} parent=11 // pred_fallthru
          _
        // Predicated region
        $region21: #{decoder_forward.4} parent=11 // pred_check
          %p179 = pneg %p101
        $region22: #{decoder_forward.4} parent=11 // pred_check_branch
          %181 = sbr.rel (%p179) target = $region24
        $region23: #{decoder_forward.4} parent=11 // pred_region
          _
        $region24: #{decoder_forward.4} parent=11 // pred_fallthru
          _
        // Predicated region
        $region25: #{decoder_forward.4} parent=11 // pred_check
          %p182 = pneg %p122
        $region26: #{decoder_forward.4} parent=11 // pred_check_branch
          %184 = sbr.rel (%p182) target = $region28
        $region27: #{decoder_forward.4} parent=11 // pred_region
          _
        $region28: #{decoder_forward.4} parent=11 // pred_fallthru
          _
      $region12: #{decoder_forward.4} parent=5 // pred_fallthru
        _
      %p185 = scmp.lt.s32.totalorder %s12, 2
      // Predicated region
      $region29: #{decoder_forward.4} parent=5 // pred_check
        %p186 = pneg %p185
      $region30: #{decoder_forward.4} parent=5 // pred_check_branch
        %188 = sbr.rel (%p186) target = $region32
      $region31: #{decoder_forward.4} parent=5 // pred_region
        // Predicated region
        $region33: #{decoder_forward.4} parent=31 // pred_check
          %p189 = pneg %p32
        $region34: #{decoder_forward.4} parent=31 // pred_check_branch
          %191 = sbr.rel (%p189) target = $region36
        $region35: #{decoder_forward.4} parent=31 // pred_region
          %p192 = scmp.lt.s32.totalorder %s12, 1
          %s193 = scalar_select %p192, %s12, 1
          %s194 = smul.addr %s193, 26
          %s195 = smul.addr %s194, 8
          %s196 = scalar_lea.vmem %s0, %s195
        $region36: #{decoder_forward.4} parent=31 // pred_fallthru
          _
      $region32: #{decoder_forward.4} parent=5 // pred_fallthru
        _
      %p197 = scmp.le.s32.totalorder 1, %s12
      %p198 = scmp.lt.s32.totalorder %s12, 3
      %p199 = pnand %p197, %p198
      %p200 = pneg %p199
      // Predicated region
      $region37: #{decoder_forward.4} parent=5 // pred_check
        _
      $region38: #{decoder_forward.4} parent=5 // pred_check_branch
        %202 = sbr.rel (%p199) target = $region40
      $region39: #{decoder_forward.4} parent=5 // pred_region
        %s203 = ssub.s32 %s12, 1
        // Predicated region
        $region41: #{decoder_forward.4} parent=39 // pred_check
          %p204 = pneg %p59
        $region42: #{decoder_forward.4} parent=39 // pred_check_branch
          %206 = sbr.rel (%p204) target = $region44
        $region43: #{decoder_forward.4} parent=39 // pred_region
          %207 = dma.done [#allocation4], 1152
        $region44: #{decoder_forward.4} parent=39 // pred_fallthru
          _
        %p208 = scmp.lt.s32.totalorder %s17, 1
        %s209 = scalar_select %p208, %s17, 1
        %s210 = smul.addr %s209, 26
        %s211 = smul.addr %s210, 8
        %s212 = scalar_lea.vmem %s0, %s211
        %p213 = pneg %p38
        %p214 = pneg %p35
        %p215 = pneg %p59
        %p216 = pneg %p56
        %p217 = pneg %p80
        %p218 = pneg %p77
        %p219 = pneg %p101
        %p220 = pneg %p98
        %p221 = pneg %p122
        %p222 = pneg %p119
        %p223 = pneg %p148
        %p224 = pneg %p145
        %p225 = scmp.lt.s32.totalorder %s17, 1
        %s226 = scalar_select %p225, %s17, 1
        %s227 = smul.addr %s226, 52
        %s228 = smul.addr %s227, 8
        %s229 = scalar_lea.vmem %s5, %s228
        %p230 = scmp.lt.s32.totalorder %s17, 1
        %s231 = scalar_select %p230, %s17, 1
        %s232 = smul.addr %s231, 26
        %s233 = smul.addr %s232, 8
        %s234 = scalar_lea.vmem %s0, %s233
        %p235 = scmp.lt.s32.totalorder %s17, 1
        %s236 = scalar_select %p235, %s17, 1
        %s237 = smul.addr %s236, 52
        %s238 = smul.addr %s237, 8
        %s239 = scalar_lea.vmem %s5, %s238
        %v240 = vld [vmem:[#allocation3] sm:$0xff]
        %v241 = vld [vmem:[#allocation3 + $0x8] sm:$0xff]
        %v242 = vld [vmem:[#allocation3 + $0x10] sm:$0xff]
        %v243 = vld [vmem:[#allocation3 + $0x18] sm:$0xff]
        %v244 = vld [vmem:[#allocation3 + $0x20] sm:$0xff]
        %v245 = vld [vmem:[#allocation3 + $0x28] sm:$0xff]
        %v246 = vld [vmem:[#allocation3 + $0x30] sm:$0xff]
        %v247 = vld [vmem:[#allocation3 + $0x38] sm:$0xff]
        %v248 = vld [vmem:[#allocation3 + $0x40] sm:$0xff]
        %v249 = vld [vmem:[%s234] sm:$0xff]
        %v250 = vld [vmem:[%s234 + $0x8] sm:$0xff]
        %v251 = vld [vmem:[%s234 + $0x10] sm:$0xff]
        %v252 = vld [vmem:[%s234 + $0x18] sm:$0xff]
        %v253 = vld [vmem:[%s234 + $0x20] sm:$0xff]
        %v254 = vld [vmem:[%s234 + $0x28] sm:$0xff]
        %v255 = vld [vmem:[%s234 + $0x30] sm:$0xff]
        %v256 = vld [vmem:[%s234 + $0x38] sm:$0xff]
        %v257 = vld [vmem:[%s234 + $0x40] sm:$0xff]
        %v258 = vld [vmem:[%s234 + $0x48] sm:$0xff]
        %v259 = vld [vmem:[%s234 + $0x50] sm:$0xff]
        %v260 = vld [vmem:[%s234 + $0x58] sm:$0xff]
        %v261 = vld [vmem:[%s234 + $0x60] sm:$0xff]
        %v262 = vld [vmem:[%s234 + $0x68] sm:$0xff]
        %v263 = vld [vmem:[%s234 + $0x70] sm:$0xff]
        %v264 = vld [vmem:[%s234 + $0x78] sm:$0xff]
        %v265 = vld [vmem:[%s234 + $0x80] sm:$0xff]
        %v266 = vld [vmem:[%s234 + $0x88] sm:$0xff]
        %v267 = vld [vmem:[%s234 + $0x90] sm:$0xff]
        %v268 = vld [vmem:[%s234 + $0x98] sm:$0xff]
        %v269 = vld [vmem:[%s234 + $0xa0] sm:$0xff]
        %v270 = vld [vmem:[%s234 + $0xa8] sm:$0xff]
        %v271 = vld [vmem:[%s234 + $0xb0] sm:$0xff]
        %v272 = vld [vmem:[%s234 + $0xb8] sm:$0xff]
        %v273 = vld [vmem:[%s234 + $0xc0] sm:$0xff]
        %v274 = vld [vmem:[%s234 + $0xc8] sm:$0xff]
        %vm275 = vcmask 130048
        %v277 = vsel %vm275, %v240, 0
        %v280 = vsel %vm275, %v241, 0
        %v283 = vsel %vm275, %v242, 0
        %v286 = vsel %vm275, %v243, 0
        %v289 = vsel %vm275, %v244, 0
        %v292 = vsel %vm275, %v245, 0
        %v295 = vsel %vm275, %v246, 0
        %v298 = vsel %vm275, %v247, 0
        %v301 = vsel %vm275, %v248, 0
        %303 = vmatprep.subr.mxu0 0.0
        %304 = vmatpush1.msra.mxu0 0.0
        %305 = vmatprep.subr.mxu0 0.0
        %306 = vmatpush1.msra.mxu0 0.0
        %307 = vmatprep.subr.mxu0 0.0
        %308 = vmatpush1.msra.mxu0 0.0
        %309 = vmatprep.subr.mxu0 0.0
        %310 = vmatpush1.msra.mxu0 0.0
        %311 = vmatprep.subr.mxu0 0.0
        %312 = vmatpush1.msra.mxu0 0.0
        %313 = vmatprep.subr.mxu0 0.0
        %314 = vmatpush1.msra.mxu0 0.0
        %315 = vmatprep.subr.mxu0 0.0
        %316 = vmatpush1.msra.mxu0 0.0
        %317 = vmatprep.subr.mxu0 0.0
        %318 = vmatpush1.msra.mxu0 0.0
        %319 = vmatprep.subr.mxu0 0.0
        %320 = vmatpush1.msra.mxu0 0.0
        %321 = vmatprep.subr.mxu0 0.0
        %322 = vmatpush1.msra.mxu0 0.0
        %323 = vmatprep.subr.mxu0 0.0
        %324 = vmatpush1.msra.mxu0 0.0
        %325 = vmatprep.subr.mxu0 0.0
        %326 = vmatpush1.msra.mxu0 0.0
        %327 = vmatprep.subr.mxu0 0.0
        %328 = vmatpush1.msra.mxu0 0.0
        %329 = vmatprep.subr.mxu0 0.0
        %330 = vmatpush1.msra.mxu0 0.0
        %331 = vmatprep.subr.mxu0 %v263
        %332 = vmatpush1.msra.mxu0 %v262
        %333 = vmatprep.subr.mxu0 %v250
        %334 = vmatpush1.msra.mxu0 %v249
        %335 = vmatprep.subr.mxu0 0.0
        %336 = vmatpush2.msra.mxu0 0.0
        %337 = vmatprep.subr.mxu0 0.0
        %338 = vmatpush2.msra.mxu0 0.0
        %339 = vmatprep.subr.mxu0 0.0
        %340 = vmatpush2.msra.mxu0 0.0
        %341 = vmatprep.subr.mxu0 0.0
        %342 = vmatpush2.msra.mxu0 0.0
        %343 = vmatprep.subr.mxu0 0.0
        %344 = vmatpush2.msra.mxu0 0.0
        %345 = vmatprep.subr.mxu0 0.0
        %346 = vmatpush2.msra.mxu0 0.0
        %347 = vmatprep.subr.mxu0 0.0
        %348 = vmatpush2.msra.mxu0 0.0
        %349 = vmatprep.subr.mxu0 0.0
        %350 = vmatpush2.msra.mxu0 0.0
        %351 = vmatprep.subr.mxu0 0.0
        %352 = vmatpush2.msra.mxu0 0.0
        %353 = vmatprep.subr.mxu0 0.0
        %354 = vmatpush2.msra.mxu0 0.0
        %355 = vmatprep.subr.mxu0 0.0
        %356 = vmatpush2.msra.mxu0 0.0
        %357 = vmatprep.subr.mxu0 0.0
        %358 = vmatpush2.msra.mxu0 0.0
        %359 = vmatprep.subr.mxu0 0.0
        %360 = vmatpush2.msra.mxu0 0.0
        %361 = vmatprep.subr.mxu0 0.0
        %362 = vmatpush2.msra.mxu0 0.0
        %363 = vmatprep.subr.mxu0 0.0
        %364 = vmatpush2.msra.mxu0 0.0
        %365 = vmatprep.subr.mxu0 0.0
        %366 = vmatpush2.msra.mxu0 0.0
        %367 = vmatprep.mubr.f32.mxu0 0.0
        %368 = vmatmul.mubr.f32.gmra.mxu0 %v277
        %v369 = vpop.f32.mrf.mxu0
        %v370 = vadd.f32 0.0, %v369
        %v371 = vpop.f32.mrf.mxu0
        %v372 = vadd.f32 0.0, %v371
        %373 = vmatprep.mubr.f32.mxu0 0.0
        %374 = vmatmul.mubr.f32.gmra.mxu0 %v280
        %v375 = vpop.f32.mrf.mxu0
        %v376 = vadd.f32 0.0, %v375
        %v377 = vpop.f32.mrf.mxu0
        %v378 = vadd.f32 0.0, %v377
        %379 = vmatprep.mubr.f32.mxu0 0.0
        %380 = vmatmul.mubr.f32.gmra.mxu0 %v283
        %v381 = vpop.f32.mrf.mxu0
        %v382 = vadd.f32 0.0, %v381
        %v383 = vpop.f32.mrf.mxu0
        %v384 = vadd.f32 0.0, %v383
        %385 = vmatprep.mubr.f32.mxu0 0.0
        %386 = vmatmul.mubr.f32.gmra.mxu0 %v286
        %v387 = vpop.f32.mrf.mxu0
        %v388 = vadd.f32 0.0, %v387
        %v389 = vpop.f32.mrf.mxu0
        %v390 = vadd.f32 0.0, %v389
        %391 = vmatprep.mubr.f32.mxu0 0.0
        %392 = vmatmul.mubr.f32.gmra.mxu0 %v289
        %v393 = vpop.f32.mrf.mxu0
        %v394 = vadd.f32 0.0, %v393
        %v395 = vpop.f32.mrf.mxu0
        %v396 = vadd.f32 0.0, %v395
        %397 = vmatprep.mubr.f32.mxu0 0.0
        %398 = vmatmul.mubr.f32.gmra.mxu0 %v292
        %v399 = vpop.f32.mrf.mxu0
        %v400 = vadd.f32 0.0, %v399
        %v401 = vpop.f32.mrf.mxu0
        %v402 = vadd.f32 0.0, %v401
        %403 = vmatprep.mubr.f32.mxu0 0.0
        %404 = vmatmul.mubr.f32.gmra.mxu0 %v295
        %v405 = vpop.f32.mrf.mxu0
        %v406 = vadd.f32 0.0, %v405
        %v407 = vpop.f32.mrf.mxu0
        %v408 = vadd.f32 0.0, %v407
        %409 = vmatprep.mubr.f32.mxu0 0.0
        %410 = vmatmul.mubr.f32.gmra.mxu0 %v298
        %v411 = vpop.f32.mrf.mxu0
        %v412 = vadd.f32 0.0, %v411
        %v413 = vpop.f32.mrf.mxu0
        %v414 = vadd.f32 0.0, %v413
        %415 = vmatprep.mubr.f32.mxu0 0.0
        %416 = vmatmul.mubr.f32.gmra.mxu0 %v301
        %v417 = vpop.f32.mrf.mxu0
        %v418 = vadd.f32 0.0, %v417
        %v419 = vpop.f32.mrf.mxu0
        %v420 = vadd.f32 0.0, %v419
        %421 = vdwg.mxu0
        %422 = vmatprep.subr.mxu0 0.0
        %423 = vmatpush1.msra.mxu0 0.0
        %424 = vmatprep.subr.mxu0 0.0
        %425 = vmatpush1.msra.mxu0 0.0
        %426 = vmatprep.subr.mxu0 0.0
        %427 = vmatpush1.msra.mxu0 0.0
        %428 = vmatprep.subr.mxu0 0.0
        %429 = vmatpush1.msra.mxu0 0.0
        %430 = vmatprep.subr.mxu0 0.0
        %431 = vmatpush1.msra.mxu0 0.0
        %432 = vmatprep.subr.mxu0 0.0
        %433 = vmatpush1.msra.mxu0 0.0
        %434 = vmatprep.subr.mxu0 0.0
        %435 = vmatpush1.msra.mxu0 0.0
        %436 = vmatprep.subr.mxu0 0.0
        %437 = vmatpush1.msra.mxu0 0.0
        %438 = vmatprep.subr.mxu0 0.0
        %439 = vmatpush1.msra.mxu0 0.0
        %440 = vmatprep.subr.mxu0 0.0
        %441 = vmatpush1.msra.mxu0 0.0
        %442 = vmatprep.subr.mxu0 0.0
        %443 = vmatpush1.msra.mxu0 0.0
        %444 = vmatprep.subr.mxu0 0.0
        %445 = vmatpush1.msra.mxu0 0.0
        %446 = vmatprep.subr.mxu0 0.0
        %447 = vmatpush1.msra.mxu0 0.0
        %448 = vmatprep.subr.mxu0 0.0
        %449 = vmatpush1.msra.mxu0 0.0
        %450 = vmatprep.subr.mxu0 %v265
        %451 = vmatpush1.msra.mxu0 %v264
        %452 = vmatprep.subr.mxu0 %v252
        %453 = vmatpush1.msra.mxu0 %v251
        %454 = vmatprep.subr.mxu0 0.0
        %455 = vmatpush2.msra.mxu0 0.0
        %456 = vmatprep.subr.mxu0 0.0
        %457 = vmatpush2.msra.mxu0 0.0
        %458 = vmatprep.subr.mxu0 0.0
        %459 = vmatpush2.msra.mxu0 0.0
        %460 = vmatprep.subr.mxu0 0.0
        %461 = vmatpush2.msra.mxu0 0.0
        %462 = vmatprep.subr.mxu0 0.0
        %463 = vmatpush2.msra.mxu0 0.0
        %464 = vmatprep.subr.mxu0 0.0
        %465 = vmatpush2.msra.mxu0 0.0
        %466 = vmatprep.subr.mxu0 0.0
        %467 = vmatpush2.msra.mxu0 0.0
        %468 = vmatprep.subr.mxu0 0.0
        %469 = vmatpush2.msra.mxu0 0.0
        %470 = vmatprep.subr.mxu0 0.0
        %471 = vmatpush2.msra.mxu0 0.0
        %472 = vmatprep.subr.mxu0 0.0
        %473 = vmatpush2.msra.mxu0 0.0
        %474 = vmatprep.subr.mxu0 0.0
        %475 = vmatpush2.msra.mxu0 0.0
        %476 = vmatprep.subr.mxu0 0.0
        %477 = vmatpush2.msra.mxu0 0.0
        %478 = vmatprep.subr.mxu0 0.0
        %479 = vmatpush2.msra.mxu0 0.0
        %480 = vmatprep.subr.mxu0 0.0
        %481 = vmatpush2.msra.mxu0 0.0
        %482 = vmatprep.subr.mxu0 0.0
        %483 = vmatpush2.msra.mxu0 0.0
        %484 = vmatprep.subr.mxu0 0.0
        %485 = vmatpush2.msra.mxu0 0.0
        %486 = vmatprep.mubr.f32.mxu0 0.0
        %487 = vmatmul.mubr.f32.gmra.mxu0 %v277
        %v488 = vpop.f32.mrf.mxu0
        %v489 = vadd.f32 0.0, %v488
        %v490 = vpop.f32.mrf.mxu0
        %v491 = vadd.f32 0.0, %v490
        %492 = vmatprep.mubr.f32.mxu0 0.0
        %493 = vmatmul.mubr.f32.gmra.mxu0 %v280
        %v494 = vpop.f32.mrf.mxu0
        %v495 = vadd.f32 0.0, %v494
        %v496 = vpop.f32.mrf.mxu0
        %v497 = vadd.f32 0.0, %v496
        %498 = vmatprep.mubr.f32.mxu0 0.0
        %499 = vmatmul.mubr.f32.gmra.mxu0 %v283
        %v500 = vpop.f32.mrf.mxu0
        %v501 = vadd.f32 0.0, %v500
        %v502 = vpop.f32.mrf.mxu0
        %v503 = vadd.f32 0.0, %v502
        %504 = vmatprep.mubr.f32.mxu0 0.0
        %505 = vmatmul.mubr.f32.gmra.mxu0 %v286
        %v506 = vpop.f32.mrf.mxu0
        %v507 = vadd.f32 0.0, %v506
        %v508 = vpop.f32.mrf.mxu0
        %v509 = vadd.f32 0.0, %v508
        %510 = vmatprep.mubr.f32.mxu0 0.0
        %511 = vmatmul.mubr.f32.gmra.mxu0 %v289
        %v512 = vpop.f32.mrf.mxu0
        %v513 = vadd.f32 0.0, %v512
        %v514 = vpop.f32.mrf.mxu0
        %v515 = vadd.f32 0.0, %v514
        %516 = vmatprep.mubr.f32.mxu0 0.0
        %517 = vmatmul.mubr.f32.gmra.mxu0 %v292
        %v518 = vpop.f32.mrf.mxu0
        %v519 = vadd.f32 0.0, %v518
        %v520 = vpop.f32.mrf.mxu0
        %v521 = vadd.f32 0.0, %v520
        %522 = vmatprep.mubr.f32.mxu0 0.0
        %523 = vmatmul.mubr.f32.gmra.mxu0 %v295
        %v524 = vpop.f32.mrf.mxu0
        %v525 = vadd.f32 0.0, %v524
        %v526 = vpop.f32.mrf.mxu0
        %v527 = vadd.f32 0.0, %v526
        %528 = vmatprep.mubr.f32.mxu0 0.0
        %529 = vmatmul.mubr.f32.gmra.mxu0 %v298
        %v530 = vpop.f32.mrf.mxu0
        %v531 = vadd.f32 0.0, %v530
        %v532 = vpop.f32.mrf.mxu0
        %v533 = vadd.f32 0.0, %v532
        %534 = vmatprep.mubr.f32.mxu0 0.0
        %535 = vmatmul.mubr.f32.gmra.mxu0 %v301
        %v536 = vpop.f32.mrf.mxu0
        %v537 = vadd.f32 0.0, %v536
        %v538 = vpop.f32.mrf.mxu0
        %v539 = vadd.f32 0.0, %v538
        %540 = vdwg.mxu0
        %541 = vmatprep.subr.mxu0 0.0
        %542 = vmatpush1.msra.mxu0 0.0
        %543 = vmatprep.subr.mxu0 0.0
        %544 = vmatpush1.msra.mxu0 0.0
        %545 = vmatprep.subr.mxu0 0.0
        %546 = vmatpush1.msra.mxu0 0.0
        %547 = vmatprep.subr.mxu0 0.0
        %548 = vmatpush1.msra.mxu0 0.0
        %549 = vmatprep.subr.mxu0 0.0
        %550 = vmatpush1.msra.mxu0 0.0
        %551 = vmatprep.subr.mxu0 0.0
        %552 = vmatpush1.msra.mxu0 0.0
        %553 = vmatprep.subr.mxu0 0.0
        %554 = vmatpush1.msra.mxu0 0.0
        %555 = vmatprep.subr.mxu0 0.0
        %556 = vmatpush1.msra.mxu0 0.0
        %557 = vmatprep.subr.mxu0 0.0
        %558 = vmatpush1.msra.mxu0 0.0
        %559 = vmatprep.subr.mxu0 0.0
        %560 = vmatpush1.msra.mxu0 0.0
        %561 = vmatprep.subr.mxu0 0.0
        %562 = vmatpush1.msra.mxu0 0.0
        %563 = vmatprep.subr.mxu0 0.0
        %564 = vmatpush1.msra.mxu0 0.0
        %565 = vmatprep.subr.mxu0 0.0
        %566 = vmatpush1.msra.mxu0 0.0
        %567 = vmatprep.subr.mxu0 0.0
        %568 = vmatpush1.msra.mxu0 0.0
        %569 = vmatprep.subr.mxu0 %v267
        %570 = vmatpush1.msra.mxu0 %v266
        %571 = vmatprep.subr.mxu0 %v254
        %572 = vmatpush1.msra.mxu0 %v253
        %573 = vmatprep.subr.mxu0 0.0
        %574 = vmatpush2.msra.mxu0 0.0
        %575 = vmatprep.subr.mxu0 0.0
        %576 = vmatpush2.msra.mxu0 0.0
        %577 = vmatprep.subr.mxu0 0.0
        %578 = vmatpush2.msra.mxu0 0.0
        %579 = vmatprep.subr.mxu0 0.0
        %580 = vmatpush2.msra.mxu0 0.0
        %581 = vmatprep.subr.mxu0 0.0
        %582 = vmatpush2.msra.mxu0 0.0
        %583 = vmatprep.subr.mxu0 0.0
        %584 = vmatpush2.msra.mxu0 0.0
        %585 = vmatprep.subr.mxu0 0.0
        %586 = vmatpush2.msra.mxu0 0.0
        %587 = vmatprep.subr.mxu0 0.0
        %588 = vmatpush2.msra.mxu0 0.0
        %589 = vmatprep.subr.mxu0 0.0
        %590 = vmatpush2.msra.mxu0 0.0
        %591 = vmatprep.subr.mxu0 0.0
        %592 = vmatpush2.msra.mxu0 0.0
        %593 = vmatprep.subr.mxu0 0.0
        %594 = vmatpush2.msra.mxu0 0.0
        %595 = vmatprep.subr.mxu0 0.0
        %596 = vmatpush2.msra.mxu0 0.0
        %597 = vmatprep.subr.mxu0 0.0
        %598 = vmatpush2.msra.mxu0 0.0
        %599 = vmatprep.subr.mxu0 0.0
        %600 = vmatpush2.msra.mxu0 0.0
        %601 = vmatprep.subr.mxu0 0.0
        %602 = vmatpush2.msra.mxu0 0.0
        %603 = vmatprep.subr.mxu0 0.0
        %604 = vmatpush2.msra.mxu0 0.0
        %605 = vmatprep.mubr.f32.mxu0 0.0
        %606 = vmatmul.mubr.f32.gmra.mxu0 %v277
        %v607 = vpop.f32.mrf.mxu0
        %v608 = vadd.f32 0.0, %v607
        %v609 = vpop.f32.mrf.mxu0
        %v610 = vadd.f32 0.0, %v609
        %611 = vmatprep.mubr.f32.mxu0 0.0
        %612 = vmatmul.mubr.f32.gmra.mxu0 %v280
        %v613 = vpop.f32.mrf.mxu0
        %v614 = vadd.f32 0.0, %v613
        %v615 = vpop.f32.mrf.mxu0
        %v616 = vadd.f32 0.0, %v615
        %617 = vmatprep.mubr.f32.mxu0 0.0
        %618 = vmatmul.mubr.f32.gmra.mxu0 %v283
        %v619 = vpop.f32.mrf.mxu0
        %v620 = vadd.f32 0.0, %v619
        %v621 = vpop.f32.mrf.mxu0
        %v622 = vadd.f32 0.0, %v621
        %623 = vmatprep.mubr.f32.mxu0 0.0
        %624 = vmatmul.mubr.f32.gmra.mxu0 %v286
        %v625 = vpop.f32.mrf.mxu0
        %v626 = vadd.f32 0.0, %v625
        %v627 = vpop.f32.mrf.mxu0
        %v628 = vadd.f32 0.0, %v627
        %629 = vmatprep.mubr.f32.mxu0 0.0
        %630 = vmatmul.mubr.f32.gmra.mxu0 %v289
        %v631 = vpop.f32.mrf.mxu0
        %v632 = vadd.f32 0.0, %v631
        %v633 = vpop.f32.mrf.mxu0
        %v634 = vadd.f32 0.0, %v633
        %635 = vmatprep.mubr.f32.mxu0 0.0
        %636 = vmatmul.mubr.f32.gmra.mxu0 %v292
        %v637 = vpop.f32.mrf.mxu0
        %v638 = vadd.f32 0.0, %v637
        %v639 = vpop.f32.mrf.mxu0
        %v640 = vadd.f32 0.0, %v639
        %641 = vmatprep.mubr.f32.mxu0 0.0
        %642 = vmatmul.mubr.f32.gmra.mxu0 %v295
        %v643 = vpop.f32.mrf.mxu0
        %v644 = vadd.f32 0.0, %v643
        %v645 = vpop.f32.mrf.mxu0
        %v646 = vadd.f32 0.0, %v645
        %647 = vmatprep.mubr.f32.mxu0 0.0
        %648 = vmatmul.mubr.f32.gmra.mxu0 %v298
        %v649 = vpop.f32.mrf.mxu0
        %v650 = vadd.f32 0.0, %v649
        %v651 = vpop.f32.mrf.mxu0
        %v652 = vadd.f32 0.0, %v651
        %653 = vmatprep.mubr.f32.mxu0 0.0
        %654 = vmatmul.mubr.f32.gmra.mxu0 %v301
        %v655 = vpop.f32.mrf.mxu0
        %v656 = vadd.f32 0.0, %v655
        %v657 = vpop.f32.mrf.mxu0
        %v658 = vadd.f32 0.0, %v657
        %659 = vdwg.mxu0
        %660 = vmatprep.subr.mxu0 0.0
        %661 = vmatpush1.msra.mxu0 0.0
        %662 = vmatprep.subr.mxu0 0.0
        %663 = vmatpush1.msra.mxu0 0.0
        %664 = vmatprep.subr.mxu0 0.0
        %665 = vmatpush1.msra.mxu0 0.0
        %666 = vmatprep.subr.mxu0 0.0
        %667 = vmatpush1.msra.mxu0 0.0
        %668 = vmatprep.subr.mxu0 0.0
        %669 = vmatpush1.msra.mxu0 0.0
        %670 = vmatprep.subr.mxu0 0.0
        %671 = vmatpush1.msra.mxu0 0.0
        %672 = vmatprep.subr.mxu0 0.0
        %673 = vmatpush1.msra.mxu0 0.0
        %674 = vmatprep.subr.mxu0 0.0
        %675 = vmatpush1.msra.mxu0 0.0
        %676 = vmatprep.subr.mxu0 0.0
        %677 = vmatpush1.msra.mxu0 0.0
        %678 = vmatprep.subr.mxu0 0.0
        %679 = vmatpush1.msra.mxu0 0.0
        %680 = vmatprep.subr.mxu0 0.0
        %681 = vmatpush1.msra.mxu0 0.0
        %682 = vmatprep.subr.mxu0 0.0
        %683 = vmatpush1.msra.mxu0 0.0
        %684 = vmatprep.subr.mxu0 0.0
        %685 = vmatpush1.msra.mxu0 0.0
        %686 = vmatprep.subr.mxu0 0.0
        %687 = vmatpush1.msra.mxu0 0.0
        %688 = vmatprep.subr.mxu0 %v269
        %689 = vmatpush1.msra.mxu0 %v268
        %690 = vmatprep.subr.mxu0 %v256
        %691 = vmatpush1.msra.mxu0 %v255
        %692 = vmatprep.subr.mxu0 0.0
        %693 = vmatpush2.msra.mxu0 0.0
        %694 = vmatprep.subr.mxu0 0.0
        %695 = vmatpush2.msra.mxu0 0.0
        %696 = vmatprep.subr.mxu0 0.0
        %697 = vmatpush2.msra.mxu0 0.0
        %698 = vmatprep.subr.mxu0 0.0
        %699 = vmatpush2.msra.mxu0 0.0
        %700 = vmatprep.subr.mxu0 0.0
        %701 = vmatpush2.msra.mxu0 0.0
        %702 = vmatprep.subr.mxu0 0.0
        %703 = vmatpush2.msra.mxu0 0.0
        %704 = vmatprep.subr.mxu0 0.0
        %705 = vmatpush2.msra.mxu0 0.0
        %706 = vmatprep.subr.mxu0 0.0
        %707 = vmatpush2.msra.mxu0 0.0
        %708 = vmatprep.subr.mxu0 0.0
        %709 = vmatpush2.msra.mxu0 0.0
        %710 = vmatprep.subr.mxu0 0.0
        %711 = vmatpush2.msra.mxu0 0.0
        %712 = vmatprep.subr.mxu0 0.0
        %713 = vmatpush2.msra.mxu0 0.0
        %714 = vmatprep.subr.mxu0 0.0
        %715 = vmatpush2.msra.mxu0 0.0
        %716 = vmatprep.subr.mxu0 0.0
        %717 = vmatpush2.msra.mxu0 0.0
        %718 = vmatprep.subr.mxu0 0.0
        %719 = vmatpush2.msra.mxu0 0.0
        %720 = vmatprep.subr.mxu0 0.0
        %721 = vmatpush2.msra.mxu0 0.0
        %722 = vmatprep.subr.mxu0 0.0
        %723 = vmatpush2.msra.mxu0 0.0
        %724 = vmatprep.mubr.f32.mxu0 0.0
        %725 = vmatmul.mubr.f32.gmra.mxu0 %v277
        %v726 = vpop.f32.mrf.mxu0
        %v727 = vadd.f32 0.0, %v726
        %v728 = vpop.f32.mrf.mxu0
        %v729 = vadd.f32 0.0, %v728
        %730 = vmatprep.mubr.f32.mxu0 0.0
        %731 = vmatmul.mubr.f32.gmra.mxu0 %v280
        %v732 = vpop.f32.mrf.mxu0
        %v733 = vadd.f32 0.0, %v732
        %v734 = vpop.f32.mrf.mxu0
        %v735 = vadd.f32 0.0, %v734
        %736 = vmatprep.mubr.f32.mxu0 0.0
        %737 = vmatmul.mubr.f32.gmra.mxu0 %v283
        %v738 = vpop.f32.mrf.mxu0
        %v739 = vadd.f32 0.0, %v738
        %v740 = vpop.f32.mrf.mxu0
        %v741 = vadd.f32 0.0, %v740
        %742 = vmatprep.mubr.f32.mxu0 0.0
        %743 = vmatmul.mubr.f32.gmra.mxu0 %v286
        %v744 = vpop.f32.mrf.mxu0
        %v745 = vadd.f32 0.0, %v744
        %v746 = vpop.f32.mrf.mxu0
        %v747 = vadd.f32 0.0, %v746
        %748 = vmatprep.mubr.f32.mxu0 0.0
        %749 = vmatmul.mubr.f32.gmra.mxu0 %v289
        %v750 = vpop.f32.mrf.mxu0
        %v751 = vadd.f32 0.0, %v750
        %v752 = vpop.f32.mrf.mxu0
        %v753 = vadd.f32 0.0, %v752
        %754 = vmatprep.mubr.f32.mxu0 0.0
        %755 = vmatmul.mubr.f32.gmra.mxu0 %v292
        %v756 = vpop.f32.mrf.mxu0
        %v757 = vadd.f32 0.0, %v756
        %v758 = vpop.f32.mrf.mxu0
        %v759 = vadd.f32 0.0, %v758
        %760 = vmatprep.mubr.f32.mxu0 0.0
        %761 = vmatmul.mubr.f32.gmra.mxu0 %v295
        %v762 = vpop.f32.mrf.mxu0
        %v763 = vadd.f32 0.0, %v762
        %v764 = vpop.f32.mrf.mxu0
        %v765 = vadd.f32 0.0, %v764
        %766 = vmatprep.mubr.f32.mxu0 0.0
        %767 = vmatmul.mubr.f32.gmra.mxu0 %v298
        %v768 = vpop.f32.mrf.mxu0
        %v769 = vadd.f32 0.0, %v768
        %v770 = vpop.f32.mrf.mxu0
        %v771 = vadd.f32 0.0, %v770
        %772 = vmatprep.mubr.f32.mxu0 0.0
        %773 = vmatmul.mubr.f32.gmra.mxu0 %v301
        %v774 = vpop.f32.mrf.mxu0
        %v775 = vadd.f32 0.0, %v774
        %v776 = vpop.f32.mrf.mxu0
        %v777 = vadd.f32 0.0, %v776
        %778 = vdwg.mxu0
        %779 = vmatprep.subr.mxu0 0.0
        %780 = vmatpush1.msra.mxu0 0.0
        %781 = vmatprep.subr.mxu0 0.0
        %782 = vmatpush1.msra.mxu0 0.0
        %783 = vmatprep.subr.mxu0 0.0
        %784 = vmatpush1.msra.mxu0 0.0
        %785 = vmatprep.subr.mxu0 0.0
        %786 = vmatpush1.msra.mxu0 0.0
        %787 = vmatprep.subr.mxu0 0.0
        %788 = vmatpush1.msra.mxu0 0.0
        %789 = vmatprep.subr.mxu0 0.0
        %790 = vmatpush1.msra.mxu0 0.0
        %791 = vmatprep.subr.mxu0 0.0
        %792 = vmatpush1.msra.mxu0 0.0
        %793 = vmatprep.subr.mxu0 0.0
        %794 = vmatpush1.msra.mxu0 0.0
        %795 = vmatprep.subr.mxu0 0.0
        %796 = vmatpush1.msra.mxu0 0.0
        %797 = vmatprep.subr.mxu0 0.0
        %798 = vmatpush1.msra.mxu0 0.0
        %799 = vmatprep.subr.mxu0 0.0
        %800 = vmatpush1.msra.mxu0 0.0
        %801 = vmatprep.subr.mxu0 0.0
        %802 = vmatpush1.msra.mxu0 0.0
        %803 = vmatprep.subr.mxu0 0.0
        %804 = vmatpush1.msra.mxu0 0.0
        %805 = vmatprep.subr.mxu0 0.0
        %806 = vmatpush1.msra.mxu0 0.0
        %807 = vmatprep.subr.mxu0 %v271
        %808 = vmatpush1.msra.mxu0 %v270
        %809 = vmatprep.subr.mxu0 %v258
        %810 = vmatpush1.msra.mxu0 %v257
        %811 = vmatprep.subr.mxu0 0.0
        %812 = vmatpush2.msra.mxu0 0.0
        %813 = vmatprep.subr.mxu0 0.0
        %814 = vmatpush2.msra.mxu0 0.0
        %815 = vmatprep.subr.mxu0 0.0
        %816 = vmatpush2.msra.mxu0 0.0
        %817 = vmatprep.subr.mxu0 0.0
        %818 = vmatpush2.msra.mxu0 0.0
        %819 = vmatprep.subr.mxu0 0.0
        %820 = vmatpush2.msra.mxu0 0.0
        %821 = vmatprep.subr.mxu0 0.0
        %822 = vmatpush2.msra.mxu0 0.0
        %823 = vmatprep.subr.mxu0 0.0
        %824 = vmatpush2.msra.mxu0 0.0
        %825 = vmatprep.subr.mxu0 0.0
        %826 = vmatpush2.msra.mxu0 0.0
        %827 = vmatprep.subr.mxu0 0.0
        %828 = vmatpush2.msra.mxu0 0.0
        %829 = vmatprep.subr.mxu0 0.0
        %830 = vmatpush2.msra.mxu0 0.0
        %831 = vmatprep.subr.mxu0 0.0
        %832 = vmatpush2.msra.mxu0 0.0
        %833 = vmatprep.subr.mxu0 0.0
        %834 = vmatpush2.msra.mxu0 0.0
        %835 = vmatprep.subr.mxu0 0.0
        %836 = vmatpush2.msra.mxu0 0.0
        %837 = vmatprep.subr.mxu0 0.0
        %838 = vmatpush2.msra.mxu0 0.0
        %839 = vmatprep.subr.mxu0 0.0
        %840 = vmatpush2.msra.mxu0 0.0
        %841 = vmatprep.subr.mxu0 0.0
        %842 = vmatpush2.msra.mxu0 0.0
        %843 = vmatprep.mubr.f32.mxu0 0.0
        %844 = vmatmul.mubr.f32.gmra.mxu0 %v277
        %v845 = vpop.f32.mrf.mxu0
        %v846 = vadd.f32 0.0, %v845
        %v847 = vpop.f32.mrf.mxu0
        %v848 = vadd.f32 0.0, %v847
        %849 = vmatprep.mubr.f32.mxu0 0.0
        %850 = vmatmul.mubr.f32.gmra.mxu0 %v280
        %v851 = vpop.f32.mrf.mxu0
        %v852 = vadd.f32 0.0, %v851
        %v853 = vpop.f32.mrf.mxu0
        %v854 = vadd.f32 0.0, %v853
        %855 = vmatprep.mubr.f32.mxu0 0.0
        %856 = vmatmul.mubr.f32.gmra.mxu0 %v283
        %v857 = vpop.f32.mrf.mxu0
        %v858 = vadd.f32 0.0, %v857
        %v859 = vpop.f32.mrf.mxu0
        %v860 = vadd.f32 0.0, %v859
        %861 = vmatprep.mubr.f32.mxu0 0.0
        %862 = vmatmul.mubr.f32.gmra.mxu0 %v286
        %v863 = vpop.f32.mrf.mxu0
        %v864 = vadd.f32 0.0, %v863
        %v865 = vpop.f32.mrf.mxu0
        %v866 = vadd.f32 0.0, %v865
        %867 = vmatprep.mubr.f32.mxu0 0.0
        %868 = vmatmul.mubr.f32.gmra.mxu0 %v289
        %v869 = vpop.f32.mrf.mxu0
        %v870 = vadd.f32 0.0, %v869
        %v871 = vpop.f32.mrf.mxu0
        %v872 = vadd.f32 0.0, %v871
        %873 = vmatprep.mubr.f32.mxu0 0.0
        %874 = vmatmul.mubr.f32.gmra.mxu0 %v292
        %v875 = vpop.f32.mrf.mxu0
        %v876 = vadd.f32 0.0, %v875
        %v877 = vpop.f32.mrf.mxu0
        %v878 = vadd.f32 0.0, %v877
        %879 = vmatprep.mubr.f32.mxu0 0.0
        %880 = vmatmul.mubr.f32.gmra.mxu0 %v295
        %v881 = vpop.f32.mrf.mxu0
        %v882 = vadd.f32 0.0, %v881
        %v883 = vpop.f32.mrf.mxu0
        %v884 = vadd.f32 0.0, %v883
        %885 = vmatprep.mubr.f32.mxu0 0.0
        %886 = vmatmul.mubr.f32.gmra.mxu0 %v298
        %v887 = vpop.f32.mrf.mxu0
        %v888 = vadd.f32 0.0, %v887
        %v889 = vpop.f32.mrf.mxu0
        %v890 = vadd.f32 0.0, %v889
        %891 = vmatprep.mubr.f32.mxu0 0.0
        %892 = vmatmul.mubr.f32.gmra.mxu0 %v301
        %v893 = vpop.f32.mrf.mxu0
        %v894 = vadd.f32 0.0, %v893
        %v895 = vpop.f32.mrf.mxu0
        %v896 = vadd.f32 0.0, %v895
        %897 = vdwg.mxu0
        %898 = vmatprep.subr.mxu0 0.0
        %899 = vmatpush1.msra.mxu0 0.0
        %900 = vmatprep.subr.mxu0 0.0
        %901 = vmatpush1.msra.mxu0 0.0
        %902 = vmatprep.subr.mxu0 0.0
        %903 = vmatpush1.msra.mxu0 0.0
        %904 = vmatprep.subr.mxu0 0.0
        %905 = vmatpush1.msra.mxu0 0.0
        %906 = vmatprep.subr.mxu0 0.0
        %907 = vmatpush1.msra.mxu0 0.0
        %908 = vmatprep.subr.mxu0 0.0
        %909 = vmatpush1.msra.mxu0 0.0
        %910 = vmatprep.subr.mxu0 0.0
        %911 = vmatpush1.msra.mxu0 0.0
        %912 = vmatprep.subr.mxu0 0.0
        %913 = vmatpush1.msra.mxu0 0.0
        %914 = vmatprep.subr.mxu0 0.0
        %915 = vmatpush1.msra.mxu0 0.0
        %916 = vmatprep.subr.mxu0 0.0
        %917 = vmatpush1.msra.mxu0 0.0
        %918 = vmatprep.subr.mxu0 0.0
        %919 = vmatpush1.msra.mxu0 0.0
        %920 = vmatprep.subr.mxu0 0.0
        %921 = vmatpush1.msra.mxu0 0.0
        %922 = vmatprep.subr.mxu0 0.0
        %923 = vmatpush1.msra.mxu0 0.0
        %924 = vmatprep.subr.mxu0 0.0
        %925 = vmatpush1.msra.mxu0 0.0
        %926 = vmatprep.subr.mxu0 %v273
        %927 = vmatpush1.msra.mxu0 %v272
        %928 = vmatprep.subr.mxu0 %v260
        %929 = vmatpush1.msra.mxu0 %v259
        %930 = vmatprep.subr.mxu0 0.0
        %931 = vmatpush2.msra.mxu0 0.0
        %932 = vmatprep.subr.mxu0 0.0
        %933 = vmatpush2.msra.mxu0 0.0
        %934 = vmatprep.subr.mxu0 0.0
        %935 = vmatpush2.msra.mxu0 0.0
        %936 = vmatprep.subr.mxu0 0.0
        %937 = vmatpush2.msra.mxu0 0.0
        %938 = vmatprep.subr.mxu0 0.0
        %939 = vmatpush2.msra.mxu0 0.0
        %940 = vmatprep.subr.mxu0 0.0
        %941 = vmatpush2.msra.mxu0 0.0
        %942 = vmatprep.subr.mxu0 0.0
        %943 = vmatpush2.msra.mxu0 0.0
        %944 = vmatprep.subr.mxu0 0.0
        %945 = vmatpush2.msra.mxu0 0.0
        %946 = vmatprep.subr.mxu0 0.0
        %947 = vmatpush2.msra.mxu0 0.0
        %948 = vmatprep.subr.mxu0 0.0
        %949 = vmatpush2.msra.mxu0 0.0
        %950 = vmatprep.subr.mxu0 0.0
        %951 = vmatpush2.msra.mxu0 0.0
        %952 = vmatprep.subr.mxu0 0.0
        %953 = vmatpush2.msra.mxu0 0.0
        %954 = vmatprep.subr.mxu0 0.0
        %955 = vmatpush2.msra.mxu0 0.0
        %956 = vmatprep.subr.mxu0 0.0
        %957 = vmatpush2.msra.mxu0 0.0
        %958 = vmatprep.subr.mxu0 0.0
        %959 = vmatpush2.msra.mxu0 0.0
        %960 = vmatprep.subr.mxu0 0.0
        %961 = vmatpush2.msra.mxu0 0.0
        %962 = vmatprep.mubr.f32.mxu0 0.0
        %963 = vmatmul.mubr.f32.gmra.mxu0 %v277
        %v964 = vpop.f32.mrf.mxu0
        %v965 = vadd.f32 0.0, %v964
        %v966 = vpop.f32.mrf.mxu0
        %v967 = vadd.f32 0.0, %v966
        %968 = vmatprep.mubr.f32.mxu0 0.0
        %969 = vmatmul.mubr.f32.gmra.mxu0 %v280
        %v970 = vpop.f32.mrf.mxu0
        %v971 = vadd.f32 0.0, %v970
        %v972 = vpop.f32.mrf.mxu0
        %v973 = vadd.f32 0.0, %v972
        %974 = vmatprep.mubr.f32.mxu0 0.0
        %975 = vmatmul.mubr.f32.gmra.mxu0 %v283
        %v976 = vpop.f32.mrf.mxu0
        %v977 = vadd.f32 0.0, %v976
        %v978 = vpop.f32.mrf.mxu0
        %v979 = vadd.f32 0.0, %v978
        %980 = vmatprep.mubr.f32.mxu0 0.0
        %981 = vmatmul.mubr.f32.gmra.mxu0 %v286
        %v982 = vpop.f32.mrf.mxu0
        %v983 = vadd.f32 0.0, %v982
        %v984 = vpop.f32.mrf.mxu0
        %v985 = vadd.f32 0.0, %v984
        %986 = vmatprep.mubr.f32.mxu0 0.0
        %987 = vmatmul.mubr.f32.gmra.mxu0 %v289
        %v988 = vpop.f32.mrf.mxu0
        %v989 = vadd.f32 0.0, %v988
        %v990 = vpop.f32.mrf.mxu0
        %v991 = vadd.f32 0.0, %v990
        %992 = vmatprep.mubr.f32.mxu0 0.0
        %993 = vmatmul.mubr.f32.gmra.mxu0 %v292
        %v994 = vpop.f32.mrf.mxu0
        %v995 = vadd.f32 0.0, %v994
        %v996 = vpop.f32.mrf.mxu0
        %v997 = vadd.f32 0.0, %v996
        %998 = vmatprep.mubr.f32.mxu0 0.0
        %999 = vmatmul.mubr.f32.gmra.mxu0 %v295
        %v1000 = vpop.f32.mrf.mxu0
        %v1001 = vadd.f32 0.0, %v1000
        %v1002 = vpop.f32.mrf.mxu0
        %v1003 = vadd.f32 0.0, %v1002
        %1004 = vmatprep.mubr.f32.mxu0 0.0
        %1005 = vmatmul.mubr.f32.gmra.mxu0 %v298
        %v1006 = vpop.f32.mrf.mxu0
        %v1007 = vadd.f32 0.0, %v1006
        %v1008 = vpop.f32.mrf.mxu0
        %v1009 = vadd.f32 0.0, %v1008
        %1010 = vmatprep.mubr.f32.mxu0 0.0
        %1011 = vmatmul.mubr.f32.gmra.mxu0 %v301
        %v1012 = vpop.f32.mrf.mxu0
        %v1013 = vadd.f32 0.0, %v1012
        %v1014 = vpop.f32.mrf.mxu0
        %v1015 = vadd.f32 0.0, %v1014
        %1016 = vdwg.mxu0
        %1017 = vmatprep.subr.mxu0 0.0
        %1018 = vmatpush1.msra.mxu0 0.0
        %1019 = vmatprep.subr.mxu0 0.0
        %1020 = vmatpush1.msra.mxu0 0.0
        %1021 = vmatprep.subr.mxu0 0.0
        %1022 = vmatpush1.msra.mxu0 0.0
        %1023 = vmatprep.subr.mxu0 0.0
        %1024 = vmatpush1.msra.mxu0 0.0
        %1025 = vmatprep.subr.mxu0 0.0
        %1026 = vmatpush1.msra.mxu0 0.0
        %1027 = vmatprep.subr.mxu0 0.0
        %1028 = vmatpush1.msra.mxu0 0.0
        %1029 = vmatprep.subr.mxu0 0.0
        %1030 = vmatpush1.msra.mxu0 0.0
        %1031 = vmatprep.subr.mxu0 0.0
        %1032 = vmatpush1.msra.mxu0 0.0
        %1033 = vmatprep.subr.mxu0 0.0
        %1034 = vmatpush1.msra.mxu0 0.0
        %1035 = vmatprep.subr.mxu0 0.0
        %1036 = vmatpush1.msra.mxu0 0.0
        %1037 = vmatprep.subr.mxu0 0.0
        %1038 = vmatpush1.msra.mxu0 0.0
        %1039 = vmatprep.subr.mxu0 0.0
        %1040 = vmatpush1.msra.mxu0 0.0
        %1041 = vmatprep.subr.mxu0 0.0
        %1042 = vmatpush1.msra.mxu0 0.0
        %1043 = vmatprep.subr.mxu0 0.0
        %1044 = vmatpush1.msra.mxu0 0.0
        %1045 = vmatprep.subr.mxu0 0.0
        %1046 = vmatpush1.msra.mxu0 %v274
        %1047 = vmatprep.subr.mxu0 0.0
        %1048 = vmatpush1.msra.mxu0 %v261
        %1049 = vmatprep.subr.mxu0 0.0
        %1050 = vmatpush2.msra.mxu0 0.0
        %1051 = vmatprep.subr.mxu0 0.0
        %1052 = vmatpush2.msra.mxu0 0.0
        %1053 = vmatprep.subr.mxu0 0.0
        %1054 = vmatpush2.msra.mxu0 0.0
        %1055 = vmatprep.subr.mxu0 0.0
        %1056 = vmatpush2.msra.mxu0 0.0
        %1057 = vmatprep.subr.mxu0 0.0
        %1058 = vmatpush2.msra.mxu0 0.0
        %1059 = vmatprep.subr.mxu0 0.0
        %1060 = vmatpush2.msra.mxu0 0.0
        %1061 = vmatprep.subr.mxu0 0.0
        %1062 = vmatpush2.msra.mxu0 0.0
        %1063 = vmatprep.subr.mxu0 0.0
        %1064 = vmatpush2.msra.mxu0 0.0
        %1065 = vmatprep.subr.mxu0 0.0
        %1066 = vmatpush2.msra.mxu0 0.0
        %1067 = vmatprep.subr.mxu0 0.0
        %1068 = vmatpush2.msra.mxu0 0.0
        %1069 = vmatprep.subr.mxu0 0.0
        %1070 = vmatpush2.msra.mxu0 0.0
        %1071 = vmatprep.subr.mxu0 0.0
        %1072 = vmatpush2.msra.mxu0 0.0
        %1073 = vmatprep.subr.mxu0 0.0
        %1074 = vmatpush2.msra.mxu0 0.0
        %1075 = vmatprep.subr.mxu0 0.0
        %1076 = vmatpush2.msra.mxu0 0.0
        %1077 = vmatprep.subr.mxu0 0.0
        %1078 = vmatpush2.msra.mxu0 0.0
        %1079 = vmatprep.subr.mxu0 0.0
        %1080 = vmatpush2.msra.mxu0 0.0
        %1081 = vmatprep.mubr.f32.mxu0 0.0
        %1082 = vmatmul.mubr.f32.gmra.mxu0 %v277
        %v1083 = vpop.f32.mrf.mxu0
        %v1084 = vadd.f32 0.0, %v1083
        %v1085 = vpop.f32.mrf.mxu0
        %1086 = vmatprep.mubr.f32.mxu0 0.0
        %1087 = vmatmul.mubr.f32.gmra.mxu0 %v280
        %v1088 = vpop.f32.mrf.mxu0
        %v1089 = vadd.f32 0.0, %v1088
        %v1090 = vpop.f32.mrf.mxu0
        %1091 = vmatprep.mubr.f32.mxu0 0.0
        %1092 = vmatmul.mubr.f32.gmra.mxu0 %v283
        %v1093 = vpop.f32.mrf.mxu0
        %v1094 = vadd.f32 0.0, %v1093
        %v1095 = vpop.f32.mrf.mxu0
        %1096 = vmatprep.mubr.f32.mxu0 0.0
        %1097 = vmatmul.mubr.f32.gmra.mxu0 %v286
        %v1098 = vpop.f32.mrf.mxu0
        %v1099 = vadd.f32 0.0, %v1098
        %v1100 = vpop.f32.mrf.mxu0
        %1101 = vmatprep.mubr.f32.mxu0 0.0
        %1102 = vmatmul.mubr.f32.gmra.mxu0 %v289
        %v1103 = vpop.f32.mrf.mxu0
        %v1104 = vadd.f32 0.0, %v1103
        %v1105 = vpop.f32.mrf.mxu0
        %1106 = vmatprep.mubr.f32.mxu0 0.0
        %1107 = vmatmul.mubr.f32.gmra.mxu0 %v292
        %v1108 = vpop.f32.mrf.mxu0
        %v1109 = vadd.f32 0.0, %v1108
        %v1110 = vpop.f32.mrf.mxu0
        %1111 = vmatprep.mubr.f32.mxu0 0.0
        %1112 = vmatmul.mubr.f32.gmra.mxu0 %v295
        %v1113 = vpop.f32.mrf.mxu0
        %v1114 = vadd.f32 0.0, %v1113
        %v1115 = vpop.f32.mrf.mxu0
        %1116 = vmatprep.mubr.f32.mxu0 0.0
        %1117 = vmatmul.mubr.f32.gmra.mxu0 %v298
        %v1118 = vpop.f32.mrf.mxu0
        %v1119 = vadd.f32 0.0, %v1118
        %v1120 = vpop.f32.mrf.mxu0
        %1121 = vmatprep.mubr.f32.mxu0 0.0
        %1122 = vmatmul.mubr.f32.gmra.mxu0 %v301
        %v1123 = vpop.f32.mrf.mxu0
        %v1124 = vadd.f32 0.0, %v1123
        %v1125 = vpop.f32.mrf.mxu0
        %1126 = vdwg.mxu0
        %1127 = vst [vmem:[#allocation2] sm:$0xff] %v370
        %1128 = vst [vmem:[#allocation2 + $0x8] sm:$0xff] %v372
        %1129 = vst [vmem:[#allocation2 + $0x10] sm:$0xff] %v489
        %1130 = vst [vmem:[#allocation2 + $0x18] sm:$0xff] %v491
        %1131 = vst [vmem:[#allocation2 + $0x20] sm:$0xff] %v608
        %1132 = vst [vmem:[#allocation2 + $0x28] sm:$0xff] %v610
        %1133 = vst [vmem:[#allocation2 + $0x30] sm:$0xff] %v727
        %1134 = vst [vmem:[#allocation2 + $0x38] sm:$0xff] %v729
        %1135 = vst [vmem:[#allocation2 + $0x40] sm:$0xff] %v846
        %1136 = vst [vmem:[#allocation2 + $0x48] sm:$0xff] %v848
        %1137 = vst [vmem:[#allocation2 + $0x50] sm:$0xff] %v965
        %1138 = vst [vmem:[#allocation2 + $0x58] sm:$0xff] %v967
        %vm1139 = vcmask 523264
        %1140 = vst.msk [vmem:[#allocation2 + $0x60] sm:$0xff] %vm1139, %v1084
        %1141 = vst [vmem:[#allocation2 + $0x68] sm:$0xff] %v376
        %1142 = vst [vmem:[#allocation2 + $0x70] sm:$0xff] %v378
        %1143 = vst [vmem:[#allocation2 + $0x78] sm:$0xff] %v495
        %1144 = vst [vmem:[#allocation2 + $0x80] sm:$0xff] %v497
        %1145 = vst [vmem:[#allocation2 + $0x88] sm:$0xff] %v614
        %1146 = vst [vmem:[#allocation2 + $0x90] sm:$0xff] %v616
        %1147 = vst [vmem:[#allocation2 + $0x98] sm:$0xff] %v733
        %1148 = vst [vmem:[#allocation2 + $0xa0] sm:$0xff] %v735
        %1149 = vst [vmem:[#allocation2 + $0xa8] sm:$0xff] %v852
        %1150 = vst [vmem:[#allocation2 + $0xb0] sm:$0xff] %v854
        %1151 = vst [vmem:[#allocation2 + $0xb8] sm:$0xff] %v971
        %1152 = vst [vmem:[#allocation2 + $0xc0] sm:$0xff] %v973
        %1153 = vst.msk [vmem:[#allocation2 + $0xc8] sm:$0xff] %vm1139, %v1089
        %1154 = vst [vmem:[#allocation2 + $0xd0] sm:$0xff] %v382
        %1155 = vst [vmem:[#allocation2 + $0xd8] sm:$0xff] %v384
        %1156 = vst [vmem:[#allocation2 + $0xe0] sm:$0xff] %v501
        %1157 = vst [vmem:[#allocation2 + $0xe8] sm:$0xff] %v503
        %1158 = vst [vmem:[#allocation2 + $0xf0] sm:$0xff] %v620
        %1159 = vst [vmem:[#allocation2 + $0xf8] sm:$0xff] %v622
        %1160 = vst [vmem:[#allocation2 + $0x100] sm:$0xff] %v739
        %1161 = vst [vmem:[#allocation2 + $0x108] sm:$0xff] %v741
        %1162 = vst [vmem:[#allocation2 + $0x110] sm:$0xff] %v858
        %1163 = vst [vmem:[#allocation2 + $0x118] sm:$0xff] %v860
        %1164 = vst [vmem:[#allocation2 + $0x120] sm:$0xff] %v977
        %1165 = vst [vmem:[#allocation2 + $0x128] sm:$0xff] %v979
        %1166 = vst.msk [vmem:[#allocation2 + $0x130] sm:$0xff] %vm1139, %v1094
        %1167 = vst [vmem:[#allocation2 + $0x138] sm:$0xff] %v388
        %1168 = vst [vmem:[#allocation2 + $0x140] sm:$0xff] %v390
        %1169 = vst [vmem:[#allocation2 + $0x148] sm:$0xff] %v507
        %1170 = vst [vmem:[#allocation2 + $0x150] sm:$0xff] %v509
        %1171 = vst [vmem:[#allocation2 + $0x158] sm:$0xff] %v626
        %1172 = vst [vmem:[#allocation2 + $0x160] sm:$0xff] %v628
        %1173 = vst [vmem:[#allocation2 + $0x168] sm:$0xff] %v745
        %1174 = vst [vmem:[#allocation2 + $0x170] sm:$0xff] %v747
        %1175 = vst [vmem:[#allocation2 + $0x178] sm:$0xff] %v864
        %1176 = vst [vmem:[#allocation2 + $0x180] sm:$0xff] %v866
        %1177 = vst [vmem:[#allocation2 + $0x188] sm:$0xff] %v983
        %1178 = vst [vmem:[#allocation2 + $0x190] sm:$0xff] %v985
        %1179 = vst.msk [vmem:[#allocation2 + $0x198] sm:$0xff] %vm1139, %v1099
        %1180 = vst [vmem:[#allocation2 + $0x1a0] sm:$0xff] %v394
        %1181 = vst [vmem:[#allocation2 + $0x1a8] sm:$0xff] %v396
        %1182 = vst [vmem:[#allocation2 + $0x1b0] sm:$0xff] %v513
        %1183 = vst [vmem:[#allocation2 + $0x1b8] sm:$0xff] %v515
        %1184 = vst [vmem:[#allocation2 + $0x1c0] sm:$0xff] %v632
        %1185 = vst [vmem:[#allocation2 + $0x1c8] sm:$0xff] %v634
        %1186 = vst [vmem:[#allocation2 + $0x1d0] sm:$0xff] %v751
        %1187 = vst [vmem:[#allocation2 + $0x1d8] sm:$0xff] %v753
        %1188 = vst [vmem:[#allocation2 + $0x1e0] sm:$0xff] %v870
        %1189 = vst [vmem:[#allocation2 + $0x1e8] sm:$0xff] %v872
        %1190 = vst [vmem:[#allocation2 + $0x1f0] sm:$0xff] %v989
        %1191 = vst [vmem:[#allocation2 + $0x1f8] sm:$0xff] %v991
        %1192 = vst.msk [vmem:[#allocation2 + $0x200] sm:$0xff] %vm1139, %v1104
        %1193 = vst [vmem:[#allocation2 + $0x208] sm:$0xff] %v400
        %1194 = vst [vmem:[#allocation2 + $0x210] sm:$0xff] %v402
        %1195 = vst [vmem:[#allocation2 + $0x218] sm:$0xff] %v519
        %1196 = vst [vmem:[#allocation2 + $0x220] sm:$0xff] %v521
        %1197 = vst [vmem:[#allocation2 + $0x228] sm:$0xff] %v638
        %1198 = vst [vmem:[#allocation2 + $0x230] sm:$0xff] %v640
        %1199 = vst [vmem:[#allocation2 + $0x238] sm:$0xff] %v757
        %1200 = vst [vmem:[#allocation2 + $0x240] sm:$0xff] %v759
        %1201 = vst [vmem:[#allocation2 + $0x248] sm:$0xff] %v876
        %1202 = vst [vmem:[#allocation2 + $0x250] sm:$0xff] %v878
        %1203 = vst [vmem:[#allocation2 + $0x258] sm:$0xff] %v995
        %1204 = vst [vmem:[#allocation2 + $0x260] sm:$0xff] %v997
        %1205 = vst.msk [vmem:[#allocation2 + $0x268] sm:$0xff] %vm1139, %v1109
        %1206 = vst [vmem:[#allocation2 + $0x270] sm:$0xff] %v406
        %1207 = vst [vmem:[#allocation2 + $0x278] sm:$0xff] %v408
        %1208 = vst [vmem:[#allocation2 + $0x280] sm:$0xff] %v525
        %1209 = vst [vmem:[#allocation2 + $0x288] sm:$0xff] %v527
        %1210 = vst [vmem:[#allocation2 + $0x290] sm:$0xff] %v644
        %1211 = vst [vmem:[#allocation2 + $0x298] sm:$0xff] %v646
        %1212 = vst [vmem:[#allocation2 + $0x2a0] sm:$0xff] %v763
        %1213 = vst [vmem:[#allocation2 + $0x2a8] sm:$0xff] %v765
        %1214 = vst [vmem:[#allocation2 + $0x2b0] sm:$0xff] %v882
        %1215 = vst [vmem:[#allocation2 + $0x2b8] sm:$0xff] %v884
        %1216 = vst [vmem:[#allocation2 + $0x2c0] sm:$0xff] %v1001
        %1217 = vst [vmem:[#allocation2 + $0x2c8] sm:$0xff] %v1003
        %1218 = vst.msk [vmem:[#allocation2 + $0x2d0] sm:$0xff] %vm1139, %v1114
        %1219 = vst [vmem:[#allocation2 + $0x2d8] sm:$0xff] %v412
        %1220 = vst [vmem:[#allocation2 + $0x2e0] sm:$0xff] %v414
        %1221 = vst [vmem:[#allocation2 + $0x2e8] sm:$0xff] %v531
        %1222 = vst [vmem:[#allocation2 + $0x2f0] sm:$0xff] %v533
        %1223 = vst [vmem:[#allocation2 + $0x2f8] sm:$0xff] %v650
        %1224 = vst [vmem:[#allocation2 + $0x300] sm:$0xff] %v652
        %1225 = vst [vmem:[#allocation2 + $0x308] sm:$0xff] %v769
        %1226 = vst [vmem:[#allocation2 + $0x310] sm:$0xff] %v771
        %1227 = vst [vmem:[#allocation2 + $0x318] sm:$0xff] %v888
        %1228 = vst [vmem:[#allocation2 + $0x320] sm:$0xff] %v890
        %1229 = vst [vmem:[#allocation2 + $0x328] sm:$0xff] %v1007
        %1230 = vst [vmem:[#allocation2 + $0x330] sm:$0xff] %v1009
        %1231 = vst.msk [vmem:[#allocation2 + $0x338] sm:$0xff] %vm1139, %v1119
        %1232 = vst [vmem:[#allocation2 + $0x340] sm:$0xff] %v418
        %1233 = vst [vmem:[#allocation2 + $0x348] sm:$0xff] %v420
        %1234 = vst [vmem:[#allocation2 + $0x350] sm:$0xff] %v537
        %1235 = vst [vmem:[#allocation2 + $0x358] sm:$0xff] %v539
        %1236 = vst [vmem:[#allocation2 + $0x360] sm:$0xff] %v656
        %1237 = vst [vmem:[#allocation2 + $0x368] sm:$0xff] %v658
        %1238 = vst [vmem:[#allocation2 + $0x370] sm:$0xff] %v775
        %1239 = vst [vmem:[#allocation2 + $0x378] sm:$0xff] %v777
        %1240 = vst [vmem:[#allocation2 + $0x380] sm:$0xff] %v894
        %1241 = vst [vmem:[#allocation2 + $0x388] sm:$0xff] %v896
        %1242 = vst [vmem:[#allocation2 + $0x390] sm:$0xff] %v1013
        %1243 = vst [vmem:[#allocation2 + $0x398] sm:$0xff] %v1015
        %1244 = vst.msk [vmem:[#allocation2 + $0x3a0] sm:$0xff] %vm1139, %v1124
        %v1245 = vld [vmem:[%s2] sm:$0xff]
        %v1246 = vld [vmem:[#allocation2] sm:$0xff]
        %v1247 = vld [vmem:[#allocation2 + $0x8] sm:$0xff]
        %v1248 = vld [vmem:[#allocation2 + $0x10] sm:$0xff]
        %v1249 = vld [vmem:[#allocation2 + $0x18] sm:$0xff]
        %v1250 = vld [vmem:[#allocation2 + $0x20] sm:$0xff]
        %v1251 = vld [vmem:[#allocation2 + $0x28] sm:$0xff]
        %v1252 = vld [vmem:[#allocation2 + $0x30] sm:$0xff]
        %v1253 = vld [vmem:[#allocation2 + $0x38] sm:$0xff]
        %v1254 = vld [vmem:[#allocation2 + $0x40] sm:$0xff]
        %v1255 = vld [vmem:[#allocation2 + $0x48] sm:$0xff]
        %v1256 = vld [vmem:[#allocation2 + $0x50] sm:$0xff]
        %v1257 = vld [vmem:[#allocation2 + $0x58] sm:$0xff]
        %v1258 = vld [vmem:[#allocation2 + $0x60] sm:$0xff]
        %v1259 = vld [vmem:[#allocation2 + $0xd0] sm:$0xff]
        %v1260 = vld [vmem:[#allocation2 + $0xd8] sm:$0xff]
        %v1261 = vld [vmem:[#allocation2 + $0xe0] sm:$0xff]
        %v1262 = vld [vmem:[#allocation2 + $0xe8] sm:$0xff]
        %v1263 = vld [vmem:[#allocation2 + $0xf0] sm:$0xff]
        %v1264 = vld [vmem:[#allocation2 + $0xf8] sm:$0xff]
        %v1265 = vld [vmem:[#allocation2 + $0x100] sm:$0xff]
        %v1266 = vld [vmem:[#allocation2 + $0x108] sm:$0xff]
        %v1267 = vld [vmem:[#allocation2 + $0x110] sm:$0xff]
        %v1268 = vld [vmem:[#allocation2 + $0x118] sm:$0xff]
        %v1269 = vld [vmem:[#allocation2 + $0x120] sm:$0xff]
        %v1270 = vld [vmem:[#allocation2 + $0x128] sm:$0xff]
        %v1271 = vld [vmem:[#allocation2 + $0x130] sm:$0xff]
        %1285 = vrot.lane.b32.xlu0 %v1259, 1
        %v1286 = vpop.permute.xlu0 %1285
        %1287 = vrot.lane.b32.xlu0 %v1260, 1
        %v1288 = vpop.permute.xlu0 %1287
        %1289 = vrot.lane.b32.xlu0 %v1261, 1
        %v1290 = vpop.permute.xlu0 %1289
        %1291 = vrot.lane.b32.xlu0 %v1262, 1
        %v1292 = vpop.permute.xlu0 %1291
        %1293 = vrot.lane.b32.xlu0 %v1263, 1
        %v1294 = vpop.permute.xlu0 %1293
        %1295 = vrot.lane.b32.xlu0 %v1264, 1
        %v1296 = vpop.permute.xlu0 %1295
        %1297 = vrot.lane.b32.xlu0 %v1265, 1
        %v1298 = vpop.permute.xlu0 %1297
        %1299 = vrot.lane.b32.xlu0 %v1266, 1
        %v1300 = vpop.permute.xlu0 %1299
        %1301 = vrot.lane.b32.xlu0 %v1267, 1
        %v1302 = vpop.permute.xlu0 %1301
        %1303 = vrot.lane.b32.xlu0 %v1268, 1
        %v1304 = vpop.permute.xlu0 %1303
        %1305 = vrot.lane.b32.xlu0 %v1269, 1
        %v1306 = vpop.permute.xlu0 %1305
        %1307 = vrot.lane.b32.xlu0 %v1270, 1
        %v1308 = vpop.permute.xlu0 %1307
        %1309 = vrot.lane.b32.xlu0 %v1271, 1
        %v1310 = vpop.permute.xlu0 %1309
        %vm1311 = vcmask 7168
        %v1312 = vsel %vm1311, %v1286, %v1288
        %v1313 = vsel %vm1311, %v1288, %v1290
        %v1314 = vsel %vm1311, %v1290, %v1292
        %v1315 = vsel %vm1311, %v1292, %v1294
        %v1316 = vsel %vm1311, %v1294, %v1296
        %v1317 = vsel %vm1311, %v1296, %v1298
        %v1318 = vsel %vm1311, %v1298, %v1300
        %v1319 = vsel %vm1311, %v1300, %v1302
        %v1320 = vsel %vm1311, %v1302, %v1304
        %v1321 = vsel %vm1311, %v1304, %v1306
        %v1322 = vsel %vm1311, %v1306, %v1308
        %v1323 = vsel %vm1311, %v1308, %v1310
        %v1337 = vsel %vm1311, 0.0, %v1286
        %v1338 = vadd.f32 %v1246, %v1337
        %v1339 = vadd.f32 %v1247, %v1312
        %v1340 = vadd.f32 %v1248, %v1313
        %v1341 = vadd.f32 %v1249, %v1314
        %v1342 = vadd.f32 %v1250, %v1315
        %v1343 = vadd.f32 %v1251, %v1316
        %v1344 = vadd.f32 %v1252, %v1317
        %v1345 = vadd.f32 %v1253, %v1318
        %v1346 = vadd.f32 %v1254, %v1319
        %v1347 = vadd.f32 %v1255, %v1320
        %v1348 = vadd.f32 %v1256, %v1321
        %v1349 = vadd.f32 %v1257, %v1322
        %v1350 = vadd.f32 %v1258, %v1323
        %v1351 = vld [vmem:[#allocation2 + $0x270] sm:$0xff]
        %v1352 = vld [vmem:[#allocation2 + $0x278] sm:$0xff]
        %v1353 = vld [vmem:[#allocation2 + $0x280] sm:$0xff]
        %v1354 = vld [vmem:[#allocation2 + $0x288] sm:$0xff]
        %v1355 = vld [vmem:[#allocation2 + $0x290] sm:$0xff]
        %v1356 = vld [vmem:[#allocation2 + $0x298] sm:$0xff]
        %v1357 = vld [vmem:[#allocation2 + $0x2a0] sm:$0xff]
        %v1358 = vld [vmem:[#allocation2 + $0x2a8] sm:$0xff]
        %v1359 = vld [vmem:[#allocation2 + $0x2b0] sm:$0xff]
        %v1360 = vld [vmem:[#allocation2 + $0x2b8] sm:$0xff]
        %v1361 = vld [vmem:[#allocation2 + $0x2c0] sm:$0xff]
        %v1362 = vld [vmem:[#allocation2 + $0x2c8] sm:$0xff]
        %v1363 = vld [vmem:[#allocation2 + $0x2d0] sm:$0xff]
        %1377 = vrot.lane.b32.xlu0 %v1351, 25
        %v1378 = vpop.permute.xlu0 %1377
        %1379 = vrot.lane.b32.xlu0 %v1352, 25
        %v1380 = vpop.permute.xlu0 %1379
        %1381 = vrot.lane.b32.xlu0 %v1353, 25
        %v1382 = vpop.permute.xlu0 %1381
        %1383 = vrot.lane.b32.xlu0 %v1354, 25
        %v1384 = vpop.permute.xlu0 %1383
        %1385 = vrot.lane.b32.xlu0 %v1355, 25
        %v1386 = vpop.permute.xlu0 %1385
        %1387 = vrot.lane.b32.xlu0 %v1356, 25
        %v1388 = vpop.permute.xlu0 %1387
        %1389 = vrot.lane.b32.xlu0 %v1357, 25
        %v1390 = vpop.permute.xlu0 %1389
        %1391 = vrot.lane.b32.xlu0 %v1358, 25
        %v1392 = vpop.permute.xlu0 %1391
        %1393 = vrot.lane.b32.xlu0 %v1359, 25
        %v1394 = vpop.permute.xlu0 %1393
        %1395 = vrot.lane.b32.xlu0 %v1360, 25
        %v1396 = vpop.permute.xlu0 %1395
        %1397 = vrot.lane.b32.xlu0 %v1361, 25
        %v1398 = vpop.permute.xlu0 %1397
        %1399 = vrot.lane.b32.xlu0 %v1362, 25
        %v1400 = vpop.permute.xlu0 %1399
        %1401 = vrot.lane.b32.xlu0 %v1363, 25
        %v1402 = vpop.permute.xlu0 %1401
        %vm1403 = vcmask 203776
        %v1404 = vsel %vm1403, %v1378, %v1380
        %v1405 = vsel %vm1403, %v1380, %v1382
        %v1406 = vsel %vm1403, %v1382, %v1384
        %v1407 = vsel %vm1403, %v1384, %v1386
        %v1408 = vsel %vm1403, %v1386, %v1388
        %v1409 = vsel %vm1403, %v1388, %v1390
        %v1410 = vsel %vm1403, %v1390, %v1392
        %v1411 = vsel %vm1403, %v1392, %v1394
        %v1412 = vsel %vm1403, %v1394, %v1396
        %v1413 = vsel %vm1403, %v1396, %v1398
        %v1414 = vsel %vm1403, %v1398, %v1400
        %v1415 = vsel %vm1403, %v1400, %v1402
        %v1429 = vsel %vm1403, 0.0, %v1378
        %v1430 = vadd.f32 %v1338, %v1429
        %v1431 = vadd.f32 %v1339, %v1404
        %v1432 = vadd.f32 %v1340, %v1405
        %v1433 = vadd.f32 %v1341, %v1406
        %v1434 = vadd.f32 %v1342, %v1407
        %v1435 = vadd.f32 %v1343, %v1408
        %v1436 = vadd.f32 %v1344, %v1409
        %v1437 = vadd.f32 %v1345, %v1410
        %v1438 = vadd.f32 %v1346, %v1411
        %v1439 = vadd.f32 %v1347, %v1412
        %v1440 = vadd.f32 %v1348, %v1413
        %v1441 = vadd.f32 %v1349, %v1414
        %v1442 = vadd.f32 %v1350, %v1415
        %v1443 = vld [vmem:[#allocation2 + $0x340] sm:$0xff]
        %v1444 = vld [vmem:[#allocation2 + $0x348] sm:$0xff]
        %v1445 = vld [vmem:[#allocation2 + $0x350] sm:$0xff]
        %v1446 = vld [vmem:[#allocation2 + $0x358] sm:$0xff]
        %v1447 = vld [vmem:[#allocation2 + $0x360] sm:$0xff]
        %v1448 = vld [vmem:[#allocation2 + $0x368] sm:$0xff]
        %v1449 = vld [vmem:[#allocation2 + $0x370] sm:$0xff]
        %v1450 = vld [vmem:[#allocation2 + $0x378] sm:$0xff]
        %v1451 = vld [vmem:[#allocation2 + $0x380] sm:$0xff]
        %v1452 = vld [vmem:[#allocation2 + $0x388] sm:$0xff]
        %v1453 = vld [vmem:[#allocation2 + $0x390] sm:$0xff]
        %v1454 = vld [vmem:[#allocation2 + $0x398] sm:$0xff]
        %v1455 = vld [vmem:[#allocation2 + $0x3a0] sm:$0xff]
        %1469 = vrot.lane.b32.xlu0 %v1443, 26
        %v1470 = vpop.permute.xlu0 %1469
        %1471 = vrot.lane.b32.xlu0 %v1444, 26
        %v1472 = vpop.permute.xlu0 %1471
        %1473 = vrot.lane.b32.xlu0 %v1445, 26
        %v1474 = vpop.permute.xlu0 %1473
        %1475 = vrot.lane.b32.xlu0 %v1446, 26
        %v1476 = vpop.permute.xlu0 %1475
        %1477 = vrot.lane.b32.xlu0 %v1447, 26
        %v1478 = vpop.permute.xlu0 %1477
        %1479 = vrot.lane.b32.xlu0 %v1448, 26
        %v1480 = vpop.permute.xlu0 %1479
        %1481 = vrot.lane.b32.xlu0 %v1449, 26
        %v1482 = vpop.permute.xlu0 %1481
        %1483 = vrot.lane.b32.xlu0 %v1450, 26
        %v1484 = vpop.permute.xlu0 %1483
        %1485 = vrot.lane.b32.xlu0 %v1451, 26
        %v1486 = vpop.permute.xlu0 %1485
        %1487 = vrot.lane.b32.xlu0 %v1452, 26
        %v1488 = vpop.permute.xlu0 %1487
        %1489 = vrot.lane.b32.xlu0 %v1453, 26
        %v1490 = vpop.permute.xlu0 %1489
        %1491 = vrot.lane.b32.xlu0 %v1454, 26
        %v1492 = vpop.permute.xlu0 %1491
        %1493 = vrot.lane.b32.xlu0 %v1455, 26
        %v1494 = vpop.permute.xlu0 %1493
        %vm1495 = vcmask 211968
        %v1496 = vsel %vm1495, %v1470, %v1472
        %v1497 = vsel %vm1495, %v1472, %v1474
        %v1498 = vsel %vm1495, %v1474, %v1476
        %v1499 = vsel %vm1495, %v1476, %v1478
        %v1500 = vsel %vm1495, %v1478, %v1480
        %v1501 = vsel %vm1495, %v1480, %v1482
        %v1502 = vsel %vm1495, %v1482, %v1484
        %v1503 = vsel %vm1495, %v1484, %v1486
        %v1504 = vsel %vm1495, %v1486, %v1488
        %v1505 = vsel %vm1495, %v1488, %v1490
        %v1506 = vsel %vm1495, %v1490, %v1492
        %v1507 = vsel %vm1495, %v1492, %v1494
        %v1521 = vsel %vm1495, 0.0, %v1470
        %v1522 = vadd.f32 %v1430, %v1521
        %v1523 = vadd.f32 %v1431, %v1496
        %v1524 = vadd.f32 %v1432, %v1497
        %v1525 = vadd.f32 %v1433, %v1498
        %v1526 = vadd.f32 %v1434, %v1499
        %v1527 = vadd.f32 %v1435, %v1500
        %v1528 = vadd.f32 %v1436, %v1501
        %v1529 = vadd.f32 %v1437, %v1502
        %v1530 = vadd.f32 %v1438, %v1503
        %v1531 = vadd.f32 %v1439, %v1504
        %v1532 = vadd.f32 %v1440, %v1505
        %v1533 = vadd.f32 %v1441, %v1506
        %v1534 = vadd.f32 %v1442, %v1507
        %1536 = vset.pattern.permute.xlu0 0
        %1537 = vperm.xlu0 %1536, %v1245
        %v1538 = vpop.permute.xlu0 %1537
        %v1540 = vadd.f32 %v1522, %v1538
        %v1541 = vadd.f32 %v1523, %v1538
        %v1542 = vadd.f32 %v1524, %v1538
        %v1543 = vadd.f32 %v1525, %v1538
        %v1544 = vadd.f32 %v1526, %v1538
        %v1545 = vadd.f32 %v1527, %v1538
        %v1546 = vadd.f32 %v1528, %v1538
        %v1547 = vadd.f32 %v1529, %v1538
        %v1548 = vadd.f32 %v1530, %v1538
        %v1549 = vadd.f32 %v1531, %v1538
        %v1550 = vadd.f32 %v1532, %v1538
        %v1551 = vadd.f32 %v1533, %v1538
        %v1552 = vadd.f32 %v1534, %v1538
        %v1553 = vmax.f32 %v1540, 0.0
        %v1554 = vmax.f32 %v1541, 0.0
        %v1555 = vmax.f32 %v1542, 0.0
        %v1556 = vmax.f32 %v1543, 0.0
        %v1557 = vmax.f32 %v1544, 0.0
        %v1558 = vmax.f32 %v1545, 0.0
        %v1559 = vmax.f32 %v1546, 0.0
        %v1560 = vmax.f32 %v1547, 0.0
        %v1561 = vmax.f32 %v1548, 0.0
        %v1562 = vmax.f32 %v1549, 0.0
        %v1563 = vmax.f32 %v1550, 0.0
        %v1564 = vmax.f32 %v1551, 0.0
        %v1565 = vmax.f32 %v1552, 0.0
        %1566 = vst [vmem:[%s239] sm:$0xff] %v1553
        %1567 = vst [vmem:[%s239 + $0x8] sm:$0xff] %v1554
        %1568 = vst [vmem:[%s239 + $0x10] sm:$0xff] %v1555
        %1569 = vst [vmem:[%s239 + $0x18] sm:$0xff] %v1556
        %1570 = vst [vmem:[%s239 + $0x20] sm:$0xff] %v1557
        %1571 = vst [vmem:[%s239 + $0x28] sm:$0xff] %v1558
        %1572 = vst [vmem:[%s239 + $0x30] sm:$0xff] %v1559
        %1573 = vst [vmem:[%s239 + $0x38] sm:$0xff] %v1560
        %1574 = vst [vmem:[%s239 + $0x40] sm:$0xff] %v1561
        %1575 = vst [vmem:[%s239 + $0x48] sm:$0xff] %v1562
        %1576 = vst [vmem:[%s239 + $0x50] sm:$0xff] %v1563
        %1577 = vst [vmem:[%s239 + $0x58] sm:$0xff] %v1564
        %1578 = vst.msk [vmem:[%s239 + $0x60] sm:$0xff] %vm1139, %v1565
        %v1579 = vld [vmem:[#allocation2 + $0x68] sm:$0xff]
        %v1580 = vld [vmem:[#allocation2 + $0x70] sm:$0xff]
        %v1581 = vld [vmem:[#allocation2 + $0x78] sm:$0xff]
        %v1582 = vld [vmem:[#allocation2 + $0x80] sm:$0xff]
        %v1583 = vld [vmem:[#allocation2 + $0x88] sm:$0xff]
        %v1584 = vld [vmem:[#allocation2 + $0x90] sm:$0xff]
        %v1585 = vld [vmem:[#allocation2 + $0x98] sm:$0xff]
        %v1586 = vld [vmem:[#allocation2 + $0xa0] sm:$0xff]
        %v1587 = vld [vmem:[#allocation2 + $0xa8] sm:$0xff]
        %v1588 = vld [vmem:[#allocation2 + $0xb0] sm:$0xff]
        %v1589 = vld [vmem:[#allocation2 + $0xb8] sm:$0xff]
        %v1590 = vld [vmem:[#allocation2 + $0xc0] sm:$0xff]
        %v1591 = vld [vmem:[#allocation2 + $0xc8] sm:$0xff]
        %v1592 = vld [vmem:[#allocation2 + $0x2d8] sm:$0xff]
        %v1593 = vld [vmem:[#allocation2 + $0x2e0] sm:$0xff]
        %v1594 = vld [vmem:[#allocation2 + $0x2e8] sm:$0xff]
        %v1595 = vld [vmem:[#allocation2 + $0x2f0] sm:$0xff]
        %v1596 = vld [vmem:[#allocation2 + $0x2f8] sm:$0xff]
        %v1597 = vld [vmem:[#allocation2 + $0x300] sm:$0xff]
        %v1598 = vld [vmem:[#allocation2 + $0x308] sm:$0xff]
        %v1599 = vld [vmem:[#allocation2 + $0x310] sm:$0xff]
        %v1600 = vld [vmem:[#allocation2 + $0x318] sm:$0xff]
        %v1601 = vld [vmem:[#allocation2 + $0x320] sm:$0xff]
        %v1602 = vld [vmem:[#allocation2 + $0x328] sm:$0xff]
        %v1603 = vld [vmem:[#allocation2 + $0x330] sm:$0xff]
        %v1604 = vld [vmem:[#allocation2 + $0x338] sm:$0xff]
        %1618 = vrot.lane.b32.xlu0 %v1592, 25
        %v1619 = vpop.permute.xlu0 %1618
        %1620 = vrot.lane.b32.xlu0 %v1593, 25
        %v1621 = vpop.permute.xlu0 %1620
        %1622 = vrot.lane.b32.xlu0 %v1594, 25
        %v1623 = vpop.permute.xlu0 %1622
        %1624 = vrot.lane.b32.xlu0 %v1595, 25
        %v1625 = vpop.permute.xlu0 %1624
        %1626 = vrot.lane.b32.xlu0 %v1596, 25
        %v1627 = vpop.permute.xlu0 %1626
        %1628 = vrot.lane.b32.xlu0 %v1597, 25
        %v1629 = vpop.permute.xlu0 %1628
        %1630 = vrot.lane.b32.xlu0 %v1598, 25
        %v1631 = vpop.permute.xlu0 %1630
        %1632 = vrot.lane.b32.xlu0 %v1599, 25
        %v1633 = vpop.permute.xlu0 %1632
        %1634 = vrot.lane.b32.xlu0 %v1600, 25
        %v1635 = vpop.permute.xlu0 %1634
        %1636 = vrot.lane.b32.xlu0 %v1601, 25
        %v1637 = vpop.permute.xlu0 %1636
        %1638 = vrot.lane.b32.xlu0 %v1602, 25
        %v1639 = vpop.permute.xlu0 %1638
        %1640 = vrot.lane.b32.xlu0 %v1603, 25
        %v1641 = vpop.permute.xlu0 %1640
        %1642 = vrot.lane.b32.xlu0 %v1604, 25
        %v1643 = vpop.permute.xlu0 %1642
        %v1644 = vsel %vm1403, %v1619, %v1621
        %v1645 = vsel %vm1403, %v1621, %v1623
        %v1646 = vsel %vm1403, %v1623, %v1625
        %v1647 = vsel %vm1403, %v1625, %v1627
        %v1648 = vsel %vm1403, %v1627, %v1629
        %v1649 = vsel %vm1403, %v1629, %v1631
        %v1650 = vsel %vm1403, %v1631, %v1633
        %v1651 = vsel %vm1403, %v1633, %v1635
        %v1652 = vsel %vm1403, %v1635, %v1637
        %v1653 = vsel %vm1403, %v1637, %v1639
        %v1654 = vsel %vm1403, %v1639, %v1641
        %v1655 = vsel %vm1403, %v1641, %v1643
        %v1669 = vsel %vm1403, 0.0, %v1619
        %v1670 = vadd.f32 %v1579, %v1669
        %v1671 = vadd.f32 %v1580, %v1644
        %v1672 = vadd.f32 %v1581, %v1645
        %v1673 = vadd.f32 %v1582, %v1646
        %v1674 = vadd.f32 %v1583, %v1647
        %v1675 = vadd.f32 %v1584, %v1648
        %v1676 = vadd.f32 %v1585, %v1649
        %v1677 = vadd.f32 %v1586, %v1650
        %v1678 = vadd.f32 %v1587, %v1651
        %v1679 = vadd.f32 %v1588, %v1652
        %v1680 = vadd.f32 %v1589, %v1653
        %v1681 = vadd.f32 %v1590, %v1654
        %v1682 = vadd.f32 %v1591, %v1655
        %v1683 = vadd.f32 %v1670, %v1538
        %v1684 = vadd.f32 %v1671, %v1538
        %v1685 = vadd.f32 %v1672, %v1538
        %v1686 = vadd.f32 %v1673, %v1538
        %v1687 = vadd.f32 %v1674, %v1538
        %v1688 = vadd.f32 %v1675, %v1538
        %v1689 = vadd.f32 %v1676, %v1538
        %v1690 = vadd.f32 %v1677, %v1538
        %v1691 = vadd.f32 %v1678, %v1538
        %v1692 = vadd.f32 %v1679, %v1538
        %v1693 = vadd.f32 %v1680, %v1538
        %v1694 = vadd.f32 %v1681, %v1538
        %v1695 = vadd.f32 %v1682, %v1538
        %v1696 = vmax.f32 %v1683, 0.0
        %v1697 = vmax.f32 %v1684, 0.0
        %v1698 = vmax.f32 %v1685, 0.0
        %v1699 = vmax.f32 %v1686, 0.0
        %v1700 = vmax.f32 %v1687, 0.0
        %v1701 = vmax.f32 %v1688, 0.0
        %v1702 = vmax.f32 %v1689, 0.0
        %v1703 = vmax.f32 %v1690, 0.0
        %v1704 = vmax.f32 %v1691, 0.0
        %v1705 = vmax.f32 %v1692, 0.0
        %v1706 = vmax.f32 %v1693, 0.0
        %v1707 = vmax.f32 %v1694, 0.0
        %v1708 = vmax.f32 %v1695, 0.0
        %v1709 = vld [vmem:[%s4] sm:$0xff]
        %v1710 = vld [vmem:[%s4 + $0x8] sm:$0x1f]
        %v1713 = vlaneseq
        %v1714 = vshrl.u32 %v1713, 7
        %v1715 = vsub.s32 0, %v1714
        %v1716 = vrot.slane %v1709, %v1715
        %v1717 = vlaneseq
        %v1718 = vshrl.u32 %v1717, 7
        %v1719 = vsub.s32 1, %v1718
        %v1720 = vrot.slane %v1709, %v1719
        %v1721 = vlaneseq
        %v1722 = vshrl.u32 %v1721, 7
        %v1723 = vsub.s32 2, %v1722
        %v1724 = vrot.slane %v1709, %v1723
        %v1725 = vlaneseq
        %v1726 = vshrl.u32 %v1725, 7
        %v1727 = vsub.s32 3, %v1726
        %v1728 = vrot.slane %v1709, %v1727
        %v1729 = vlaneseq
        %v1730 = vshrl.u32 %v1729, 7
        %v1731 = vsub.s32 4, %v1730
        %v1732 = vrot.slane %v1709, %v1731
        %v1733 = vlaneseq
        %v1734 = vshrl.u32 %v1733, 7
        %v1735 = vsub.s32 5, %v1734
        %v1736 = vrot.slane %v1709, %v1735
        %v1737 = vlaneseq
        %v1738 = vshrl.u32 %v1737, 7
        %v1739 = vsub.s32 6, %v1738
        %v1740 = vrot.slane %v1709, %v1739
        %v1741 = vlaneseq
        %v1742 = vshrl.u32 %v1741, 7
        %v1743 = vsub.s32 7, %v1742
        %v1744 = vrot.slane %v1709, %v1743
        %v1745 = vlaneseq
        %v1746 = vshrl.u32 %v1745, 7
        %v1747 = vsub.s32 0, %v1746
        %v1748 = vrot.slane %v1710, %v1747
        %v1749 = vlaneseq
        %v1750 = vshrl.u32 %v1749, 7
        %v1751 = vsub.s32 1, %v1750
        %v1752 = vrot.slane %v1710, %v1751
        %v1753 = vlaneseq
        %v1754 = vshrl.u32 %v1753, 7
        %v1755 = vsub.s32 2, %v1754
        %v1756 = vrot.slane %v1710, %v1755
        %v1757 = vlaneseq
        %v1758 = vshrl.u32 %v1757, 7
        %v1759 = vsub.s32 3, %v1758
        %v1760 = vrot.slane %v1710, %v1759
        %v1761 = vlaneseq
        %v1762 = vshrl.u32 %v1761, 7
        %v1763 = vsub.s32 4, %v1762
        %v1764 = vrot.slane %v1710, %v1763
        %v1778 = vmul.f32 %v1696, %v1716
        %v1779 = vmul.f32 %v1697, %v1720
        %v1780 = vmul.f32 %v1698, %v1724
        %v1781 = vmul.f32 %v1699, %v1728
        %v1782 = vmul.f32 %v1700, %v1732
        %v1783 = vmul.f32 %v1701, %v1736
        %v1784 = vmul.f32 %v1702, %v1740
        %v1785 = vmul.f32 %v1703, %v1744
        %v1786 = vmul.f32 %v1704, %v1748
        %v1787 = vmul.f32 %v1705, %v1752
        %v1788 = vmul.f32 %v1706, %v1756
        %v1789 = vmul.f32 %v1707, %v1760
        %v1790 = vmul.f32 %v1708, %v1764
        %s1791 = scalar_lea.vmem %s239, 104
        %1792 = vst [vmem:[%s1791] sm:$0xff] %v1778
        %1793 = vst [vmem:[%s1791 + $0x8] sm:$0xff] %v1779
        %1794 = vst [vmem:[%s1791 + $0x10] sm:$0xff] %v1780
        %1795 = vst [vmem:[%s1791 + $0x18] sm:$0xff] %v1781
        %1796 = vst [vmem:[%s1791 + $0x20] sm:$0xff] %v1782
        %1797 = vst [vmem:[%s1791 + $0x28] sm:$0xff] %v1783
        %1798 = vst [vmem:[%s1791 + $0x30] sm:$0xff] %v1784
        %1799 = vst [vmem:[%s1791 + $0x38] sm:$0xff] %v1785
        %1800 = vst [vmem:[%s1791 + $0x40] sm:$0xff] %v1786
        %1801 = vst [vmem:[%s1791 + $0x48] sm:$0xff] %v1787
        %1802 = vst [vmem:[%s1791 + $0x50] sm:$0xff] %v1788
        %1803 = vst [vmem:[%s1791 + $0x58] sm:$0xff] %v1789
        %1804 = vst.msk [vmem:[%s1791 + $0x60] sm:$0xff] %vm1139, %v1790
        %v1805 = vld [vmem:[#allocation2 + $0x138] sm:$0xff]
        %v1806 = vld [vmem:[#allocation2 + $0x140] sm:$0xff]
        %v1807 = vld [vmem:[#allocation2 + $0x148] sm:$0xff]
        %v1808 = vld [vmem:[#allocation2 + $0x150] sm:$0xff]
        %v1809 = vld [vmem:[#allocation2 + $0x158] sm:$0xff]
        %v1810 = vld [vmem:[#allocation2 + $0x160] sm:$0xff]
        %v1811 = vld [vmem:[#allocation2 + $0x168] sm:$0xff]
        %v1812 = vld [vmem:[#allocation2 + $0x170] sm:$0xff]
        %v1813 = vld [vmem:[#allocation2 + $0x178] sm:$0xff]
        %v1814 = vld [vmem:[#allocation2 + $0x180] sm:$0xff]
        %v1815 = vld [vmem:[#allocation2 + $0x188] sm:$0xff]
        %v1816 = vld [vmem:[#allocation2 + $0x190] sm:$0xff]
        %v1817 = vld [vmem:[#allocation2 + $0x198] sm:$0xff]
        %v1818 = vld [vmem:[#allocation2 + $0x208] sm:$0xff]
        %v1819 = vld [vmem:[#allocation2 + $0x210] sm:$0xff]
        %v1820 = vld [vmem:[#allocation2 + $0x218] sm:$0xff]
        %v1821 = vld [vmem:[#allocation2 + $0x220] sm:$0xff]
        %v1822 = vld [vmem:[#allocation2 + $0x228] sm:$0xff]
        %v1823 = vld [vmem:[#allocation2 + $0x230] sm:$0xff]
        %v1824 = vld [vmem:[#allocation2 + $0x238] sm:$0xff]
        %v1825 = vld [vmem:[#allocation2 + $0x240] sm:$0xff]
        %v1826 = vld [vmem:[#allocation2 + $0x248] sm:$0xff]
        %v1827 = vld [vmem:[#allocation2 + $0x250] sm:$0xff]
        %v1828 = vld [vmem:[#allocation2 + $0x258] sm:$0xff]
        %v1829 = vld [vmem:[#allocation2 + $0x260] sm:$0xff]
        %v1830 = vld [vmem:[#allocation2 + $0x268] sm:$0xff]
        %1844 = vrot.lane.b32.xlu0 %v1818, 1
        %v1845 = vpop.permute.xlu0 %1844
        %1846 = vrot.lane.b32.xlu0 %v1819, 1
        %v1847 = vpop.permute.xlu0 %1846
        %1848 = vrot.lane.b32.xlu0 %v1820, 1
        %v1849 = vpop.permute.xlu0 %1848
        %1850 = vrot.lane.b32.xlu0 %v1821, 1
        %v1851 = vpop.permute.xlu0 %1850
        %1852 = vrot.lane.b32.xlu0 %v1822, 1
        %v1853 = vpop.permute.xlu0 %1852
        %1854 = vrot.lane.b32.xlu0 %v1823, 1
        %v1855 = vpop.permute.xlu0 %1854
        %1856 = vrot.lane.b32.xlu0 %v1824, 1
        %v1857 = vpop.permute.xlu0 %1856
        %1858 = vrot.lane.b32.xlu0 %v1825, 1
        %v1859 = vpop.permute.xlu0 %1858
        %1860 = vrot.lane.b32.xlu0 %v1826, 1
        %v1861 = vpop.permute.xlu0 %1860
        %1862 = vrot.lane.b32.xlu0 %v1827, 1
        %v1863 = vpop.permute.xlu0 %1862
        %1864 = vrot.lane.b32.xlu0 %v1828, 1
        %v1865 = vpop.permute.xlu0 %1864
        %1866 = vrot.lane.b32.xlu0 %v1829, 1
        %v1867 = vpop.permute.xlu0 %1866
        %1868 = vrot.lane.b32.xlu0 %v1830, 1
        %v1869 = vpop.permute.xlu0 %1868
        %v1870 = vsel %vm1311, %v1845, %v1847
        %v1871 = vsel %vm1311, %v1847, %v1849
        %v1872 = vsel %vm1311, %v1849, %v1851
        %v1873 = vsel %vm1311, %v1851, %v1853
        %v1874 = vsel %vm1311, %v1853, %v1855
        %v1875 = vsel %vm1311, %v1855, %v1857
        %v1876 = vsel %vm1311, %v1857, %v1859
        %v1877 = vsel %vm1311, %v1859, %v1861
        %v1878 = vsel %vm1311, %v1861, %v1863
        %v1879 = vsel %vm1311, %v1863, %v1865
        %v1880 = vsel %vm1311, %v1865, %v1867
        %v1881 = vsel %vm1311, %v1867, %v1869
        %v1895 = vsel %vm1311, 0.0, %v1845
        %v1896 = vadd.f32 %v1805, %v1895
        %v1897 = vadd.f32 %v1806, %v1870
        %v1898 = vadd.f32 %v1807, %v1871
        %v1899 = vadd.f32 %v1808, %v1872
        %v1900 = vadd.f32 %v1809, %v1873
        %v1901 = vadd.f32 %v1810, %v1874
        %v1902 = vadd.f32 %v1811, %v1875
        %v1903 = vadd.f32 %v1812, %v1876
        %v1904 = vadd.f32 %v1813, %v1877
        %v1905 = vadd.f32 %v1814, %v1878
        %v1906 = vadd.f32 %v1815, %v1879
        %v1907 = vadd.f32 %v1816, %v1880
        %v1908 = vadd.f32 %v1817, %v1881
        %v1909 = vadd.f32 %v1896, %v1538
        %v1910 = vadd.f32 %v1897, %v1538
        %v1911 = vadd.f32 %v1898, %v1538
        %v1912 = vadd.f32 %v1899, %v1538
        %v1913 = vadd.f32 %v1900, %v1538
        %v1914 = vadd.f32 %v1901, %v1538
        %v1915 = vadd.f32 %v1902, %v1538
        %v1916 = vadd.f32 %v1903, %v1538
        %v1917 = vadd.f32 %v1904, %v1538
        %v1918 = vadd.f32 %v1905, %v1538
        %v1919 = vadd.f32 %v1906, %v1538
        %v1920 = vadd.f32 %v1907, %v1538
        %v1921 = vadd.f32 %v1908, %v1538
        %v1922 = vmax.f32 %v1909, 0.0
        %v1923 = vmax.f32 %v1910, 0.0
        %v1924 = vmax.f32 %v1911, 0.0
        %v1925 = vmax.f32 %v1912, 0.0
        %v1926 = vmax.f32 %v1913, 0.0
        %v1927 = vmax.f32 %v1914, 0.0
        %v1928 = vmax.f32 %v1915, 0.0
        %v1929 = vmax.f32 %v1916, 0.0
        %v1930 = vmax.f32 %v1917, 0.0
        %v1931 = vmax.f32 %v1918, 0.0
        %v1932 = vmax.f32 %v1919, 0.0
        %v1933 = vmax.f32 %v1920, 0.0
        %v1934 = vmax.f32 %v1921, 0.0
        %v1935 = vld [vmem:[%s3] sm:$0xff]
        %v1936 = vld [vmem:[%s3 + $0x8] sm:$0x1f]
        %v1939 = vlaneseq
        %v1940 = vshrl.u32 %v1939, 7
        %v1941 = vsub.s32 0, %v1940
        %v1942 = vrot.slane %v1935, %v1941
        %v1943 = vlaneseq
        %v1944 = vshrl.u32 %v1943, 7
        %v1945 = vsub.s32 1, %v1944
        %v1946 = vrot.slane %v1935, %v1945
        %v1947 = vlaneseq
        %v1948 = vshrl.u32 %v1947, 7
        %v1949 = vsub.s32 2, %v1948
        %v1950 = vrot.slane %v1935, %v1949
        %v1951 = vlaneseq
        %v1952 = vshrl.u32 %v1951, 7
        %v1953 = vsub.s32 3, %v1952
        %v1954 = vrot.slane %v1935, %v1953
        %v1955 = vlaneseq
        %v1956 = vshrl.u32 %v1955, 7
        %v1957 = vsub.s32 4, %v1956
        %v1958 = vrot.slane %v1935, %v1957
        %v1959 = vlaneseq
        %v1960 = vshrl.u32 %v1959, 7
        %v1961 = vsub.s32 5, %v1960
        %v1962 = vrot.slane %v1935, %v1961
        %v1963 = vlaneseq
        %v1964 = vshrl.u32 %v1963, 7
        %v1965 = vsub.s32 6, %v1964
        %v1966 = vrot.slane %v1935, %v1965
        %v1967 = vlaneseq
        %v1968 = vshrl.u32 %v1967, 7
        %v1969 = vsub.s32 7, %v1968
        %v1970 = vrot.slane %v1935, %v1969
        %v1971 = vlaneseq
        %v1972 = vshrl.u32 %v1971, 7
        %v1973 = vsub.s32 0, %v1972
        %v1974 = vrot.slane %v1936, %v1973
        %v1975 = vlaneseq
        %v1976 = vshrl.u32 %v1975, 7
        %v1977 = vsub.s32 1, %v1976
        %v1978 = vrot.slane %v1936, %v1977
        %v1979 = vlaneseq
        %v1980 = vshrl.u32 %v1979, 7
        %v1981 = vsub.s32 2, %v1980
        %v1982 = vrot.slane %v1936, %v1981
        %v1983 = vlaneseq
        %v1984 = vshrl.u32 %v1983, 7
        %v1985 = vsub.s32 3, %v1984
        %v1986 = vrot.slane %v1936, %v1985
        %v1987 = vlaneseq
        %v1988 = vshrl.u32 %v1987, 7
        %v1989 = vsub.s32 4, %v1988
        %v1990 = vrot.slane %v1936, %v1989
        %v2004 = vmul.f32 %v1922, %v1942
        %v2005 = vmul.f32 %v1923, %v1946
        %v2006 = vmul.f32 %v1924, %v1950
        %v2007 = vmul.f32 %v1925, %v1954
        %v2008 = vmul.f32 %v1926, %v1958
        %v2009 = vmul.f32 %v1927, %v1962
        %v2010 = vmul.f32 %v1928, %v1966
        %v2011 = vmul.f32 %v1929, %v1970
        %v2012 = vmul.f32 %v1930, %v1974
        %v2013 = vmul.f32 %v1931, %v1978
        %v2014 = vmul.f32 %v1932, %v1982
        %v2015 = vmul.f32 %v1933, %v1986
        %v2016 = vmul.f32 %v1934, %v1990
        %s2017 = scalar_lea.vmem %s239, 208
        %2018 = vst [vmem:[%s2017] sm:$0xff] %v2004
        %2019 = vst [vmem:[%s2017 + $0x8] sm:$0xff] %v2005
        %2020 = vst [vmem:[%s2017 + $0x10] sm:$0xff] %v2006
        %2021 = vst [vmem:[%s2017 + $0x18] sm:$0xff] %v2007
        %2022 = vst [vmem:[%s2017 + $0x20] sm:$0xff] %v2008
        %2023 = vst [vmem:[%s2017 + $0x28] sm:$0xff] %v2009
        %2024 = vst [vmem:[%s2017 + $0x30] sm:$0xff] %v2010
        %2025 = vst [vmem:[%s2017 + $0x38] sm:$0xff] %v2011
        %2026 = vst [vmem:[%s2017 + $0x40] sm:$0xff] %v2012
        %2027 = vst [vmem:[%s2017 + $0x48] sm:$0xff] %v2013
        %2028 = vst [vmem:[%s2017 + $0x50] sm:$0xff] %v2014
        %2029 = vst [vmem:[%s2017 + $0x58] sm:$0xff] %v2015
        %2030 = vst.msk [vmem:[%s2017 + $0x60] sm:$0xff] %vm1139, %v2016
        %v2031 = vld [vmem:[#allocation2 + $0x1a0] sm:$0xff]
        %v2032 = vld [vmem:[#allocation2 + $0x1a8] sm:$0xff]
        %v2033 = vld [vmem:[#allocation2 + $0x1b0] sm:$0xff]
        %v2034 = vld [vmem:[#allocation2 + $0x1b8] sm:$0xff]
        %v2035 = vld [vmem:[#allocation2 + $0x1c0] sm:$0xff]
        %v2036 = vld [vmem:[#allocation2 + $0x1c8] sm:$0xff]
        %v2037 = vld [vmem:[#allocation2 + $0x1d0] sm:$0xff]
        %v2038 = vld [vmem:[#allocation2 + $0x1d8] sm:$0xff]
        %v2039 = vld [vmem:[#allocation2 + $0x1e0] sm:$0xff]
        %v2040 = vld [vmem:[#allocation2 + $0x1e8] sm:$0xff]
        %v2041 = vld [vmem:[#allocation2 + $0x1f0] sm:$0xff]
        %v2042 = vld [vmem:[#allocation2 + $0x1f8] sm:$0xff]
        %v2043 = vld [vmem:[#allocation2 + $0x200] sm:$0xff]
        %v2044 = vadd.f32 %v2031, %v1538
        %v2045 = vadd.f32 %v2032, %v1538
        %v2046 = vadd.f32 %v2033, %v1538
        %v2047 = vadd.f32 %v2034, %v1538
        %v2048 = vadd.f32 %v2035, %v1538
        %v2049 = vadd.f32 %v2036, %v1538
        %v2050 = vadd.f32 %v2037, %v1538
        %v2051 = vadd.f32 %v2038, %v1538
        %v2052 = vadd.f32 %v2039, %v1538
        %v2053 = vadd.f32 %v2040, %v1538
        %v2054 = vadd.f32 %v2041, %v1538
        %v2055 = vadd.f32 %v2042, %v1538
        %v2056 = vadd.f32 %v2043, %v1538
        %v2057 = vmax.f32 %v2044, 0.0
        %v2058 = vmax.f32 %v2045, 0.0
        %v2059 = vmax.f32 %v2046, 0.0
        %v2060 = vmax.f32 %v2047, 0.0
        %v2061 = vmax.f32 %v2048, 0.0
        %v2062 = vmax.f32 %v2049, 0.0
        %v2063 = vmax.f32 %v2050, 0.0
        %v2064 = vmax.f32 %v2051, 0.0
        %v2065 = vmax.f32 %v2052, 0.0
        %v2066 = vmax.f32 %v2053, 0.0
        %v2067 = vmax.f32 %v2054, 0.0
        %v2068 = vmax.f32 %v2055, 0.0
        %v2069 = vmax.f32 %v2056, 0.0
        %v2070 = vld [vmem:[%s3] sm:$0xff]
        %v2071 = vld [vmem:[%s3 + $0x8] sm:$0x1f]
        %v2074 = vlaneseq
        %v2075 = vshrl.u32 %v2074, 7
        %v2076 = vsub.s32 0, %v2075
        %v2077 = vrot.slane %v2070, %v2076
        %v2078 = vlaneseq
        %v2079 = vshrl.u32 %v2078, 7
        %v2080 = vsub.s32 1, %v2079
        %v2081 = vrot.slane %v2070, %v2080
        %v2082 = vlaneseq
        %v2083 = vshrl.u32 %v2082, 7
        %v2084 = vsub.s32 2, %v2083
        %v2085 = vrot.slane %v2070, %v2084
        %v2086 = vlaneseq
        %v2087 = vshrl.u32 %v2086, 7
        %v2088 = vsub.s32 3, %v2087
        %v2089 = vrot.slane %v2070, %v2088
        %v2090 = vlaneseq
        %v2091 = vshrl.u32 %v2090, 7
        %v2092 = vsub.s32 4, %v2091
        %v2093 = vrot.slane %v2070, %v2092
        %v2094 = vlaneseq
        %v2095 = vshrl.u32 %v2094, 7
        %v2096 = vsub.s32 5, %v2095
        %v2097 = vrot.slane %v2070, %v2096
        %v2098 = vlaneseq
        %v2099 = vshrl.u32 %v2098, 7
        %v2100 = vsub.s32 6, %v2099
        %v2101 = vrot.slane %v2070, %v2100
        %v2102 = vlaneseq
        %v2103 = vshrl.u32 %v2102, 7
        %v2104 = vsub.s32 7, %v2103
        %v2105 = vrot.slane %v2070, %v2104
        %v2106 = vlaneseq
        %v2107 = vshrl.u32 %v2106, 7
        %v2108 = vsub.s32 0, %v2107
        %v2109 = vrot.slane %v2071, %v2108
        %v2110 = vlaneseq
        %v2111 = vshrl.u32 %v2110, 7
        %v2112 = vsub.s32 1, %v2111
        %v2113 = vrot.slane %v2071, %v2112
        %v2114 = vlaneseq
        %v2115 = vshrl.u32 %v2114, 7
        %v2116 = vsub.s32 2, %v2115
        %v2117 = vrot.slane %v2071, %v2116
        %v2118 = vlaneseq
        %v2119 = vshrl.u32 %v2118, 7
        %v2120 = vsub.s32 3, %v2119
        %v2121 = vrot.slane %v2071, %v2120
        %v2122 = vlaneseq
        %v2123 = vshrl.u32 %v2122, 7
        %v2124 = vsub.s32 4, %v2123
        %v2125 = vrot.slane %v2071, %v2124
        %v2139 = vmul.f32 %v2057, %v2077
        %v2140 = vmul.f32 %v2058, %v2081
        %v2141 = vmul.f32 %v2059, %v2085
        %v2142 = vmul.f32 %v2060, %v2089
        %v2143 = vmul.f32 %v2061, %v2093
        %v2144 = vmul.f32 %v2062, %v2097
        %v2145 = vmul.f32 %v2063, %v2101
        %v2146 = vmul.f32 %v2064, %v2105
        %v2147 = vmul.f32 %v2065, %v2109
        %v2148 = vmul.f32 %v2066, %v2113
        %v2149 = vmul.f32 %v2067, %v2117
        %v2150 = vmul.f32 %v2068, %v2121
        %v2151 = vmul.f32 %v2069, %v2125
        %v2152 = vld [vmem:[%s4] sm:$0xff]
        %v2153 = vld [vmem:[%s4 + $0x8] sm:$0x1f]
        %v2156 = vlaneseq
        %v2157 = vshrl.u32 %v2156, 7
        %v2158 = vsub.s32 0, %v2157
        %v2159 = vrot.slane %v2152, %v2158
        %v2160 = vlaneseq
        %v2161 = vshrl.u32 %v2160, 7
        %v2162 = vsub.s32 1, %v2161
        %v2163 = vrot.slane %v2152, %v2162
        %v2164 = vlaneseq
        %v2165 = vshrl.u32 %v2164, 7
        %v2166 = vsub.s32 2, %v2165
        %v2167 = vrot.slane %v2152, %v2166
        %v2168 = vlaneseq
        %v2169 = vshrl.u32 %v2168, 7
        %v2170 = vsub.s32 3, %v2169
        %v2171 = vrot.slane %v2152, %v2170
        %v2172 = vlaneseq
        %v2173 = vshrl.u32 %v2172, 7
        %v2174 = vsub.s32 4, %v2173
        %v2175 = vrot.slane %v2152, %v2174
        %v2176 = vlaneseq
        %v2177 = vshrl.u32 %v2176, 7
        %v2178 = vsub.s32 5, %v2177
        %v2179 = vrot.slane %v2152, %v2178
        %v2180 = vlaneseq
        %v2181 = vshrl.u32 %v2180, 7
        %v2182 = vsub.s32 6, %v2181
        %v2183 = vrot.slane %v2152, %v2182
        %v2184 = vlaneseq
        %v2185 = vshrl.u32 %v2184, 7
        %v2186 = vsub.s32 7, %v2185
        %v2187 = vrot.slane %v2152, %v2186
        %v2188 = vlaneseq
        %v2189 = vshrl.u32 %v2188, 7
        %v2190 = vsub.s32 0, %v2189
        %v2191 = vrot.slane %v2153, %v2190
        %v2192 = vlaneseq
        %v2193 = vshrl.u32 %v2192, 7
        %v2194 = vsub.s32 1, %v2193
        %v2195 = vrot.slane %v2153, %v2194
        %v2196 = vlaneseq
        %v2197 = vshrl.u32 %v2196, 7
        %v2198 = vsub.s32 2, %v2197
        %v2199 = vrot.slane %v2153, %v2198
        %v2200 = vlaneseq
        %v2201 = vshrl.u32 %v2200, 7
        %v2202 = vsub.s32 3, %v2201
        %v2203 = vrot.slane %v2153, %v2202
        %v2204 = vlaneseq
        %v2205 = vshrl.u32 %v2204, 7
        %v2206 = vsub.s32 4, %v2205
        %v2207 = vrot.slane %v2153, %v2206
        %v2221 = vmul.f32 %v2139, %v2159
        %v2222 = vmul.f32 %v2140, %v2163
        %v2223 = vmul.f32 %v2141, %v2167
        %v2224 = vmul.f32 %v2142, %v2171
        %v2225 = vmul.f32 %v2143, %v2175
        %v2226 = vmul.f32 %v2144, %v2179
        %v2227 = vmul.f32 %v2145, %v2183
        %v2228 = vmul.f32 %v2146, %v2187
        %v2229 = vmul.f32 %v2147, %v2191
        %v2230 = vmul.f32 %v2148, %v2195
        %v2231 = vmul.f32 %v2149, %v2199
        %v2232 = vmul.f32 %v2150, %v2203
        %v2233 = vmul.f32 %v2151, %v2207
        %s2234 = scalar_lea.vmem %s239, 312
        %2235 = vst [vmem:[%s2234] sm:$0xff] %v2221
        %2236 = vst [vmem:[%s2234 + $0x8] sm:$0xff] %v2222
        %2237 = vst [vmem:[%s2234 + $0x10] sm:$0xff] %v2223
        %2238 = vst [vmem:[%s2234 + $0x18] sm:$0xff] %v2224
        %2239 = vst [vmem:[%s2234 + $0x20] sm:$0xff] %v2225
        %2240 = vst [vmem:[%s2234 + $0x28] sm:$0xff] %v2226
        %2241 = vst [vmem:[%s2234 + $0x30] sm:$0xff] %v2227
        %2242 = vst [vmem:[%s2234 + $0x38] sm:$0xff] %v2228
        %2243 = vst [vmem:[%s2234 + $0x40] sm:$0xff] %v2229
        %2244 = vst [vmem:[%s2234 + $0x48] sm:$0xff] %v2230
        %2245 = vst [vmem:[%s2234 + $0x50] sm:$0xff] %v2231
        %2246 = vst [vmem:[%s2234 + $0x58] sm:$0xff] %v2232
        %2247 = vst.msk [vmem:[%s2234 + $0x60] sm:$0xff] %vm1139, %v2233
        %p2248 = scmp.lt.s32.totalorder %s17, 1
        %s2249 = scalar_select %p2248, %s17, 1
        %s2250 = smul.addr %s2249, 52
        %s2251 = smul.addr %s2250, 8
        %s2252 = scalar_lea.vmem %s5, %s2251
        // Predicated region
        $region45: #{decoder_forward.4} parent=39 // pred_check
          %p2253 = pneg %p145
        $region46: #{decoder_forward.4} parent=39 // pred_check_branch
          %2255 = sbr.rel (%p2253) target = $region48
        $region47: #{decoder_forward.4} parent=39 // pred_region
          _
        $region48: #{decoder_forward.4} parent=39 // pred_fallthru
          _
      $region40: #{decoder_forward.4} parent=5 // pred_fallthru
        _
      %p2256 = scmp.le.s32.totalorder 2, %s12
      // Predicated region
      $region49: #{decoder_forward.4} parent=5 // pred_check
        %p2257 = pneg %p2256
      $region50: #{decoder_forward.4} parent=5 // pred_check_branch
        %2259 = sbr.rel (%p2257) target = $region52
      $region51: #{decoder_forward.4} parent=5 // pred_region
        %s2260 = ssub.s32 %s12, 2
        // Predicated region
        $region53: #{decoder_forward.4} parent=51 // pred_check
          %p2261 = pneg %p151
        $region54: #{decoder_forward.4} parent=51 // pred_check_branch
          %2263 = sbr.rel (%p2261) target = $region56
        $region55: #{decoder_forward.4} parent=51 // pred_region
          %p2264 = scmp.lt.s32.totalorder %s18, 1
          %s2265 = scalar_select %p2264, %s18, 1
          %s2266 = smul.addr %s2265, 52
          %s2267 = smul.addr %s2266, 8
          %s2268 = scalar_lea.vmem %s5, %s2267
        $region56: #{decoder_forward.4} parent=51 // pred_fallthru
          _
      $region52: #{decoder_forward.4} parent=5 // pred_fallthru
        _
    $region6: #{decoder_forward.4} parent=1 // loop_footer
      %s16 = sadd.s32 1, %s12
    $region7: #{decoder_forward.4} parent=1 // loop_footer_branch
      %11 = sbr.rel target = $region3
    $region8: #{decoder_forward.4} parent=1 // loop_exit
      _
    %2269 = vsyncpa [#allocation4], 1
    %s2270 = scalar_lea.sflag [#allocation4], 1
    %2271 = vsyncpa %s2270, 1

// kernel: decoder_forward.3
$region0: #{decoder_forward.3}
  #allocation0 [shape = 'u32[]', space=smem, size = 0x4, offset = 0x4, fixed_abs, tag = 'smem constant byte address 0x4 - core index']
  #allocation1 [shape = 'u32[144,128]{1,0:T(1,128)}', space=vmem, size = 0x12000, scoped, tag = 'internal scratch']
  %s0 = inlined_call_operand.hbm [shape: f32[2,32], index: 0, kind: input, shape index: {}]
  %s1 = inlined_call_operand.hbm [shape: f32[32,25600], index: 1, kind: input, shape index: {}]
  %s2 = inlined_call_operand.hbm [shape: f32[1,25600], index: 2, kind: input, shape index: {}]
  %s3 = inlined_call_operand.vmem [shape: f32[2,25600], index: 3, kind: output, shape index: {}]
  %s4 = sld [smem:[#allocation0]]
  $region57: #{decoder_forward.3} parent=0
    _
  %s6 = ssub.s32 1, %s4
  %s7 = scalar_select 0, %s6, %s4
  $region1: #{decoder_forward.3} parent=0
    #allocation2 [shape = 'u8[1024]{0}', space=vmem, size = 0x400, scoped, tag = 'input window, operand 0, single buffered']
    #allocation3 [shape = 's32[2]{0}', space=sflag, size = 0x8, scoped, tag = 'scoped memory for decoder_forward.3']
    #allocation4 [shape = 'u8[1638400]{0}', space=vmem, size = 0x190000, scoped, tag = 'input window, operand 1']
    #allocation5 [shape = 's32[2]{0}', space=sflag, size = 0x8, scoped, tag = 'scoped memory for decoder_forward.3']
    #allocation6 [shape = 'u8[51200]{0}', space=vmem, size = 0xc800, scoped, tag = 'input window, operand 2']
    %8 = vsyncpa [#allocation3], 0
    %9 = vsyncpa [#allocation5], 0
    %s10 = scalar_lea.sflag [#allocation5], 1
    %11 = vsyncpa %s10, 0
    loop: start=0, step=1, limit=6
    $region2: #{decoder_forward.3} parent=1 // loop_pre_header
      _
    $region3: #{decoder_forward.3} parent=1 // loop_header
      %s13 = sphi 0, %s17
      %p14 = scmp.ge.s32.totalorder %s13, 6
      %s21 = sphi 0, %s21
      %s23 = sphi 0, %s21
      %s24 = sphi 0, %s23
      %s38 = sphi 0, %s24
      %s44 = sphi 0, %s46
      %s47 = sphi 0, %s44
      %s48 = sphi 0, %s47
      %s64 = sphi 0, %s48
      %s70 = sphi 0, %s72
      %s73 = sphi 0, %s70
      %s74 = sphi 0, %s73
      %s90 = sphi 0, %s74
      %s96 = sphi 0, %s98
      %s99 = sphi 0, %s96
      %s100 = sphi 0, %s99
      %s116 = sphi 0, %s100
    $region4: #{decoder_forward.3} parent=1 // loop_header_branch
      %16 = sbr.rel (%p14) target = $region8
    $region5: #{decoder_forward.3} parent=1 // loop_body
      %s18 = ssub.s32 %s13, 1
      %s19 = ssub.s32 %s13, 2
      %s20 = sadd.s32 %s13, 1
      %s22 = sadd.s32 %s21, 1
      %p25 = scmp.eq.s32.totalorder %s13, 3
      %p26 = scmp.ne.s32.totalorder %s21, %s23
      %p27 = scmp.eq.s32.totalorder %s13, 0
      %p28 = por %p26, %p27
      %p29 = scmp.ne.s32.totalorder %s21, %s23
      %p30 = scmp.eq.s32.totalorder %s18, 3
      %p31 = por %p29, %p30
      %p32 = scmp.ne.s32.totalorder %s23, %s24
      %p33 = scmp.eq.s32.totalorder %s18, 0
      %p34 = por %p32, %p33
      %p35 = scmp.ne.s32.totalorder %s23, %s24
      %p36 = scmp.eq.s32.totalorder %s19, 3
      %p37 = por %p35, %p36
      %p39 = scmp.ne.s32.totalorder %s24, %s38
      %p40 = scmp.eq.s32.totalorder %s19, 0
      %p41 = por %p39, %p40
      %s42 = ssub.s32 %s13, %s20
      %p43 = scmp.eq.s32.totalorder %s42, 0
      %s45 = sadd.s32 %s44, 1
      %s46 = scalar_select %p43, %s44, %s45
      %p49 = pneg %p43
      %p50 = scmp.eq.s32.totalorder %s13, 3
      %p51 = por %p49, %p50
      %p52 = scmp.ne.s32.totalorder %s44, %s47
      %p53 = scmp.eq.s32.totalorder %s13, 0
      %p54 = por %p52, %p53
      %p55 = scmp.ne.s32.totalorder %s44, %s47
      %p56 = scmp.eq.s32.totalorder %s18, 3
      %p57 = por %p55, %p56
      %p58 = scmp.ne.s32.totalorder %s47, %s48
      %p59 = scmp.eq.s32.totalorder %s18, 0
      %p60 = por %p58, %p59
      %p61 = scmp.ne.s32.totalorder %s47, %s48
      %p62 = scmp.eq.s32.totalorder %s19, 3
      %p63 = por %p61, %p62
      %p65 = scmp.ne.s32.totalorder %s48, %s64
      %p66 = scmp.eq.s32.totalorder %s19, 0
      %p67 = por %p65, %p66
      %s68 = ssub.s32 %s13, %s20
      %p69 = scmp.eq.s32.totalorder %s68, 0
      %s71 = sadd.s32 %s70, 1
      %s72 = scalar_select %p69, %s70, %s71
      %p75 = pneg %p69
      %p76 = scmp.eq.s32.totalorder %s13, 3
      %p77 = por %p75, %p76
      %p78 = scmp.ne.s32.totalorder %s70, %s73
      %p79 = scmp.eq.s32.totalorder %s13, 0
      %p80 = por %p78, %p79
      %p81 = scmp.ne.s32.totalorder %s70, %s73
      %p82 = scmp.eq.s32.totalorder %s18, 3
      %p83 = por %p81, %p82
      %p84 = scmp.ne.s32.totalorder %s73, %s74
      %p85 = scmp.eq.s32.totalorder %s18, 0
      %p86 = por %p84, %p85
      %p87 = scmp.ne.s32.totalorder %s73, %s74
      %p88 = scmp.eq.s32.totalorder %s19, 3
      %p89 = por %p87, %p88
      %p91 = scmp.ne.s32.totalorder %s74, %s90
      %p92 = scmp.eq.s32.totalorder %s19, 0
      %p93 = por %p91, %p92
      %s94 = ssub.s32 %s13, %s20
      %p95 = scmp.eq.s32.totalorder %s94, 0
      %s97 = sadd.s32 %s96, 1
      %s98 = scalar_select %p95, %s96, %s97
      %p101 = pneg %p95
      %p102 = scmp.eq.s32.totalorder %s13, 3
      %p103 = por %p101, %p102
      %p104 = scmp.ne.s32.totalorder %s96, %s99
      %p105 = scmp.eq.s32.totalorder %s13, 0
      %p106 = por %p104, %p105
      %p107 = scmp.ne.s32.totalorder %s96, %s99
      %p108 = scmp.eq.s32.totalorder %s18, 3
      %p109 = por %p107, %p108
      %p110 = scmp.ne.s32.totalorder %s99, %s100
      %p111 = scmp.eq.s32.totalorder %s18, 0
      %p112 = por %p110, %p111
      %p113 = scmp.ne.s32.totalorder %s99, %s100
      %p114 = scmp.eq.s32.totalorder %s19, 3
      %p115 = por %p113, %p114
      %p117 = scmp.ne.s32.totalorder %s100, %s116
      %p118 = scmp.eq.s32.totalorder %s19, 0
      %p119 = por %p117, %p118
      %p120 = scmp.le.s32.totalorder 1, %s13
      %p121 = scmp.lt.s32.totalorder %s13, 5
      %p122 = pnand %p120, %p121
      %p123 = pneg %p122
      // Predicated region
      $region9: #{decoder_forward.3} parent=5 // pred_check
        _
      $region10: #{decoder_forward.3} parent=5 // pred_check_branch
        %125 = sbr.rel (%p122) target = $region12
      $region11: #{decoder_forward.3} parent=5 // pred_region
        %s126 = ssub.s32 %s13, 1
        // Predicated region
        $region13: #{decoder_forward.3} parent=11 // pred_check
          %p127 = pneg %p34
        $region14: #{decoder_forward.3} parent=11 // pred_check_branch
          %129 = sbr.rel (%p127) target = $region16
        $region15: #{decoder_forward.3} parent=11 // pred_region
          %s131 = ssub.s32 32, 32
          %132 = vsyncadd [#allocation3], %s131
          %s134 = sshll.u32 [#allocation2], 4
          %s135 = int_to_ptr.vmem [resolvable:$true] %s134
          %137 = dma.hbm_to_vmem [thread:$0]  %s0, 32, %s135, [#allocation3]
        $region16: #{decoder_forward.3} parent=11 // pred_fallthru
          _
      $region12: #{decoder_forward.3} parent=5 // pred_fallthru
        _
      %p138 = scmp.lt.s32.totalorder %s13, 4
      // Predicated region
      $region17: #{decoder_forward.3} parent=5 // pred_check
        %p139 = pneg %p138
      $region18: #{decoder_forward.3} parent=5 // pred_check_branch
        %141 = sbr.rel (%p139) target = $region20
      $region19: #{decoder_forward.3} parent=5 // pred_region
        // Predicated region
        $region21: #{decoder_forward.3} parent=19 // pred_check
          %p142 = pneg %p54
        $region22: #{decoder_forward.3} parent=19 // pred_check_branch
          %144 = sbr.rel (%p142) target = $region24
        $region23: #{decoder_forward.3} parent=19 // pred_region
          %s145 = sand.u32 %s13, 1
          %s146 = scalar_lea.sflag [#allocation5], %s145
          %s147 = sand.u32 %s44, 1
          %s148 = smul.addr %s147, 1600
          %s149 = scalar_lea.vmem [#allocation4], %s148
          %s150 = smul.u32 50, %s13
          %s152 = ssub.s32 25600, 25600
          %153 = vsyncadd %s146, %s152
          %s154 = smul.addr %s150, 128
          %s155 = scalar_lea.hbm %s1, %s154
          %s156 = sshll.u32 %s149, 4
          %s157 = int_to_ptr.vmem [resolvable:$true] %s156
          %162 = dma.hbm_to_vmem [thread:$0]  %s155, 25600, %s157, %s146, 25600, 6400, 400
        $region24: #{decoder_forward.3} parent=19 // pred_fallthru
          _
        // Predicated region
        $region25: #{decoder_forward.3} parent=19 // pred_check
          %p163 = pneg %p80
        $region26: #{decoder_forward.3} parent=19 // pred_check_branch
          %165 = sbr.rel (%p163) target = $region28
        $region27: #{decoder_forward.3} parent=19 // pred_region
          %s166 = sand.u32 %s13, 1
          %s167 = scalar_lea.sflag [#allocation5], %s166
          %s168 = sand.u32 %s70, 1
          %s169 = smul.addr %s168, 50
          %s170 = scalar_lea.vmem [#allocation6], %s169
          %s171 = smul.u32 50, %s13
          %s173 = ssub.s32 800, 800
          %174 = vsyncadd %s167, %s173
          %s175 = smul.addr %s171, 16
          %s176 = scalar_lea.hbm %s2, %s175
          %s178 = sshll.u32 %s170, 4
          %s179 = int_to_ptr.vmem [resolvable:$true] %s178
          %181 = dma.hbm_to_vmem [thread:$0]  %s176, 800, %s179, %s167
        $region28: #{decoder_forward.3} parent=19 // pred_fallthru
          _
      $region20: #{decoder_forward.3} parent=5 // pred_fallthru
        _
      %p182 = scmp.le.s32.totalorder 1, %s13
      %p183 = scmp.lt.s32.totalorder %s13, 5
      %p184 = pnand %p182, %p183
      %p185 = pneg %p184
      // Predicated region
      $region29: #{decoder_forward.3} parent=5 // pred_check
        _
      $region30: #{decoder_forward.3} parent=5 // pred_check_branch
        %187 = sbr.rel (%p184) target = $region32
      $region31: #{decoder_forward.3} parent=5 // pred_region
        %s188 = ssub.s32 %s13, 1
        // Predicated region
        $region33: #{decoder_forward.3} parent=31 // pred_check
          %p189 = pneg %p34
        $region34: #{decoder_forward.3} parent=31 // pred_check_branch
          %191 = sbr.rel (%p189) target = $region36
        $region35: #{decoder_forward.3} parent=31 // pred_region
          %192 = dma.done [#allocation3], 32
        $region36: #{decoder_forward.3} parent=31 // pred_fallthru
          _
        %s193 = sand.u32 %s18, 1
        %s194 = scalar_lea.sflag [#allocation5], %s193
        %s195 = sand.u32 %s47, 1
        %s196 = smul.addr %s195, 1600
        %s197 = scalar_lea.vmem [#allocation4], %s196
        // Predicated region
        $region37: #{decoder_forward.3} parent=31 // pred_check
          %p198 = pneg %p60
        $region38: #{decoder_forward.3} parent=31 // pred_check_branch
          %200 = sbr.rel (%p198) target = $region40
        $region39: #{decoder_forward.3} parent=31 // pred_region
          %201 = dma.done %s194, 25600
        $region40: #{decoder_forward.3} parent=31 // pred_fallthru
          _
        %s202 = sand.u32 %s18, 1
        %s203 = scalar_lea.sflag [#allocation5], %s202
        %s204 = sand.u32 %s73, 1
        %s205 = smul.addr %s204, 50
        %s206 = scalar_lea.vmem [#allocation6], %s205
        // Predicated region
        $region41: #{decoder_forward.3} parent=31 // pred_check
          %p207 = pneg %p86
        $region42: #{decoder_forward.3} parent=31 // pred_check_branch
          %209 = sbr.rel (%p207) target = $region44
        $region43: #{decoder_forward.3} parent=31 // pred_region
          %210 = dma.done %s203, 800
        $region44: #{decoder_forward.3} parent=31 // pred_fallthru
          _
        %p211 = pneg %p34
        %p212 = pneg %p31
        %s213 = sand.u32 %s18, 1
        %s214 = scalar_lea.sflag [#allocation5], %s213
        %s215 = sand.u32 %s47, 1
        %s216 = smul.addr %s215, 1600
        %s217 = scalar_lea.vmem [#allocation4], %s216
        %p218 = pneg %p60
        %p219 = pneg %p57
        %s220 = sand.u32 %s18, 1
        %s221 = scalar_lea.sflag [#allocation5], %s220
        %s222 = sand.u32 %s73, 1
        %s223 = smul.addr %s222, 50
        %s224 = scalar_lea.vmem [#allocation6], %s223
        %p225 = pneg %p86
        %p226 = pneg %p83
        %p227 = pneg %p112
        %p228 = pneg %p109
        %s229 = smul.u32 50, %s18
        %p230 = scmp.lt.s32.totalorder %s229, 199
        %s231 = scalar_select %p230, %s229, 199
        %s232 = smul.addr %s231, 2
        %s233 = scalar_lea.vmem %s3, %s232
        %s234 = smul.u32 50, %s18
        %s235 = smul.u32 50, %s18
        %s236 = smul.u32 50, %s18
        %p237 = scmp.lt.s32.totalorder %s236, 199
        %s238 = scalar_select %p237, %s236, 199
        %s239 = smul.addr %s238, 2
        %s240 = scalar_lea.vmem %s3, %s239
        %s241 = smul.u32 50, %s18
        %v242 = vld [vmem:[#allocation2] sm:$0x3]
        %v243 = vld [vmem:[%s197] sm:$0xff]
        %v244 = vld [vmem:[%s197 + $0x8] sm:$0xff]
        %v245 = vld [vmem:[%s197 + $0x10] sm:$0xff]
        %v246 = vld [vmem:[%s197 + $0x18] sm:$0xff]
        %v247 = vld [vmem:[%s197 + $0x20] sm:$0xff]
        %v248 = vld [vmem:[%s197 + $0x28] sm:$0xff]
        %v249 = vld [vmem:[%s197 + $0x30] sm:$0xff]
        %v250 = vld [vmem:[%s197 + $0x38] sm:$0xff]
        %v251 = vld [vmem:[%s197 + $0x40] sm:$0xff]
        %v252 = vld [vmem:[%s197 + $0x48] sm:$0xff]
        %v253 = vld [vmem:[%s197 + $0x50] sm:$0xff]
        %v254 = vld [vmem:[%s197 + $0x58] sm:$0xff]
        %v255 = vld [vmem:[%s197 + $0x60] sm:$0xff]
        %v256 = vld [vmem:[%s197 + $0x68] sm:$0xff]
        %v257 = vld [vmem:[%s197 + $0x70] sm:$0xff]
        %v258 = vld [vmem:[%s197 + $0x78] sm:$0xff]
        %v259 = vld [vmem:[%s197 + $0x80] sm:$0xff]
        %v260 = vld [vmem:[%s197 + $0x88] sm:$0xff]
        %v261 = vld [vmem:[%s197 + $0x90] sm:$0xff]
        %v262 = vld [vmem:[%s197 + $0x98] sm:$0xff]
        %v263 = vld [vmem:[%s197 + $0xa0] sm:$0xff]
        %v264 = vld [vmem:[%s197 + $0xa8] sm:$0xff]
        %v265 = vld [vmem:[%s197 + $0xb0] sm:$0xff]
        %v266 = vld [vmem:[%s197 + $0xb8] sm:$0xff]
        %v267 = vld [vmem:[%s197 + $0xc0] sm:$0xff]
        %v268 = vld [vmem:[%s197 + $0xc8] sm:$0xff]
        %v269 = vld [vmem:[%s197 + $0xd0] sm:$0xff]
        %v270 = vld [vmem:[%s197 + $0xd8] sm:$0xff]
        %v271 = vld [vmem:[%s197 + $0xe0] sm:$0xff]
        %v272 = vld [vmem:[%s197 + $0xe8] sm:$0xff]
        %v273 = vld [vmem:[%s197 + $0xf0] sm:$0xff]
        %v274 = vld [vmem:[%s197 + $0xf8] sm:$0xff]
        %v275 = vld [vmem:[%s197 + $0x100] sm:$0xff]
        %v276 = vld [vmem:[%s197 + $0x108] sm:$0xff]
        %v277 = vld [vmem:[%s197 + $0x110] sm:$0xff]
        %v278 = vld [vmem:[%s197 + $0x118] sm:$0xff]
        %v279 = vld [vmem:[%s197 + $0x120] sm:$0xff]
        %v280 = vld [vmem:[%s197 + $0x128] sm:$0xff]
        %v281 = vld [vmem:[%s197 + $0x130] sm:$0xff]
        %v282 = vld [vmem:[%s197 + $0x138] sm:$0xff]
        %v283 = vld [vmem:[%s197 + $0x140] sm:$0xff]
        %v284 = vld [vmem:[%s197 + $0x148] sm:$0xff]
        %v285 = vld [vmem:[%s197 + $0x150] sm:$0xff]
        %v286 = vld [vmem:[%s197 + $0x158] sm:$0xff]
        %v287 = vld [vmem:[%s197 + $0x160] sm:$0xff]
        %v288 = vld [vmem:[%s197 + $0x168] sm:$0xff]
        %v289 = vld [vmem:[%s197 + $0x170] sm:$0xff]
        %v290 = vld [vmem:[%s197 + $0x178] sm:$0xff]
        %v291 = vld [vmem:[%s197 + $0x180] sm:$0xff]
        %v292 = vld [vmem:[%s197 + $0x188] sm:$0xff]
        %v293 = vld [vmem:[%s197 + $0x190] sm:$0xff]
        %v294 = vld [vmem:[%s197 + $0x198] sm:$0xff]
        %v295 = vld [vmem:[%s197 + $0x1a0] sm:$0xff]
        %v296 = vld [vmem:[%s197 + $0x1a8] sm:$0xff]
        %v297 = vld [vmem:[%s197 + $0x1b0] sm:$0xff]
        %v298 = vld [vmem:[%s197 + $0x1b8] sm:$0xff]
        %v299 = vld [vmem:[%s197 + $0x1c0] sm:$0xff]
        %v300 = vld [vmem:[%s197 + $0x1c8] sm:$0xff]
        %v301 = vld [vmem:[%s197 + $0x1d0] sm:$0xff]
        %v302 = vld [vmem:[%s197 + $0x1d8] sm:$0xff]
        %v303 = vld [vmem:[%s197 + $0x1e0] sm:$0xff]
        %v304 = vld [vmem:[%s197 + $0x1e8] sm:$0xff]
        %v305 = vld [vmem:[%s197 + $0x1f0] sm:$0xff]
        %v306 = vld [vmem:[%s197 + $0x1f8] sm:$0xff]
        %v307 = vld [vmem:[%s197 + $0x200] sm:$0xff]
        %v308 = vld [vmem:[%s197 + $0x208] sm:$0xff]
        %v309 = vld [vmem:[%s197 + $0x210] sm:$0xff]
        %v310 = vld [vmem:[%s197 + $0x218] sm:$0xff]
        %v311 = vld [vmem:[%s197 + $0x220] sm:$0xff]
        %v312 = vld [vmem:[%s197 + $0x228] sm:$0xff]
        %v313 = vld [vmem:[%s197 + $0x230] sm:$0xff]
        %v314 = vld [vmem:[%s197 + $0x238] sm:$0xff]
        %v315 = vld [vmem:[%s197 + $0x240] sm:$0xff]
        %v316 = vld [vmem:[%s197 + $0x248] sm:$0xff]
        %v317 = vld [vmem:[%s197 + $0x250] sm:$0xff]
        %v318 = vld [vmem:[%s197 + $0x258] sm:$0xff]
        %v319 = vld [vmem:[%s197 + $0x260] sm:$0xff]
        %v320 = vld [vmem:[%s197 + $0x268] sm:$0xff]
        %v321 = vld [vmem:[%s197 + $0x270] sm:$0xff]
        %v322 = vld [vmem:[%s197 + $0x278] sm:$0xff]
        %v323 = vld [vmem:[%s197 + $0x280] sm:$0xff]
        %v324 = vld [vmem:[%s197 + $0x288] sm:$0xff]
        %v325 = vld [vmem:[%s197 + $0x290] sm:$0xff]
        %v326 = vld [vmem:[%s197 + $0x298] sm:$0xff]
        %v327 = vld [vmem:[%s197 + $0x2a0] sm:$0xff]
        %v328 = vld [vmem:[%s197 + $0x2a8] sm:$0xff]
        %v329 = vld [vmem:[%s197 + $0x2b0] sm:$0xff]
        %v330 = vld [vmem:[%s197 + $0x2b8] sm:$0xff]
        %v331 = vld [vmem:[%s197 + $0x2c0] sm:$0xff]
        %v332 = vld [vmem:[%s197 + $0x2c8] sm:$0xff]
        %v333 = vld [vmem:[%s197 + $0x2d0] sm:$0xff]
        %v334 = vld [vmem:[%s197 + $0x2d8] sm:$0xff]
        %v335 = vld [vmem:[%s197 + $0x2e0] sm:$0xff]
        %v336 = vld [vmem:[%s197 + $0x2e8] sm:$0xff]
        %v337 = vld [vmem:[%s197 + $0x2f0] sm:$0xff]
        %v338 = vld [vmem:[%s197 + $0x2f8] sm:$0xff]
        %v339 = vld [vmem:[%s197 + $0x300] sm:$0xff]
        %v340 = vld [vmem:[%s197 + $0x308] sm:$0xff]
        %v341 = vld [vmem:[%s197 + $0x310] sm:$0xff]
        %v342 = vld [vmem:[%s197 + $0x318] sm:$0xff]
        %v343 = vld [vmem:[%s197 + $0x320] sm:$0xff]
        %v344 = vld [vmem:[%s197 + $0x328] sm:$0xff]
        %v345 = vld [vmem:[%s197 + $0x330] sm:$0xff]
        %v346 = vld [vmem:[%s197 + $0x338] sm:$0xff]
        %v347 = vld [vmem:[%s197 + $0x340] sm:$0xff]
        %v348 = vld [vmem:[%s197 + $0x348] sm:$0xff]
        %v349 = vld [vmem:[%s197 + $0x350] sm:$0xff]
        %v350 = vld [vmem:[%s197 + $0x358] sm:$0xff]
        %v351 = vld [vmem:[%s197 + $0x360] sm:$0xff]
        %v352 = vld [vmem:[%s197 + $0x368] sm:$0xff]
        %v353 = vld [vmem:[%s197 + $0x370] sm:$0xff]
        %v354 = vld [vmem:[%s197 + $0x378] sm:$0xff]
        %v355 = vld [vmem:[%s197 + $0x380] sm:$0xff]
        %v356 = vld [vmem:[%s197 + $0x388] sm:$0xff]
        %v357 = vld [vmem:[%s197 + $0x390] sm:$0xff]
        %v358 = vld [vmem:[%s197 + $0x398] sm:$0xff]
        %v359 = vld [vmem:[%s197 + $0x3a0] sm:$0xff]
        %v360 = vld [vmem:[%s197 + $0x3a8] sm:$0xff]
        %v361 = vld [vmem:[%s197 + $0x3b0] sm:$0xff]
        %v362 = vld [vmem:[%s197 + $0x3b8] sm:$0xff]
        %v363 = vld [vmem:[%s197 + $0x3c0] sm:$0xff]
        %v364 = vld [vmem:[%s197 + $0x3c8] sm:$0xff]
        %v365 = vld [vmem:[%s197 + $0x3d0] sm:$0xff]
        %v366 = vld [vmem:[%s197 + $0x3d8] sm:$0xff]
        %v367 = vld [vmem:[%s197 + $0x3e0] sm:$0xff]
        %v368 = vld [vmem:[%s197 + $0x3e8] sm:$0xff]
        %v369 = vld [vmem:[%s197 + $0x3f0] sm:$0xff]
        %v370 = vld [vmem:[%s197 + $0x3f8] sm:$0xff]
        %v371 = vld [vmem:[%s197 + $0x400] sm:$0xff]
        %v372 = vld [vmem:[%s197 + $0x408] sm:$0xff]
        %v373 = vld [vmem:[%s197 + $0x410] sm:$0xff]
        %v374 = vld [vmem:[%s197 + $0x418] sm:$0xff]
        %v375 = vld [vmem:[%s197 + $0x420] sm:$0xff]
        %v376 = vld [vmem:[%s197 + $0x428] sm:$0xff]
        %v377 = vld [vmem:[%s197 + $0x430] sm:$0xff]
        %v378 = vld [vmem:[%s197 + $0x438] sm:$0xff]
        %v379 = vld [vmem:[%s197 + $0x440] sm:$0xff]
        %v380 = vld [vmem:[%s197 + $0x448] sm:$0xff]
        %v381 = vld [vmem:[%s197 + $0x450] sm:$0xff]
        %v382 = vld [vmem:[%s197 + $0x458] sm:$0xff]
        %v383 = vld [vmem:[%s197 + $0x460] sm:$0xff]
        %v384 = vld [vmem:[%s197 + $0x468] sm:$0xff]
        %v385 = vld [vmem:[%s197 + $0x470] sm:$0xff]
        %v386 = vld [vmem:[%s197 + $0x478] sm:$0xff]
        %v387 = vld [vmem:[%s197 + $0x480] sm:$0xff]
        %v388 = vld [vmem:[%s197 + $0x488] sm:$0xff]
        %v389 = vld [vmem:[%s197 + $0x490] sm:$0xff]
        %v390 = vld [vmem:[%s197 + $0x498] sm:$0xff]
        %v391 = vld [vmem:[%s197 + $0x4a0] sm:$0xff]
        %v392 = vld [vmem:[%s197 + $0x4a8] sm:$0xff]
        %v393 = vld [vmem:[%s197 + $0x4b0] sm:$0xff]
        %v394 = vld [vmem:[%s197 + $0x4b8] sm:$0xff]
        %v395 = vld [vmem:[%s197 + $0x4c0] sm:$0xff]
        %v396 = vld [vmem:[%s197 + $0x4c8] sm:$0xff]
        %v397 = vld [vmem:[%s197 + $0x4d0] sm:$0xff]
        %v398 = vld [vmem:[%s197 + $0x4d8] sm:$0xff]
        %v399 = vld [vmem:[%s197 + $0x4e0] sm:$0xff]
        %v400 = vld [vmem:[%s197 + $0x4e8] sm:$0xff]
        %v401 = vld [vmem:[%s197 + $0x4f0] sm:$0xff]
        %v402 = vld [vmem:[%s197 + $0x4f8] sm:$0xff]
        %v403 = vld [vmem:[%s197 + $0x500] sm:$0xff]
        %v404 = vld [vmem:[%s197 + $0x508] sm:$0xff]
        %v405 = vld [vmem:[%s197 + $0x510] sm:$0xff]
        %v406 = vld [vmem:[%s197 + $0x518] sm:$0xff]
        %v407 = vld [vmem:[%s197 + $0x520] sm:$0xff]
        %v408 = vld [vmem:[%s197 + $0x528] sm:$0xff]
        %v409 = vld [vmem:[%s197 + $0x530] sm:$0xff]
        %v410 = vld [vmem:[%s197 + $0x538] sm:$0xff]
        %v411 = vld [vmem:[%s197 + $0x540] sm:$0xff]
        %v412 = vld [vmem:[%s197 + $0x548] sm:$0xff]
        %v413 = vld [vmem:[%s197 + $0x550] sm:$0xff]
        %v414 = vld [vmem:[%s197 + $0x558] sm:$0xff]
        %v415 = vld [vmem:[%s197 + $0x560] sm:$0xff]
        %v416 = vld [vmem:[%s197 + $0x568] sm:$0xff]
        %v417 = vld [vmem:[%s197 + $0x570] sm:$0xff]
        %v418 = vld [vmem:[%s197 + $0x578] sm:$0xff]
        %v419 = vld [vmem:[%s197 + $0x580] sm:$0xff]
        %v420 = vld [vmem:[%s197 + $0x588] sm:$0xff]
        %v421 = vld [vmem:[%s197 + $0x590] sm:$0xff]
        %v422 = vld [vmem:[%s197 + $0x598] sm:$0xff]
        %v423 = vld [vmem:[%s197 + $0x5a0] sm:$0xff]
        %v424 = vld [vmem:[%s197 + $0x5a8] sm:$0xff]
        %v425 = vld [vmem:[%s197 + $0x5b0] sm:$0xff]
        %v426 = vld [vmem:[%s197 + $0x5b8] sm:$0xff]
        %v427 = vld [vmem:[%s197 + $0x5c0] sm:$0xff]
        %v428 = vld [vmem:[%s197 + $0x5c8] sm:$0xff]
        %v429 = vld [vmem:[%s197 + $0x5d0] sm:$0xff]
        %v430 = vld [vmem:[%s197 + $0x5d8] sm:$0xff]
        %v431 = vld [vmem:[%s197 + $0x5e0] sm:$0xff]
        %v432 = vld [vmem:[%s197 + $0x5e8] sm:$0xff]
        %v433 = vld [vmem:[%s197 + $0x5f0] sm:$0xff]
        %v434 = vld [vmem:[%s197 + $0x5f8] sm:$0xff]
        %v435 = vld [vmem:[%s197 + $0x600] sm:$0xff]
        %v436 = vld [vmem:[%s197 + $0x608] sm:$0xff]
        %v437 = vld [vmem:[%s197 + $0x610] sm:$0xff]
        %v438 = vld [vmem:[%s197 + $0x618] sm:$0xff]
        %v439 = vld [vmem:[%s197 + $0x620] sm:$0xff]
        %v440 = vld [vmem:[%s197 + $0x628] sm:$0xff]
        %v441 = vld [vmem:[%s197 + $0x630] sm:$0xff]
        %v442 = vld [vmem:[%s197 + $0x638] sm:$0xff]
        %v443 = vld [vmem:[%s206] sm:$0xff]
        %v444 = vld [vmem:[%s206 + $0x8] sm:$0xff]
        %v445 = vld [vmem:[%s206 + $0x10] sm:$0xff]
        %v446 = vld [vmem:[%s206 + $0x18] sm:$0xff]
        %v447 = vld [vmem:[%s206 + $0x20] sm:$0xff]
        %v448 = vld [vmem:[%s206 + $0x28] sm:$0xff]
        %v449 = vld [vmem:[%s206 + $0x30] sm:$0x3]
        %v457 = vlaneseq
        %v458 = vshrl.u32 %v457, 7
        %v459 = vsub.s32 0, %v458
        %v460 = vrot.slane %v443, %v459
        %v461 = vlaneseq
        %v462 = vshrl.u32 %v461, 7
        %v463 = vsub.s32 1, %v462
        %v464 = vrot.slane %v443, %v463
        %v465 = vlaneseq
        %v466 = vshrl.u32 %v465, 7
        %v467 = vsub.s32 2, %v466
        %v468 = vrot.slane %v443, %v467
        %v469 = vlaneseq
        %v470 = vshrl.u32 %v469, 7
        %v471 = vsub.s32 3, %v470
        %v472 = vrot.slane %v443, %v471
        %v473 = vlaneseq
        %v474 = vshrl.u32 %v473, 7
        %v475 = vsub.s32 4, %v474
        %v476 = vrot.slane %v443, %v475
        %v477 = vlaneseq
        %v478 = vshrl.u32 %v477, 7
        %v479 = vsub.s32 5, %v478
        %v480 = vrot.slane %v443, %v479
        %v481 = vlaneseq
        %v482 = vshrl.u32 %v481, 7
        %v483 = vsub.s32 6, %v482
        %v484 = vrot.slane %v443, %v483
        %v485 = vlaneseq
        %v486 = vshrl.u32 %v485, 7
        %v487 = vsub.s32 7, %v486
        %v488 = vrot.slane %v443, %v487
        %v489 = vlaneseq
        %v490 = vshrl.u32 %v489, 7
        %v491 = vsub.s32 0, %v490
        %v492 = vrot.slane %v444, %v491
        %v493 = vlaneseq
        %v494 = vshrl.u32 %v493, 7
        %v495 = vsub.s32 1, %v494
        %v496 = vrot.slane %v444, %v495
        %v497 = vlaneseq
        %v498 = vshrl.u32 %v497, 7
        %v499 = vsub.s32 2, %v498
        %v500 = vrot.slane %v444, %v499
        %v501 = vlaneseq
        %v502 = vshrl.u32 %v501, 7
        %v503 = vsub.s32 3, %v502
        %v504 = vrot.slane %v444, %v503
        %v505 = vlaneseq
        %v506 = vshrl.u32 %v505, 7
        %v507 = vsub.s32 4, %v506
        %v508 = vrot.slane %v444, %v507
        %v509 = vlaneseq
        %v510 = vshrl.u32 %v509, 7
        %v511 = vsub.s32 5, %v510
        %v512 = vrot.slane %v444, %v511
        %v513 = vlaneseq
        %v514 = vshrl.u32 %v513, 7
        %v515 = vsub.s32 6, %v514
        %v516 = vrot.slane %v444, %v515
        %v517 = vlaneseq
        %v518 = vshrl.u32 %v517, 7
        %v519 = vsub.s32 7, %v518
        %v520 = vrot.slane %v444, %v519
        %v521 = vlaneseq
        %v522 = vshrl.u32 %v521, 7
        %v523 = vsub.s32 0, %v522
        %v524 = vrot.slane %v445, %v523
        %v525 = vlaneseq
        %v526 = vshrl.u32 %v525, 7
        %v527 = vsub.s32 1, %v526
        %v528 = vrot.slane %v445, %v527
        %v529 = vlaneseq
        %v530 = vshrl.u32 %v529, 7
        %v531 = vsub.s32 2, %v530
        %v532 = vrot.slane %v445, %v531
        %v533 = vlaneseq
        %v534 = vshrl.u32 %v533, 7
        %v535 = vsub.s32 3, %v534
        %v536 = vrot.slane %v445, %v535
        %v537 = vlaneseq
        %v538 = vshrl.u32 %v537, 7
        %v539 = vsub.s32 4, %v538
        %v540 = vrot.slane %v445, %v539
        %v541 = vlaneseq
        %v542 = vshrl.u32 %v541, 7
        %v543 = vsub.s32 5, %v542
        %v544 = vrot.slane %v445, %v543
        %v545 = vlaneseq
        %v546 = vshrl.u32 %v545, 7
        %v547 = vsub.s32 6, %v546
        %v548 = vrot.slane %v445, %v547
        %v549 = vlaneseq
        %v550 = vshrl.u32 %v549, 7
        %v551 = vsub.s32 7, %v550
        %v552 = vrot.slane %v445, %v551
        %v553 = vlaneseq
        %v554 = vshrl.u32 %v553, 7
        %v555 = vsub.s32 0, %v554
        %v556 = vrot.slane %v446, %v555
        %v557 = vlaneseq
        %v558 = vshrl.u32 %v557, 7
        %v559 = vsub.s32 1, %v558
        %v560 = vrot.slane %v446, %v559
        %v561 = vlaneseq
        %v562 = vshrl.u32 %v561, 7
        %v563 = vsub.s32 2, %v562
        %v564 = vrot.slane %v446, %v563
        %v565 = vlaneseq
        %v566 = vshrl.u32 %v565, 7
        %v567 = vsub.s32 3, %v566
        %v568 = vrot.slane %v446, %v567
        %v569 = vlaneseq
        %v570 = vshrl.u32 %v569, 7
        %v571 = vsub.s32 4, %v570
        %v572 = vrot.slane %v446, %v571
        %v573 = vlaneseq
        %v574 = vshrl.u32 %v573, 7
        %v575 = vsub.s32 5, %v574
        %v576 = vrot.slane %v446, %v575
        %v577 = vlaneseq
        %v578 = vshrl.u32 %v577, 7
        %v579 = vsub.s32 6, %v578
        %v580 = vrot.slane %v446, %v579
        %v581 = vlaneseq
        %v582 = vshrl.u32 %v581, 7
        %v583 = vsub.s32 7, %v582
        %v584 = vrot.slane %v446, %v583
        %v585 = vlaneseq
        %v586 = vshrl.u32 %v585, 7
        %v587 = vsub.s32 0, %v586
        %v588 = vrot.slane %v447, %v587
        %v589 = vlaneseq
        %v590 = vshrl.u32 %v589, 7
        %v591 = vsub.s32 1, %v590
        %v592 = vrot.slane %v447, %v591
        %v593 = vlaneseq
        %v594 = vshrl.u32 %v593, 7
        %v595 = vsub.s32 2, %v594
        %v596 = vrot.slane %v447, %v595
        %v597 = vlaneseq
        %v598 = vshrl.u32 %v597, 7
        %v599 = vsub.s32 3, %v598
        %v600 = vrot.slane %v447, %v599
        %v601 = vlaneseq
        %v602 = vshrl.u32 %v601, 7
        %v603 = vsub.s32 4, %v602
        %v604 = vrot.slane %v447, %v603
        %v605 = vlaneseq
        %v606 = vshrl.u32 %v605, 7
        %v607 = vsub.s32 5, %v606
        %v608 = vrot.slane %v447, %v607
        %v609 = vlaneseq
        %v610 = vshrl.u32 %v609, 7
        %v611 = vsub.s32 6, %v610
        %v612 = vrot.slane %v447, %v611
        %v613 = vlaneseq
        %v614 = vshrl.u32 %v613, 7
        %v615 = vsub.s32 7, %v614
        %v616 = vrot.slane %v447, %v615
        %v617 = vlaneseq
        %v618 = vshrl.u32 %v617, 7
        %v619 = vsub.s32 0, %v618
        %v620 = vrot.slane %v448, %v619
        %v621 = vlaneseq
        %v622 = vshrl.u32 %v621, 7
        %v623 = vsub.s32 1, %v622
        %v624 = vrot.slane %v448, %v623
        %v625 = vlaneseq
        %v626 = vshrl.u32 %v625, 7
        %v627 = vsub.s32 2, %v626
        %v628 = vrot.slane %v448, %v627
        %v629 = vlaneseq
        %v630 = vshrl.u32 %v629, 7
        %v631 = vsub.s32 3, %v630
        %v632 = vrot.slane %v448, %v631
        %v633 = vlaneseq
        %v634 = vshrl.u32 %v633, 7
        %v635 = vsub.s32 4, %v634
        %v636 = vrot.slane %v448, %v635
        %v637 = vlaneseq
        %v638 = vshrl.u32 %v637, 7
        %v639 = vsub.s32 5, %v638
        %v640 = vrot.slane %v448, %v639
        %v641 = vlaneseq
        %v642 = vshrl.u32 %v641, 7
        %v643 = vsub.s32 6, %v642
        %v644 = vrot.slane %v448, %v643
        %v645 = vlaneseq
        %v646 = vshrl.u32 %v645, 7
        %v647 = vsub.s32 7, %v646
        %v648 = vrot.slane %v448, %v647
        %v649 = vlaneseq
        %v650 = vshrl.u32 %v649, 7
        %v651 = vsub.s32 0, %v650
        %v652 = vrot.slane %v449, %v651
        %v653 = vlaneseq
        %v654 = vshrl.u32 %v653, 7
        %v655 = vsub.s32 1, %v654
        %v656 = vrot.slane %v449, %v655
        %vm707 = vcmask 261120
        %v709 = vsel %vm707, %v242, 0
        %711 = vmatprep.subr.mxu0 0.0
        %712 = vmatpush1.msra.mxu0 0.0
        %713 = vmatprep.subr.mxu0 0.0
        %714 = vmatpush1.msra.mxu0 0.0
        %715 = vmatprep.subr.mxu0 0.0
        %716 = vmatpush1.msra.mxu0 0.0
        %717 = vmatprep.subr.mxu0 0.0
        %718 = vmatpush1.msra.mxu0 0.0
        %719 = vmatprep.subr.mxu0 0.0
        %720 = vmatpush1.msra.mxu0 0.0
        %721 = vmatprep.subr.mxu0 0.0
        %722 = vmatpush1.msra.mxu0 0.0
        %723 = vmatprep.subr.mxu0 0.0
        %724 = vmatpush1.msra.mxu0 0.0
        %725 = vmatprep.subr.mxu0 0.0
        %726 = vmatpush1.msra.mxu0 0.0
        %727 = vmatprep.subr.mxu0 0.0
        %728 = vmatpush1.msra.mxu0 0.0
        %729 = vmatprep.subr.mxu0 0.0
        %730 = vmatpush1.msra.mxu0 0.0
        %731 = vmatprep.subr.mxu0 0.0
        %732 = vmatpush1.msra.mxu0 0.0
        %733 = vmatprep.subr.mxu0 0.0
        %734 = vmatpush1.msra.mxu0 0.0
        %735 = vmatprep.subr.mxu0 %v394
        %736 = vmatpush1.msra.mxu0 %v393
        %737 = vmatprep.subr.mxu0 %v344
        %738 = vmatpush1.msra.mxu0 %v343
        %739 = vmatprep.subr.mxu0 %v294
        %740 = vmatpush1.msra.mxu0 %v293
        %741 = vmatprep.subr.mxu0 %v244
        %742 = vmatpush1.msra.mxu0 %v243
        %743 = vmatprep.subr.mxu0 0.0
        %744 = vmatpush2.msra.mxu0 0.0
        %745 = vmatprep.subr.mxu0 0.0
        %746 = vmatpush2.msra.mxu0 0.0
        %747 = vmatprep.subr.mxu0 0.0
        %748 = vmatpush2.msra.mxu0 0.0
        %749 = vmatprep.subr.mxu0 0.0
        %750 = vmatpush2.msra.mxu0 0.0
        %751 = vmatprep.subr.mxu0 0.0
        %752 = vmatpush2.msra.mxu0 0.0
        %753 = vmatprep.subr.mxu0 0.0
        %754 = vmatpush2.msra.mxu0 0.0
        %755 = vmatprep.subr.mxu0 0.0
        %756 = vmatpush2.msra.mxu0 0.0
        %757 = vmatprep.subr.mxu0 0.0
        %758 = vmatpush2.msra.mxu0 0.0
        %759 = vmatprep.subr.mxu0 0.0
        %760 = vmatpush2.msra.mxu0 0.0
        %761 = vmatprep.subr.mxu0 0.0
        %762 = vmatpush2.msra.mxu0 0.0
        %763 = vmatprep.subr.mxu0 0.0
        %764 = vmatpush2.msra.mxu0 0.0
        %765 = vmatprep.subr.mxu0 0.0
        %766 = vmatpush2.msra.mxu0 0.0
        %767 = vmatprep.subr.mxu0 0.0
        %768 = vmatpush2.msra.mxu0 0.0
        %769 = vmatprep.subr.mxu0 0.0
        %770 = vmatpush2.msra.mxu0 0.0
        %771 = vmatprep.subr.mxu0 0.0
        %772 = vmatpush2.msra.mxu0 0.0
        %773 = vmatprep.subr.mxu0 0.0
        %774 = vmatpush2.msra.mxu0 0.0
        %775 = vmatprep.mubr.f32.mxu0 0.0
        %776 = vmatmul.mubr.f32.gmra.mxu0 %v709
        %v777 = vpop.f32.mrf.mxu0
        %v778 = vadd.f32 %v460, %v777
        %v779 = vpop.f32.mrf.mxu0
        %v780 = vadd.f32 %v464, %v779
        %781 = vdwg.mxu0
        %782 = vmatprep.subr.mxu0 0.0
        %783 = vmatpush1.msra.mxu0 0.0
        %784 = vmatprep.subr.mxu0 0.0
        %785 = vmatpush1.msra.mxu0 0.0
        %786 = vmatprep.subr.mxu0 0.0
        %787 = vmatpush1.msra.mxu0 0.0
        %788 = vmatprep.subr.mxu0 0.0
        %789 = vmatpush1.msra.mxu0 0.0
        %790 = vmatprep.subr.mxu0 0.0
        %791 = vmatpush1.msra.mxu0 0.0
        %792 = vmatprep.subr.mxu0 0.0
        %793 = vmatpush1.msra.mxu0 0.0
        %794 = vmatprep.subr.mxu0 0.0
        %795 = vmatpush1.msra.mxu0 0.0
        %796 = vmatprep.subr.mxu0 0.0
        %797 = vmatpush1.msra.mxu0 0.0
        %798 = vmatprep.subr.mxu0 0.0
        %799 = vmatpush1.msra.mxu0 0.0
        %800 = vmatprep.subr.mxu0 0.0
        %801 = vmatpush1.msra.mxu0 0.0
        %802 = vmatprep.subr.mxu0 0.0
        %803 = vmatpush1.msra.mxu0 0.0
        %804 = vmatprep.subr.mxu0 0.0
        %805 = vmatpush1.msra.mxu0 0.0
        %806 = vmatprep.subr.mxu0 %v396
        %807 = vmatpush1.msra.mxu0 %v395
        %808 = vmatprep.subr.mxu0 %v346
        %809 = vmatpush1.msra.mxu0 %v345
        %810 = vmatprep.subr.mxu0 %v296
        %811 = vmatpush1.msra.mxu0 %v295
        %812 = vmatprep.subr.mxu0 %v246
        %813 = vmatpush1.msra.mxu0 %v245
        %814 = vmatprep.subr.mxu0 0.0
        %815 = vmatpush2.msra.mxu0 0.0
        %816 = vmatprep.subr.mxu0 0.0
        %817 = vmatpush2.msra.mxu0 0.0
        %818 = vmatprep.subr.mxu0 0.0
        %819 = vmatpush2.msra.mxu0 0.0
        %820 = vmatprep.subr.mxu0 0.0
        %821 = vmatpush2.msra.mxu0 0.0
        %822 = vmatprep.subr.mxu0 0.0
        %823 = vmatpush2.msra.mxu0 0.0
        %824 = vmatprep.subr.mxu0 0.0
        %825 = vmatpush2.msra.mxu0 0.0
        %826 = vmatprep.subr.mxu0 0.0
        %827 = vmatpush2.msra.mxu0 0.0
        %828 = vmatprep.subr.mxu0 0.0
        %829 = vmatpush2.msra.mxu0 0.0
        %830 = vmatprep.subr.mxu0 0.0
        %831 = vmatpush2.msra.mxu0 0.0
        %832 = vmatprep.subr.mxu0 0.0
        %833 = vmatpush2.msra.mxu0 0.0
        %834 = vmatprep.subr.mxu0 0.0
        %835 = vmatpush2.msra.mxu0 0.0
        %836 = vmatprep.subr.mxu0 0.0
        %837 = vmatpush2.msra.mxu0 0.0
        %838 = vmatprep.subr.mxu0 0.0
        %839 = vmatpush2.msra.mxu0 0.0
        %840 = vmatprep.subr.mxu0 0.0
        %841 = vmatpush2.msra.mxu0 0.0
        %842 = vmatprep.subr.mxu0 0.0
        %843 = vmatpush2.msra.mxu0 0.0
        %844 = vmatprep.subr.mxu0 0.0
        %845 = vmatpush2.msra.mxu0 0.0
        %846 = vmatprep.mubr.f32.mxu0 0.0
        %847 = vmatmul.mubr.f32.gmra.mxu0 %v709
        %v848 = vpop.f32.mrf.mxu0
        %v849 = vadd.f32 %v468, %v848
        %v850 = vpop.f32.mrf.mxu0
        %v851 = vadd.f32 %v472, %v850
        %852 = vdwg.mxu0
        %853 = vmatprep.subr.mxu0 0.0
        %854 = vmatpush1.msra.mxu0 0.0
        %855 = vmatprep.subr.mxu0 0.0
        %856 = vmatpush1.msra.mxu0 0.0
        %857 = vmatprep.subr.mxu0 0.0
        %858 = vmatpush1.msra.mxu0 0.0
        %859 = vmatprep.subr.mxu0 0.0
        %860 = vmatpush1.msra.mxu0 0.0
        %861 = vmatprep.subr.mxu0 0.0
        %862 = vmatpush1.msra.mxu0 0.0
        %863 = vmatprep.subr.mxu0 0.0
        %864 = vmatpush1.msra.mxu0 0.0
        %865 = vmatprep.subr.mxu0 0.0
        %866 = vmatpush1.msra.mxu0 0.0
        %867 = vmatprep.subr.mxu0 0.0
        %868 = vmatpush1.msra.mxu0 0.0
        %869 = vmatprep.subr.mxu0 0.0
        %870 = vmatpush1.msra.mxu0 0.0
        %871 = vmatprep.subr.mxu0 0.0
        %872 = vmatpush1.msra.mxu0 0.0
        %873 = vmatprep.subr.mxu0 0.0
        %874 = vmatpush1.msra.mxu0 0.0
        %875 = vmatprep.subr.mxu0 0.0
        %876 = vmatpush1.msra.mxu0 0.0
        %877 = vmatprep.subr.mxu0 %v398
        %878 = vmatpush1.msra.mxu0 %v397
        %879 = vmatprep.subr.mxu0 %v348
        %880 = vmatpush1.msra.mxu0 %v347
        %881 = vmatprep.subr.mxu0 %v298
        %882 = vmatpush1.msra.mxu0 %v297
        %883 = vmatprep.subr.mxu0 %v248
        %884 = vmatpush1.msra.mxu0 %v247
        %885 = vmatprep.subr.mxu0 0.0
        %886 = vmatpush2.msra.mxu0 0.0
        %887 = vmatprep.subr.mxu0 0.0
        %888 = vmatpush2.msra.mxu0 0.0
        %889 = vmatprep.subr.mxu0 0.0
        %890 = vmatpush2.msra.mxu0 0.0
        %891 = vmatprep.subr.mxu0 0.0
        %892 = vmatpush2.msra.mxu0 0.0
        %893 = vmatprep.subr.mxu0 0.0
        %894 = vmatpush2.msra.mxu0 0.0
        %895 = vmatprep.subr.mxu0 0.0
        %896 = vmatpush2.msra.mxu0 0.0
        %897 = vmatprep.subr.mxu0 0.0
        %898 = vmatpush2.msra.mxu0 0.0
        %899 = vmatprep.subr.mxu0 0.0
        %900 = vmatpush2.msra.mxu0 0.0
        %901 = vmatprep.subr.mxu0 0.0
        %902 = vmatpush2.msra.mxu0 0.0
        %903 = vmatprep.subr.mxu0 0.0
        %904 = vmatpush2.msra.mxu0 0.0
        %905 = vmatprep.subr.mxu0 0.0
        %906 = vmatpush2.msra.mxu0 0.0
        %907 = vmatprep.subr.mxu0 0.0
        %908 = vmatpush2.msra.mxu0 0.0
        %909 = vmatprep.subr.mxu0 0.0
        %910 = vmatpush2.msra.mxu0 0.0
        %911 = vmatprep.subr.mxu0 0.0
        %912 = vmatpush2.msra.mxu0 0.0
        %913 = vmatprep.subr.mxu0 0.0
        %914 = vmatpush2.msra.mxu0 0.0
        %915 = vmatprep.subr.mxu0 0.0
        %916 = vmatpush2.msra.mxu0 0.0
        %917 = vmatprep.mubr.f32.mxu0 0.0
        %918 = vmatmul.mubr.f32.gmra.mxu0 %v709
        %v919 = vpop.f32.mrf.mxu0
        %v920 = vadd.f32 %v476, %v919
        %v921 = vpop.f32.mrf.mxu0
        %v922 = vadd.f32 %v480, %v921
        %923 = vdwg.mxu0
        %924 = vmatprep.subr.mxu0 0.0
        %925 = vmatpush1.msra.mxu0 0.0
        %926 = vmatprep.subr.mxu0 0.0
        %927 = vmatpush1.msra.mxu0 0.0
        %928 = vmatprep.subr.mxu0 0.0
        %929 = vmatpush1.msra.mxu0 0.0
        %930 = vmatprep.subr.mxu0 0.0
        %931 = vmatpush1.msra.mxu0 0.0
        %932 = vmatprep.subr.mxu0 0.0
        %933 = vmatpush1.msra.mxu0 0.0
        %934 = vmatprep.subr.mxu0 0.0
        %935 = vmatpush1.msra.mxu0 0.0
        %936 = vmatprep.subr.mxu0 0.0
        %937 = vmatpush1.msra.mxu0 0.0
        %938 = vmatprep.subr.mxu0 0.0
        %939 = vmatpush1.msra.mxu0 0.0
        %940 = vmatprep.subr.mxu0 0.0
        %941 = vmatpush1.msra.mxu0 0.0
        %942 = vmatprep.subr.mxu0 0.0
        %943 = vmatpush1.msra.mxu0 0.0
        %944 = vmatprep.subr.mxu0 0.0
        %945 = vmatpush1.msra.mxu0 0.0
        %946 = vmatprep.subr.mxu0 0.0
        %947 = vmatpush1.msra.mxu0 0.0
        %948 = vmatprep.subr.mxu0 %v400
        %949 = vmatpush1.msra.mxu0 %v399
        %950 = vmatprep.subr.mxu0 %v350
        %951 = vmatpush1.msra.mxu0 %v349
        %952 = vmatprep.subr.mxu0 %v300
        %953 = vmatpush1.msra.mxu0 %v299
        %954 = vmatprep.subr.mxu0 %v250
        %955 = vmatpush1.msra.mxu0 %v249
        %956 = vmatprep.subr.mxu0 0.0
        %957 = vmatpush2.msra.mxu0 0.0
        %958 = vmatprep.subr.mxu0 0.0
        %959 = vmatpush2.msra.mxu0 0.0
        %960 = vmatprep.subr.mxu0 0.0
        %961 = vmatpush2.msra.mxu0 0.0
        %962 = vmatprep.subr.mxu0 0.0
        %963 = vmatpush2.msra.mxu0 0.0
        %964 = vmatprep.subr.mxu0 0.0
        %965 = vmatpush2.msra.mxu0 0.0
        %966 = vmatprep.subr.mxu0 0.0
        %967 = vmatpush2.msra.mxu0 0.0
        %968 = vmatprep.subr.mxu0 0.0
        %969 = vmatpush2.msra.mxu0 0.0
        %970 = vmatprep.subr.mxu0 0.0
        %971 = vmatpush2.msra.mxu0 0.0
        %972 = vmatprep.subr.mxu0 0.0
        %973 = vmatpush2.msra.mxu0 0.0
        %974 = vmatprep.subr.mxu0 0.0
        %975 = vmatpush2.msra.mxu0 0.0
        %976 = vmatprep.subr.mxu0 0.0
        %977 = vmatpush2.msra.mxu0 0.0
        %978 = vmatprep.subr.mxu0 0.0
        %979 = vmatpush2.msra.mxu0 0.0
        %980 = vmatprep.subr.mxu0 0.0
        %981 = vmatpush2.msra.mxu0 0.0
        %982 = vmatprep.subr.mxu0 0.0
        %983 = vmatpush2.msra.mxu0 0.0
        %984 = vmatprep.subr.mxu0 0.0
        %985 = vmatpush2.msra.mxu0 0.0
        %986 = vmatprep.subr.mxu0 0.0
        %987 = vmatpush2.msra.mxu0 0.0
        %988 = vmatprep.mubr.f32.mxu0 0.0
        %989 = vmatmul.mubr.f32.gmra.mxu0 %v709
        %v990 = vpop.f32.mrf.mxu0
        %v991 = vadd.f32 %v484, %v990
        %v992 = vpop.f32.mrf.mxu0
        %v993 = vadd.f32 %v488, %v992
        %994 = vdwg.mxu0
        %995 = vmatprep.subr.mxu0 0.0
        %996 = vmatpush1.msra.mxu0 0.0
        %997 = vmatprep.subr.mxu0 0.0
        %998 = vmatpush1.msra.mxu0 0.0
        %999 = vmatprep.subr.mxu0 0.0
        %1000 = vmatpush1.msra.mxu0 0.0
        %1001 = vmatprep.subr.mxu0 0.0
        %1002 = vmatpush1.msra.mxu0 0.0
        %1003 = vmatprep.subr.mxu0 0.0
        %1004 = vmatpush1.msra.mxu0 0.0
        %1005 = vmatprep.subr.mxu0 0.0
        %1006 = vmatpush1.msra.mxu0 0.0
        %1007 = vmatprep.subr.mxu0 0.0
        %1008 = vmatpush1.msra.mxu0 0.0
        %1009 = vmatprep.subr.mxu0 0.0
        %1010 = vmatpush1.msra.mxu0 0.0
        %1011 = vmatprep.subr.mxu0 0.0
        %1012 = vmatpush1.msra.mxu0 0.0
        %1013 = vmatprep.subr.mxu0 0.0
        %1014 = vmatpush1.msra.mxu0 0.0
        %1015 = vmatprep.subr.mxu0 0.0
        %1016 = vmatpush1.msra.mxu0 0.0
        %1017 = vmatprep.subr.mxu0 0.0
        %1018 = vmatpush1.msra.mxu0 0.0
        %1019 = vmatprep.subr.mxu0 %v402
        %1020 = vmatpush1.msra.mxu0 %v401
        %1021 = vmatprep.subr.mxu0 %v352
        %1022 = vmatpush1.msra.mxu0 %v351
        %1023 = vmatprep.subr.mxu0 %v302
        %1024 = vmatpush1.msra.mxu0 %v301
        %1025 = vmatprep.subr.mxu0 %v252
        %1026 = vmatpush1.msra.mxu0 %v251
        %1027 = vmatprep.subr.mxu0 0.0
        %1028 = vmatpush2.msra.mxu0 0.0
        %1029 = vmatprep.subr.mxu0 0.0
        %1030 = vmatpush2.msra.mxu0 0.0
        %1031 = vmatprep.subr.mxu0 0.0
        %1032 = vmatpush2.msra.mxu0 0.0
        %1033 = vmatprep.subr.mxu0 0.0
        %1034 = vmatpush2.msra.mxu0 0.0
        %1035 = vmatprep.subr.mxu0 0.0
        %1036 = vmatpush2.msra.mxu0 0.0
        %1037 = vmatprep.subr.mxu0 0.0
        %1038 = vmatpush2.msra.mxu0 0.0
        %1039 = vmatprep.subr.mxu0 0.0
        %1040 = vmatpush2.msra.mxu0 0.0
        %1041 = vmatprep.subr.mxu0 0.0
        %1042 = vmatpush2.msra.mxu0 0.0
        %1043 = vmatprep.subr.mxu0 0.0
        %1044 = vmatpush2.msra.mxu0 0.0
        %1045 = vmatprep.subr.mxu0 0.0
        %1046 = vmatpush2.msra.mxu0 0.0
        %1047 = vmatprep.subr.mxu0 0.0
        %1048 = vmatpush2.msra.mxu0 0.0
        %1049 = vmatprep.subr.mxu0 0.0
        %1050 = vmatpush2.msra.mxu0 0.0
        %1051 = vmatprep.subr.mxu0 0.0
        %1052 = vmatpush2.msra.mxu0 0.0
        %1053 = vmatprep.subr.mxu0 0.0
        %1054 = vmatpush2.msra.mxu0 0.0
        %1055 = vmatprep.subr.mxu0 0.0
        %1056 = vmatpush2.msra.mxu0 0.0
        %1057 = vmatprep.subr.mxu0 0.0
        %1058 = vmatpush2.msra.mxu0 0.0
        %1059 = vmatprep.mubr.f32.mxu0 0.0
        %1060 = vmatmul.mubr.f32.gmra.mxu0 %v709
        %v1061 = vpop.f32.mrf.mxu0
        %v1062 = vadd.f32 %v492, %v1061
        %v1063 = vpop.f32.mrf.mxu0
        %v1064 = vadd.f32 %v496, %v1063
        %1065 = vdwg.mxu0
        %1066 = vmatprep.subr.mxu0 0.0
        %1067 = vmatpush1.msra.mxu0 0.0
        %1068 = vmatprep.subr.mxu0 0.0
        %1069 = vmatpush1.msra.mxu0 0.0
        %1070 = vmatprep.subr.mxu0 0.0
        %1071 = vmatpush1.msra.mxu0 0.0
        %1072 = vmatprep.subr.mxu0 0.0
        %1073 = vmatpush1.msra.mxu0 0.0
        %1074 = vmatprep.subr.mxu0 0.0
        %1075 = vmatpush1.msra.mxu0 0.0
        %1076 = vmatprep.subr.mxu0 0.0
        %1077 = vmatpush1.msra.mxu0 0.0
        %1078 = vmatprep.subr.mxu0 0.0
        %1079 = vmatpush1.msra.mxu0 0.0
        %1080 = vmatprep.subr.mxu0 0.0
        %1081 = vmatpush1.msra.mxu0 0.0
        %1082 = vmatprep.subr.mxu0 0.0
        %1083 = vmatpush1.msra.mxu0 0.0
        %1084 = vmatprep.subr.mxu0 0.0
        %1085 = vmatpush1.msra.mxu0 0.0
        %1086 = vmatprep.subr.mxu0 0.0
        %1087 = vmatpush1.msra.mxu0 0.0
        %1088 = vmatprep.subr.mxu0 0.0
        %1089 = vmatpush1.msra.mxu0 0.0
        %1090 = vmatprep.subr.mxu0 %v404
        %1091 = vmatpush1.msra.mxu0 %v403
        %1092 = vmatprep.subr.mxu0 %v354
        %1093 = vmatpush1.msra.mxu0 %v353
        %1094 = vmatprep.subr.mxu0 %v304
        %1095 = vmatpush1.msra.mxu0 %v303
        %1096 = vmatprep.subr.mxu0 %v254
        %1097 = vmatpush1.msra.mxu0 %v253
        %1098 = vmatprep.subr.mxu0 0.0
        %1099 = vmatpush2.msra.mxu0 0.0
        %1100 = vmatprep.subr.mxu0 0.0
        %1101 = vmatpush2.msra.mxu0 0.0
        %1102 = vmatprep.subr.mxu0 0.0
        %1103 = vmatpush2.msra.mxu0 0.0
        %1104 = vmatprep.subr.mxu0 0.0
        %1105 = vmatpush2.msra.mxu0 0.0
        %1106 = vmatprep.subr.mxu0 0.0
        %1107 = vmatpush2.msra.mxu0 0.0
        %1108 = vmatprep.subr.mxu0 0.0
        %1109 = vmatpush2.msra.mxu0 0.0
        %1110 = vmatprep.subr.mxu0 0.0
        %1111 = vmatpush2.msra.mxu0 0.0
        %1112 = vmatprep.subr.mxu0 0.0
        %1113 = vmatpush2.msra.mxu0 0.0
        %1114 = vmatprep.subr.mxu0 0.0
        %1115 = vmatpush2.msra.mxu0 0.0
        %1116 = vmatprep.subr.mxu0 0.0
        %1117 = vmatpush2.msra.mxu0 0.0
        %1118 = vmatprep.subr.mxu0 0.0
        %1119 = vmatpush2.msra.mxu0 0.0
        %1120 = vmatprep.subr.mxu0 0.0
        %1121 = vmatpush2.msra.mxu0 0.0
        %1122 = vmatprep.subr.mxu0 0.0
        %1123 = vmatpush2.msra.mxu0 0.0
        %1124 = vmatprep.subr.mxu0 0.0
        %1125 = vmatpush2.msra.mxu0 0.0
        %1126 = vmatprep.subr.mxu0 0.0
        %1127 = vmatpush2.msra.mxu0 0.0
        %1128 = vmatprep.subr.mxu0 0.0
        %1129 = vmatpush2.msra.mxu0 0.0
        %1130 = vmatprep.mubr.f32.mxu0 0.0
        %1131 = vmatmul.mubr.f32.gmra.mxu0 %v709
        %v1132 = vpop.f32.mrf.mxu0
        %v1133 = vadd.f32 %v500, %v1132
        %v1134 = vpop.f32.mrf.mxu0
        %v1135 = vadd.f32 %v504, %v1134
        %1136 = vdwg.mxu0
        %1137 = vmatprep.subr.mxu0 0.0
        %1138 = vmatpush1.msra.mxu0 0.0
        %1139 = vmatprep.subr.mxu0 0.0
        %1140 = vmatpush1.msra.mxu0 0.0
        %1141 = vmatprep.subr.mxu0 0.0
        %1142 = vmatpush1.msra.mxu0 0.0
        %1143 = vmatprep.subr.mxu0 0.0
        %1144 = vmatpush1.msra.mxu0 0.0
        %1145 = vmatprep.subr.mxu0 0.0
        %1146 = vmatpush1.msra.mxu0 0.0
        %1147 = vmatprep.subr.mxu0 0.0
        %1148 = vmatpush1.msra.mxu0 0.0
        %1149 = vmatprep.subr.mxu0 0.0
        %1150 = vmatpush1.msra.mxu0 0.0
        %1151 = vmatprep.subr.mxu0 0.0
        %1152 = vmatpush1.msra.mxu0 0.0
        %1153 = vmatprep.subr.mxu0 0.0
        %1154 = vmatpush1.msra.mxu0 0.0
        %1155 = vmatprep.subr.mxu0 0.0
        %1156 = vmatpush1.msra.mxu0 0.0
        %1157 = vmatprep.subr.mxu0 0.0
        %1158 = vmatpush1.msra.mxu0 0.0
        %1159 = vmatprep.subr.mxu0 0.0
        %1160 = vmatpush1.msra.mxu0 0.0
        %1161 = vmatprep.subr.mxu0 %v406
        %1162 = vmatpush1.msra.mxu0 %v405
        %1163 = vmatprep.subr.mxu0 %v356
        %1164 = vmatpush1.msra.mxu0 %v355
        %1165 = vmatprep.subr.mxu0 %v306
        %1166 = vmatpush1.msra.mxu0 %v305
        %1167 = vmatprep.subr.mxu0 %v256
        %1168 = vmatpush1.msra.mxu0 %v255
        %1169 = vmatprep.subr.mxu0 0.0
        %1170 = vmatpush2.msra.mxu0 0.0
        %1171 = vmatprep.subr.mxu0 0.0
        %1172 = vmatpush2.msra.mxu0 0.0
        %1173 = vmatprep.subr.mxu0 0.0
        %1174 = vmatpush2.msra.mxu0 0.0
        %1175 = vmatprep.subr.mxu0 0.0
        %1176 = vmatpush2.msra.mxu0 0.0
        %1177 = vmatprep.subr.mxu0 0.0
        %1178 = vmatpush2.msra.mxu0 0.0
        %1179 = vmatprep.subr.mxu0 0.0
        %1180 = vmatpush2.msra.mxu0 0.0
        %1181 = vmatprep.subr.mxu0 0.0
        %1182 = vmatpush2.msra.mxu0 0.0
        %1183 = vmatprep.subr.mxu0 0.0
        %1184 = vmatpush2.msra.mxu0 0.0
        %1185 = vmatprep.subr.mxu0 0.0
        %1186 = vmatpush2.msra.mxu0 0.0
        %1187 = vmatprep.subr.mxu0 0.0
        %1188 = vmatpush2.msra.mxu0 0.0
        %1189 = vmatprep.subr.mxu0 0.0
        %1190 = vmatpush2.msra.mxu0 0.0
        %1191 = vmatprep.subr.mxu0 0.0
        %1192 = vmatpush2.msra.mxu0 0.0
        %1193 = vmatprep.subr.mxu0 0.0
        %1194 = vmatpush2.msra.mxu0 0.0
        %1195 = vmatprep.subr.mxu0 0.0
        %1196 = vmatpush2.msra.mxu0 0.0
        %1197 = vmatprep.subr.mxu0 0.0
        %1198 = vmatpush2.msra.mxu0 0.0
        %1199 = vmatprep.subr.mxu0 0.0
        %1200 = vmatpush2.msra.mxu0 0.0
        %1201 = vmatprep.mubr.f32.mxu0 0.0
        %1202 = vmatmul.mubr.f32.gmra.mxu0 %v709
        %v1203 = vpop.f32.mrf.mxu0
        %v1204 = vadd.f32 %v508, %v1203
        %v1205 = vpop.f32.mrf.mxu0
        %v1206 = vadd.f32 %v512, %v1205
        %1207 = vdwg.mxu0
        %1208 = vmatprep.subr.mxu0 0.0
        %1209 = vmatpush1.msra.mxu0 0.0
        %1210 = vmatprep.subr.mxu0 0.0
        %1211 = vmatpush1.msra.mxu0 0.0
        %1212 = vmatprep.subr.mxu0 0.0
        %1213 = vmatpush1.msra.mxu0 0.0
        %1214 = vmatprep.subr.mxu0 0.0
        %1215 = vmatpush1.msra.mxu0 0.0
        %1216 = vmatprep.subr.mxu0 0.0
        %1217 = vmatpush1.msra.mxu0 0.0
        %1218 = vmatprep.subr.mxu0 0.0
        %1219 = vmatpush1.msra.mxu0 0.0
        %1220 = vmatprep.subr.mxu0 0.0
        %1221 = vmatpush1.msra.mxu0 0.0
        %1222 = vmatprep.subr.mxu0 0.0
        %1223 = vmatpush1.msra.mxu0 0.0
        %1224 = vmatprep.subr.mxu0 0.0
        %1225 = vmatpush1.msra.mxu0 0.0
        %1226 = vmatprep.subr.mxu0 0.0
        %1227 = vmatpush1.msra.mxu0 0.0
        %1228 = vmatprep.subr.mxu0 0.0
        %1229 = vmatpush1.msra.mxu0 0.0
        %1230 = vmatprep.subr.mxu0 0.0
        %1231 = vmatpush1.msra.mxu0 0.0
        %1232 = vmatprep.subr.mxu0 %v408
        %1233 = vmatpush1.msra.mxu0 %v407
        %1234 = vmatprep.subr.mxu0 %v358
        %1235 = vmatpush1.msra.mxu0 %v357
        %1236 = vmatprep.subr.mxu0 %v308
        %1237 = vmatpush1.msra.mxu0 %v307
        %1238 = vmatprep.subr.mxu0 %v258
        %1239 = vmatpush1.msra.mxu0 %v257
        %1240 = vmatprep.subr.mxu0 0.0
        %1241 = vmatpush2.msra.mxu0 0.0
        %1242 = vmatprep.subr.mxu0 0.0
        %1243 = vmatpush2.msra.mxu0 0.0
        %1244 = vmatprep.subr.mxu0 0.0
        %1245 = vmatpush2.msra.mxu0 0.0
        %1246 = vmatprep.subr.mxu0 0.0
        %1247 = vmatpush2.msra.mxu0 0.0
        %1248 = vmatprep.subr.mxu0 0.0
        %1249 = vmatpush2.msra.mxu0 0.0
        %1250 = vmatprep.subr.mxu0 0.0
        %1251 = vmatpush2.msra.mxu0 0.0
        %1252 = vmatprep.subr.mxu0 0.0
        %1253 = vmatpush2.msra.mxu0 0.0
        %1254 = vmatprep.subr.mxu0 0.0
        %1255 = vmatpush2.msra.mxu0 0.0
        %1256 = vmatprep.subr.mxu0 0.0
        %1257 = vmatpush2.msra.mxu0 0.0
        %1258 = vmatprep.subr.mxu0 0.0
        %1259 = vmatpush2.msra.mxu0 0.0
        %1260 = vmatprep.subr.mxu0 0.0
        %1261 = vmatpush2.msra.mxu0 0.0
        %1262 = vmatprep.subr.mxu0 0.0
        %1263 = vmatpush2.msra.mxu0 0.0
        %1264 = vmatprep.subr.mxu0 0.0
        %1265 = vmatpush2.msra.mxu0 0.0
        %1266 = vmatprep.subr.mxu0 0.0
        %1267 = vmatpush2.msra.mxu0 0.0
        %1268 = vmatprep.subr.mxu0 0.0
        %1269 = vmatpush2.msra.mxu0 0.0
        %1270 = vmatprep.subr.mxu0 0.0
        %1271 = vmatpush2.msra.mxu0 0.0
        %1272 = vmatprep.mubr.f32.mxu0 0.0
        %1273 = vmatmul.mubr.f32.gmra.mxu0 %v709
        %v1274 = vpop.f32.mrf.mxu0
        %v1275 = vadd.f32 %v516, %v1274
        %v1276 = vpop.f32.mrf.mxu0
        %v1277 = vadd.f32 %v520, %v1276
        %1278 = vdwg.mxu0
        %1279 = vmatprep.subr.mxu0 0.0
        %1280 = vmatpush1.msra.mxu0 0.0
        %1281 = vmatprep.subr.mxu0 0.0
        %1282 = vmatpush1.msra.mxu0 0.0
        %1283 = vmatprep.subr.mxu0 0.0
        %1284 = vmatpush1.msra.mxu0 0.0
        %1285 = vmatprep.subr.mxu0 0.0
        %1286 = vmatpush1.msra.mxu0 0.0
        %1287 = vmatprep.subr.mxu0 0.0
        %1288 = vmatpush1.msra.mxu0 0.0
        %1289 = vmatprep.subr.mxu0 0.0
        %1290 = vmatpush1.msra.mxu0 0.0
        %1291 = vmatprep.subr.mxu0 0.0
        %1292 = vmatpush1.msra.mxu0 0.0
        %1293 = vmatprep.subr.mxu0 0.0
        %1294 = vmatpush1.msra.mxu0 0.0
        %1295 = vmatprep.subr.mxu0 0.0
        %1296 = vmatpush1.msra.mxu0 0.0
        %1297 = vmatprep.subr.mxu0 0.0
        %1298 = vmatpush1.msra.mxu0 0.0
        %1299 = vmatprep.subr.mxu0 0.0
        %1300 = vmatpush1.msra.mxu0 0.0
        %1301 = vmatprep.subr.mxu0 0.0
        %1302 = vmatpush1.msra.mxu0 0.0
        %1303 = vmatprep.subr.mxu0 %v410
        %1304 = vmatpush1.msra.mxu0 %v409
        %1305 = vmatprep.subr.mxu0 %v360
        %1306 = vmatpush1.msra.mxu0 %v359
        %1307 = vmatprep.subr.mxu0 %v310
        %1308 = vmatpush1.msra.mxu0 %v309
        %1309 = vmatprep.subr.mxu0 %v260
        %1310 = vmatpush1.msra.mxu0 %v259
        %1311 = vmatprep.subr.mxu0 0.0
        %1312 = vmatpush2.msra.mxu0 0.0
        %1313 = vmatprep.subr.mxu0 0.0
        %1314 = vmatpush2.msra.mxu0 0.0
        %1315 = vmatprep.subr.mxu0 0.0
        %1316 = vmatpush2.msra.mxu0 0.0
        %1317 = vmatprep.subr.mxu0 0.0
        %1318 = vmatpush2.msra.mxu0 0.0
        %1319 = vmatprep.subr.mxu0 0.0
        %1320 = vmatpush2.msra.mxu0 0.0
        %1321 = vmatprep.subr.mxu0 0.0
        %1322 = vmatpush2.msra.mxu0 0.0
        %1323 = vmatprep.subr.mxu0 0.0
        %1324 = vmatpush2.msra.mxu0 0.0
        %1325 = vmatprep.subr.mxu0 0.0
        %1326 = vmatpush2.msra.mxu0 0.0
        %1327 = vmatprep.subr.mxu0 0.0
        %1328 = vmatpush2.msra.mxu0 0.0
        %1329 = vmatprep.subr.mxu0 0.0
        %1330 = vmatpush2.msra.mxu0 0.0
        %1331 = vmatprep.subr.mxu0 0.0
        %1332 = vmatpush2.msra.mxu0 0.0
        %1333 = vmatprep.subr.mxu0 0.0
        %1334 = vmatpush2.msra.mxu0 0.0
        %1335 = vmatprep.subr.mxu0 0.0
        %1336 = vmatpush2.msra.mxu0 0.0
        %1337 = vmatprep.subr.mxu0 0.0
        %1338 = vmatpush2.msra.mxu0 0.0
        %1339 = vmatprep.subr.mxu0 0.0
        %1340 = vmatpush2.msra.mxu0 0.0
        %1341 = vmatprep.subr.mxu0 0.0
        %1342 = vmatpush2.msra.mxu0 0.0
        %1343 = vmatprep.mubr.f32.mxu0 0.0
        %1344 = vmatmul.mubr.f32.gmra.mxu0 %v709
        %v1345 = vpop.f32.mrf.mxu0
        %v1346 = vadd.f32 %v524, %v1345
        %v1347 = vpop.f32.mrf.mxu0
        %v1348 = vadd.f32 %v528, %v1347
        %1349 = vdwg.mxu0
        %1350 = vmatprep.subr.mxu0 0.0
        %1351 = vmatpush1.msra.mxu0 0.0
        %1352 = vmatprep.subr.mxu0 0.0
        %1353 = vmatpush1.msra.mxu0 0.0
        %1354 = vmatprep.subr.mxu0 0.0
        %1355 = vmatpush1.msra.mxu0 0.0
        %1356 = vmatprep.subr.mxu0 0.0
        %1357 = vmatpush1.msra.mxu0 0.0
        %1358 = vmatprep.subr.mxu0 0.0
        %1359 = vmatpush1.msra.mxu0 0.0
        %1360 = vmatprep.subr.mxu0 0.0
        %1361 = vmatpush1.msra.mxu0 0.0
        %1362 = vmatprep.subr.mxu0 0.0
        %1363 = vmatpush1.msra.mxu0 0.0
        %1364 = vmatprep.subr.mxu0 0.0
        %1365 = vmatpush1.msra.mxu0 0.0
        %1366 = vmatprep.subr.mxu0 0.0
        %1367 = vmatpush1.msra.mxu0 0.0
        %1368 = vmatprep.subr.mxu0 0.0
        %1369 = vmatpush1.msra.mxu0 0.0
        %1370 = vmatprep.subr.mxu0 0.0
        %1371 = vmatpush1.msra.mxu0 0.0
        %1372 = vmatprep.subr.mxu0 0.0
        %1373 = vmatpush1.msra.mxu0 0.0
        %1374 = vmatprep.subr.mxu0 %v412
        %1375 = vmatpush1.msra.mxu0 %v411
        %1376 = vmatprep.subr.mxu0 %v362
        %1377 = vmatpush1.msra.mxu0 %v361
        %1378 = vmatprep.subr.mxu0 %v312
        %1379 = vmatpush1.msra.mxu0 %v311
        %1380 = vmatprep.subr.mxu0 %v262
        %1381 = vmatpush1.msra.mxu0 %v261
        %1382 = vmatprep.subr.mxu0 0.0
        %1383 = vmatpush2.msra.mxu0 0.0
        %1384 = vmatprep.subr.mxu0 0.0
        %1385 = vmatpush2.msra.mxu0 0.0
        %1386 = vmatprep.subr.mxu0 0.0
        %1387 = vmatpush2.msra.mxu0 0.0
        %1388 = vmatprep.subr.mxu0 0.0
        %1389 = vmatpush2.msra.mxu0 0.0
        %1390 = vmatprep.subr.mxu0 0.0
        %1391 = vmatpush2.msra.mxu0 0.0
        %1392 = vmatprep.subr.mxu0 0.0
        %1393 = vmatpush2.msra.mxu0 0.0
        %1394 = vmatprep.subr.mxu0 0.0
        %1395 = vmatpush2.msra.mxu0 0.0
        %1396 = vmatprep.subr.mxu0 0.0
        %1397 = vmatpush2.msra.mxu0 0.0
        %1398 = vmatprep.subr.mxu0 0.0
        %1399 = vmatpush2.msra.mxu0 0.0
        %1400 = vmatprep.subr.mxu0 0.0
        %1401 = vmatpush2.msra.mxu0 0.0
        %1402 = vmatprep.subr.mxu0 0.0
        %1403 = vmatpush2.msra.mxu0 0.0
        %1404 = vmatprep.subr.mxu0 0.0
        %1405 = vmatpush2.msra.mxu0 0.0
        %1406 = vmatprep.subr.mxu0 0.0
        %1407 = vmatpush2.msra.mxu0 0.0
        %1408 = vmatprep.subr.mxu0 0.0
        %1409 = vmatpush2.msra.mxu0 0.0
        %1410 = vmatprep.subr.mxu0 0.0
        %1411 = vmatpush2.msra.mxu0 0.0
        %1412 = vmatprep.subr.mxu0 0.0
        %1413 = vmatpush2.msra.mxu0 0.0
        %1414 = vmatprep.mubr.f32.mxu0 0.0
        %1415 = vmatmul.mubr.f32.gmra.mxu0 %v709
        %v1416 = vpop.f32.mrf.mxu0
        %v1417 = vadd.f32 %v532, %v1416
        %v1418 = vpop.f32.mrf.mxu0
        %v1419 = vadd.f32 %v536, %v1418
        %1420 = vdwg.mxu0
        %1421 = vmatprep.subr.mxu0 0.0
        %1422 = vmatpush1.msra.mxu0 0.0
        %1423 = vmatprep.subr.mxu0 0.0
        %1424 = vmatpush1.msra.mxu0 0.0
        %1425 = vmatprep.subr.mxu0 0.0
        %1426 = vmatpush1.msra.mxu0 0.0
        %1427 = vmatprep.subr.mxu0 0.0
        %1428 = vmatpush1.msra.mxu0 0.0
        %1429 = vmatprep.subr.mxu0 0.0
        %1430 = vmatpush1.msra.mxu0 0.0
        %1431 = vmatprep.subr.mxu0 0.0
        %1432 = vmatpush1.msra.mxu0 0.0
        %1433 = vmatprep.subr.mxu0 0.0
        %1434 = vmatpush1.msra.mxu0 0.0
        %1435 = vmatprep.subr.mxu0 0.0
        %1436 = vmatpush1.msra.mxu0 0.0
        %1437 = vmatprep.subr.mxu0 0.0
        %1438 = vmatpush1.msra.mxu0 0.0
        %1439 = vmatprep.subr.mxu0 0.0
        %1440 = vmatpush1.msra.mxu0 0.0
        %1441 = vmatprep.subr.mxu0 0.0
        %1442 = vmatpush1.msra.mxu0 0.0
        %1443 = vmatprep.subr.mxu0 0.0
        %1444 = vmatpush1.msra.mxu0 0.0
        %1445 = vmatprep.subr.mxu0 %v414
        %1446 = vmatpush1.msra.mxu0 %v413
        %1447 = vmatprep.subr.mxu0 %v364
        %1448 = vmatpush1.msra.mxu0 %v363
        %1449 = vmatprep.subr.mxu0 %v314
        %1450 = vmatpush1.msra.mxu0 %v313
        %1451 = vmatprep.subr.mxu0 %v264
        %1452 = vmatpush1.msra.mxu0 %v263
        %1453 = vmatprep.subr.mxu0 0.0
        %1454 = vmatpush2.msra.mxu0 0.0
        %1455 = vmatprep.subr.mxu0 0.0
        %1456 = vmatpush2.msra.mxu0 0.0
        %1457 = vmatprep.subr.mxu0 0.0
        %1458 = vmatpush2.msra.mxu0 0.0
        %1459 = vmatprep.subr.mxu0 0.0
        %1460 = vmatpush2.msra.mxu0 0.0
        %1461 = vmatprep.subr.mxu0 0.0
        %1462 = vmatpush2.msra.mxu0 0.0
        %1463 = vmatprep.subr.mxu0 0.0
        %1464 = vmatpush2.msra.mxu0 0.0
        %1465 = vmatprep.subr.mxu0 0.0
        %1466 = vmatpush2.msra.mxu0 0.0
        %1467 = vmatprep.subr.mxu0 0.0
        %1468 = vmatpush2.msra.mxu0 0.0
        %1469 = vmatprep.subr.mxu0 0.0
        %1470 = vmatpush2.msra.mxu0 0.0
        %1471 = vmatprep.subr.mxu0 0.0
        %1472 = vmatpush2.msra.mxu0 0.0
        %1473 = vmatprep.subr.mxu0 0.0
        %1474 = vmatpush2.msra.mxu0 0.0
        %1475 = vmatprep.subr.mxu0 0.0
        %1476 = vmatpush2.msra.mxu0 0.0
        %1477 = vmatprep.subr.mxu0 0.0
        %1478 = vmatpush2.msra.mxu0 0.0
        %1479 = vmatprep.subr.mxu0 0.0
        %1480 = vmatpush2.msra.mxu0 0.0
        %1481 = vmatprep.subr.mxu0 0.0
        %1482 = vmatpush2.msra.mxu0 0.0
        %1483 = vmatprep.subr.mxu0 0.0
        %1484 = vmatpush2.msra.mxu0 0.0
        %1485 = vmatprep.mubr.f32.mxu0 0.0
        %1486 = vmatmul.mubr.f32.gmra.mxu0 %v709
        %v1487 = vpop.f32.mrf.mxu0
        %v1488 = vadd.f32 %v540, %v1487
        %v1489 = vpop.f32.mrf.mxu0
        %v1490 = vadd.f32 %v544, %v1489
        %1491 = vdwg.mxu0
        %1492 = vmatprep.subr.mxu0 0.0
        %1493 = vmatpush1.msra.mxu0 0.0
        %1494 = vmatprep.subr.mxu0 0.0
        %1495 = vmatpush1.msra.mxu0 0.0
        %1496 = vmatprep.subr.mxu0 0.0
        %1497 = vmatpush1.msra.mxu0 0.0
        %1498 = vmatprep.subr.mxu0 0.0
        %1499 = vmatpush1.msra.mxu0 0.0
        %1500 = vmatprep.subr.mxu0 0.0
        %1501 = vmatpush1.msra.mxu0 0.0
        %1502 = vmatprep.subr.mxu0 0.0
        %1503 = vmatpush1.msra.mxu0 0.0
        %1504 = vmatprep.subr.mxu0 0.0
        %1505 = vmatpush1.msra.mxu0 0.0
        %1506 = vmatprep.subr.mxu0 0.0
        %1507 = vmatpush1.msra.mxu0 0.0
        %1508 = vmatprep.subr.mxu0 0.0
        %1509 = vmatpush1.msra.mxu0 0.0
        %1510 = vmatprep.subr.mxu0 0.0
        %1511 = vmatpush1.msra.mxu0 0.0
        %1512 = vmatprep.subr.mxu0 0.0
        %1513 = vmatpush1.msra.mxu0 0.0
        %1514 = vmatprep.subr.mxu0 0.0
        %1515 = vmatpush1.msra.mxu0 0.0
        %1516 = vmatprep.subr.mxu0 %v416
        %1517 = vmatpush1.msra.mxu0 %v415
        %1518 = vmatprep.subr.mxu0 %v366
        %1519 = vmatpush1.msra.mxu0 %v365
        %1520 = vmatprep.subr.mxu0 %v316
        %1521 = vmatpush1.msra.mxu0 %v315
        %1522 = vmatprep.subr.mxu0 %v266
        %1523 = vmatpush1.msra.mxu0 %v265
        %1524 = vmatprep.subr.mxu0 0.0
        %1525 = vmatpush2.msra.mxu0 0.0
        %1526 = vmatprep.subr.mxu0 0.0
        %1527 = vmatpush2.msra.mxu0 0.0
        %1528 = vmatprep.subr.mxu0 0.0
        %1529 = vmatpush2.msra.mxu0 0.0
        %1530 = vmatprep.subr.mxu0 0.0
        %1531 = vmatpush2.msra.mxu0 0.0
        %1532 = vmatprep.subr.mxu0 0.0
        %1533 = vmatpush2.msra.mxu0 0.0
        %1534 = vmatprep.subr.mxu0 0.0
        %1535 = vmatpush2.msra.mxu0 0.0
        %1536 = vmatprep.subr.mxu0 0.0
        %1537 = vmatpush2.msra.mxu0 0.0
        %1538 = vmatprep.subr.mxu0 0.0
        %1539 = vmatpush2.msra.mxu0 0.0
        %1540 = vmatprep.subr.mxu0 0.0
        %1541 = vmatpush2.msra.mxu0 0.0
        %1542 = vmatprep.subr.mxu0 0.0
        %1543 = vmatpush2.msra.mxu0 0.0
        %1544 = vmatprep.subr.mxu0 0.0
        %1545 = vmatpush2.msra.mxu0 0.0
        %1546 = vmatprep.subr.mxu0 0.0
        %1547 = vmatpush2.msra.mxu0 0.0
        %1548 = vmatprep.subr.mxu0 0.0
        %1549 = vmatpush2.msra.mxu0 0.0
        %1550 = vmatprep.subr.mxu0 0.0
        %1551 = vmatpush2.msra.mxu0 0.0
        %1552 = vmatprep.subr.mxu0 0.0
        %1553 = vmatpush2.msra.mxu0 0.0
        %1554 = vmatprep.subr.mxu0 0.0
        %1555 = vmatpush2.msra.mxu0 0.0
        %1556 = vmatprep.mubr.f32.mxu0 0.0
        %1557 = vmatmul.mubr.f32.gmra.mxu0 %v709
        %v1558 = vpop.f32.mrf.mxu0
        %v1559 = vadd.f32 %v548, %v1558
        %v1560 = vpop.f32.mrf.mxu0
        %v1561 = vadd.f32 %v552, %v1560
        %1562 = vdwg.mxu0
        %1563 = vmatprep.subr.mxu0 0.0
        %1564 = vmatpush1.msra.mxu0 0.0
        %1565 = vmatprep.subr.mxu0 0.0
        %1566 = vmatpush1.msra.mxu0 0.0
        %1567 = vmatprep.subr.mxu0 0.0
        %1568 = vmatpush1.msra.mxu0 0.0
        %1569 = vmatprep.subr.mxu0 0.0
        %1570 = vmatpush1.msra.mxu0 0.0
        %1571 = vmatprep.subr.mxu0 0.0
        %1572 = vmatpush1.msra.mxu0 0.0
        %1573 = vmatprep.subr.mxu0 0.0
        %1574 = vmatpush1.msra.mxu0 0.0
        %1575 = vmatprep.subr.mxu0 0.0
        %1576 = vmatpush1.msra.mxu0 0.0
        %1577 = vmatprep.subr.mxu0 0.0
        %1578 = vmatpush1.msra.mxu0 0.0
        %1579 = vmatprep.subr.mxu0 0.0
        %1580 = vmatpush1.msra.mxu0 0.0
        %1581 = vmatprep.subr.mxu0 0.0
        %1582 = vmatpush1.msra.mxu0 0.0
        %1583 = vmatprep.subr.mxu0 0.0
        %1584 = vmatpush1.msra.mxu0 0.0
        %1585 = vmatprep.subr.mxu0 0.0
        %1586 = vmatpush1.msra.mxu0 0.0
        %1587 = vmatprep.subr.mxu0 %v418
        %1588 = vmatpush1.msra.mxu0 %v417
        %1589 = vmatprep.subr.mxu0 %v368
        %1590 = vmatpush1.msra.mxu0 %v367
        %1591 = vmatprep.subr.mxu0 %v318
        %1592 = vmatpush1.msra.mxu0 %v317
        %1593 = vmatprep.subr.mxu0 %v268
        %1594 = vmatpush1.msra.mxu0 %v267
        %1595 = vmatprep.subr.mxu0 0.0
        %1596 = vmatpush2.msra.mxu0 0.0
        %1597 = vmatprep.subr.mxu0 0.0
        %1598 = vmatpush2.msra.mxu0 0.0
        %1599 = vmatprep.subr.mxu0 0.0
        %1600 = vmatpush2.msra.mxu0 0.0
        %1601 = vmatprep.subr.mxu0 0.0
        %1602 = vmatpush2.msra.mxu0 0.0
        %1603 = vmatprep.subr.mxu0 0.0
        %1604 = vmatpush2.msra.mxu0 0.0
        %1605 = vmatprep.subr.mxu0 0.0
        %1606 = vmatpush2.msra.mxu0 0.0
        %1607 = vmatprep.subr.mxu0 0.0
        %1608 = vmatpush2.msra.mxu0 0.0
        %1609 = vmatprep.subr.mxu0 0.0
        %1610 = vmatpush2.msra.mxu0 0.0
        %1611 = vmatprep.subr.mxu0 0.0
        %1612 = vmatpush2.msra.mxu0 0.0
        %1613 = vmatprep.subr.mxu0 0.0
        %1614 = vmatpush2.msra.mxu0 0.0
        %1615 = vmatprep.subr.mxu0 0.0
        %1616 = vmatpush2.msra.mxu0 0.0
        %1617 = vmatprep.subr.mxu0 0.0
        %1618 = vmatpush2.msra.mxu0 0.0
        %1619 = vmatprep.subr.mxu0 0.0
        %1620 = vmatpush2.msra.mxu0 0.0
        %1621 = vmatprep.subr.mxu0 0.0
        %1622 = vmatpush2.msra.mxu0 0.0
        %1623 = vmatprep.subr.mxu0 0.0
        %1624 = vmatpush2.msra.mxu0 0.0
        %1625 = vmatprep.subr.mxu0 0.0
        %1626 = vmatpush2.msra.mxu0 0.0
        %1627 = vmatprep.mubr.f32.mxu0 0.0
        %1628 = vmatmul.mubr.f32.gmra.mxu0 %v709
        %v1629 = vpop.f32.mrf.mxu0
        %v1630 = vadd.f32 %v556, %v1629
        %v1631 = vpop.f32.mrf.mxu0
        %v1632 = vadd.f32 %v560, %v1631
        %1633 = vdwg.mxu0
        %1634 = vmatprep.subr.mxu0 0.0
        %1635 = vmatpush1.msra.mxu0 0.0
        %1636 = vmatprep.subr.mxu0 0.0
        %1637 = vmatpush1.msra.mxu0 0.0
        %1638 = vmatprep.subr.mxu0 0.0
        %1639 = vmatpush1.msra.mxu0 0.0
        %1640 = vmatprep.subr.mxu0 0.0
        %1641 = vmatpush1.msra.mxu0 0.0
        %1642 = vmatprep.subr.mxu0 0.0
        %1643 = vmatpush1.msra.mxu0 0.0
        %1644 = vmatprep.subr.mxu0 0.0
        %1645 = vmatpush1.msra.mxu0 0.0
        %1646 = vmatprep.subr.mxu0 0.0
        %1647 = vmatpush1.msra.mxu0 0.0
        %1648 = vmatprep.subr.mxu0 0.0
        %1649 = vmatpush1.msra.mxu0 0.0
        %1650 = vmatprep.subr.mxu0 0.0
        %1651 = vmatpush1.msra.mxu0 0.0
        %1652 = vmatprep.subr.mxu0 0.0
        %1653 = vmatpush1.msra.mxu0 0.0
        %1654 = vmatprep.subr.mxu0 0.0
        %1655 = vmatpush1.msra.mxu0 0.0
        %1656 = vmatprep.subr.mxu0 0.0
        %1657 = vmatpush1.msra.mxu0 0.0
        %1658 = vmatprep.subr.mxu0 %v420
        %1659 = vmatpush1.msra.mxu0 %v419
        %1660 = vmatprep.subr.mxu0 %v370
        %1661 = vmatpush1.msra.mxu0 %v369
        %1662 = vmatprep.subr.mxu0 %v320
        %1663 = vmatpush1.msra.mxu0 %v319
        %1664 = vmatprep.subr.mxu0 %v270
        %1665 = vmatpush1.msra.mxu0 %v269
        %1666 = vmatprep.subr.mxu0 0.0
        %1667 = vmatpush2.msra.mxu0 0.0
        %1668 = vmatprep.subr.mxu0 0.0
        %1669 = vmatpush2.msra.mxu0 0.0
        %1670 = vmatprep.subr.mxu0 0.0
        %1671 = vmatpush2.msra.mxu0 0.0
        %1672 = vmatprep.subr.mxu0 0.0
        %1673 = vmatpush2.msra.mxu0 0.0
        %1674 = vmatprep.subr.mxu0 0.0
        %1675 = vmatpush2.msra.mxu0 0.0
        %1676 = vmatprep.subr.mxu0 0.0
        %1677 = vmatpush2.msra.mxu0 0.0
        %1678 = vmatprep.subr.mxu0 0.0
        %1679 = vmatpush2.msra.mxu0 0.0
        %1680 = vmatprep.subr.mxu0 0.0
        %1681 = vmatpush2.msra.mxu0 0.0
        %1682 = vmatprep.subr.mxu0 0.0
        %1683 = vmatpush2.msra.mxu0 0.0
        %1684 = vmatprep.subr.mxu0 0.0
        %1685 = vmatpush2.msra.mxu0 0.0
        %1686 = vmatprep.subr.mxu0 0.0
        %1687 = vmatpush2.msra.mxu0 0.0
        %1688 = vmatprep.subr.mxu0 0.0
        %1689 = vmatpush2.msra.mxu0 0.0
        %1690 = vmatprep.subr.mxu0 0.0
        %1691 = vmatpush2.msra.mxu0 0.0
        %1692 = vmatprep.subr.mxu0 0.0
        %1693 = vmatpush2.msra.mxu0 0.0
        %1694 = vmatprep.subr.mxu0 0.0
        %1695 = vmatpush2.msra.mxu0 0.0
        %1696 = vmatprep.subr.mxu0 0.0
        %1697 = vmatpush2.msra.mxu0 0.0
        %1698 = vmatprep.mubr.f32.mxu0 0.0
        %1699 = vmatmul.mubr.f32.gmra.mxu0 %v709
        %v1700 = vpop.f32.mrf.mxu0
        %v1701 = vadd.f32 %v564, %v1700
        %v1702 = vpop.f32.mrf.mxu0
        %v1703 = vadd.f32 %v568, %v1702
        %1704 = vdwg.mxu0
        %1705 = vmatprep.subr.mxu0 0.0
        %1706 = vmatpush1.msra.mxu0 0.0
        %1707 = vmatprep.subr.mxu0 0.0
        %1708 = vmatpush1.msra.mxu0 0.0
        %1709 = vmatprep.subr.mxu0 0.0
        %1710 = vmatpush1.msra.mxu0 0.0
        %1711 = vmatprep.subr.mxu0 0.0
        %1712 = vmatpush1.msra.mxu0 0.0
        %1713 = vmatprep.subr.mxu0 0.0
        %1714 = vmatpush1.msra.mxu0 0.0
        %1715 = vmatprep.subr.mxu0 0.0
        %1716 = vmatpush1.msra.mxu0 0.0
        %1717 = vmatprep.subr.mxu0 0.0
        %1718 = vmatpush1.msra.mxu0 0.0
        %1719 = vmatprep.subr.mxu0 0.0
        %1720 = vmatpush1.msra.mxu0 0.0
        %1721 = vmatprep.subr.mxu0 0.0
        %1722 = vmatpush1.msra.mxu0 0.0
        %1723 = vmatprep.subr.mxu0 0.0
        %1724 = vmatpush1.msra.mxu0 0.0
        %1725 = vmatprep.subr.mxu0 0.0
        %1726 = vmatpush1.msra.mxu0 0.0
        %1727 = vmatprep.subr.mxu0 0.0
        %1728 = vmatpush1.msra.mxu0 0.0
        %1729 = vmatprep.subr.mxu0 %v422
        %1730 = vmatpush1.msra.mxu0 %v421
        %1731 = vmatprep.subr.mxu0 %v372
        %1732 = vmatpush1.msra.mxu0 %v371
        %1733 = vmatprep.subr.mxu0 %v322
        %1734 = vmatpush1.msra.mxu0 %v321
        %1735 = vmatprep.subr.mxu0 %v272
        %1736 = vmatpush1.msra.mxu0 %v271
        %1737 = vmatprep.subr.mxu0 0.0
        %1738 = vmatpush2.msra.mxu0 0.0
        %1739 = vmatprep.subr.mxu0 0.0
        %1740 = vmatpush2.msra.mxu0 0.0
        %1741 = vmatprep.subr.mxu0 0.0
        %1742 = vmatpush2.msra.mxu0 0.0
        %1743 = vmatprep.subr.mxu0 0.0
        %1744 = vmatpush2.msra.mxu0 0.0
        %1745 = vmatprep.subr.mxu0 0.0
        %1746 = vmatpush2.msra.mxu0 0.0
        %1747 = vmatprep.subr.mxu0 0.0
        %1748 = vmatpush2.msra.mxu0 0.0
        %1749 = vmatprep.subr.mxu0 0.0
        %1750 = vmatpush2.msra.mxu0 0.0
        %1751 = vmatprep.subr.mxu0 0.0
        %1752 = vmatpush2.msra.mxu0 0.0
        %1753 = vmatprep.subr.mxu0 0.0
        %1754 = vmatpush2.msra.mxu0 0.0
        %1755 = vmatprep.subr.mxu0 0.0
        %1756 = vmatpush2.msra.mxu0 0.0
        %1757 = vmatprep.subr.mxu0 0.0
        %1758 = vmatpush2.msra.mxu0 0.0
        %1759 = vmatprep.subr.mxu0 0.0
        %1760 = vmatpush2.msra.mxu0 0.0
        %1761 = vmatprep.subr.mxu0 0.0
        %1762 = vmatpush2.msra.mxu0 0.0
        %1763 = vmatprep.subr.mxu0 0.0
        %1764 = vmatpush2.msra.mxu0 0.0
        %1765 = vmatprep.subr.mxu0 0.0
        %1766 = vmatpush2.msra.mxu0 0.0
        %1767 = vmatprep.subr.mxu0 0.0
        %1768 = vmatpush2.msra.mxu0 0.0
        %1769 = vmatprep.mubr.f32.mxu0 0.0
        %1770 = vmatmul.mubr.f32.gmra.mxu0 %v709
        %v1771 = vpop.f32.mrf.mxu0
        %v1772 = vadd.f32 %v572, %v1771
        %v1773 = vpop.f32.mrf.mxu0
        %v1774 = vadd.f32 %v576, %v1773
        %1775 = vdwg.mxu0
        %1776 = vmatprep.subr.mxu0 0.0
        %1777 = vmatpush1.msra.mxu0 0.0
        %1778 = vmatprep.subr.mxu0 0.0
        %1779 = vmatpush1.msra.mxu0 0.0
        %1780 = vmatprep.subr.mxu0 0.0
        %1781 = vmatpush1.msra.mxu0 0.0
        %1782 = vmatprep.subr.mxu0 0.0
        %1783 = vmatpush1.msra.mxu0 0.0
        %1784 = vmatprep.subr.mxu0 0.0
        %1785 = vmatpush1.msra.mxu0 0.0
        %1786 = vmatprep.subr.mxu0 0.0
        %1787 = vmatpush1.msra.mxu0 0.0
        %1788 = vmatprep.subr.mxu0 0.0
        %1789 = vmatpush1.msra.mxu0 0.0
        %1790 = vmatprep.subr.mxu0 0.0
        %1791 = vmatpush1.msra.mxu0 0.0
        %1792 = vmatprep.subr.mxu0 0.0
        %1793 = vmatpush1.msra.mxu0 0.0
        %1794 = vmatprep.subr.mxu0 0.0
        %1795 = vmatpush1.msra.mxu0 0.0
        %1796 = vmatprep.subr.mxu0 0.0
        %1797 = vmatpush1.msra.mxu0 0.0
        %1798 = vmatprep.subr.mxu0 0.0
        %1799 = vmatpush1.msra.mxu0 0.0
        %1800 = vmatprep.subr.mxu0 %v424
        %1801 = vmatpush1.msra.mxu0 %v423
        %1802 = vmatprep.subr.mxu0 %v374
        %1803 = vmatpush1.msra.mxu0 %v373
        %1804 = vmatprep.subr.mxu0 %v324
        %1805 = vmatpush1.msra.mxu0 %v323
        %1806 = vmatprep.subr.mxu0 %v274
        %1807 = vmatpush1.msra.mxu0 %v273
        %1808 = vmatprep.subr.mxu0 0.0
        %1809 = vmatpush2.msra.mxu0 0.0
        %1810 = vmatprep.subr.mxu0 0.0
        %1811 = vmatpush2.msra.mxu0 0.0
        %1812 = vmatprep.subr.mxu0 0.0
        %1813 = vmatpush2.msra.mxu0 0.0
        %1814 = vmatprep.subr.mxu0 0.0
        %1815 = vmatpush2.msra.mxu0 0.0
        %1816 = vmatprep.subr.mxu0 0.0
        %1817 = vmatpush2.msra.mxu0 0.0
        %1818 = vmatprep.subr.mxu0 0.0
        %1819 = vmatpush2.msra.mxu0 0.0
        %1820 = vmatprep.subr.mxu0 0.0
        %1821 = vmatpush2.msra.mxu0 0.0
        %1822 = vmatprep.subr.mxu0 0.0
        %1823 = vmatpush2.msra.mxu0 0.0
        %1824 = vmatprep.subr.mxu0 0.0
        %1825 = vmatpush2.msra.mxu0 0.0
        %1826 = vmatprep.subr.mxu0 0.0
        %1827 = vmatpush2.msra.mxu0 0.0
        %1828 = vmatprep.subr.mxu0 0.0
        %1829 = vmatpush2.msra.mxu0 0.0
        %1830 = vmatprep.subr.mxu0 0.0
        %1831 = vmatpush2.msra.mxu0 0.0
        %1832 = vmatprep.subr.mxu0 0.0
        %1833 = vmatpush2.msra.mxu0 0.0
        %1834 = vmatprep.subr.mxu0 0.0
        %1835 = vmatpush2.msra.mxu0 0.0
        %1836 = vmatprep.subr.mxu0 0.0
        %1837 = vmatpush2.msra.mxu0 0.0
        %1838 = vmatprep.subr.mxu0 0.0
        %1839 = vmatpush2.msra.mxu0 0.0
        %1840 = vmatprep.mubr.f32.mxu0 0.0
        %1841 = vmatmul.mubr.f32.gmra.mxu0 %v709
        %v1842 = vpop.f32.mrf.mxu0
        %v1843 = vadd.f32 %v580, %v1842
        %v1844 = vpop.f32.mrf.mxu0
        %v1845 = vadd.f32 %v584, %v1844
        %1846 = vdwg.mxu0
        %1847 = vmatprep.subr.mxu0 0.0
        %1848 = vmatpush1.msra.mxu0 0.0
        %1849 = vmatprep.subr.mxu0 0.0
        %1850 = vmatpush1.msra.mxu0 0.0
        %1851 = vmatprep.subr.mxu0 0.0
        %1852 = vmatpush1.msra.mxu0 0.0
        %1853 = vmatprep.subr.mxu0 0.0
        %1854 = vmatpush1.msra.mxu0 0.0
        %1855 = vmatprep.subr.mxu0 0.0
        %1856 = vmatpush1.msra.mxu0 0.0
        %1857 = vmatprep.subr.mxu0 0.0
        %1858 = vmatpush1.msra.mxu0 0.0
        %1859 = vmatprep.subr.mxu0 0.0
        %1860 = vmatpush1.msra.mxu0 0.0
        %1861 = vmatprep.subr.mxu0 0.0
        %1862 = vmatpush1.msra.mxu0 0.0
        %1863 = vmatprep.subr.mxu0 0.0
        %1864 = vmatpush1.msra.mxu0 0.0
        %1865 = vmatprep.subr.mxu0 0.0
        %1866 = vmatpush1.msra.mxu0 0.0
        %1867 = vmatprep.subr.mxu0 0.0
        %1868 = vmatpush1.msra.mxu0 0.0
        %1869 = vmatprep.subr.mxu0 0.0
        %1870 = vmatpush1.msra.mxu0 0.0
        %1871 = vmatprep.subr.mxu0 %v426
        %1872 = vmatpush1.msra.mxu0 %v425
        %1873 = vmatprep.subr.mxu0 %v376
        %1874 = vmatpush1.msra.mxu0 %v375
        %1875 = vmatprep.subr.mxu0 %v326
        %1876 = vmatpush1.msra.mxu0 %v325
        %1877 = vmatprep.subr.mxu0 %v276
        %1878 = vmatpush1.msra.mxu0 %v275
        %1879 = vmatprep.subr.mxu0 0.0
        %1880 = vmatpush2.msra.mxu0 0.0
        %1881 = vmatprep.subr.mxu0 0.0
        %1882 = vmatpush2.msra.mxu0 0.0
        %1883 = vmatprep.subr.mxu0 0.0
        %1884 = vmatpush2.msra.mxu0 0.0
        %1885 = vmatprep.subr.mxu0 0.0
        %1886 = vmatpush2.msra.mxu0 0.0
        %1887 = vmatprep.subr.mxu0 0.0
        %1888 = vmatpush2.msra.mxu0 0.0
        %1889 = vmatprep.subr.mxu0 0.0
        %1890 = vmatpush2.msra.mxu0 0.0
        %1891 = vmatprep.subr.mxu0 0.0
        %1892 = vmatpush2.msra.mxu0 0.0
        %1893 = vmatprep.subr.mxu0 0.0
        %1894 = vmatpush2.msra.mxu0 0.0
        %1895 = vmatprep.subr.mxu0 0.0
        %1896 = vmatpush2.msra.mxu0 0.0
        %1897 = vmatprep.subr.mxu0 0.0
        %1898 = vmatpush2.msra.mxu0 0.0
        %1899 = vmatprep.subr.mxu0 0.0
        %1900 = vmatpush2.msra.mxu0 0.0
        %1901 = vmatprep.subr.mxu0 0.0
        %1902 = vmatpush2.msra.mxu0 0.0
        %1903 = vmatprep.subr.mxu0 0.0
        %1904 = vmatpush2.msra.mxu0 0.0
        %1905 = vmatprep.subr.mxu0 0.0
        %1906 = vmatpush2.msra.mxu0 0.0
        %1907 = vmatprep.subr.mxu0 0.0
        %1908 = vmatpush2.msra.mxu0 0.0
        %1909 = vmatprep.subr.mxu0 0.0
        %1910 = vmatpush2.msra.mxu0 0.0
        %1911 = vmatprep.mubr.f32.mxu0 0.0
        %1912 = vmatmul.mubr.f32.gmra.mxu0 %v709
        %v1913 = vpop.f32.mrf.mxu0
        %v1914 = vadd.f32 %v588, %v1913
        %v1915 = vpop.f32.mrf.mxu0
        %v1916 = vadd.f32 %v592, %v1915
        %1917 = vdwg.mxu0
        %1918 = vmatprep.subr.mxu0 0.0
        %1919 = vmatpush1.msra.mxu0 0.0
        %1920 = vmatprep.subr.mxu0 0.0
        %1921 = vmatpush1.msra.mxu0 0.0
        %1922 = vmatprep.subr.mxu0 0.0
        %1923 = vmatpush1.msra.mxu0 0.0
        %1924 = vmatprep.subr.mxu0 0.0
        %1925 = vmatpush1.msra.mxu0 0.0
        %1926 = vmatprep.subr.mxu0 0.0
        %1927 = vmatpush1.msra.mxu0 0.0
        %1928 = vmatprep.subr.mxu0 0.0
        %1929 = vmatpush1.msra.mxu0 0.0
        %1930 = vmatprep.subr.mxu0 0.0
        %1931 = vmatpush1.msra.mxu0 0.0
        %1932 = vmatprep.subr.mxu0 0.0
        %1933 = vmatpush1.msra.mxu0 0.0
        %1934 = vmatprep.subr.mxu0 0.0
        %1935 = vmatpush1.msra.mxu0 0.0
        %1936 = vmatprep.subr.mxu0 0.0
        %1937 = vmatpush1.msra.mxu0 0.0
        %1938 = vmatprep.subr.mxu0 0.0
        %1939 = vmatpush1.msra.mxu0 0.0
        %1940 = vmatprep.subr.mxu0 0.0
        %1941 = vmatpush1.msra.mxu0 0.0
        %1942 = vmatprep.subr.mxu0 %v428
        %1943 = vmatpush1.msra.mxu0 %v427
        %1944 = vmatprep.subr.mxu0 %v378
        %1945 = vmatpush1.msra.mxu0 %v377
        %1946 = vmatprep.subr.mxu0 %v328
        %1947 = vmatpush1.msra.mxu0 %v327
        %1948 = vmatprep.subr.mxu0 %v278
        %1949 = vmatpush1.msra.mxu0 %v277
        %1950 = vmatprep.subr.mxu0 0.0
        %1951 = vmatpush2.msra.mxu0 0.0
        %1952 = vmatprep.subr.mxu0 0.0
        %1953 = vmatpush2.msra.mxu0 0.0
        %1954 = vmatprep.subr.mxu0 0.0
        %1955 = vmatpush2.msra.mxu0 0.0
        %1956 = vmatprep.subr.mxu0 0.0
        %1957 = vmatpush2.msra.mxu0 0.0
        %1958 = vmatprep.subr.mxu0 0.0
        %1959 = vmatpush2.msra.mxu0 0.0
        %1960 = vmatprep.subr.mxu0 0.0
        %1961 = vmatpush2.msra.mxu0 0.0
        %1962 = vmatprep.subr.mxu0 0.0
        %1963 = vmatpush2.msra.mxu0 0.0
        %1964 = vmatprep.subr.mxu0 0.0
        %1965 = vmatpush2.msra.mxu0 0.0
        %1966 = vmatprep.subr.mxu0 0.0
        %1967 = vmatpush2.msra.mxu0 0.0
        %1968 = vmatprep.subr.mxu0 0.0
        %1969 = vmatpush2.msra.mxu0 0.0
        %1970 = vmatprep.subr.mxu0 0.0
        %1971 = vmatpush2.msra.mxu0 0.0
        %1972 = vmatprep.subr.mxu0 0.0
        %1973 = vmatpush2.msra.mxu0 0.0
        %1974 = vmatprep.subr.mxu0 0.0
        %1975 = vmatpush2.msra.mxu0 0.0
        %1976 = vmatprep.subr.mxu0 0.0
        %1977 = vmatpush2.msra.mxu0 0.0
        %1978 = vmatprep.subr.mxu0 0.0
        %1979 = vmatpush2.msra.mxu0 0.0
        %1980 = vmatprep.subr.mxu0 0.0
        %1981 = vmatpush2.msra.mxu0 0.0
        %1982 = vmatprep.mubr.f32.mxu0 0.0
        %1983 = vmatmul.mubr.f32.gmra.mxu0 %v709
        %v1984 = vpop.f32.mrf.mxu0
        %v1985 = vadd.f32 %v596, %v1984
        %v1986 = vpop.f32.mrf.mxu0
        %v1987 = vadd.f32 %v600, %v1986
        %1988 = vdwg.mxu0
        %1989 = vmatprep.subr.mxu0 0.0
        %1990 = vmatpush1.msra.mxu0 0.0
        %1991 = vmatprep.subr.mxu0 0.0
        %1992 = vmatpush1.msra.mxu0 0.0
        %1993 = vmatprep.subr.mxu0 0.0
        %1994 = vmatpush1.msra.mxu0 0.0
        %1995 = vmatprep.subr.mxu0 0.0
        %1996 = vmatpush1.msra.mxu0 0.0
        %1997 = vmatprep.subr.mxu0 0.0
        %1998 = vmatpush1.msra.mxu0 0.0
        %1999 = vmatprep.subr.mxu0 0.0
        %2000 = vmatpush1.msra.mxu0 0.0
        %2001 = vmatprep.subr.mxu0 0.0
        %2002 = vmatpush1.msra.mxu0 0.0
        %2003 = vmatprep.subr.mxu0 0.0
        %2004 = vmatpush1.msra.mxu0 0.0
        %2005 = vmatprep.subr.mxu0 0.0
        %2006 = vmatpush1.msra.mxu0 0.0
        %2007 = vmatprep.subr.mxu0 0.0
        %2008 = vmatpush1.msra.mxu0 0.0
        %2009 = vmatprep.subr.mxu0 0.0
        %2010 = vmatpush1.msra.mxu0 0.0
        %2011 = vmatprep.subr.mxu0 0.0
        %2012 = vmatpush1.msra.mxu0 0.0
        %2013 = vmatprep.subr.mxu0 %v430
        %2014 = vmatpush1.msra.mxu0 %v429
        %2015 = vmatprep.subr.mxu0 %v380
        %2016 = vmatpush1.msra.mxu0 %v379
        %2017 = vmatprep.subr.mxu0 %v330
        %2018 = vmatpush1.msra.mxu0 %v329
        %2019 = vmatprep.subr.mxu0 %v280
        %2020 = vmatpush1.msra.mxu0 %v279
        %2021 = vmatprep.subr.mxu0 0.0
        %2022 = vmatpush2.msra.mxu0 0.0
        %2023 = vmatprep.subr.mxu0 0.0
        %2024 = vmatpush2.msra.mxu0 0.0
        %2025 = vmatprep.subr.mxu0 0.0
        %2026 = vmatpush2.msra.mxu0 0.0
        %2027 = vmatprep.subr.mxu0 0.0
        %2028 = vmatpush2.msra.mxu0 0.0
        %2029 = vmatprep.subr.mxu0 0.0
        %2030 = vmatpush2.msra.mxu0 0.0
        %2031 = vmatprep.subr.mxu0 0.0
        %2032 = vmatpush2.msra.mxu0 0.0
        %2033 = vmatprep.subr.mxu0 0.0
        %2034 = vmatpush2.msra.mxu0 0.0
        %2035 = vmatprep.subr.mxu0 0.0
        %2036 = vmatpush2.msra.mxu0 0.0
        %2037 = vmatprep.subr.mxu0 0.0
        %2038 = vmatpush2.msra.mxu0 0.0
        %2039 = vmatprep.subr.mxu0 0.0
        %2040 = vmatpush2.msra.mxu0 0.0
        %2041 = vmatprep.subr.mxu0 0.0
        %2042 = vmatpush2.msra.mxu0 0.0
        %2043 = vmatprep.subr.mxu0 0.0
        %2044 = vmatpush2.msra.mxu0 0.0
        %2045 = vmatprep.subr.mxu0 0.0
        %2046 = vmatpush2.msra.mxu0 0.0
        %2047 = vmatprep.subr.mxu0 0.0
        %2048 = vmatpush2.msra.mxu0 0.0
        %2049 = vmatprep.subr.mxu0 0.0
        %2050 = vmatpush2.msra.mxu0 0.0
        %2051 = vmatprep.subr.mxu0 0.0
        %2052 = vmatpush2.msra.mxu0 0.0
        %2053 = vmatprep.mubr.f32.mxu0 0.0
        %2054 = vmatmul.mubr.f32.gmra.mxu0 %v709
        %v2055 = vpop.f32.mrf.mxu0
        %v2056 = vadd.f32 %v604, %v2055
        %v2057 = vpop.f32.mrf.mxu0
        %v2058 = vadd.f32 %v608, %v2057
        %2059 = vdwg.mxu0
        %2060 = vmatprep.subr.mxu0 0.0
        %2061 = vmatpush1.msra.mxu0 0.0
        %2062 = vmatprep.subr.mxu0 0.0
        %2063 = vmatpush1.msra.mxu0 0.0
        %2064 = vmatprep.subr.mxu0 0.0
        %2065 = vmatpush1.msra.mxu0 0.0
        %2066 = vmatprep.subr.mxu0 0.0
        %2067 = vmatpush1.msra.mxu0 0.0
        %2068 = vmatprep.subr.mxu0 0.0
        %2069 = vmatpush1.msra.mxu0 0.0
        %2070 = vmatprep.subr.mxu0 0.0
        %2071 = vmatpush1.msra.mxu0 0.0
        %2072 = vmatprep.subr.mxu0 0.0
        %2073 = vmatpush1.msra.mxu0 0.0
        %2074 = vmatprep.subr.mxu0 0.0
        %2075 = vmatpush1.msra.mxu0 0.0
        %2076 = vmatprep.subr.mxu0 0.0
        %2077 = vmatpush1.msra.mxu0 0.0
        %2078 = vmatprep.subr.mxu0 0.0
        %2079 = vmatpush1.msra.mxu0 0.0
        %2080 = vmatprep.subr.mxu0 0.0
        %2081 = vmatpush1.msra.mxu0 0.0
        %2082 = vmatprep.subr.mxu0 0.0
        %2083 = vmatpush1.msra.mxu0 0.0
        %2084 = vmatprep.subr.mxu0 %v432
        %2085 = vmatpush1.msra.mxu0 %v431
        %2086 = vmatprep.subr.mxu0 %v382
        %2087 = vmatpush1.msra.mxu0 %v381
        %2088 = vmatprep.subr.mxu0 %v332
        %2089 = vmatpush1.msra.mxu0 %v331
        %2090 = vmatprep.subr.mxu0 %v282
        %2091 = vmatpush1.msra.mxu0 %v281
        %2092 = vmatprep.subr.mxu0 0.0
        %2093 = vmatpush2.msra.mxu0 0.0
        %2094 = vmatprep.subr.mxu0 0.0
        %2095 = vmatpush2.msra.mxu0 0.0
        %2096 = vmatprep.subr.mxu0 0.0
        %2097 = vmatpush2.msra.mxu0 0.0
        %2098 = vmatprep.subr.mxu0 0.0
        %2099 = vmatpush2.msra.mxu0 0.0
        %2100 = vmatprep.subr.mxu0 0.0
        %2101 = vmatpush2.msra.mxu0 0.0
        %2102 = vmatprep.subr.mxu0 0.0
        %2103 = vmatpush2.msra.mxu0 0.0
        %2104 = vmatprep.subr.mxu0 0.0
        %2105 = vmatpush2.msra.mxu0 0.0
        %2106 = vmatprep.subr.mxu0 0.0
        %2107 = vmatpush2.msra.mxu0 0.0
        %2108 = vmatprep.subr.mxu0 0.0
        %2109 = vmatpush2.msra.mxu0 0.0
        %2110 = vmatprep.subr.mxu0 0.0
        %2111 = vmatpush2.msra.mxu0 0.0
        %2112 = vmatprep.subr.mxu0 0.0
        %2113 = vmatpush2.msra.mxu0 0.0
        %2114 = vmatprep.subr.mxu0 0.0
        %2115 = vmatpush2.msra.mxu0 0.0
        %2116 = vmatprep.subr.mxu0 0.0
        %2117 = vmatpush2.msra.mxu0 0.0
        %2118 = vmatprep.subr.mxu0 0.0
        %2119 = vmatpush2.msra.mxu0 0.0
        %2120 = vmatprep.subr.mxu0 0.0
        %2121 = vmatpush2.msra.mxu0 0.0
        %2122 = vmatprep.subr.mxu0 0.0
        %2123 = vmatpush2.msra.mxu0 0.0
        %2124 = vmatprep.mubr.f32.mxu0 0.0
        %2125 = vmatmul.mubr.f32.gmra.mxu0 %v709
        %v2126 = vpop.f32.mrf.mxu0
        %v2127 = vadd.f32 %v612, %v2126
        %v2128 = vpop.f32.mrf.mxu0
        %v2129 = vadd.f32 %v616, %v2128
        %2130 = vdwg.mxu0
        %2131 = vmatprep.subr.mxu0 0.0
        %2132 = vmatpush1.msra.mxu0 0.0
        %2133 = vmatprep.subr.mxu0 0.0
        %2134 = vmatpush1.msra.mxu0 0.0
        %2135 = vmatprep.subr.mxu0 0.0
        %2136 = vmatpush1.msra.mxu0 0.0
        %2137 = vmatprep.subr.mxu0 0.0
        %2138 = vmatpush1.msra.mxu0 0.0
        %2139 = vmatprep.subr.mxu0 0.0
        %2140 = vmatpush1.msra.mxu0 0.0
        %2141 = vmatprep.subr.mxu0 0.0
        %2142 = vmatpush1.msra.mxu0 0.0
        %2143 = vmatprep.subr.mxu0 0.0
        %2144 = vmatpush1.msra.mxu0 0.0
        %2145 = vmatprep.subr.mxu0 0.0
        %2146 = vmatpush1.msra.mxu0 0.0
        %2147 = vmatprep.subr.mxu0 0.0
        %2148 = vmatpush1.msra.mxu0 0.0
        %2149 = vmatprep.subr.mxu0 0.0
        %2150 = vmatpush1.msra.mxu0 0.0
        %2151 = vmatprep.subr.mxu0 0.0
        %2152 = vmatpush1.msra.mxu0 0.0
        %2153 = vmatprep.subr.mxu0 0.0
        %2154 = vmatpush1.msra.mxu0 0.0
        %2155 = vmatprep.subr.mxu0 %v434
        %2156 = vmatpush1.msra.mxu0 %v433
        %2157 = vmatprep.subr.mxu0 %v384
        %2158 = vmatpush1.msra.mxu0 %v383
        %2159 = vmatprep.subr.mxu0 %v334
        %2160 = vmatpush1.msra.mxu0 %v333
        %2161 = vmatprep.subr.mxu0 %v284
        %2162 = vmatpush1.msra.mxu0 %v283
        %2163 = vmatprep.subr.mxu0 0.0
        %2164 = vmatpush2.msra.mxu0 0.0
        %2165 = vmatprep.subr.mxu0 0.0
        %2166 = vmatpush2.msra.mxu0 0.0
        %2167 = vmatprep.subr.mxu0 0.0
        %2168 = vmatpush2.msra.mxu0 0.0
        %2169 = vmatprep.subr.mxu0 0.0
        %2170 = vmatpush2.msra.mxu0 0.0
        %2171 = vmatprep.subr.mxu0 0.0
        %2172 = vmatpush2.msra.mxu0 0.0
        %2173 = vmatprep.subr.mxu0 0.0
        %2174 = vmatpush2.msra.mxu0 0.0
        %2175 = vmatprep.subr.mxu0 0.0
        %2176 = vmatpush2.msra.mxu0 0.0
        %2177 = vmatprep.subr.mxu0 0.0
        %2178 = vmatpush2.msra.mxu0 0.0
        %2179 = vmatprep.subr.mxu0 0.0
        %2180 = vmatpush2.msra.mxu0 0.0
        %2181 = vmatprep.subr.mxu0 0.0
        %2182 = vmatpush2.msra.mxu0 0.0
        %2183 = vmatprep.subr.mxu0 0.0
        %2184 = vmatpush2.msra.mxu0 0.0
        %2185 = vmatprep.subr.mxu0 0.0
        %2186 = vmatpush2.msra.mxu0 0.0
        %2187 = vmatprep.subr.mxu0 0.0
        %2188 = vmatpush2.msra.mxu0 0.0
        %2189 = vmatprep.subr.mxu0 0.0
        %2190 = vmatpush2.msra.mxu0 0.0
        %2191 = vmatprep.subr.mxu0 0.0
        %2192 = vmatpush2.msra.mxu0 0.0
        %2193 = vmatprep.subr.mxu0 0.0
        %2194 = vmatpush2.msra.mxu0 0.0
        %2195 = vmatprep.mubr.f32.mxu0 0.0
        %2196 = vmatmul.mubr.f32.gmra.mxu0 %v709
        %v2197 = vpop.f32.mrf.mxu0
        %v2198 = vadd.f32 %v620, %v2197
        %v2199 = vpop.f32.mrf.mxu0
        %v2200 = vadd.f32 %v624, %v2199
        %2201 = vdwg.mxu0
        %2202 = vmatprep.subr.mxu0 0.0
        %2203 = vmatpush1.msra.mxu0 0.0
        %2204 = vmatprep.subr.mxu0 0.0
        %2205 = vmatpush1.msra.mxu0 0.0
        %2206 = vmatprep.subr.mxu0 0.0
        %2207 = vmatpush1.msra.mxu0 0.0
        %2208 = vmatprep.subr.mxu0 0.0
        %2209 = vmatpush1.msra.mxu0 0.0
        %2210 = vmatprep.subr.mxu0 0.0
        %2211 = vmatpush1.msra.mxu0 0.0
        %2212 = vmatprep.subr.mxu0 0.0
        %2213 = vmatpush1.msra.mxu0 0.0
        %2214 = vmatprep.subr.mxu0 0.0
        %2215 = vmatpush1.msra.mxu0 0.0
        %2216 = vmatprep.subr.mxu0 0.0
        %2217 = vmatpush1.msra.mxu0 0.0
        %2218 = vmatprep.subr.mxu0 0.0
        %2219 = vmatpush1.msra.mxu0 0.0
        %2220 = vmatprep.subr.mxu0 0.0
        %2221 = vmatpush1.msra.mxu0 0.0
        %2222 = vmatprep.subr.mxu0 0.0
        %2223 = vmatpush1.msra.mxu0 0.0
        %2224 = vmatprep.subr.mxu0 0.0
        %2225 = vmatpush1.msra.mxu0 0.0
        %2226 = vmatprep.subr.mxu0 %v436
        %2227 = vmatpush1.msra.mxu0 %v435
        %2228 = vmatprep.subr.mxu0 %v386
        %2229 = vmatpush1.msra.mxu0 %v385
        %2230 = vmatprep.subr.mxu0 %v336
        %2231 = vmatpush1.msra.mxu0 %v335
        %2232 = vmatprep.subr.mxu0 %v286
        %2233 = vmatpush1.msra.mxu0 %v285
        %2234 = vmatprep.subr.mxu0 0.0
        %2235 = vmatpush2.msra.mxu0 0.0
        %2236 = vmatprep.subr.mxu0 0.0
        %2237 = vmatpush2.msra.mxu0 0.0
        %2238 = vmatprep.subr.mxu0 0.0
        %2239 = vmatpush2.msra.mxu0 0.0
        %2240 = vmatprep.subr.mxu0 0.0
        %2241 = vmatpush2.msra.mxu0 0.0
        %2242 = vmatprep.subr.mxu0 0.0
        %2243 = vmatpush2.msra.mxu0 0.0
        %2244 = vmatprep.subr.mxu0 0.0
        %2245 = vmatpush2.msra.mxu0 0.0
        %2246 = vmatprep.subr.mxu0 0.0
        %2247 = vmatpush2.msra.mxu0 0.0
        %2248 = vmatprep.subr.mxu0 0.0
        %2249 = vmatpush2.msra.mxu0 0.0
        %2250 = vmatprep.subr.mxu0 0.0
        %2251 = vmatpush2.msra.mxu0 0.0
        %2252 = vmatprep.subr.mxu0 0.0
        %2253 = vmatpush2.msra.mxu0 0.0
        %2254 = vmatprep.subr.mxu0 0.0
        %2255 = vmatpush2.msra.mxu0 0.0
        %2256 = vmatprep.subr.mxu0 0.0
        %2257 = vmatpush2.msra.mxu0 0.0
        %2258 = vmatprep.subr.mxu0 0.0
        %2259 = vmatpush2.msra.mxu0 0.0
        %2260 = vmatprep.subr.mxu0 0.0
        %2261 = vmatpush2.msra.mxu0 0.0
        %2262 = vmatprep.subr.mxu0 0.0
        %2263 = vmatpush2.msra.mxu0 0.0
        %2264 = vmatprep.subr.mxu0 0.0
        %2265 = vmatpush2.msra.mxu0 0.0
        %2266 = vmatprep.mubr.f32.mxu0 0.0
        %2267 = vmatmul.mubr.f32.gmra.mxu0 %v709
        %v2268 = vpop.f32.mrf.mxu0
        %v2269 = vadd.f32 %v628, %v2268
        %v2270 = vpop.f32.mrf.mxu0
        %v2271 = vadd.f32 %v632, %v2270
        %2272 = vdwg.mxu0
        %2273 = vmatprep.subr.mxu0 0.0
        %2274 = vmatpush1.msra.mxu0 0.0
        %2275 = vmatprep.subr.mxu0 0.0
        %2276 = vmatpush1.msra.mxu0 0.0
        %2277 = vmatprep.subr.mxu0 0.0
        %2278 = vmatpush1.msra.mxu0 0.0
        %2279 = vmatprep.subr.mxu0 0.0
        %2280 = vmatpush1.msra.mxu0 0.0
        %2281 = vmatprep.subr.mxu0 0.0
        %2282 = vmatpush1.msra.mxu0 0.0
        %2283 = vmatprep.subr.mxu0 0.0
        %2284 = vmatpush1.msra.mxu0 0.0
        %2285 = vmatprep.subr.mxu0 0.0
        %2286 = vmatpush1.msra.mxu0 0.0
        %2287 = vmatprep.subr.mxu0 0.0
        %2288 = vmatpush1.msra.mxu0 0.0
        %2289 = vmatprep.subr.mxu0 0.0
        %2290 = vmatpush1.msra.mxu0 0.0
        %2291 = vmatprep.subr.mxu0 0.0
        %2292 = vmatpush1.msra.mxu0 0.0
        %2293 = vmatprep.subr.mxu0 0.0
        %2294 = vmatpush1.msra.mxu0 0.0
        %2295 = vmatprep.subr.mxu0 0.0
        %2296 = vmatpush1.msra.mxu0 0.0
        %2297 = vmatprep.subr.mxu0 %v438
        %2298 = vmatpush1.msra.mxu0 %v437
        %2299 = vmatprep.subr.mxu0 %v388
        %2300 = vmatpush1.msra.mxu0 %v387
        %2301 = vmatprep.subr.mxu0 %v338
        %2302 = vmatpush1.msra.mxu0 %v337
        %2303 = vmatprep.subr.mxu0 %v288
        %2304 = vmatpush1.msra.mxu0 %v287
        %2305 = vmatprep.subr.mxu0 0.0
        %2306 = vmatpush2.msra.mxu0 0.0
        %2307 = vmatprep.subr.mxu0 0.0
        %2308 = vmatpush2.msra.mxu0 0.0
        %2309 = vmatprep.subr.mxu0 0.0
        %2310 = vmatpush2.msra.mxu0 0.0
        %2311 = vmatprep.subr.mxu0 0.0
        %2312 = vmatpush2.msra.mxu0 0.0
        %2313 = vmatprep.subr.mxu0 0.0
        %2314 = vmatpush2.msra.mxu0 0.0
        %2315 = vmatprep.subr.mxu0 0.0
        %2316 = vmatpush2.msra.mxu0 0.0
        %2317 = vmatprep.subr.mxu0 0.0
        %2318 = vmatpush2.msra.mxu0 0.0
        %2319 = vmatprep.subr.mxu0 0.0
        %2320 = vmatpush2.msra.mxu0 0.0
        %2321 = vmatprep.subr.mxu0 0.0
        %2322 = vmatpush2.msra.mxu0 0.0
        %2323 = vmatprep.subr.mxu0 0.0
        %2324 = vmatpush2.msra.mxu0 0.0
        %2325 = vmatprep.subr.mxu0 0.0
        %2326 = vmatpush2.msra.mxu0 0.0
        %2327 = vmatprep.subr.mxu0 0.0
        %2328 = vmatpush2.msra.mxu0 0.0
        %2329 = vmatprep.subr.mxu0 0.0
        %2330 = vmatpush2.msra.mxu0 0.0
        %2331 = vmatprep.subr.mxu0 0.0
        %2332 = vmatpush2.msra.mxu0 0.0
        %2333 = vmatprep.subr.mxu0 0.0
        %2334 = vmatpush2.msra.mxu0 0.0
        %2335 = vmatprep.subr.mxu0 0.0
        %2336 = vmatpush2.msra.mxu0 0.0
        %2337 = vmatprep.mubr.f32.mxu0 0.0
        %2338 = vmatmul.mubr.f32.gmra.mxu0 %v709
        %v2339 = vpop.f32.mrf.mxu0
        %v2340 = vadd.f32 %v636, %v2339
        %v2341 = vpop.f32.mrf.mxu0
        %v2342 = vadd.f32 %v640, %v2341
        %2343 = vdwg.mxu0
        %2344 = vmatprep.subr.mxu0 0.0
        %2345 = vmatpush1.msra.mxu0 0.0
        %2346 = vmatprep.subr.mxu0 0.0
        %2347 = vmatpush1.msra.mxu0 0.0
        %2348 = vmatprep.subr.mxu0 0.0
        %2349 = vmatpush1.msra.mxu0 0.0
        %2350 = vmatprep.subr.mxu0 0.0
        %2351 = vmatpush1.msra.mxu0 0.0
        %2352 = vmatprep.subr.mxu0 0.0
        %2353 = vmatpush1.msra.mxu0 0.0
        %2354 = vmatprep.subr.mxu0 0.0
        %2355 = vmatpush1.msra.mxu0 0.0
        %2356 = vmatprep.subr.mxu0 0.0
        %2357 = vmatpush1.msra.mxu0 0.0
        %2358 = vmatprep.subr.mxu0 0.0
        %2359 = vmatpush1.msra.mxu0 0.0
        %2360 = vmatprep.subr.mxu0 0.0
        %2361 = vmatpush1.msra.mxu0 0.0
        %2362 = vmatprep.subr.mxu0 0.0
        %2363 = vmatpush1.msra.mxu0 0.0
        %2364 = vmatprep.subr.mxu0 0.0
        %2365 = vmatpush1.msra.mxu0 0.0
        %2366 = vmatprep.subr.mxu0 0.0
        %2367 = vmatpush1.msra.mxu0 0.0
        %2368 = vmatprep.subr.mxu0 %v440
        %2369 = vmatpush1.msra.mxu0 %v439
        %2370 = vmatprep.subr.mxu0 %v390
        %2371 = vmatpush1.msra.mxu0 %v389
        %2372 = vmatprep.subr.mxu0 %v340
        %2373 = vmatpush1.msra.mxu0 %v339
        %2374 = vmatprep.subr.mxu0 %v290
        %2375 = vmatpush1.msra.mxu0 %v289
        %2376 = vmatprep.subr.mxu0 0.0
        %2377 = vmatpush2.msra.mxu0 0.0
        %2378 = vmatprep.subr.mxu0 0.0
        %2379 = vmatpush2.msra.mxu0 0.0
        %2380 = vmatprep.subr.mxu0 0.0
        %2381 = vmatpush2.msra.mxu0 0.0
        %2382 = vmatprep.subr.mxu0 0.0
        %2383 = vmatpush2.msra.mxu0 0.0
        %2384 = vmatprep.subr.mxu0 0.0
        %2385 = vmatpush2.msra.mxu0 0.0
        %2386 = vmatprep.subr.mxu0 0.0
        %2387 = vmatpush2.msra.mxu0 0.0
        %2388 = vmatprep.subr.mxu0 0.0
        %2389 = vmatpush2.msra.mxu0 0.0
        %2390 = vmatprep.subr.mxu0 0.0
        %2391 = vmatpush2.msra.mxu0 0.0
        %2392 = vmatprep.subr.mxu0 0.0
        %2393 = vmatpush2.msra.mxu0 0.0
        %2394 = vmatprep.subr.mxu0 0.0
        %2395 = vmatpush2.msra.mxu0 0.0
        %2396 = vmatprep.subr.mxu0 0.0
        %2397 = vmatpush2.msra.mxu0 0.0
        %2398 = vmatprep.subr.mxu0 0.0
        %2399 = vmatpush2.msra.mxu0 0.0
        %2400 = vmatprep.subr.mxu0 0.0
        %2401 = vmatpush2.msra.mxu0 0.0
        %2402 = vmatprep.subr.mxu0 0.0
        %2403 = vmatpush2.msra.mxu0 0.0
        %2404 = vmatprep.subr.mxu0 0.0
        %2405 = vmatpush2.msra.mxu0 0.0
        %2406 = vmatprep.subr.mxu0 0.0
        %2407 = vmatpush2.msra.mxu0 0.0
        %2408 = vmatprep.mubr.f32.mxu0 0.0
        %2409 = vmatmul.mubr.f32.gmra.mxu0 %v709
        %v2410 = vpop.f32.mrf.mxu0
        %v2411 = vadd.f32 %v644, %v2410
        %v2412 = vpop.f32.mrf.mxu0
        %v2413 = vadd.f32 %v648, %v2412
        %2414 = vdwg.mxu0
        %2415 = vmatprep.subr.mxu0 0.0
        %2416 = vmatpush1.msra.mxu0 0.0
        %2417 = vmatprep.subr.mxu0 0.0
        %2418 = vmatpush1.msra.mxu0 0.0
        %2419 = vmatprep.subr.mxu0 0.0
        %2420 = vmatpush1.msra.mxu0 0.0
        %2421 = vmatprep.subr.mxu0 0.0
        %2422 = vmatpush1.msra.mxu0 0.0
        %2423 = vmatprep.subr.mxu0 0.0
        %2424 = vmatpush1.msra.mxu0 0.0
        %2425 = vmatprep.subr.mxu0 0.0
        %2426 = vmatpush1.msra.mxu0 0.0
        %2427 = vmatprep.subr.mxu0 0.0
        %2428 = vmatpush1.msra.mxu0 0.0
        %2429 = vmatprep.subr.mxu0 0.0
        %2430 = vmatpush1.msra.mxu0 0.0
        %2431 = vmatprep.subr.mxu0 0.0
        %2432 = vmatpush1.msra.mxu0 0.0
        %2433 = vmatprep.subr.mxu0 0.0
        %2434 = vmatpush1.msra.mxu0 0.0
        %2435 = vmatprep.subr.mxu0 0.0
        %2436 = vmatpush1.msra.mxu0 0.0
        %2437 = vmatprep.subr.mxu0 0.0
        %2438 = vmatpush1.msra.mxu0 0.0
        %2439 = vmatprep.subr.mxu0 %v442
        %2440 = vmatpush1.msra.mxu0 %v441
        %2441 = vmatprep.subr.mxu0 %v392
        %2442 = vmatpush1.msra.mxu0 %v391
        %2443 = vmatprep.subr.mxu0 %v342
        %2444 = vmatpush1.msra.mxu0 %v341
        %2445 = vmatprep.subr.mxu0 %v292
        %2446 = vmatpush1.msra.mxu0 %v291
        %2447 = vmatprep.subr.mxu0 0.0
        %2448 = vmatpush2.msra.mxu0 0.0
        %2449 = vmatprep.subr.mxu0 0.0
        %2450 = vmatpush2.msra.mxu0 0.0
        %2451 = vmatprep.subr.mxu0 0.0
        %2452 = vmatpush2.msra.mxu0 0.0
        %2453 = vmatprep.subr.mxu0 0.0
        %2454 = vmatpush2.msra.mxu0 0.0
        %2455 = vmatprep.subr.mxu0 0.0
        %2456 = vmatpush2.msra.mxu0 0.0
        %2457 = vmatprep.subr.mxu0 0.0
        %2458 = vmatpush2.msra.mxu0 0.0
        %2459 = vmatprep.subr.mxu0 0.0
        %2460 = vmatpush2.msra.mxu0 0.0
        %2461 = vmatprep.subr.mxu0 0.0
        %2462 = vmatpush2.msra.mxu0 0.0
        %2463 = vmatprep.subr.mxu0 0.0
        %2464 = vmatpush2.msra.mxu0 0.0
        %2465 = vmatprep.subr.mxu0 0.0
        %2466 = vmatpush2.msra.mxu0 0.0
        %2467 = vmatprep.subr.mxu0 0.0
        %2468 = vmatpush2.msra.mxu0 0.0
        %2469 = vmatprep.subr.mxu0 0.0
        %2470 = vmatpush2.msra.mxu0 0.0
        %2471 = vmatprep.subr.mxu0 0.0
        %2472 = vmatpush2.msra.mxu0 0.0
        %2473 = vmatprep.subr.mxu0 0.0
        %2474 = vmatpush2.msra.mxu0 0.0
        %2475 = vmatprep.subr.mxu0 0.0
        %2476 = vmatpush2.msra.mxu0 0.0
        %2477 = vmatprep.subr.mxu0 0.0
        %2478 = vmatpush2.msra.mxu0 0.0
        %2479 = vmatprep.mubr.f32.mxu0 0.0
        %2480 = vmatmul.mubr.f32.gmra.mxu0 %v709
        %v2481 = vpop.f32.mrf.mxu0
        %v2482 = vadd.f32 %v652, %v2481
        %v2483 = vpop.f32.mrf.mxu0
        %v2484 = vadd.f32 %v656, %v2483
        %2485 = vdwg.mxu0
        %v2486 = vmax.f32 %v778, 0.0
        %v2487 = vmax.f32 %v780, 0.0
        %v2488 = vmax.f32 %v849, 0.0
        %v2489 = vmax.f32 %v851, 0.0
        %v2490 = vmax.f32 %v920, 0.0
        %v2491 = vmax.f32 %v922, 0.0
        %v2492 = vmax.f32 %v991, 0.0
        %v2493 = vmax.f32 %v993, 0.0
        %v2494 = vmax.f32 %v1062, 0.0
        %v2495 = vmax.f32 %v1064, 0.0
        %v2496 = vmax.f32 %v1133, 0.0
        %v2497 = vmax.f32 %v1135, 0.0
        %v2498 = vmax.f32 %v1204, 0.0
        %v2499 = vmax.f32 %v1206, 0.0
        %v2500 = vmax.f32 %v1275, 0.0
        %v2501 = vmax.f32 %v1277, 0.0
        %v2502 = vmax.f32 %v1346, 0.0
        %v2503 = vmax.f32 %v1348, 0.0
        %v2504 = vmax.f32 %v1417, 0.0
        %v2505 = vmax.f32 %v1419, 0.0
        %v2506 = vmax.f32 %v1488, 0.0
        %v2507 = vmax.f32 %v1490, 0.0
        %v2508 = vmax.f32 %v1559, 0.0
        %v2509 = vmax.f32 %v1561, 0.0
        %v2510 = vmax.f32 %v1630, 0.0
        %v2511 = vmax.f32 %v1632, 0.0
        %v2512 = vmax.f32 %v1701, 0.0
        %v2513 = vmax.f32 %v1703, 0.0
        %v2514 = vmax.f32 %v1772, 0.0
        %v2515 = vmax.f32 %v1774, 0.0
        %v2516 = vmax.f32 %v1843, 0.0
        %v2517 = vmax.f32 %v1845, 0.0
        %v2518 = vmax.f32 %v1914, 0.0
        %v2519 = vmax.f32 %v1916, 0.0
        %v2520 = vmax.f32 %v1985, 0.0
        %v2521 = vmax.f32 %v1987, 0.0
        %v2522 = vmax.f32 %v2056, 0.0
        %v2523 = vmax.f32 %v2058, 0.0
        %v2524 = vmax.f32 %v2127, 0.0
        %v2525 = vmax.f32 %v2129, 0.0
        %v2526 = vmax.f32 %v2198, 0.0
        %v2527 = vmax.f32 %v2200, 0.0
        %v2528 = vmax.f32 %v2269, 0.0
        %v2529 = vmax.f32 %v2271, 0.0
        %v2530 = vmax.f32 %v2340, 0.0
        %v2531 = vmax.f32 %v2342, 0.0
        %v2532 = vmax.f32 %v2411, 0.0
        %v2533 = vmax.f32 %v2413, 0.0
        %v2534 = vmax.f32 %v2482, 0.0
        %v2535 = vmax.f32 %v2484, 0.0
        %v2586 = vcombine.low %v2486, %v2487
        %v2587 = vcombine.low %v2488, %v2489
        %v2589 = vunpack.c.l.s4 1983009808
        %v2590 = vunpack.c.0.s8 %v2589
        %v2591 = vlaneseq
        %v2592 = vshrl.u32 %v2591, 7
        %v2593 = vsub.s32 %v2590, %v2592
        %v2594 = vrot.slane %v2586, %v2593
        %v2596 = vunpack.c.l.s4 1983009808
        %v2597 = vunpack.c.0.s8 %v2596
        %v2598 = vlaneseq
        %v2599 = vshrl.u32 %v2598, 7
        %v2600 = vsub.s32 %v2597, %v2599
        %v2601 = vrot.slane %v2587, %v2600
        %v2602 = vcombine.low %v2594, %v2601
        %v2603 = vcombine.low %v2490, %v2491
        %v2604 = vcombine.low %v2492, %v2493
        %v2606 = vunpack.c.l.s4 1983009808
        %v2607 = vunpack.c.0.s8 %v2606
        %v2608 = vlaneseq
        %v2609 = vshrl.u32 %v2608, 7
        %v2610 = vsub.s32 %v2607, %v2609
        %v2611 = vrot.slane %v2603, %v2610
        %v2613 = vunpack.c.l.s4 1983009808
        %v2614 = vunpack.c.0.s8 %v2613
        %v2615 = vlaneseq
        %v2616 = vshrl.u32 %v2615, 7
        %v2617 = vsub.s32 %v2614, %v2616
        %v2618 = vrot.slane %v2604, %v2617
        %v2619 = vcombine.low %v2611, %v2618
        %v2620 = vcombine.low %v2494, %v2495
        %v2621 = vcombine.low %v2496, %v2497
        %v2623 = vunpack.c.l.s4 1983009808
        %v2624 = vunpack.c.0.s8 %v2623
        %v2625 = vlaneseq
        %v2626 = vshrl.u32 %v2625, 7
        %v2627 = vsub.s32 %v2624, %v2626
        %v2628 = vrot.slane %v2620, %v2627
        %v2630 = vunpack.c.l.s4 1983009808
        %v2631 = vunpack.c.0.s8 %v2630
        %v2632 = vlaneseq
        %v2633 = vshrl.u32 %v2632, 7
        %v2634 = vsub.s32 %v2631, %v2633
        %v2635 = vrot.slane %v2621, %v2634
        %v2636 = vcombine.low %v2628, %v2635
        %v2637 = vcombine.low %v2498, %v2499
        %v2638 = vcombine.low %v2500, %v2501
        %v2640 = vunpack.c.l.s4 1983009808
        %v2641 = vunpack.c.0.s8 %v2640
        %v2642 = vlaneseq
        %v2643 = vshrl.u32 %v2642, 7
        %v2644 = vsub.s32 %v2641, %v2643
        %v2645 = vrot.slane %v2637, %v2644
        %v2647 = vunpack.c.l.s4 1983009808
        %v2648 = vunpack.c.0.s8 %v2647
        %v2649 = vlaneseq
        %v2650 = vshrl.u32 %v2649, 7
        %v2651 = vsub.s32 %v2648, %v2650
        %v2652 = vrot.slane %v2638, %v2651
        %v2653 = vcombine.low %v2645, %v2652
        %v2654 = vcombine.low %v2502, %v2503
        %v2655 = vcombine.low %v2504, %v2505
        %v2657 = vunpack.c.l.s4 1983009808
        %v2658 = vunpack.c.0.s8 %v2657
        %v2659 = vlaneseq
        %v2660 = vshrl.u32 %v2659, 7
        %v2661 = vsub.s32 %v2658, %v2660
        %v2662 = vrot.slane %v2654, %v2661
        %v2664 = vunpack.c.l.s4 1983009808
        %v2665 = vunpack.c.0.s8 %v2664
        %v2666 = vlaneseq
        %v2667 = vshrl.u32 %v2666, 7
        %v2668 = vsub.s32 %v2665, %v2667
        %v2669 = vrot.slane %v2655, %v2668
        %v2670 = vcombine.low %v2662, %v2669
        %v2671 = vcombine.low %v2506, %v2507
        %v2672 = vcombine.low %v2508, %v2509
        %v2674 = vunpack.c.l.s4 1983009808
        %v2675 = vunpack.c.0.s8 %v2674
        %v2676 = vlaneseq
        %v2677 = vshrl.u32 %v2676, 7
        %v2678 = vsub.s32 %v2675, %v2677
        %v2679 = vrot.slane %v2671, %v2678
        %v2681 = vunpack.c.l.s4 1983009808
        %v2682 = vunpack.c.0.s8 %v2681
        %v2683 = vlaneseq
        %v2684 = vshrl.u32 %v2683, 7
        %v2685 = vsub.s32 %v2682, %v2684
        %v2686 = vrot.slane %v2672, %v2685
        %v2687 = vcombine.low %v2679, %v2686
        %v2688 = vcombine.low %v2510, %v2511
        %v2689 = vcombine.low %v2512, %v2513
        %v2691 = vunpack.c.l.s4 1983009808
        %v2692 = vunpack.c.0.s8 %v2691
        %v2693 = vlaneseq
        %v2694 = vshrl.u32 %v2693, 7
        %v2695 = vsub.s32 %v2692, %v2694
        %v2696 = vrot.slane %v2688, %v2695
        %v2698 = vunpack.c.l.s4 1983009808
        %v2699 = vunpack.c.0.s8 %v2698
        %v2700 = vlaneseq
        %v2701 = vshrl.u32 %v2700, 7
        %v2702 = vsub.s32 %v2699, %v2701
        %v2703 = vrot.slane %v2689, %v2702
        %v2704 = vcombine.low %v2696, %v2703
        %v2705 = vcombine.low %v2514, %v2515
        %v2706 = vcombine.low %v2516, %v2517
        %v2708 = vunpack.c.l.s4 1983009808
        %v2709 = vunpack.c.0.s8 %v2708
        %v2710 = vlaneseq
        %v2711 = vshrl.u32 %v2710, 7
        %v2712 = vsub.s32 %v2709, %v2711
        %v2713 = vrot.slane %v2705, %v2712
        %v2715 = vunpack.c.l.s4 1983009808
        %v2716 = vunpack.c.0.s8 %v2715
        %v2717 = vlaneseq
        %v2718 = vshrl.u32 %v2717, 7
        %v2719 = vsub.s32 %v2716, %v2718
        %v2720 = vrot.slane %v2706, %v2719
        %v2721 = vcombine.low %v2713, %v2720
        %v2722 = vcombine.low %v2518, %v2519
        %v2723 = vcombine.low %v2520, %v2521
        %v2725 = vunpack.c.l.s4 1983009808
        %v2726 = vunpack.c.0.s8 %v2725
        %v2727 = vlaneseq
        %v2728 = vshrl.u32 %v2727, 7
        %v2729 = vsub.s32 %v2726, %v2728
        %v2730 = vrot.slane %v2722, %v2729
        %v2732 = vunpack.c.l.s4 1983009808
        %v2733 = vunpack.c.0.s8 %v2732
        %v2734 = vlaneseq
        %v2735 = vshrl.u32 %v2734, 7
        %v2736 = vsub.s32 %v2733, %v2735
        %v2737 = vrot.slane %v2723, %v2736
        %v2738 = vcombine.low %v2730, %v2737
        %v2739 = vcombine.low %v2522, %v2523
        %v2740 = vcombine.low %v2524, %v2525
        %v2742 = vunpack.c.l.s4 1983009808
        %v2743 = vunpack.c.0.s8 %v2742
        %v2744 = vlaneseq
        %v2745 = vshrl.u32 %v2744, 7
        %v2746 = vsub.s32 %v2743, %v2745
        %v2747 = vrot.slane %v2739, %v2746
        %v2749 = vunpack.c.l.s4 1983009808
        %v2750 = vunpack.c.0.s8 %v2749
        %v2751 = vlaneseq
        %v2752 = vshrl.u32 %v2751, 7
        %v2753 = vsub.s32 %v2750, %v2752
        %v2754 = vrot.slane %v2740, %v2753
        %v2755 = vcombine.low %v2747, %v2754
        %v2756 = vcombine.low %v2526, %v2527
        %v2757 = vcombine.low %v2528, %v2529
        %v2759 = vunpack.c.l.s4 1983009808
        %v2760 = vunpack.c.0.s8 %v2759
        %v2761 = vlaneseq
        %v2762 = vshrl.u32 %v2761, 7
        %v2763 = vsub.s32 %v2760, %v2762
        %v2764 = vrot.slane %v2756, %v2763
        %v2766 = vunpack.c.l.s4 1983009808
        %v2767 = vunpack.c.0.s8 %v2766
        %v2768 = vlaneseq
        %v2769 = vshrl.u32 %v2768, 7
        %v2770 = vsub.s32 %v2767, %v2769
        %v2771 = vrot.slane %v2757, %v2770
        %v2772 = vcombine.low %v2764, %v2771
        %v2773 = vcombine.low %v2530, %v2531
        %v2774 = vcombine.low %v2532, %v2533
        %v2776 = vunpack.c.l.s4 1983009808
        %v2777 = vunpack.c.0.s8 %v2776
        %v2778 = vlaneseq
        %v2779 = vshrl.u32 %v2778, 7
        %v2780 = vsub.s32 %v2777, %v2779
        %v2781 = vrot.slane %v2773, %v2780
        %v2783 = vunpack.c.l.s4 1983009808
        %v2784 = vunpack.c.0.s8 %v2783
        %v2785 = vlaneseq
        %v2786 = vshrl.u32 %v2785, 7
        %v2787 = vsub.s32 %v2784, %v2786
        %v2788 = vrot.slane %v2774, %v2787
        %v2789 = vcombine.low %v2781, %v2788
        %v2790 = vcombine.low %v2534, %v2535
        %v2792 = vunpack.c.l.s4 1983009808
        %v2793 = vunpack.c.0.s8 %v2792
        %v2794 = vlaneseq
        %v2795 = vshrl.u32 %v2794, 7
        %v2796 = vsub.s32 %v2793, %v2795
        %v2797 = vrot.slane %v2790, %v2796
        %2811 = vst [vmem:[%s240] sm:$0xff] %v2602
        %2812 = vst [vmem:[%s240 + $0x8] sm:$0xff] %v2619
        %2813 = vst [vmem:[%s240 + $0x10] sm:$0xff] %v2636
        %2814 = vst [vmem:[%s240 + $0x18] sm:$0xff] %v2653
        %2815 = vst [vmem:[%s240 + $0x20] sm:$0xff] %v2670
        %2816 = vst [vmem:[%s240 + $0x28] sm:$0xff] %v2687
        %2817 = vst [vmem:[%s240 + $0x30] sm:$0xff] %v2704
        %2818 = vst [vmem:[%s240 + $0x38] sm:$0xff] %v2721
        %2819 = vst [vmem:[%s240 + $0x40] sm:$0xff] %v2738
        %2820 = vst [vmem:[%s240 + $0x48] sm:$0xff] %v2755
        %2821 = vst [vmem:[%s240 + $0x50] sm:$0xff] %v2772
        %2822 = vst [vmem:[%s240 + $0x58] sm:$0xff] %v2789
        %2823 = vst [vmem:[%s240 + $0x60] sm:$0xf] %v2797
        %s2824 = smul.u32 50, %s18
        %p2825 = scmp.lt.s32.totalorder %s2824, 199
        %s2826 = scalar_select %p2825, %s2824, 199
        %s2827 = smul.addr %s2826, 2
        %s2828 = scalar_lea.vmem %s3, %s2827
        // Predicated region
        $region45: #{decoder_forward.3} parent=31 // pred_check
          %p2829 = pneg %p109
        $region46: #{decoder_forward.3} parent=31 // pred_check_branch
          %2831 = sbr.rel (%p2829) target = $region48
        $region47: #{decoder_forward.3} parent=31 // pred_region
          %s2832 = smul.u32 50, %s18
        $region48: #{decoder_forward.3} parent=31 // pred_fallthru
          _
      $region32: #{decoder_forward.3} parent=5 // pred_fallthru
        _
      %p2833 = scmp.le.s32.totalorder 2, %s13
      // Predicated region
      $region49: #{decoder_forward.3} parent=5 // pred_check
        %p2834 = pneg %p2833
      $region50: #{decoder_forward.3} parent=5 // pred_check_branch
        %2836 = sbr.rel (%p2834) target = $region52
      $region51: #{decoder_forward.3} parent=5 // pred_region
        %s2837 = ssub.s32 %s13, 2
        // Predicated region
        $region53: #{decoder_forward.3} parent=51 // pred_check
          %p2838 = pneg %p115
        $region54: #{decoder_forward.3} parent=51 // pred_check_branch
          %2840 = sbr.rel (%p2838) target = $region56
        $region55: #{decoder_forward.3} parent=51 // pred_region
          %s2841 = smul.u32 50, %s19
          %p2842 = scmp.lt.s32.totalorder %s2841, 199
          %s2843 = scalar_select %p2842, %s2841, 199
          %s2844 = smul.addr %s2843, 2
          %s2845 = scalar_lea.vmem %s3, %s2844
        $region56: #{decoder_forward.3} parent=51 // pred_fallthru
          _
      $region52: #{decoder_forward.3} parent=5 // pred_fallthru
        _
    $region6: #{decoder_forward.3} parent=1 // loop_footer
      %s17 = sadd.s32 1, %s13
    $region7: #{decoder_forward.3} parent=1 // loop_footer_branch
      %12 = sbr.rel target = $region3
    $region8: #{decoder_forward.3} parent=1 // loop_exit
      _
    %2846 = vsyncpa [#allocation3], 1
    %s2847 = scalar_lea.sflag [#allocation3], 1
    %2848 = vsyncpa %s2847, 1
    %2849 = vsyncpa [#allocation5], 1
    %s2850 = scalar_lea.sflag [#allocation5], 1
    %2851 = vsyncpa %s2850, 1

// kernel: decoder_forward.5
$region0: #{decoder_forward.5}
  #allocation0 [shape = 'u32[]', space=smem, size = 0x4, offset = 0x4, fixed_abs, tag = 'smem constant byte address 0x4 - core index']
  #allocation1 [shape = 'u32[144,128]{1,0:T(1,128)}', space=vmem, size = 0x12000, scoped, tag = 'internal scratch']
  #allocation2 [shape = 'f32[9,6400]{1,0:T(8,128)}', space=vmem, size = 0x64000, scoped, tag = 'scratch operand']
  #allocation3 [shape = 'f32[1,1]{1,0:T(1,128)S(1)}', space=vmem, size = 0x200, scoped, tag = 'scoped memory for decoder_forward.5']
  %s0 = inlined_call_operand.vmem [shape: f32[2,8,6400], index: 0, kind: input, shape index: {}]
  %s1 = inlined_call_operand.vmem [shape: f32[9,8], index: 1, kind: input, shape index: {}]
  %s2 = inlined_call_operand.<no memory space> [shape: f32[1,1], index: 2, kind: input, shape index: {}]
  %s3 = inlined_call_operand.vmem [shape: f32[2,4,1,6400], index: 3, kind: output, shape index: {}]
  %s4 = sld [smem:[#allocation0]]
  $region45: #{decoder_forward.5} parent=0
    _
  %s6 = ssub.s32 1, %s4
  %s7 = scalar_select 0, %s6, %s4
  %v8 = vstv %s2
  %9 = vst [vmem:[#allocation3] sm:$0x1] %v8
  loop: start=0, step=1, limit=4
  $region2: #{decoder_forward.5} parent=0 // loop_pre_header
    _
  $region3: #{decoder_forward.5} parent=0 // loop_header
    %s11 = sphi 0, %s15
    %p12 = scmp.ge.s32.totalorder %s11, 4
    %s21 = sphi 0, %s23
    %s24 = sphi 0, %s21
    %s25 = sphi 0, %s24
    %s41 = sphi 0, %s25
    %s45 = sphi 0, %s45
    %s47 = sphi 0, %s45
    %s48 = sphi 0, %s47
    %s62 = sphi 0, %s48
    %s66 = sphi 0, %s66
    %s68 = sphi 0, %s66
    %s69 = sphi 0, %s68
    %s83 = sphi 0, %s69
    %s89 = sphi 0, %s91
    %s92 = sphi 0, %s89
    %s93 = sphi 0, %s92
    %s109 = sphi 0, %s93
  $region4: #{decoder_forward.5} parent=0 // loop_header_branch
    %14 = sbr.rel (%p12) target = $region8
  $region5: #{decoder_forward.5} parent=0 // loop_body
    %s16 = ssub.s32 %s11, 1
    %s17 = ssub.s32 %s11, 2
    %s18 = sadd.s32 %s11, 1
    %s19 = ssub.s32 %s11, %s18
    %p20 = scmp.eq.s32.totalorder %s19, 0
    %s22 = sadd.s32 %s21, 1
    %s23 = scalar_select %p20, %s21, %s22
    %p26 = pneg %p20
    %p27 = scmp.eq.s32.totalorder %s11, 1
    %p28 = por %p26, %p27
    %p29 = scmp.ne.s32.totalorder %s21, %s24
    %p30 = scmp.eq.s32.totalorder %s11, 0
    %p31 = por %p29, %p30
    %p32 = scmp.ne.s32.totalorder %s21, %s24
    %p33 = scmp.eq.s32.totalorder %s16, 1
    %p34 = por %p32, %p33
    %p35 = scmp.ne.s32.totalorder %s24, %s25
    %p36 = scmp.eq.s32.totalorder %s16, 0
    %p37 = por %p35, %p36
    %p38 = scmp.ne.s32.totalorder %s24, %s25
    %p39 = scmp.eq.s32.totalorder %s17, 1
    %p40 = por %p38, %p39
    %p42 = scmp.ne.s32.totalorder %s25, %s41
    %p43 = scmp.eq.s32.totalorder %s17, 0
    %p44 = por %p42, %p43
    %s46 = sadd.s32 %s45, 1
    %p49 = scmp.eq.s32.totalorder %s11, 1
    %p50 = scmp.ne.s32.totalorder %s45, %s47
    %p51 = scmp.eq.s32.totalorder %s11, 0
    %p52 = por %p50, %p51
    %p53 = scmp.ne.s32.totalorder %s45, %s47
    %p54 = scmp.eq.s32.totalorder %s16, 1
    %p55 = por %p53, %p54
    %p56 = scmp.ne.s32.totalorder %s47, %s48
    %p57 = scmp.eq.s32.totalorder %s16, 0
    %p58 = por %p56, %p57
    %p59 = scmp.ne.s32.totalorder %s47, %s48
    %p60 = scmp.eq.s32.totalorder %s17, 1
    %p61 = por %p59, %p60
    %p63 = scmp.ne.s32.totalorder %s48, %s62
    %p64 = scmp.eq.s32.totalorder %s17, 0
    %p65 = por %p63, %p64
    %s67 = sadd.s32 %s66, 1
    %p70 = scmp.eq.s32.totalorder %s11, 1
    %p71 = scmp.ne.s32.totalorder %s66, %s68
    %p72 = scmp.eq.s32.totalorder %s11, 0
    %p73 = por %p71, %p72
    %p74 = scmp.ne.s32.totalorder %s66, %s68
    %p75 = scmp.eq.s32.totalorder %s16, 1
    %p76 = por %p74, %p75
    %p77 = scmp.ne.s32.totalorder %s68, %s69
    %p78 = scmp.eq.s32.totalorder %s16, 0
    %p79 = por %p77, %p78
    %p80 = scmp.ne.s32.totalorder %s68, %s69
    %p81 = scmp.eq.s32.totalorder %s17, 1
    %p82 = por %p80, %p81
    %p84 = scmp.ne.s32.totalorder %s69, %s83
    %p85 = scmp.eq.s32.totalorder %s17, 0
    %p86 = por %p84, %p85
    %s87 = ssub.s32 %s11, %s18
    %p88 = scmp.eq.s32.totalorder %s87, 0
    %s90 = sadd.s32 %s89, 1
    %s91 = scalar_select %p88, %s89, %s90
    %p94 = pneg %p88
    %p95 = scmp.eq.s32.totalorder %s11, 1
    %p96 = por %p94, %p95
    %p97 = scmp.ne.s32.totalorder %s89, %s92
    %p98 = scmp.eq.s32.totalorder %s11, 0
    %p99 = por %p97, %p98
    %p100 = scmp.ne.s32.totalorder %s89, %s92
    %p101 = scmp.eq.s32.totalorder %s16, 1
    %p102 = por %p100, %p101
    %p103 = scmp.ne.s32.totalorder %s92, %s93
    %p104 = scmp.eq.s32.totalorder %s16, 0
    %p105 = por %p103, %p104
    %p106 = scmp.ne.s32.totalorder %s92, %s93
    %p107 = scmp.eq.s32.totalorder %s17, 1
    %p108 = por %p106, %p107
    %p110 = scmp.ne.s32.totalorder %s93, %s109
    %p111 = scmp.eq.s32.totalorder %s17, 0
    %p112 = por %p110, %p111
    %p113 = scmp.le.s32.totalorder 1, %s11
    %p114 = scmp.lt.s32.totalorder %s11, 3
    %p115 = pnand %p113, %p114
    %p116 = pneg %p115
    // Predicated region
    $region9: #{decoder_forward.5} parent=5 // pred_check
      _
    $region10: #{decoder_forward.5} parent=5 // pred_check_branch
      %118 = sbr.rel (%p115) target = $region12
    $region11: #{decoder_forward.5} parent=5 // pred_region
      %s119 = ssub.s32 %s11, 1
      // Predicated region
      $region13: #{decoder_forward.5} parent=11 // pred_check
        %p120 = pneg %p58
      $region14: #{decoder_forward.5} parent=11 // pred_check_branch
        %122 = sbr.rel (%p120) target = $region16
      $region15: #{decoder_forward.5} parent=11 // pred_region
        _
      $region16: #{decoder_forward.5} parent=11 // pred_fallthru
        _
      // Predicated region
      $region17: #{decoder_forward.5} parent=11 // pred_check
        %p123 = pneg %p79
      $region18: #{decoder_forward.5} parent=11 // pred_check_branch
        %125 = sbr.rel (%p123) target = $region20
      $region19: #{decoder_forward.5} parent=11 // pred_region
        _
      $region20: #{decoder_forward.5} parent=11 // pred_fallthru
        _
    $region12: #{decoder_forward.5} parent=5 // pred_fallthru
      _
    %p126 = scmp.lt.s32.totalorder %s11, 2
    // Predicated region
    $region21: #{decoder_forward.5} parent=5 // pred_check
      %p127 = pneg %p126
    $region22: #{decoder_forward.5} parent=5 // pred_check_branch
      %129 = sbr.rel (%p127) target = $region24
    $region23: #{decoder_forward.5} parent=5 // pred_region
      // Predicated region
      $region25: #{decoder_forward.5} parent=23 // pred_check
        %p130 = pneg %p31
      $region26: #{decoder_forward.5} parent=23 // pred_check_branch
        %132 = sbr.rel (%p130) target = $region28
      $region27: #{decoder_forward.5} parent=23 // pred_region
        %p133 = scmp.lt.s32.totalorder %s11, 1
        %s134 = scalar_select %p133, %s11, 1
        %s135 = smul.addr %s134, 50
        %s136 = smul.addr %s135, 8
        %s137 = scalar_lea.vmem %s0, %s136
      $region28: #{decoder_forward.5} parent=23 // pred_fallthru
        _
    $region24: #{decoder_forward.5} parent=5 // pred_fallthru
      _
    %p138 = scmp.le.s32.totalorder 1, %s11
    %p139 = scmp.lt.s32.totalorder %s11, 3
    %p140 = pnand %p138, %p139
    %p141 = pneg %p140
    // Predicated region
    $region29: #{decoder_forward.5} parent=5 // pred_check
      _
    $region30: #{decoder_forward.5} parent=5 // pred_check_branch
      %143 = sbr.rel (%p140) target = $region32
    $region31: #{decoder_forward.5} parent=5 // pred_region
      %s144 = ssub.s32 %s11, 1
      %p145 = scmp.lt.s32.totalorder %s16, 1
      %s146 = scalar_select %p145, %s16, 1
      %s147 = smul.addr %s146, 50
      %s148 = smul.addr %s147, 8
      %s149 = scalar_lea.vmem %s0, %s148
      %p150 = pneg %p37
      %p151 = pneg %p34
      %p152 = pneg %p58
      %p153 = pneg %p55
      %p154 = pneg %p79
      %p155 = pneg %p76
      %p156 = pneg %p105
      %p157 = pneg %p102
      %p158 = scmp.lt.s32.totalorder %s16, 1
      %s159 = scalar_select %p158, %s16, 1
      %s160 = smul.addr %s159, 200
      %s161 = scalar_lea.vmem %s3, %s160
      %p162 = scmp.lt.s32.totalorder %s16, 1
      %s163 = scalar_select %p162, %s16, 1
      %s164 = smul.addr %s163, 50
      %s165 = smul.addr %s164, 8
      %s166 = scalar_lea.vmem %s0, %s165
      %p167 = scmp.lt.s32.totalorder %s16, 1
      %s168 = scalar_select %p167, %s16, 1
      %s169 = smul.addr %s168, 200
      %s170 = scalar_lea.vmem %s3, %s169
      %v171 = vld [vmem:[%s1] sm:$0xff]
      %v172 = vld [vmem:[%s1 + $0x8] sm:$0x1]
      %v173 = vld [vmem:[%s166] sm:$0xff]
      %v174 = vld [vmem:[%s166 + $0x8] sm:$0xff]
      %v175 = vld [vmem:[%s166 + $0x10] sm:$0xff]
      %v176 = vld [vmem:[%s166 + $0x18] sm:$0xff]
      %v177 = vld [vmem:[%s166 + $0x20] sm:$0xff]
      %v178 = vld [vmem:[%s166 + $0x28] sm:$0xff]
      %v179 = vld [vmem:[%s166 + $0x30] sm:$0xff]
      %v180 = vld [vmem:[%s166 + $0x38] sm:$0xff]
      %v181 = vld [vmem:[%s166 + $0x40] sm:$0xff]
      %v182 = vld [vmem:[%s166 + $0x48] sm:$0xff]
      %v183 = vld [vmem:[%s166 + $0x50] sm:$0xff]
      %v184 = vld [vmem:[%s166 + $0x58] sm:$0xff]
      %v185 = vld [vmem:[%s166 + $0x60] sm:$0xff]
      %v186 = vld [vmem:[%s166 + $0x68] sm:$0xff]
      %v187 = vld [vmem:[%s166 + $0x70] sm:$0xff]
      %v188 = vld [vmem:[%s166 + $0x78] sm:$0xff]
      %v189 = vld [vmem:[%s166 + $0x80] sm:$0xff]
      %v190 = vld [vmem:[%s166 + $0x88] sm:$0xff]
      %v191 = vld [vmem:[%s166 + $0x90] sm:$0xff]
      %v192 = vld [vmem:[%s166 + $0x98] sm:$0xff]
      %v193 = vld [vmem:[%s166 + $0xa0] sm:$0xff]
      %v194 = vld [vmem:[%s166 + $0xa8] sm:$0xff]
      %v195 = vld [vmem:[%s166 + $0xb0] sm:$0xff]
      %v196 = vld [vmem:[%s166 + $0xb8] sm:$0xff]
      %v197 = vld [vmem:[%s166 + $0xc0] sm:$0xff]
      %v198 = vld [vmem:[%s166 + $0xc8] sm:$0xff]
      %v199 = vld [vmem:[%s166 + $0xd0] sm:$0xff]
      %v200 = vld [vmem:[%s166 + $0xd8] sm:$0xff]
      %v201 = vld [vmem:[%s166 + $0xe0] sm:$0xff]
      %v202 = vld [vmem:[%s166 + $0xe8] sm:$0xff]
      %v203 = vld [vmem:[%s166 + $0xf0] sm:$0xff]
      %v204 = vld [vmem:[%s166 + $0xf8] sm:$0xff]
      %v205 = vld [vmem:[%s166 + $0x100] sm:$0xff]
      %v206 = vld [vmem:[%s166 + $0x108] sm:$0xff]
      %v207 = vld [vmem:[%s166 + $0x110] sm:$0xff]
      %v208 = vld [vmem:[%s166 + $0x118] sm:$0xff]
      %v209 = vld [vmem:[%s166 + $0x120] sm:$0xff]
      %v210 = vld [vmem:[%s166 + $0x128] sm:$0xff]
      %v211 = vld [vmem:[%s166 + $0x130] sm:$0xff]
      %v212 = vld [vmem:[%s166 + $0x138] sm:$0xff]
      %v213 = vld [vmem:[%s166 + $0x140] sm:$0xff]
      %v214 = vld [vmem:[%s166 + $0x148] sm:$0xff]
      %v215 = vld [vmem:[%s166 + $0x150] sm:$0xff]
      %v216 = vld [vmem:[%s166 + $0x158] sm:$0xff]
      %v217 = vld [vmem:[%s166 + $0x160] sm:$0xff]
      %v218 = vld [vmem:[%s166 + $0x168] sm:$0xff]
      %v219 = vld [vmem:[%s166 + $0x170] sm:$0xff]
      %v220 = vld [vmem:[%s166 + $0x178] sm:$0xff]
      %v221 = vld [vmem:[%s166 + $0x180] sm:$0xff]
      %v222 = vld [vmem:[%s166 + $0x188] sm:$0xff]
      %vm223 = vcmask 64512
      %v225 = vsel %vm223, %v171, 0
      %v228 = vsel %vm223, %v172, 0
      %230 = vmatprep.subr.mxu0 0.0
      %231 = vmatpush1.msra.mxu0 0.0
      %232 = vmatprep.subr.mxu0 0.0
      %233 = vmatpush1.msra.mxu0 0.0
      %234 = vmatprep.subr.mxu0 0.0
      %235 = vmatpush1.msra.mxu0 0.0
      %236 = vmatprep.subr.mxu0 0.0
      %237 = vmatpush1.msra.mxu0 0.0
      %238 = vmatprep.subr.mxu0 0.0
      %239 = vmatpush1.msra.mxu0 0.0
      %240 = vmatprep.subr.mxu0 0.0
      %241 = vmatpush1.msra.mxu0 0.0
      %242 = vmatprep.subr.mxu0 0.0
      %243 = vmatpush1.msra.mxu0 0.0
      %244 = vmatprep.subr.mxu0 0.0
      %245 = vmatpush1.msra.mxu0 0.0
      %246 = vmatprep.subr.mxu0 0.0
      %247 = vmatpush1.msra.mxu0 0.0
      %248 = vmatprep.subr.mxu0 0.0
      %249 = vmatpush1.msra.mxu0 0.0
      %250 = vmatprep.subr.mxu0 0.0
      %251 = vmatpush1.msra.mxu0 0.0
      %252 = vmatprep.subr.mxu0 0.0
      %253 = vmatpush1.msra.mxu0 0.0
      %254 = vmatprep.subr.mxu0 0.0
      %255 = vmatpush1.msra.mxu0 0.0
      %256 = vmatprep.subr.mxu0 0.0
      %257 = vmatpush1.msra.mxu0 0.0
      %258 = vmatprep.subr.mxu0 0.0
      %259 = vmatpush1.msra.mxu0 0.0
      %260 = vmatprep.subr.mxu0 %v174
      %261 = vmatpush1.msra.mxu0 %v173
      %262 = vmatprep.subr.mxu0 0.0
      %263 = vmatpush2.msra.mxu0 0.0
      %264 = vmatprep.subr.mxu0 0.0
      %265 = vmatpush2.msra.mxu0 0.0
      %266 = vmatprep.subr.mxu0 0.0
      %267 = vmatpush2.msra.mxu0 0.0
      %268 = vmatprep.subr.mxu0 0.0
      %269 = vmatpush2.msra.mxu0 0.0
      %270 = vmatprep.subr.mxu0 0.0
      %271 = vmatpush2.msra.mxu0 0.0
      %272 = vmatprep.subr.mxu0 0.0
      %273 = vmatpush2.msra.mxu0 0.0
      %274 = vmatprep.subr.mxu0 0.0
      %275 = vmatpush2.msra.mxu0 0.0
      %276 = vmatprep.subr.mxu0 0.0
      %277 = vmatpush2.msra.mxu0 0.0
      %278 = vmatprep.subr.mxu0 0.0
      %279 = vmatpush2.msra.mxu0 0.0
      %280 = vmatprep.subr.mxu0 0.0
      %281 = vmatpush2.msra.mxu0 0.0
      %282 = vmatprep.subr.mxu0 0.0
      %283 = vmatpush2.msra.mxu0 0.0
      %284 = vmatprep.subr.mxu0 0.0
      %285 = vmatpush2.msra.mxu0 0.0
      %286 = vmatprep.subr.mxu0 0.0
      %287 = vmatpush2.msra.mxu0 0.0
      %288 = vmatprep.subr.mxu0 0.0
      %289 = vmatpush2.msra.mxu0 0.0
      %290 = vmatprep.subr.mxu0 0.0
      %291 = vmatpush2.msra.mxu0 0.0
      %292 = vmatprep.subr.mxu0 0.0
      %293 = vmatpush2.msra.mxu0 0.0
      %294 = vmatprep.mubr.f32.mxu0 0.0
      %295 = vmatmul.mubr.f32.gmra.mxu0 %v225
      %v296 = vpop.f32.mrf.mxu0
      %v297 = vadd.f32 0.0, %v296
      %v298 = vpop.f32.mrf.mxu0
      %v299 = vadd.f32 0.0, %v298
      %300 = vmatprep.mubr.f32.mxu0 0.0
      %301 = vmatmul.mubr.f32.gmra.mxu0 %v228
      %v302 = vpop.f32.mrf.mxu0
      %v303 = vadd.f32 0.0, %v302
      %v304 = vpop.f32.mrf.mxu0
      %v305 = vadd.f32 0.0, %v304
      %306 = vdwg.mxu0
      %307 = vmatprep.subr.mxu0 0.0
      %308 = vmatpush1.msra.mxu0 0.0
      %309 = vmatprep.subr.mxu0 0.0
      %310 = vmatpush1.msra.mxu0 0.0
      %311 = vmatprep.subr.mxu0 0.0
      %312 = vmatpush1.msra.mxu0 0.0
      %313 = vmatprep.subr.mxu0 0.0
      %314 = vmatpush1.msra.mxu0 0.0
      %315 = vmatprep.subr.mxu0 0.0
      %316 = vmatpush1.msra.mxu0 0.0
      %317 = vmatprep.subr.mxu0 0.0
      %318 = vmatpush1.msra.mxu0 0.0
      %319 = vmatprep.subr.mxu0 0.0
      %320 = vmatpush1.msra.mxu0 0.0
      %321 = vmatprep.subr.mxu0 0.0
      %322 = vmatpush1.msra.mxu0 0.0
      %323 = vmatprep.subr.mxu0 0.0
      %324 = vmatpush1.msra.mxu0 0.0
      %325 = vmatprep.subr.mxu0 0.0
      %326 = vmatpush1.msra.mxu0 0.0
      %327 = vmatprep.subr.mxu0 0.0
      %328 = vmatpush1.msra.mxu0 0.0
      %329 = vmatprep.subr.mxu0 0.0
      %330 = vmatpush1.msra.mxu0 0.0
      %331 = vmatprep.subr.mxu0 0.0
      %332 = vmatpush1.msra.mxu0 0.0
      %333 = vmatprep.subr.mxu0 0.0
      %334 = vmatpush1.msra.mxu0 0.0
      %335 = vmatprep.subr.mxu0 0.0
      %336 = vmatpush1.msra.mxu0 0.0
      %337 = vmatprep.subr.mxu0 %v176
      %338 = vmatpush1.msra.mxu0 %v175
      %339 = vmatprep.subr.mxu0 0.0
      %340 = vmatpush2.msra.mxu0 0.0
      %341 = vmatprep.subr.mxu0 0.0
      %342 = vmatpush2.msra.mxu0 0.0
      %343 = vmatprep.subr.mxu0 0.0
      %344 = vmatpush2.msra.mxu0 0.0
      %345 = vmatprep.subr.mxu0 0.0
      %346 = vmatpush2.msra.mxu0 0.0
      %347 = vmatprep.subr.mxu0 0.0
      %348 = vmatpush2.msra.mxu0 0.0
      %349 = vmatprep.subr.mxu0 0.0
      %350 = vmatpush2.msra.mxu0 0.0
      %351 = vmatprep.subr.mxu0 0.0
      %352 = vmatpush2.msra.mxu0 0.0
      %353 = vmatprep.subr.mxu0 0.0
      %354 = vmatpush2.msra.mxu0 0.0
      %355 = vmatprep.subr.mxu0 0.0
      %356 = vmatpush2.msra.mxu0 0.0
      %357 = vmatprep.subr.mxu0 0.0
      %358 = vmatpush2.msra.mxu0 0.0
      %359 = vmatprep.subr.mxu0 0.0
      %360 = vmatpush2.msra.mxu0 0.0
      %361 = vmatprep.subr.mxu0 0.0
      %362 = vmatpush2.msra.mxu0 0.0
      %363 = vmatprep.subr.mxu0 0.0
      %364 = vmatpush2.msra.mxu0 0.0
      %365 = vmatprep.subr.mxu0 0.0
      %366 = vmatpush2.msra.mxu0 0.0
      %367 = vmatprep.subr.mxu0 0.0
      %368 = vmatpush2.msra.mxu0 0.0
      %369 = vmatprep.subr.mxu0 0.0
      %370 = vmatpush2.msra.mxu0 0.0
      %371 = vmatprep.mubr.f32.mxu0 0.0
      %372 = vmatmul.mubr.f32.gmra.mxu0 %v225
      %v373 = vpop.f32.mrf.mxu0
      %v374 = vadd.f32 0.0, %v373
      %v375 = vpop.f32.mrf.mxu0
      %v376 = vadd.f32 0.0, %v375
      %377 = vmatprep.mubr.f32.mxu0 0.0
      %378 = vmatmul.mubr.f32.gmra.mxu0 %v228
      %v379 = vpop.f32.mrf.mxu0
      %v380 = vadd.f32 0.0, %v379
      %v381 = vpop.f32.mrf.mxu0
      %v382 = vadd.f32 0.0, %v381
      %383 = vdwg.mxu0
      %384 = vmatprep.subr.mxu0 0.0
      %385 = vmatpush1.msra.mxu0 0.0
      %386 = vmatprep.subr.mxu0 0.0
      %387 = vmatpush1.msra.mxu0 0.0
      %388 = vmatprep.subr.mxu0 0.0
      %389 = vmatpush1.msra.mxu0 0.0
      %390 = vmatprep.subr.mxu0 0.0
      %391 = vmatpush1.msra.mxu0 0.0
      %392 = vmatprep.subr.mxu0 0.0
      %393 = vmatpush1.msra.mxu0 0.0
      %394 = vmatprep.subr.mxu0 0.0
      %395 = vmatpush1.msra.mxu0 0.0
      %396 = vmatprep.subr.mxu0 0.0
      %397 = vmatpush1.msra.mxu0 0.0
      %398 = vmatprep.subr.mxu0 0.0
      %399 = vmatpush1.msra.mxu0 0.0
      %400 = vmatprep.subr.mxu0 0.0
      %401 = vmatpush1.msra.mxu0 0.0
      %402 = vmatprep.subr.mxu0 0.0
      %403 = vmatpush1.msra.mxu0 0.0
      %404 = vmatprep.subr.mxu0 0.0
      %405 = vmatpush1.msra.mxu0 0.0
      %406 = vmatprep.subr.mxu0 0.0
      %407 = vmatpush1.msra.mxu0 0.0
      %408 = vmatprep.subr.mxu0 0.0
      %409 = vmatpush1.msra.mxu0 0.0
      %410 = vmatprep.subr.mxu0 0.0
      %411 = vmatpush1.msra.mxu0 0.0
      %412 = vmatprep.subr.mxu0 0.0
      %413 = vmatpush1.msra.mxu0 0.0
      %414 = vmatprep.subr.mxu0 %v178
      %415 = vmatpush1.msra.mxu0 %v177
      %416 = vmatprep.subr.mxu0 0.0
      %417 = vmatpush2.msra.mxu0 0.0
      %418 = vmatprep.subr.mxu0 0.0
      %419 = vmatpush2.msra.mxu0 0.0
      %420 = vmatprep.subr.mxu0 0.0
      %421 = vmatpush2.msra.mxu0 0.0
      %422 = vmatprep.subr.mxu0 0.0
      %423 = vmatpush2.msra.mxu0 0.0
      %424 = vmatprep.subr.mxu0 0.0
      %425 = vmatpush2.msra.mxu0 0.0
      %426 = vmatprep.subr.mxu0 0.0
      %427 = vmatpush2.msra.mxu0 0.0
      %428 = vmatprep.subr.mxu0 0.0
      %429 = vmatpush2.msra.mxu0 0.0
      %430 = vmatprep.subr.mxu0 0.0
      %431 = vmatpush2.msra.mxu0 0.0
      %432 = vmatprep.subr.mxu0 0.0
      %433 = vmatpush2.msra.mxu0 0.0
      %434 = vmatprep.subr.mxu0 0.0
      %435 = vmatpush2.msra.mxu0 0.0
      %436 = vmatprep.subr.mxu0 0.0
      %437 = vmatpush2.msra.mxu0 0.0
      %438 = vmatprep.subr.mxu0 0.0
      %439 = vmatpush2.msra.mxu0 0.0
      %440 = vmatprep.subr.mxu0 0.0
      %441 = vmatpush2.msra.mxu0 0.0
      %442 = vmatprep.subr.mxu0 0.0
      %443 = vmatpush2.msra.mxu0 0.0
      %444 = vmatprep.subr.mxu0 0.0
      %445 = vmatpush2.msra.mxu0 0.0
      %446 = vmatprep.subr.mxu0 0.0
      %447 = vmatpush2.msra.mxu0 0.0
      %448 = vmatprep.mubr.f32.mxu0 0.0
      %449 = vmatmul.mubr.f32.gmra.mxu0 %v225
      %v450 = vpop.f32.mrf.mxu0
      %v451 = vadd.f32 0.0, %v450
      %v452 = vpop.f32.mrf.mxu0
      %v453 = vadd.f32 0.0, %v452
      %454 = vmatprep.mubr.f32.mxu0 0.0
      %455 = vmatmul.mubr.f32.gmra.mxu0 %v228
      %v456 = vpop.f32.mrf.mxu0
      %v457 = vadd.f32 0.0, %v456
      %v458 = vpop.f32.mrf.mxu0
      %v459 = vadd.f32 0.0, %v458
      %460 = vdwg.mxu0
      %461 = vmatprep.subr.mxu0 0.0
      %462 = vmatpush1.msra.mxu0 0.0
      %463 = vmatprep.subr.mxu0 0.0
      %464 = vmatpush1.msra.mxu0 0.0
      %465 = vmatprep.subr.mxu0 0.0
      %466 = vmatpush1.msra.mxu0 0.0
      %467 = vmatprep.subr.mxu0 0.0
      %468 = vmatpush1.msra.mxu0 0.0
      %469 = vmatprep.subr.mxu0 0.0
      %470 = vmatpush1.msra.mxu0 0.0
      %471 = vmatprep.subr.mxu0 0.0
      %472 = vmatpush1.msra.mxu0 0.0
      %473 = vmatprep.subr.mxu0 0.0
      %474 = vmatpush1.msra.mxu0 0.0
      %475 = vmatprep.subr.mxu0 0.0
      %476 = vmatpush1.msra.mxu0 0.0
      %477 = vmatprep.subr.mxu0 0.0
      %478 = vmatpush1.msra.mxu0 0.0
      %479 = vmatprep.subr.mxu0 0.0
      %480 = vmatpush1.msra.mxu0 0.0
      %481 = vmatprep.subr.mxu0 0.0
      %482 = vmatpush1.msra.mxu0 0.0
      %483 = vmatprep.subr.mxu0 0.0
      %484 = vmatpush1.msra.mxu0 0.0
      %485 = vmatprep.subr.mxu0 0.0
      %486 = vmatpush1.msra.mxu0 0.0
      %487 = vmatprep.subr.mxu0 0.0
      %488 = vmatpush1.msra.mxu0 0.0
      %489 = vmatprep.subr.mxu0 0.0
      %490 = vmatpush1.msra.mxu0 0.0
      %491 = vmatprep.subr.mxu0 %v180
      %492 = vmatpush1.msra.mxu0 %v179
      %493 = vmatprep.subr.mxu0 0.0
      %494 = vmatpush2.msra.mxu0 0.0
      %495 = vmatprep.subr.mxu0 0.0
      %496 = vmatpush2.msra.mxu0 0.0
      %497 = vmatprep.subr.mxu0 0.0
      %498 = vmatpush2.msra.mxu0 0.0
      %499 = vmatprep.subr.mxu0 0.0
      %500 = vmatpush2.msra.mxu0 0.0
      %501 = vmatprep.subr.mxu0 0.0
      %502 = vmatpush2.msra.mxu0 0.0
      %503 = vmatprep.subr.mxu0 0.0
      %504 = vmatpush2.msra.mxu0 0.0
      %505 = vmatprep.subr.mxu0 0.0
      %506 = vmatpush2.msra.mxu0 0.0
      %507 = vmatprep.subr.mxu0 0.0
      %508 = vmatpush2.msra.mxu0 0.0
      %509 = vmatprep.subr.mxu0 0.0
      %510 = vmatpush2.msra.mxu0 0.0
      %511 = vmatprep.subr.mxu0 0.0
      %512 = vmatpush2.msra.mxu0 0.0
      %513 = vmatprep.subr.mxu0 0.0
      %514 = vmatpush2.msra.mxu0 0.0
      %515 = vmatprep.subr.mxu0 0.0
      %516 = vmatpush2.msra.mxu0 0.0
      %517 = vmatprep.subr.mxu0 0.0
      %518 = vmatpush2.msra.mxu0 0.0
      %519 = vmatprep.subr.mxu0 0.0
      %520 = vmatpush2.msra.mxu0 0.0
      %521 = vmatprep.subr.mxu0 0.0
      %522 = vmatpush2.msra.mxu0 0.0
      %523 = vmatprep.subr.mxu0 0.0
      %524 = vmatpush2.msra.mxu0 0.0
      %525 = vmatprep.mubr.f32.mxu0 0.0
      %526 = vmatmul.mubr.f32.gmra.mxu0 %v225
      %v527 = vpop.f32.mrf.mxu0
      %v528 = vadd.f32 0.0, %v527
      %v529 = vpop.f32.mrf.mxu0
      %v530 = vadd.f32 0.0, %v529
      %531 = vmatprep.mubr.f32.mxu0 0.0
      %532 = vmatmul.mubr.f32.gmra.mxu0 %v228
      %v533 = vpop.f32.mrf.mxu0
      %v534 = vadd.f32 0.0, %v533
      %v535 = vpop.f32.mrf.mxu0
      %v536 = vadd.f32 0.0, %v535
      %537 = vdwg.mxu0
      %538 = vmatprep.subr.mxu0 0.0
      %539 = vmatpush1.msra.mxu0 0.0
      %540 = vmatprep.subr.mxu0 0.0
      %541 = vmatpush1.msra.mxu0 0.0
      %542 = vmatprep.subr.mxu0 0.0
      %543 = vmatpush1.msra.mxu0 0.0
      %544 = vmatprep.subr.mxu0 0.0
      %545 = vmatpush1.msra.mxu0 0.0
      %546 = vmatprep.subr.mxu0 0.0
      %547 = vmatpush1.msra.mxu0 0.0
      %548 = vmatprep.subr.mxu0 0.0
      %549 = vmatpush1.msra.mxu0 0.0
      %550 = vmatprep.subr.mxu0 0.0
      %551 = vmatpush1.msra.mxu0 0.0
      %552 = vmatprep.subr.mxu0 0.0
      %553 = vmatpush1.msra.mxu0 0.0
      %554 = vmatprep.subr.mxu0 0.0
      %555 = vmatpush1.msra.mxu0 0.0
      %556 = vmatprep.subr.mxu0 0.0
      %557 = vmatpush1.msra.mxu0 0.0
      %558 = vmatprep.subr.mxu0 0.0
      %559 = vmatpush1.msra.mxu0 0.0
      %560 = vmatprep.subr.mxu0 0.0
      %561 = vmatpush1.msra.mxu0 0.0
      %562 = vmatprep.subr.mxu0 0.0
      %563 = vmatpush1.msra.mxu0 0.0
      %564 = vmatprep.subr.mxu0 0.0
      %565 = vmatpush1.msra.mxu0 0.0
      %566 = vmatprep.subr.mxu0 0.0
      %567 = vmatpush1.msra.mxu0 0.0
      %568 = vmatprep.subr.mxu0 %v182
      %569 = vmatpush1.msra.mxu0 %v181
      %570 = vmatprep.subr.mxu0 0.0
      %571 = vmatpush2.msra.mxu0 0.0
      %572 = vmatprep.subr.mxu0 0.0
      %573 = vmatpush2.msra.mxu0 0.0
      %574 = vmatprep.subr.mxu0 0.0
      %575 = vmatpush2.msra.mxu0 0.0
      %576 = vmatprep.subr.mxu0 0.0
      %577 = vmatpush2.msra.mxu0 0.0
      %578 = vmatprep.subr.mxu0 0.0
      %579 = vmatpush2.msra.mxu0 0.0
      %580 = vmatprep.subr.mxu0 0.0
      %581 = vmatpush2.msra.mxu0 0.0
      %582 = vmatprep.subr.mxu0 0.0
      %583 = vmatpush2.msra.mxu0 0.0
      %584 = vmatprep.subr.mxu0 0.0
      %585 = vmatpush2.msra.mxu0 0.0
      %586 = vmatprep.subr.mxu0 0.0
      %587 = vmatpush2.msra.mxu0 0.0
      %588 = vmatprep.subr.mxu0 0.0
      %589 = vmatpush2.msra.mxu0 0.0
      %590 = vmatprep.subr.mxu0 0.0
      %591 = vmatpush2.msra.mxu0 0.0
      %592 = vmatprep.subr.mxu0 0.0
      %593 = vmatpush2.msra.mxu0 0.0
      %594 = vmatprep.subr.mxu0 0.0
      %595 = vmatpush2.msra.mxu0 0.0
      %596 = vmatprep.subr.mxu0 0.0
      %597 = vmatpush2.msra.mxu0 0.0
      %598 = vmatprep.subr.mxu0 0.0
      %599 = vmatpush2.msra.mxu0 0.0
      %600 = vmatprep.subr.mxu0 0.0
      %601 = vmatpush2.msra.mxu0 0.0
      %602 = vmatprep.mubr.f32.mxu0 0.0
      %603 = vmatmul.mubr.f32.gmra.mxu0 %v225
      %v604 = vpop.f32.mrf.mxu0
      %v605 = vadd.f32 0.0, %v604
      %v606 = vpop.f32.mrf.mxu0
      %v607 = vadd.f32 0.0, %v606
      %608 = vmatprep.mubr.f32.mxu0 0.0
      %609 = vmatmul.mubr.f32.gmra.mxu0 %v228
      %v610 = vpop.f32.mrf.mxu0
      %v611 = vadd.f32 0.0, %v610
      %v612 = vpop.f32.mrf.mxu0
      %v613 = vadd.f32 0.0, %v612
      %614 = vdwg.mxu0
      %615 = vmatprep.subr.mxu0 0.0
      %616 = vmatpush1.msra.mxu0 0.0
      %617 = vmatprep.subr.mxu0 0.0
      %618 = vmatpush1.msra.mxu0 0.0
      %619 = vmatprep.subr.mxu0 0.0
      %620 = vmatpush1.msra.mxu0 0.0
      %621 = vmatprep.subr.mxu0 0.0
      %622 = vmatpush1.msra.mxu0 0.0
      %623 = vmatprep.subr.mxu0 0.0
      %624 = vmatpush1.msra.mxu0 0.0
      %625 = vmatprep.subr.mxu0 0.0
      %626 = vmatpush1.msra.mxu0 0.0
      %627 = vmatprep.subr.mxu0 0.0
      %628 = vmatpush1.msra.mxu0 0.0
      %629 = vmatprep.subr.mxu0 0.0
      %630 = vmatpush1.msra.mxu0 0.0
      %631 = vmatprep.subr.mxu0 0.0
      %632 = vmatpush1.msra.mxu0 0.0
      %633 = vmatprep.subr.mxu0 0.0
      %634 = vmatpush1.msra.mxu0 0.0
      %635 = vmatprep.subr.mxu0 0.0
      %636 = vmatpush1.msra.mxu0 0.0
      %637 = vmatprep.subr.mxu0 0.0
      %638 = vmatpush1.msra.mxu0 0.0
      %639 = vmatprep.subr.mxu0 0.0
      %640 = vmatpush1.msra.mxu0 0.0
      %641 = vmatprep.subr.mxu0 0.0
      %642 = vmatpush1.msra.mxu0 0.0
      %643 = vmatprep.subr.mxu0 0.0
      %644 = vmatpush1.msra.mxu0 0.0
      %645 = vmatprep.subr.mxu0 %v184
      %646 = vmatpush1.msra.mxu0 %v183
      %647 = vmatprep.subr.mxu0 0.0
      %648 = vmatpush2.msra.mxu0 0.0
      %649 = vmatprep.subr.mxu0 0.0
      %650 = vmatpush2.msra.mxu0 0.0
      %651 = vmatprep.subr.mxu0 0.0
      %652 = vmatpush2.msra.mxu0 0.0
      %653 = vmatprep.subr.mxu0 0.0
      %654 = vmatpush2.msra.mxu0 0.0
      %655 = vmatprep.subr.mxu0 0.0
      %656 = vmatpush2.msra.mxu0 0.0
      %657 = vmatprep.subr.mxu0 0.0
      %658 = vmatpush2.msra.mxu0 0.0
      %659 = vmatprep.subr.mxu0 0.0
      %660 = vmatpush2.msra.mxu0 0.0
      %661 = vmatprep.subr.mxu0 0.0
      %662 = vmatpush2.msra.mxu0 0.0
      %663 = vmatprep.subr.mxu0 0.0
      %664 = vmatpush2.msra.mxu0 0.0
      %665 = vmatprep.subr.mxu0 0.0
      %666 = vmatpush2.msra.mxu0 0.0
      %667 = vmatprep.subr.mxu0 0.0
      %668 = vmatpush2.msra.mxu0 0.0
      %669 = vmatprep.subr.mxu0 0.0
      %670 = vmatpush2.msra.mxu0 0.0
      %671 = vmatprep.subr.mxu0 0.0
      %672 = vmatpush2.msra.mxu0 0.0
      %673 = vmatprep.subr.mxu0 0.0
      %674 = vmatpush2.msra.mxu0 0.0
      %675 = vmatprep.subr.mxu0 0.0
      %676 = vmatpush2.msra.mxu0 0.0
      %677 = vmatprep.subr.mxu0 0.0
      %678 = vmatpush2.msra.mxu0 0.0
      %679 = vmatprep.mubr.f32.mxu0 0.0
      %680 = vmatmul.mubr.f32.gmra.mxu0 %v225
      %v681 = vpop.f32.mrf.mxu0
      %v682 = vadd.f32 0.0, %v681
      %v683 = vpop.f32.mrf.mxu0
      %v684 = vadd.f32 0.0, %v683
      %685 = vmatprep.mubr.f32.mxu0 0.0
      %686 = vmatmul.mubr.f32.gmra.mxu0 %v228
      %v687 = vpop.f32.mrf.mxu0
      %v688 = vadd.f32 0.0, %v687
      %v689 = vpop.f32.mrf.mxu0
      %v690 = vadd.f32 0.0, %v689
      %691 = vdwg.mxu0
      %692 = vmatprep.subr.mxu0 0.0
      %693 = vmatpush1.msra.mxu0 0.0
      %694 = vmatprep.subr.mxu0 0.0
      %695 = vmatpush1.msra.mxu0 0.0
      %696 = vmatprep.subr.mxu0 0.0
      %697 = vmatpush1.msra.mxu0 0.0
      %698 = vmatprep.subr.mxu0 0.0
      %699 = vmatpush1.msra.mxu0 0.0
      %700 = vmatprep.subr.mxu0 0.0
      %701 = vmatpush1.msra.mxu0 0.0
      %702 = vmatprep.subr.mxu0 0.0
      %703 = vmatpush1.msra.mxu0 0.0
      %704 = vmatprep.subr.mxu0 0.0
      %705 = vmatpush1.msra.mxu0 0.0
      %706 = vmatprep.subr.mxu0 0.0
      %707 = vmatpush1.msra.mxu0 0.0
      %708 = vmatprep.subr.mxu0 0.0
      %709 = vmatpush1.msra.mxu0 0.0
      %710 = vmatprep.subr.mxu0 0.0
      %711 = vmatpush1.msra.mxu0 0.0
      %712 = vmatprep.subr.mxu0 0.0
      %713 = vmatpush1.msra.mxu0 0.0
      %714 = vmatprep.subr.mxu0 0.0
      %715 = vmatpush1.msra.mxu0 0.0
      %716 = vmatprep.subr.mxu0 0.0
      %717 = vmatpush1.msra.mxu0 0.0
      %718 = vmatprep.subr.mxu0 0.0
      %719 = vmatpush1.msra.mxu0 0.0
      %720 = vmatprep.subr.mxu0 0.0
      %721 = vmatpush1.msra.mxu0 0.0
      %722 = vmatprep.subr.mxu0 %v186
      %723 = vmatpush1.msra.mxu0 %v185
      %724 = vmatprep.subr.mxu0 0.0
      %725 = vmatpush2.msra.mxu0 0.0
      %726 = vmatprep.subr.mxu0 0.0
      %727 = vmatpush2.msra.mxu0 0.0
      %728 = vmatprep.subr.mxu0 0.0
      %729 = vmatpush2.msra.mxu0 0.0
      %730 = vmatprep.subr.mxu0 0.0
      %731 = vmatpush2.msra.mxu0 0.0
      %732 = vmatprep.subr.mxu0 0.0
      %733 = vmatpush2.msra.mxu0 0.0
      %734 = vmatprep.subr.mxu0 0.0
      %735 = vmatpush2.msra.mxu0 0.0
      %736 = vmatprep.subr.mxu0 0.0
      %737 = vmatpush2.msra.mxu0 0.0
      %738 = vmatprep.subr.mxu0 0.0
      %739 = vmatpush2.msra.mxu0 0.0
      %740 = vmatprep.subr.mxu0 0.0
      %741 = vmatpush2.msra.mxu0 0.0
      %742 = vmatprep.subr.mxu0 0.0
      %743 = vmatpush2.msra.mxu0 0.0
      %744 = vmatprep.subr.mxu0 0.0
      %745 = vmatpush2.msra.mxu0 0.0
      %746 = vmatprep.subr.mxu0 0.0
      %747 = vmatpush2.msra.mxu0 0.0
      %748 = vmatprep.subr.mxu0 0.0
      %749 = vmatpush2.msra.mxu0 0.0
      %750 = vmatprep.subr.mxu0 0.0
      %751 = vmatpush2.msra.mxu0 0.0
      %752 = vmatprep.subr.mxu0 0.0
      %753 = vmatpush2.msra.mxu0 0.0
      %754 = vmatprep.subr.mxu0 0.0
      %755 = vmatpush2.msra.mxu0 0.0
      %756 = vmatprep.mubr.f32.mxu0 0.0
      %757 = vmatmul.mubr.f32.gmra.mxu0 %v225
      %v758 = vpop.f32.mrf.mxu0
      %v759 = vadd.f32 0.0, %v758
      %v760 = vpop.f32.mrf.mxu0
      %v761 = vadd.f32 0.0, %v760
      %762 = vmatprep.mubr.f32.mxu0 0.0
      %763 = vmatmul.mubr.f32.gmra.mxu0 %v228
      %v764 = vpop.f32.mrf.mxu0
      %v765 = vadd.f32 0.0, %v764
      %v766 = vpop.f32.mrf.mxu0
      %v767 = vadd.f32 0.0, %v766
      %768 = vdwg.mxu0
      %769 = vmatprep.subr.mxu0 0.0
      %770 = vmatpush1.msra.mxu0 0.0
      %771 = vmatprep.subr.mxu0 0.0
      %772 = vmatpush1.msra.mxu0 0.0
      %773 = vmatprep.subr.mxu0 0.0
      %774 = vmatpush1.msra.mxu0 0.0
      %775 = vmatprep.subr.mxu0 0.0
      %776 = vmatpush1.msra.mxu0 0.0
      %777 = vmatprep.subr.mxu0 0.0
      %778 = vmatpush1.msra.mxu0 0.0
      %779 = vmatprep.subr.mxu0 0.0
      %780 = vmatpush1.msra.mxu0 0.0
      %781 = vmatprep.subr.mxu0 0.0
      %782 = vmatpush1.msra.mxu0 0.0
      %783 = vmatprep.subr.mxu0 0.0
      %784 = vmatpush1.msra.mxu0 0.0
      %785 = vmatprep.subr.mxu0 0.0
      %786 = vmatpush1.msra.mxu0 0.0
      %787 = vmatprep.subr.mxu0 0.0
      %788 = vmatpush1.msra.mxu0 0.0
      %789 = vmatprep.subr.mxu0 0.0
      %790 = vmatpush1.msra.mxu0 0.0
      %791 = vmatprep.subr.mxu0 0.0
      %792 = vmatpush1.msra.mxu0 0.0
      %793 = vmatprep.subr.mxu0 0.0
      %794 = vmatpush1.msra.mxu0 0.0
      %795 = vmatprep.subr.mxu0 0.0
      %796 = vmatpush1.msra.mxu0 0.0
      %797 = vmatprep.subr.mxu0 0.0
      %798 = vmatpush1.msra.mxu0 0.0
      %799 = vmatprep.subr.mxu0 %v188
      %800 = vmatpush1.msra.mxu0 %v187
      %801 = vmatprep.subr.mxu0 0.0
      %802 = vmatpush2.msra.mxu0 0.0
      %803 = vmatprep.subr.mxu0 0.0
      %804 = vmatpush2.msra.mxu0 0.0
      %805 = vmatprep.subr.mxu0 0.0
      %806 = vmatpush2.msra.mxu0 0.0
      %807 = vmatprep.subr.mxu0 0.0
      %808 = vmatpush2.msra.mxu0 0.0
      %809 = vmatprep.subr.mxu0 0.0
      %810 = vmatpush2.msra.mxu0 0.0
      %811 = vmatprep.subr.mxu0 0.0
      %812 = vmatpush2.msra.mxu0 0.0
      %813 = vmatprep.subr.mxu0 0.0
      %814 = vmatpush2.msra.mxu0 0.0
      %815 = vmatprep.subr.mxu0 0.0
      %816 = vmatpush2.msra.mxu0 0.0
      %817 = vmatprep.subr.mxu0 0.0
      %818 = vmatpush2.msra.mxu0 0.0
      %819 = vmatprep.subr.mxu0 0.0
      %820 = vmatpush2.msra.mxu0 0.0
      %821 = vmatprep.subr.mxu0 0.0
      %822 = vmatpush2.msra.mxu0 0.0
      %823 = vmatprep.subr.mxu0 0.0
      %824 = vmatpush2.msra.mxu0 0.0
      %825 = vmatprep.subr.mxu0 0.0
      %826 = vmatpush2.msra.mxu0 0.0
      %827 = vmatprep.subr.mxu0 0.0
      %828 = vmatpush2.msra.mxu0 0.0
      %829 = vmatprep.subr.mxu0 0.0
      %830 = vmatpush2.msra.mxu0 0.0
      %831 = vmatprep.subr.mxu0 0.0
      %832 = vmatpush2.msra.mxu0 0.0
      %833 = vmatprep.mubr.f32.mxu0 0.0
      %834 = vmatmul.mubr.f32.gmra.mxu0 %v225
      %v835 = vpop.f32.mrf.mxu0
      %v836 = vadd.f32 0.0, %v835
      %v837 = vpop.f32.mrf.mxu0
      %v838 = vadd.f32 0.0, %v837
      %839 = vmatprep.mubr.f32.mxu0 0.0
      %840 = vmatmul.mubr.f32.gmra.mxu0 %v228
      %v841 = vpop.f32.mrf.mxu0
      %v842 = vadd.f32 0.0, %v841
      %v843 = vpop.f32.mrf.mxu0
      %v844 = vadd.f32 0.0, %v843
      %845 = vdwg.mxu0
      %846 = vmatprep.subr.mxu0 0.0
      %847 = vmatpush1.msra.mxu0 0.0
      %848 = vmatprep.subr.mxu0 0.0
      %849 = vmatpush1.msra.mxu0 0.0
      %850 = vmatprep.subr.mxu0 0.0
      %851 = vmatpush1.msra.mxu0 0.0
      %852 = vmatprep.subr.mxu0 0.0
      %853 = vmatpush1.msra.mxu0 0.0
      %854 = vmatprep.subr.mxu0 0.0
      %855 = vmatpush1.msra.mxu0 0.0
      %856 = vmatprep.subr.mxu0 0.0
      %857 = vmatpush1.msra.mxu0 0.0
      %858 = vmatprep.subr.mxu0 0.0
      %859 = vmatpush1.msra.mxu0 0.0
      %860 = vmatprep.subr.mxu0 0.0
      %861 = vmatpush1.msra.mxu0 0.0
      %862 = vmatprep.subr.mxu0 0.0
      %863 = vmatpush1.msra.mxu0 0.0
      %864 = vmatprep.subr.mxu0 0.0
      %865 = vmatpush1.msra.mxu0 0.0
      %866 = vmatprep.subr.mxu0 0.0
      %867 = vmatpush1.msra.mxu0 0.0
      %868 = vmatprep.subr.mxu0 0.0
      %869 = vmatpush1.msra.mxu0 0.0
      %870 = vmatprep.subr.mxu0 0.0
      %871 = vmatpush1.msra.mxu0 0.0
      %872 = vmatprep.subr.mxu0 0.0
      %873 = vmatpush1.msra.mxu0 0.0
      %874 = vmatprep.subr.mxu0 0.0
      %875 = vmatpush1.msra.mxu0 0.0
      %876 = vmatprep.subr.mxu0 %v190
      %877 = vmatpush1.msra.mxu0 %v189
      %878 = vmatprep.subr.mxu0 0.0
      %879 = vmatpush2.msra.mxu0 0.0
      %880 = vmatprep.subr.mxu0 0.0
      %881 = vmatpush2.msra.mxu0 0.0
      %882 = vmatprep.subr.mxu0 0.0
      %883 = vmatpush2.msra.mxu0 0.0
      %884 = vmatprep.subr.mxu0 0.0
      %885 = vmatpush2.msra.mxu0 0.0
      %886 = vmatprep.subr.mxu0 0.0
      %887 = vmatpush2.msra.mxu0 0.0
      %888 = vmatprep.subr.mxu0 0.0
      %889 = vmatpush2.msra.mxu0 0.0
      %890 = vmatprep.subr.mxu0 0.0
      %891 = vmatpush2.msra.mxu0 0.0
      %892 = vmatprep.subr.mxu0 0.0
      %893 = vmatpush2.msra.mxu0 0.0
      %894 = vmatprep.subr.mxu0 0.0
      %895 = vmatpush2.msra.mxu0 0.0
      %896 = vmatprep.subr.mxu0 0.0
      %897 = vmatpush2.msra.mxu0 0.0
      %898 = vmatprep.subr.mxu0 0.0
      %899 = vmatpush2.msra.mxu0 0.0
      %900 = vmatprep.subr.mxu0 0.0
      %901 = vmatpush2.msra.mxu0 0.0
      %902 = vmatprep.subr.mxu0 0.0
      %903 = vmatpush2.msra.mxu0 0.0
      %904 = vmatprep.subr.mxu0 0.0
      %905 = vmatpush2.msra.mxu0 0.0
      %906 = vmatprep.subr.mxu0 0.0
      %907 = vmatpush2.msra.mxu0 0.0
      %908 = vmatprep.subr.mxu0 0.0
      %909 = vmatpush2.msra.mxu0 0.0
      %910 = vmatprep.mubr.f32.mxu0 0.0
      %911 = vmatmul.mubr.f32.gmra.mxu0 %v225
      %v912 = vpop.f32.mrf.mxu0
      %v913 = vadd.f32 0.0, %v912
      %v914 = vpop.f32.mrf.mxu0
      %v915 = vadd.f32 0.0, %v914
      %916 = vmatprep.mubr.f32.mxu0 0.0
      %917 = vmatmul.mubr.f32.gmra.mxu0 %v228
      %v918 = vpop.f32.mrf.mxu0
      %v919 = vadd.f32 0.0, %v918
      %v920 = vpop.f32.mrf.mxu0
      %v921 = vadd.f32 0.0, %v920
      %922 = vdwg.mxu0
      %923 = vmatprep.subr.mxu0 0.0
      %924 = vmatpush1.msra.mxu0 0.0
      %925 = vmatprep.subr.mxu0 0.0
      %926 = vmatpush1.msra.mxu0 0.0
      %927 = vmatprep.subr.mxu0 0.0
      %928 = vmatpush1.msra.mxu0 0.0
      %929 = vmatprep.subr.mxu0 0.0
      %930 = vmatpush1.msra.mxu0 0.0
      %931 = vmatprep.subr.mxu0 0.0
      %932 = vmatpush1.msra.mxu0 0.0
      %933 = vmatprep.subr.mxu0 0.0
      %934 = vmatpush1.msra.mxu0 0.0
      %935 = vmatprep.subr.mxu0 0.0
      %936 = vmatpush1.msra.mxu0 0.0
      %937 = vmatprep.subr.mxu0 0.0
      %938 = vmatpush1.msra.mxu0 0.0
      %939 = vmatprep.subr.mxu0 0.0
      %940 = vmatpush1.msra.mxu0 0.0
      %941 = vmatprep.subr.mxu0 0.0
      %942 = vmatpush1.msra.mxu0 0.0
      %943 = vmatprep.subr.mxu0 0.0
      %944 = vmatpush1.msra.mxu0 0.0
      %945 = vmatprep.subr.mxu0 0.0
      %946 = vmatpush1.msra.mxu0 0.0
      %947 = vmatprep.subr.mxu0 0.0
      %948 = vmatpush1.msra.mxu0 0.0
      %949 = vmatprep.subr.mxu0 0.0
      %950 = vmatpush1.msra.mxu0 0.0
      %951 = vmatprep.subr.mxu0 0.0
      %952 = vmatpush1.msra.mxu0 0.0
      %953 = vmatprep.subr.mxu0 %v192
      %954 = vmatpush1.msra.mxu0 %v191
      %955 = vmatprep.subr.mxu0 0.0
      %956 = vmatpush2.msra.mxu0 0.0
      %957 = vmatprep.subr.mxu0 0.0
      %958 = vmatpush2.msra.mxu0 0.0
      %959 = vmatprep.subr.mxu0 0.0
      %960 = vmatpush2.msra.mxu0 0.0
      %961 = vmatprep.subr.mxu0 0.0
      %962 = vmatpush2.msra.mxu0 0.0
      %963 = vmatprep.subr.mxu0 0.0
      %964 = vmatpush2.msra.mxu0 0.0
      %965 = vmatprep.subr.mxu0 0.0
      %966 = vmatpush2.msra.mxu0 0.0
      %967 = vmatprep.subr.mxu0 0.0
      %968 = vmatpush2.msra.mxu0 0.0
      %969 = vmatprep.subr.mxu0 0.0
      %970 = vmatpush2.msra.mxu0 0.0
      %971 = vmatprep.subr.mxu0 0.0
      %972 = vmatpush2.msra.mxu0 0.0
      %973 = vmatprep.subr.mxu0 0.0
      %974 = vmatpush2.msra.mxu0 0.0
      %975 = vmatprep.subr.mxu0 0.0
      %976 = vmatpush2.msra.mxu0 0.0
      %977 = vmatprep.subr.mxu0 0.0
      %978 = vmatpush2.msra.mxu0 0.0
      %979 = vmatprep.subr.mxu0 0.0
      %980 = vmatpush2.msra.mxu0 0.0
      %981 = vmatprep.subr.mxu0 0.0
      %982 = vmatpush2.msra.mxu0 0.0
      %983 = vmatprep.subr.mxu0 0.0
      %984 = vmatpush2.msra.mxu0 0.0
      %985 = vmatprep.subr.mxu0 0.0
      %986 = vmatpush2.msra.mxu0 0.0
      %987 = vmatprep.mubr.f32.mxu0 0.0
      %988 = vmatmul.mubr.f32.gmra.mxu0 %v225
      %v989 = vpop.f32.mrf.mxu0
      %v990 = vadd.f32 0.0, %v989
      %v991 = vpop.f32.mrf.mxu0
      %v992 = vadd.f32 0.0, %v991
      %993 = vmatprep.mubr.f32.mxu0 0.0
      %994 = vmatmul.mubr.f32.gmra.mxu0 %v228
      %v995 = vpop.f32.mrf.mxu0
      %v996 = vadd.f32 0.0, %v995
      %v997 = vpop.f32.mrf.mxu0
      %v998 = vadd.f32 0.0, %v997
      %999 = vdwg.mxu0
      %1000 = vmatprep.subr.mxu0 0.0
      %1001 = vmatpush1.msra.mxu0 0.0
      %1002 = vmatprep.subr.mxu0 0.0
      %1003 = vmatpush1.msra.mxu0 0.0
      %1004 = vmatprep.subr.mxu0 0.0
      %1005 = vmatpush1.msra.mxu0 0.0
      %1006 = vmatprep.subr.mxu0 0.0
      %1007 = vmatpush1.msra.mxu0 0.0
      %1008 = vmatprep.subr.mxu0 0.0
      %1009 = vmatpush1.msra.mxu0 0.0
      %1010 = vmatprep.subr.mxu0 0.0
      %1011 = vmatpush1.msra.mxu0 0.0
      %1012 = vmatprep.subr.mxu0 0.0
      %1013 = vmatpush1.msra.mxu0 0.0
      %1014 = vmatprep.subr.mxu0 0.0
      %1015 = vmatpush1.msra.mxu0 0.0
      %1016 = vmatprep.subr.mxu0 0.0
      %1017 = vmatpush1.msra.mxu0 0.0
      %1018 = vmatprep.subr.mxu0 0.0
      %1019 = vmatpush1.msra.mxu0 0.0
      %1020 = vmatprep.subr.mxu0 0.0
      %1021 = vmatpush1.msra.mxu0 0.0
      %1022 = vmatprep.subr.mxu0 0.0
      %1023 = vmatpush1.msra.mxu0 0.0
      %1024 = vmatprep.subr.mxu0 0.0
      %1025 = vmatpush1.msra.mxu0 0.0
      %1026 = vmatprep.subr.mxu0 0.0
      %1027 = vmatpush1.msra.mxu0 0.0
      %1028 = vmatprep.subr.mxu0 0.0
      %1029 = vmatpush1.msra.mxu0 0.0
      %1030 = vmatprep.subr.mxu0 %v194
      %1031 = vmatpush1.msra.mxu0 %v193
      %1032 = vmatprep.subr.mxu0 0.0
      %1033 = vmatpush2.msra.mxu0 0.0
      %1034 = vmatprep.subr.mxu0 0.0
      %1035 = vmatpush2.msra.mxu0 0.0
      %1036 = vmatprep.subr.mxu0 0.0
      %1037 = vmatpush2.msra.mxu0 0.0
      %1038 = vmatprep.subr.mxu0 0.0
      %1039 = vmatpush2.msra.mxu0 0.0
      %1040 = vmatprep.subr.mxu0 0.0
      %1041 = vmatpush2.msra.mxu0 0.0
      %1042 = vmatprep.subr.mxu0 0.0
      %1043 = vmatpush2.msra.mxu0 0.0
      %1044 = vmatprep.subr.mxu0 0.0
      %1045 = vmatpush2.msra.mxu0 0.0
      %1046 = vmatprep.subr.mxu0 0.0
      %1047 = vmatpush2.msra.mxu0 0.0
      %1048 = vmatprep.subr.mxu0 0.0
      %1049 = vmatpush2.msra.mxu0 0.0
      %1050 = vmatprep.subr.mxu0 0.0
      %1051 = vmatpush2.msra.mxu0 0.0
      %1052 = vmatprep.subr.mxu0 0.0
      %1053 = vmatpush2.msra.mxu0 0.0
      %1054 = vmatprep.subr.mxu0 0.0
      %1055 = vmatpush2.msra.mxu0 0.0
      %1056 = vmatprep.subr.mxu0 0.0
      %1057 = vmatpush2.msra.mxu0 0.0
      %1058 = vmatprep.subr.mxu0 0.0
      %1059 = vmatpush2.msra.mxu0 0.0
      %1060 = vmatprep.subr.mxu0 0.0
      %1061 = vmatpush2.msra.mxu0 0.0
      %1062 = vmatprep.subr.mxu0 0.0
      %1063 = vmatpush2.msra.mxu0 0.0
      %1064 = vmatprep.mubr.f32.mxu0 0.0
      %1065 = vmatmul.mubr.f32.gmra.mxu0 %v225
      %v1066 = vpop.f32.mrf.mxu0
      %v1067 = vadd.f32 0.0, %v1066
      %v1068 = vpop.f32.mrf.mxu0
      %v1069 = vadd.f32 0.0, %v1068
      %1070 = vmatprep.mubr.f32.mxu0 0.0
      %1071 = vmatmul.mubr.f32.gmra.mxu0 %v228
      %v1072 = vpop.f32.mrf.mxu0
      %v1073 = vadd.f32 0.0, %v1072
      %v1074 = vpop.f32.mrf.mxu0
      %v1075 = vadd.f32 0.0, %v1074
      %1076 = vdwg.mxu0
      %1077 = vmatprep.subr.mxu0 0.0
      %1078 = vmatpush1.msra.mxu0 0.0
      %1079 = vmatprep.subr.mxu0 0.0
      %1080 = vmatpush1.msra.mxu0 0.0
      %1081 = vmatprep.subr.mxu0 0.0
      %1082 = vmatpush1.msra.mxu0 0.0
      %1083 = vmatprep.subr.mxu0 0.0
      %1084 = vmatpush1.msra.mxu0 0.0
      %1085 = vmatprep.subr.mxu0 0.0
      %1086 = vmatpush1.msra.mxu0 0.0
      %1087 = vmatprep.subr.mxu0 0.0
      %1088 = vmatpush1.msra.mxu0 0.0
      %1089 = vmatprep.subr.mxu0 0.0
      %1090 = vmatpush1.msra.mxu0 0.0
      %1091 = vmatprep.subr.mxu0 0.0
      %1092 = vmatpush1.msra.mxu0 0.0
      %1093 = vmatprep.subr.mxu0 0.0
      %1094 = vmatpush1.msra.mxu0 0.0
      %1095 = vmatprep.subr.mxu0 0.0
      %1096 = vmatpush1.msra.mxu0 0.0
      %1097 = vmatprep.subr.mxu0 0.0
      %1098 = vmatpush1.msra.mxu0 0.0
      %1099 = vmatprep.subr.mxu0 0.0
      %1100 = vmatpush1.msra.mxu0 0.0
      %1101 = vmatprep.subr.mxu0 0.0
      %1102 = vmatpush1.msra.mxu0 0.0
      %1103 = vmatprep.subr.mxu0 0.0
      %1104 = vmatpush1.msra.mxu0 0.0
      %1105 = vmatprep.subr.mxu0 0.0
      %1106 = vmatpush1.msra.mxu0 0.0
      %1107 = vmatprep.subr.mxu0 %v196
      %1108 = vmatpush1.msra.mxu0 %v195
      %1109 = vmatprep.subr.mxu0 0.0
      %1110 = vmatpush2.msra.mxu0 0.0
      %1111 = vmatprep.subr.mxu0 0.0
      %1112 = vmatpush2.msra.mxu0 0.0
      %1113 = vmatprep.subr.mxu0 0.0
      %1114 = vmatpush2.msra.mxu0 0.0
      %1115 = vmatprep.subr.mxu0 0.0
      %1116 = vmatpush2.msra.mxu0 0.0
      %1117 = vmatprep.subr.mxu0 0.0
      %1118 = vmatpush2.msra.mxu0 0.0
      %1119 = vmatprep.subr.mxu0 0.0
      %1120 = vmatpush2.msra.mxu0 0.0
      %1121 = vmatprep.subr.mxu0 0.0
      %1122 = vmatpush2.msra.mxu0 0.0
      %1123 = vmatprep.subr.mxu0 0.0
      %1124 = vmatpush2.msra.mxu0 0.0
      %1125 = vmatprep.subr.mxu0 0.0
      %1126 = vmatpush2.msra.mxu0 0.0
      %1127 = vmatprep.subr.mxu0 0.0
      %1128 = vmatpush2.msra.mxu0 0.0
      %1129 = vmatprep.subr.mxu0 0.0
      %1130 = vmatpush2.msra.mxu0 0.0
      %1131 = vmatprep.subr.mxu0 0.0
      %1132 = vmatpush2.msra.mxu0 0.0
      %1133 = vmatprep.subr.mxu0 0.0
      %1134 = vmatpush2.msra.mxu0 0.0
      %1135 = vmatprep.subr.mxu0 0.0
      %1136 = vmatpush2.msra.mxu0 0.0
      %1137 = vmatprep.subr.mxu0 0.0
      %1138 = vmatpush2.msra.mxu0 0.0
      %1139 = vmatprep.subr.mxu0 0.0
      %1140 = vmatpush2.msra.mxu0 0.0
      %1141 = vmatprep.mubr.f32.mxu0 0.0
      %1142 = vmatmul.mubr.f32.gmra.mxu0 %v225
      %v1143 = vpop.f32.mrf.mxu0
      %v1144 = vadd.f32 0.0, %v1143
      %v1145 = vpop.f32.mrf.mxu0
      %v1146 = vadd.f32 0.0, %v1145
      %1147 = vmatprep.mubr.f32.mxu0 0.0
      %1148 = vmatmul.mubr.f32.gmra.mxu0 %v228
      %v1149 = vpop.f32.mrf.mxu0
      %v1150 = vadd.f32 0.0, %v1149
      %v1151 = vpop.f32.mrf.mxu0
      %v1152 = vadd.f32 0.0, %v1151
      %1153 = vdwg.mxu0
      %1154 = vmatprep.subr.mxu0 0.0
      %1155 = vmatpush1.msra.mxu0 0.0
      %1156 = vmatprep.subr.mxu0 0.0
      %1157 = vmatpush1.msra.mxu0 0.0
      %1158 = vmatprep.subr.mxu0 0.0
      %1159 = vmatpush1.msra.mxu0 0.0
      %1160 = vmatprep.subr.mxu0 0.0
      %1161 = vmatpush1.msra.mxu0 0.0
      %1162 = vmatprep.subr.mxu0 0.0
      %1163 = vmatpush1.msra.mxu0 0.0
      %1164 = vmatprep.subr.mxu0 0.0
      %1165 = vmatpush1.msra.mxu0 0.0
      %1166 = vmatprep.subr.mxu0 0.0
      %1167 = vmatpush1.msra.mxu0 0.0
      %1168 = vmatprep.subr.mxu0 0.0
      %1169 = vmatpush1.msra.mxu0 0.0
      %1170 = vmatprep.subr.mxu0 0.0
      %1171 = vmatpush1.msra.mxu0 0.0
      %1172 = vmatprep.subr.mxu0 0.0
      %1173 = vmatpush1.msra.mxu0 0.0
      %1174 = vmatprep.subr.mxu0 0.0
      %1175 = vmatpush1.msra.mxu0 0.0
      %1176 = vmatprep.subr.mxu0 0.0
      %1177 = vmatpush1.msra.mxu0 0.0
      %1178 = vmatprep.subr.mxu0 0.0
      %1179 = vmatpush1.msra.mxu0 0.0
      %1180 = vmatprep.subr.mxu0 0.0
      %1181 = vmatpush1.msra.mxu0 0.0
      %1182 = vmatprep.subr.mxu0 0.0
      %1183 = vmatpush1.msra.mxu0 0.0
      %1184 = vmatprep.subr.mxu0 %v198
      %1185 = vmatpush1.msra.mxu0 %v197
      %1186 = vmatprep.subr.mxu0 0.0
      %1187 = vmatpush2.msra.mxu0 0.0
      %1188 = vmatprep.subr.mxu0 0.0
      %1189 = vmatpush2.msra.mxu0 0.0
      %1190 = vmatprep.subr.mxu0 0.0
      %1191 = vmatpush2.msra.mxu0 0.0
      %1192 = vmatprep.subr.mxu0 0.0
      %1193 = vmatpush2.msra.mxu0 0.0
      %1194 = vmatprep.subr.mxu0 0.0
      %1195 = vmatpush2.msra.mxu0 0.0
      %1196 = vmatprep.subr.mxu0 0.0
      %1197 = vmatpush2.msra.mxu0 0.0
      %1198 = vmatprep.subr.mxu0 0.0
      %1199 = vmatpush2.msra.mxu0 0.0
      %1200 = vmatprep.subr.mxu0 0.0
      %1201 = vmatpush2.msra.mxu0 0.0
      %1202 = vmatprep.subr.mxu0 0.0
      %1203 = vmatpush2.msra.mxu0 0.0
      %1204 = vmatprep.subr.mxu0 0.0
      %1205 = vmatpush2.msra.mxu0 0.0
      %1206 = vmatprep.subr.mxu0 0.0
      %1207 = vmatpush2.msra.mxu0 0.0
      %1208 = vmatprep.subr.mxu0 0.0
      %1209 = vmatpush2.msra.mxu0 0.0
      %1210 = vmatprep.subr.mxu0 0.0
      %1211 = vmatpush2.msra.mxu0 0.0
      %1212 = vmatprep.subr.mxu0 0.0
      %1213 = vmatpush2.msra.mxu0 0.0
      %1214 = vmatprep.subr.mxu0 0.0
      %1215 = vmatpush2.msra.mxu0 0.0
      %1216 = vmatprep.subr.mxu0 0.0
      %1217 = vmatpush2.msra.mxu0 0.0
      %1218 = vmatprep.mubr.f32.mxu0 0.0
      %1219 = vmatmul.mubr.f32.gmra.mxu0 %v225
      %v1220 = vpop.f32.mrf.mxu0
      %v1221 = vadd.f32 0.0, %v1220
      %v1222 = vpop.f32.mrf.mxu0
      %v1223 = vadd.f32 0.0, %v1222
      %1224 = vmatprep.mubr.f32.mxu0 0.0
      %1225 = vmatmul.mubr.f32.gmra.mxu0 %v228
      %v1226 = vpop.f32.mrf.mxu0
      %v1227 = vadd.f32 0.0, %v1226
      %v1228 = vpop.f32.mrf.mxu0
      %v1229 = vadd.f32 0.0, %v1228
      %1230 = vdwg.mxu0
      %1231 = vmatprep.subr.mxu0 0.0
      %1232 = vmatpush1.msra.mxu0 0.0
      %1233 = vmatprep.subr.mxu0 0.0
      %1234 = vmatpush1.msra.mxu0 0.0
      %1235 = vmatprep.subr.mxu0 0.0
      %1236 = vmatpush1.msra.mxu0 0.0
      %1237 = vmatprep.subr.mxu0 0.0
      %1238 = vmatpush1.msra.mxu0 0.0
      %1239 = vmatprep.subr.mxu0 0.0
      %1240 = vmatpush1.msra.mxu0 0.0
      %1241 = vmatprep.subr.mxu0 0.0
      %1242 = vmatpush1.msra.mxu0 0.0
      %1243 = vmatprep.subr.mxu0 0.0
      %1244 = vmatpush1.msra.mxu0 0.0
      %1245 = vmatprep.subr.mxu0 0.0
      %1246 = vmatpush1.msra.mxu0 0.0
      %1247 = vmatprep.subr.mxu0 0.0
      %1248 = vmatpush1.msra.mxu0 0.0
      %1249 = vmatprep.subr.mxu0 0.0
      %1250 = vmatpush1.msra.mxu0 0.0
      %1251 = vmatprep.subr.mxu0 0.0
      %1252 = vmatpush1.msra.mxu0 0.0
      %1253 = vmatprep.subr.mxu0 0.0
      %1254 = vmatpush1.msra.mxu0 0.0
      %1255 = vmatprep.subr.mxu0 0.0
      %1256 = vmatpush1.msra.mxu0 0.0
      %1257 = vmatprep.subr.mxu0 0.0
      %1258 = vmatpush1.msra.mxu0 0.0
      %1259 = vmatprep.subr.mxu0 0.0
      %1260 = vmatpush1.msra.mxu0 0.0
      %1261 = vmatprep.subr.mxu0 %v200
      %1262 = vmatpush1.msra.mxu0 %v199
      %1263 = vmatprep.subr.mxu0 0.0
      %1264 = vmatpush2.msra.mxu0 0.0
      %1265 = vmatprep.subr.mxu0 0.0
      %1266 = vmatpush2.msra.mxu0 0.0
      %1267 = vmatprep.subr.mxu0 0.0
      %1268 = vmatpush2.msra.mxu0 0.0
      %1269 = vmatprep.subr.mxu0 0.0
      %1270 = vmatpush2.msra.mxu0 0.0
      %1271 = vmatprep.subr.mxu0 0.0
      %1272 = vmatpush2.msra.mxu0 0.0
      %1273 = vmatprep.subr.mxu0 0.0
      %1274 = vmatpush2.msra.mxu0 0.0
      %1275 = vmatprep.subr.mxu0 0.0
      %1276 = vmatpush2.msra.mxu0 0.0
      %1277 = vmatprep.subr.mxu0 0.0
      %1278 = vmatpush2.msra.mxu0 0.0
      %1279 = vmatprep.subr.mxu0 0.0
      %1280 = vmatpush2.msra.mxu0 0.0
      %1281 = vmatprep.subr.mxu0 0.0
      %1282 = vmatpush2.msra.mxu0 0.0
      %1283 = vmatprep.subr.mxu0 0.0
      %1284 = vmatpush2.msra.mxu0 0.0
      %1285 = vmatprep.subr.mxu0 0.0
      %1286 = vmatpush2.msra.mxu0 0.0
      %1287 = vmatprep.subr.mxu0 0.0
      %1288 = vmatpush2.msra.mxu0 0.0
      %1289 = vmatprep.subr.mxu0 0.0
      %1290 = vmatpush2.msra.mxu0 0.0
      %1291 = vmatprep.subr.mxu0 0.0
      %1292 = vmatpush2.msra.mxu0 0.0
      %1293 = vmatprep.subr.mxu0 0.0
      %1294 = vmatpush2.msra.mxu0 0.0
      %1295 = vmatprep.mubr.f32.mxu0 0.0
      %1296 = vmatmul.mubr.f32.gmra.mxu0 %v225
      %v1297 = vpop.f32.mrf.mxu0
      %v1298 = vadd.f32 0.0, %v1297
      %v1299 = vpop.f32.mrf.mxu0
      %v1300 = vadd.f32 0.0, %v1299
      %1301 = vmatprep.mubr.f32.mxu0 0.0
      %1302 = vmatmul.mubr.f32.gmra.mxu0 %v228
      %v1303 = vpop.f32.mrf.mxu0
      %v1304 = vadd.f32 0.0, %v1303
      %v1305 = vpop.f32.mrf.mxu0
      %v1306 = vadd.f32 0.0, %v1305
      %1307 = vdwg.mxu0
      %1308 = vmatprep.subr.mxu0 0.0
      %1309 = vmatpush1.msra.mxu0 0.0
      %1310 = vmatprep.subr.mxu0 0.0
      %1311 = vmatpush1.msra.mxu0 0.0
      %1312 = vmatprep.subr.mxu0 0.0
      %1313 = vmatpush1.msra.mxu0 0.0
      %1314 = vmatprep.subr.mxu0 0.0
      %1315 = vmatpush1.msra.mxu0 0.0
      %1316 = vmatprep.subr.mxu0 0.0
      %1317 = vmatpush1.msra.mxu0 0.0
      %1318 = vmatprep.subr.mxu0 0.0
      %1319 = vmatpush1.msra.mxu0 0.0
      %1320 = vmatprep.subr.mxu0 0.0
      %1321 = vmatpush1.msra.mxu0 0.0
      %1322 = vmatprep.subr.mxu0 0.0
      %1323 = vmatpush1.msra.mxu0 0.0
      %1324 = vmatprep.subr.mxu0 0.0
      %1325 = vmatpush1.msra.mxu0 0.0
      %1326 = vmatprep.subr.mxu0 0.0
      %1327 = vmatpush1.msra.mxu0 0.0
      %1328 = vmatprep.subr.mxu0 0.0
      %1329 = vmatpush1.msra.mxu0 0.0
      %1330 = vmatprep.subr.mxu0 0.0
      %1331 = vmatpush1.msra.mxu0 0.0
      %1332 = vmatprep.subr.mxu0 0.0
      %1333 = vmatpush1.msra.mxu0 0.0
      %1334 = vmatprep.subr.mxu0 0.0
      %1335 = vmatpush1.msra.mxu0 0.0
      %1336 = vmatprep.subr.mxu0 0.0
      %1337 = vmatpush1.msra.mxu0 0.0
      %1338 = vmatprep.subr.mxu0 %v202
      %1339 = vmatpush1.msra.mxu0 %v201
      %1340 = vmatprep.subr.mxu0 0.0
      %1341 = vmatpush2.msra.mxu0 0.0
      %1342 = vmatprep.subr.mxu0 0.0
      %1343 = vmatpush2.msra.mxu0 0.0
      %1344 = vmatprep.subr.mxu0 0.0
      %1345 = vmatpush2.msra.mxu0 0.0
      %1346 = vmatprep.subr.mxu0 0.0
      %1347 = vmatpush2.msra.mxu0 0.0
      %1348 = vmatprep.subr.mxu0 0.0
      %1349 = vmatpush2.msra.mxu0 0.0
      %1350 = vmatprep.subr.mxu0 0.0
      %1351 = vmatpush2.msra.mxu0 0.0
      %1352 = vmatprep.subr.mxu0 0.0
      %1353 = vmatpush2.msra.mxu0 0.0
      %1354 = vmatprep.subr.mxu0 0.0
      %1355 = vmatpush2.msra.mxu0 0.0
      %1356 = vmatprep.subr.mxu0 0.0
      %1357 = vmatpush2.msra.mxu0 0.0
      %1358 = vmatprep.subr.mxu0 0.0
      %1359 = vmatpush2.msra.mxu0 0.0
      %1360 = vmatprep.subr.mxu0 0.0
      %1361 = vmatpush2.msra.mxu0 0.0
      %1362 = vmatprep.subr.mxu0 0.0
      %1363 = vmatpush2.msra.mxu0 0.0
      %1364 = vmatprep.subr.mxu0 0.0
      %1365 = vmatpush2.msra.mxu0 0.0
      %1366 = vmatprep.subr.mxu0 0.0
      %1367 = vmatpush2.msra.mxu0 0.0
      %1368 = vmatprep.subr.mxu0 0.0
      %1369 = vmatpush2.msra.mxu0 0.0
      %1370 = vmatprep.subr.mxu0 0.0
      %1371 = vmatpush2.msra.mxu0 0.0
      %1372 = vmatprep.mubr.f32.mxu0 0.0
      %1373 = vmatmul.mubr.f32.gmra.mxu0 %v225
      %v1374 = vpop.f32.mrf.mxu0
      %v1375 = vadd.f32 0.0, %v1374
      %v1376 = vpop.f32.mrf.mxu0
      %v1377 = vadd.f32 0.0, %v1376
      %1378 = vmatprep.mubr.f32.mxu0 0.0
      %1379 = vmatmul.mubr.f32.gmra.mxu0 %v228
      %v1380 = vpop.f32.mrf.mxu0
      %v1381 = vadd.f32 0.0, %v1380
      %v1382 = vpop.f32.mrf.mxu0
      %v1383 = vadd.f32 0.0, %v1382
      %1384 = vdwg.mxu0
      %1385 = vmatprep.subr.mxu0 0.0
      %1386 = vmatpush1.msra.mxu0 0.0
      %1387 = vmatprep.subr.mxu0 0.0
      %1388 = vmatpush1.msra.mxu0 0.0
      %1389 = vmatprep.subr.mxu0 0.0
      %1390 = vmatpush1.msra.mxu0 0.0
      %1391 = vmatprep.subr.mxu0 0.0
      %1392 = vmatpush1.msra.mxu0 0.0
      %1393 = vmatprep.subr.mxu0 0.0
      %1394 = vmatpush1.msra.mxu0 0.0
      %1395 = vmatprep.subr.mxu0 0.0
      %1396 = vmatpush1.msra.mxu0 0.0
      %1397 = vmatprep.subr.mxu0 0.0
      %1398 = vmatpush1.msra.mxu0 0.0
      %1399 = vmatprep.subr.mxu0 0.0
      %1400 = vmatpush1.msra.mxu0 0.0
      %1401 = vmatprep.subr.mxu0 0.0
      %1402 = vmatpush1.msra.mxu0 0.0
      %1403 = vmatprep.subr.mxu0 0.0
      %1404 = vmatpush1.msra.mxu0 0.0
      %1405 = vmatprep.subr.mxu0 0.0
      %1406 = vmatpush1.msra.mxu0 0.0
      %1407 = vmatprep.subr.mxu0 0.0
      %1408 = vmatpush1.msra.mxu0 0.0
      %1409 = vmatprep.subr.mxu0 0.0
      %1410 = vmatpush1.msra.mxu0 0.0
      %1411 = vmatprep.subr.mxu0 0.0
      %1412 = vmatpush1.msra.mxu0 0.0
      %1413 = vmatprep.subr.mxu0 0.0
      %1414 = vmatpush1.msra.mxu0 0.0
      %1415 = vmatprep.subr.mxu0 %v204
      %1416 = vmatpush1.msra.mxu0 %v203
      %1417 = vmatprep.subr.mxu0 0.0
      %1418 = vmatpush2.msra.mxu0 0.0
      %1419 = vmatprep.subr.mxu0 0.0
      %1420 = vmatpush2.msra.mxu0 0.0
      %1421 = vmatprep.subr.mxu0 0.0
      %1422 = vmatpush2.msra.mxu0 0.0
      %1423 = vmatprep.subr.mxu0 0.0
      %1424 = vmatpush2.msra.mxu0 0.0
      %1425 = vmatprep.subr.mxu0 0.0
      %1426 = vmatpush2.msra.mxu0 0.0
      %1427 = vmatprep.subr.mxu0 0.0
      %1428 = vmatpush2.msra.mxu0 0.0
      %1429 = vmatprep.subr.mxu0 0.0
      %1430 = vmatpush2.msra.mxu0 0.0
      %1431 = vmatprep.subr.mxu0 0.0
      %1432 = vmatpush2.msra.mxu0 0.0
      %1433 = vmatprep.subr.mxu0 0.0
      %1434 = vmatpush2.msra.mxu0 0.0
      %1435 = vmatprep.subr.mxu0 0.0
      %1436 = vmatpush2.msra.mxu0 0.0
      %1437 = vmatprep.subr.mxu0 0.0
      %1438 = vmatpush2.msra.mxu0 0.0
      %1439 = vmatprep.subr.mxu0 0.0
      %1440 = vmatpush2.msra.mxu0 0.0
      %1441 = vmatprep.subr.mxu0 0.0
      %1442 = vmatpush2.msra.mxu0 0.0
      %1443 = vmatprep.subr.mxu0 0.0
      %1444 = vmatpush2.msra.mxu0 0.0
      %1445 = vmatprep.subr.mxu0 0.0
      %1446 = vmatpush2.msra.mxu0 0.0
      %1447 = vmatprep.subr.mxu0 0.0
      %1448 = vmatpush2.msra.mxu0 0.0
      %1449 = vmatprep.mubr.f32.mxu0 0.0
      %1450 = vmatmul.mubr.f32.gmra.mxu0 %v225
      %v1451 = vpop.f32.mrf.mxu0
      %v1452 = vadd.f32 0.0, %v1451
      %v1453 = vpop.f32.mrf.mxu0
      %v1454 = vadd.f32 0.0, %v1453
      %1455 = vmatprep.mubr.f32.mxu0 0.0
      %1456 = vmatmul.mubr.f32.gmra.mxu0 %v228
      %v1457 = vpop.f32.mrf.mxu0
      %v1458 = vadd.f32 0.0, %v1457
      %v1459 = vpop.f32.mrf.mxu0
      %v1460 = vadd.f32 0.0, %v1459
      %1461 = vdwg.mxu0
      %1462 = vmatprep.subr.mxu0 0.0
      %1463 = vmatpush1.msra.mxu0 0.0
      %1464 = vmatprep.subr.mxu0 0.0
      %1465 = vmatpush1.msra.mxu0 0.0
      %1466 = vmatprep.subr.mxu0 0.0
      %1467 = vmatpush1.msra.mxu0 0.0
      %1468 = vmatprep.subr.mxu0 0.0
      %1469 = vmatpush1.msra.mxu0 0.0
      %1470 = vmatprep.subr.mxu0 0.0
      %1471 = vmatpush1.msra.mxu0 0.0
      %1472 = vmatprep.subr.mxu0 0.0
      %1473 = vmatpush1.msra.mxu0 0.0
      %1474 = vmatprep.subr.mxu0 0.0
      %1475 = vmatpush1.msra.mxu0 0.0
      %1476 = vmatprep.subr.mxu0 0.0
      %1477 = vmatpush1.msra.mxu0 0.0
      %1478 = vmatprep.subr.mxu0 0.0
      %1479 = vmatpush1.msra.mxu0 0.0
      %1480 = vmatprep.subr.mxu0 0.0
      %1481 = vmatpush1.msra.mxu0 0.0
      %1482 = vmatprep.subr.mxu0 0.0
      %1483 = vmatpush1.msra.mxu0 0.0
      %1484 = vmatprep.subr.mxu0 0.0
      %1485 = vmatpush1.msra.mxu0 0.0
      %1486 = vmatprep.subr.mxu0 0.0
      %1487 = vmatpush1.msra.mxu0 0.0
      %1488 = vmatprep.subr.mxu0 0.0
      %1489 = vmatpush1.msra.mxu0 0.0
      %1490 = vmatprep.subr.mxu0 0.0
      %1491 = vmatpush1.msra.mxu0 0.0
      %1492 = vmatprep.subr.mxu0 %v206
      %1493 = vmatpush1.msra.mxu0 %v205
      %1494 = vmatprep.subr.mxu0 0.0
      %1495 = vmatpush2.msra.mxu0 0.0
      %1496 = vmatprep.subr.mxu0 0.0
      %1497 = vmatpush2.msra.mxu0 0.0
      %1498 = vmatprep.subr.mxu0 0.0
      %1499 = vmatpush2.msra.mxu0 0.0
      %1500 = vmatprep.subr.mxu0 0.0
      %1501 = vmatpush2.msra.mxu0 0.0
      %1502 = vmatprep.subr.mxu0 0.0
      %1503 = vmatpush2.msra.mxu0 0.0
      %1504 = vmatprep.subr.mxu0 0.0
      %1505 = vmatpush2.msra.mxu0 0.0
      %1506 = vmatprep.subr.mxu0 0.0
      %1507 = vmatpush2.msra.mxu0 0.0
      %1508 = vmatprep.subr.mxu0 0.0
      %1509 = vmatpush2.msra.mxu0 0.0
      %1510 = vmatprep.subr.mxu0 0.0
      %1511 = vmatpush2.msra.mxu0 0.0
      %1512 = vmatprep.subr.mxu0 0.0
      %1513 = vmatpush2.msra.mxu0 0.0
      %1514 = vmatprep.subr.mxu0 0.0
      %1515 = vmatpush2.msra.mxu0 0.0
      %1516 = vmatprep.subr.mxu0 0.0
      %1517 = vmatpush2.msra.mxu0 0.0
      %1518 = vmatprep.subr.mxu0 0.0
      %1519 = vmatpush2.msra.mxu0 0.0
      %1520 = vmatprep.subr.mxu0 0.0
      %1521 = vmatpush2.msra.mxu0 0.0
      %1522 = vmatprep.subr.mxu0 0.0
      %1523 = vmatpush2.msra.mxu0 0.0
      %1524 = vmatprep.subr.mxu0 0.0
      %1525 = vmatpush2.msra.mxu0 0.0
      %1526 = vmatprep.mubr.f32.mxu0 0.0
      %1527 = vmatmul.mubr.f32.gmra.mxu0 %v225
      %v1528 = vpop.f32.mrf.mxu0
      %v1529 = vadd.f32 0.0, %v1528
      %v1530 = vpop.f32.mrf.mxu0
      %v1531 = vadd.f32 0.0, %v1530
      %1532 = vmatprep.mubr.f32.mxu0 0.0
      %1533 = vmatmul.mubr.f32.gmra.mxu0 %v228
      %v1534 = vpop.f32.mrf.mxu0
      %v1535 = vadd.f32 0.0, %v1534
      %v1536 = vpop.f32.mrf.mxu0
      %v1537 = vadd.f32 0.0, %v1536
      %1538 = vdwg.mxu0
      %1539 = vmatprep.subr.mxu0 0.0
      %1540 = vmatpush1.msra.mxu0 0.0
      %1541 = vmatprep.subr.mxu0 0.0
      %1542 = vmatpush1.msra.mxu0 0.0
      %1543 = vmatprep.subr.mxu0 0.0
      %1544 = vmatpush1.msra.mxu0 0.0
      %1545 = vmatprep.subr.mxu0 0.0
      %1546 = vmatpush1.msra.mxu0 0.0
      %1547 = vmatprep.subr.mxu0 0.0
      %1548 = vmatpush1.msra.mxu0 0.0
      %1549 = vmatprep.subr.mxu0 0.0
      %1550 = vmatpush1.msra.mxu0 0.0
      %1551 = vmatprep.subr.mxu0 0.0
      %1552 = vmatpush1.msra.mxu0 0.0
      %1553 = vmatprep.subr.mxu0 0.0
      %1554 = vmatpush1.msra.mxu0 0.0
      %1555 = vmatprep.subr.mxu0 0.0
      %1556 = vmatpush1.msra.mxu0 0.0
      %1557 = vmatprep.subr.mxu0 0.0
      %1558 = vmatpush1.msra.mxu0 0.0
      %1559 = vmatprep.subr.mxu0 0.0
      %1560 = vmatpush1.msra.mxu0 0.0
      %1561 = vmatprep.subr.mxu0 0.0
      %1562 = vmatpush1.msra.mxu0 0.0
      %1563 = vmatprep.subr.mxu0 0.0
      %1564 = vmatpush1.msra.mxu0 0.0
      %1565 = vmatprep.subr.mxu0 0.0
      %1566 = vmatpush1.msra.mxu0 0.0
      %1567 = vmatprep.subr.mxu0 0.0
      %1568 = vmatpush1.msra.mxu0 0.0
      %1569 = vmatprep.subr.mxu0 %v208
      %1570 = vmatpush1.msra.mxu0 %v207
      %1571 = vmatprep.subr.mxu0 0.0
      %1572 = vmatpush2.msra.mxu0 0.0
      %1573 = vmatprep.subr.mxu0 0.0
      %1574 = vmatpush2.msra.mxu0 0.0
      %1575 = vmatprep.subr.mxu0 0.0
      %1576 = vmatpush2.msra.mxu0 0.0
      %1577 = vmatprep.subr.mxu0 0.0
      %1578 = vmatpush2.msra.mxu0 0.0
      %1579 = vmatprep.subr.mxu0 0.0
      %1580 = vmatpush2.msra.mxu0 0.0
      %1581 = vmatprep.subr.mxu0 0.0
      %1582 = vmatpush2.msra.mxu0 0.0
      %1583 = vmatprep.subr.mxu0 0.0
      %1584 = vmatpush2.msra.mxu0 0.0
      %1585 = vmatprep.subr.mxu0 0.0
      %1586 = vmatpush2.msra.mxu0 0.0
      %1587 = vmatprep.subr.mxu0 0.0
      %1588 = vmatpush2.msra.mxu0 0.0
      %1589 = vmatprep.subr.mxu0 0.0
      %1590 = vmatpush2.msra.mxu0 0.0
      %1591 = vmatprep.subr.mxu0 0.0
      %1592 = vmatpush2.msra.mxu0 0.0
      %1593 = vmatprep.subr.mxu0 0.0
      %1594 = vmatpush2.msra.mxu0 0.0
      %1595 = vmatprep.subr.mxu0 0.0
      %1596 = vmatpush2.msra.mxu0 0.0
      %1597 = vmatprep.subr.mxu0 0.0
      %1598 = vmatpush2.msra.mxu0 0.0
      %1599 = vmatprep.subr.mxu0 0.0
      %1600 = vmatpush2.msra.mxu0 0.0
      %1601 = vmatprep.subr.mxu0 0.0
      %1602 = vmatpush2.msra.mxu0 0.0
      %1603 = vmatprep.mubr.f32.mxu0 0.0
      %1604 = vmatmul.mubr.f32.gmra.mxu0 %v225
      %v1605 = vpop.f32.mrf.mxu0
      %v1606 = vadd.f32 0.0, %v1605
      %v1607 = vpop.f32.mrf.mxu0
      %v1608 = vadd.f32 0.0, %v1607
      %1609 = vmatprep.mubr.f32.mxu0 0.0
      %1610 = vmatmul.mubr.f32.gmra.mxu0 %v228
      %v1611 = vpop.f32.mrf.mxu0
      %v1612 = vadd.f32 0.0, %v1611
      %v1613 = vpop.f32.mrf.mxu0
      %v1614 = vadd.f32 0.0, %v1613
      %1615 = vdwg.mxu0
      %1616 = vmatprep.subr.mxu0 0.0
      %1617 = vmatpush1.msra.mxu0 0.0
      %1618 = vmatprep.subr.mxu0 0.0
      %1619 = vmatpush1.msra.mxu0 0.0
      %1620 = vmatprep.subr.mxu0 0.0
      %1621 = vmatpush1.msra.mxu0 0.0
      %1622 = vmatprep.subr.mxu0 0.0
      %1623 = vmatpush1.msra.mxu0 0.0
      %1624 = vmatprep.subr.mxu0 0.0
      %1625 = vmatpush1.msra.mxu0 0.0
      %1626 = vmatprep.subr.mxu0 0.0
      %1627 = vmatpush1.msra.mxu0 0.0
      %1628 = vmatprep.subr.mxu0 0.0
      %1629 = vmatpush1.msra.mxu0 0.0
      %1630 = vmatprep.subr.mxu0 0.0
      %1631 = vmatpush1.msra.mxu0 0.0
      %1632 = vmatprep.subr.mxu0 0.0
      %1633 = vmatpush1.msra.mxu0 0.0
      %1634 = vmatprep.subr.mxu0 0.0
      %1635 = vmatpush1.msra.mxu0 0.0
      %1636 = vmatprep.subr.mxu0 0.0
      %1637 = vmatpush1.msra.mxu0 0.0
      %1638 = vmatprep.subr.mxu0 0.0
      %1639 = vmatpush1.msra.mxu0 0.0
      %1640 = vmatprep.subr.mxu0 0.0
      %1641 = vmatpush1.msra.mxu0 0.0
      %1642 = vmatprep.subr.mxu0 0.0
      %1643 = vmatpush1.msra.mxu0 0.0
      %1644 = vmatprep.subr.mxu0 0.0
      %1645 = vmatpush1.msra.mxu0 0.0
      %1646 = vmatprep.subr.mxu0 %v210
      %1647 = vmatpush1.msra.mxu0 %v209
      %1648 = vmatprep.subr.mxu0 0.0
      %1649 = vmatpush2.msra.mxu0 0.0
      %1650 = vmatprep.subr.mxu0 0.0
      %1651 = vmatpush2.msra.mxu0 0.0
      %1652 = vmatprep.subr.mxu0 0.0
      %1653 = vmatpush2.msra.mxu0 0.0
      %1654 = vmatprep.subr.mxu0 0.0
      %1655 = vmatpush2.msra.mxu0 0.0
      %1656 = vmatprep.subr.mxu0 0.0
      %1657 = vmatpush2.msra.mxu0 0.0
      %1658 = vmatprep.subr.mxu0 0.0
      %1659 = vmatpush2.msra.mxu0 0.0
      %1660 = vmatprep.subr.mxu0 0.0
      %1661 = vmatpush2.msra.mxu0 0.0
      %1662 = vmatprep.subr.mxu0 0.0
      %1663 = vmatpush2.msra.mxu0 0.0
      %1664 = vmatprep.subr.mxu0 0.0
      %1665 = vmatpush2.msra.mxu0 0.0
      %1666 = vmatprep.subr.mxu0 0.0
      %1667 = vmatpush2.msra.mxu0 0.0
      %1668 = vmatprep.subr.mxu0 0.0
      %1669 = vmatpush2.msra.mxu0 0.0
      %1670 = vmatprep.subr.mxu0 0.0
      %1671 = vmatpush2.msra.mxu0 0.0
      %1672 = vmatprep.subr.mxu0 0.0
      %1673 = vmatpush2.msra.mxu0 0.0
      %1674 = vmatprep.subr.mxu0 0.0
      %1675 = vmatpush2.msra.mxu0 0.0
      %1676 = vmatprep.subr.mxu0 0.0
      %1677 = vmatpush2.msra.mxu0 0.0
      %1678 = vmatprep.subr.mxu0 0.0
      %1679 = vmatpush2.msra.mxu0 0.0
      %1680 = vmatprep.mubr.f32.mxu0 0.0
      %1681 = vmatmul.mubr.f32.gmra.mxu0 %v225
      %v1682 = vpop.f32.mrf.mxu0
      %v1683 = vadd.f32 0.0, %v1682
      %v1684 = vpop.f32.mrf.mxu0
      %v1685 = vadd.f32 0.0, %v1684
      %1686 = vmatprep.mubr.f32.mxu0 0.0
      %1687 = vmatmul.mubr.f32.gmra.mxu0 %v228
      %v1688 = vpop.f32.mrf.mxu0
      %v1689 = vadd.f32 0.0, %v1688
      %v1690 = vpop.f32.mrf.mxu0
      %v1691 = vadd.f32 0.0, %v1690
      %1692 = vdwg.mxu0
      %1693 = vmatprep.subr.mxu0 0.0
      %1694 = vmatpush1.msra.mxu0 0.0
      %1695 = vmatprep.subr.mxu0 0.0
      %1696 = vmatpush1.msra.mxu0 0.0
      %1697 = vmatprep.subr.mxu0 0.0
      %1698 = vmatpush1.msra.mxu0 0.0
      %1699 = vmatprep.subr.mxu0 0.0
      %1700 = vmatpush1.msra.mxu0 0.0
      %1701 = vmatprep.subr.mxu0 0.0
      %1702 = vmatpush1.msra.mxu0 0.0
      %1703 = vmatprep.subr.mxu0 0.0
      %1704 = vmatpush1.msra.mxu0 0.0
      %1705 = vmatprep.subr.mxu0 0.0
      %1706 = vmatpush1.msra.mxu0 0.0
      %1707 = vmatprep.subr.mxu0 0.0
      %1708 = vmatpush1.msra.mxu0 0.0
      %1709 = vmatprep.subr.mxu0 0.0
      %1710 = vmatpush1.msra.mxu0 0.0
      %1711 = vmatprep.subr.mxu0 0.0
      %1712 = vmatpush1.msra.mxu0 0.0
      %1713 = vmatprep.subr.mxu0 0.0
      %1714 = vmatpush1.msra.mxu0 0.0
      %1715 = vmatprep.subr.mxu0 0.0
      %1716 = vmatpush1.msra.mxu0 0.0
      %1717 = vmatprep.subr.mxu0 0.0
      %1718 = vmatpush1.msra.mxu0 0.0
      %1719 = vmatprep.subr.mxu0 0.0
      %1720 = vmatpush1.msra.mxu0 0.0
      %1721 = vmatprep.subr.mxu0 0.0
      %1722 = vmatpush1.msra.mxu0 0.0
      %1723 = vmatprep.subr.mxu0 %v212
      %1724 = vmatpush1.msra.mxu0 %v211
      %1725 = vmatprep.subr.mxu0 0.0
      %1726 = vmatpush2.msra.mxu0 0.0
      %1727 = vmatprep.subr.mxu0 0.0
      %1728 = vmatpush2.msra.mxu0 0.0
      %1729 = vmatprep.subr.mxu0 0.0
      %1730 = vmatpush2.msra.mxu0 0.0
      %1731 = vmatprep.subr.mxu0 0.0
      %1732 = vmatpush2.msra.mxu0 0.0
      %1733 = vmatprep.subr.mxu0 0.0
      %1734 = vmatpush2.msra.mxu0 0.0
      %1735 = vmatprep.subr.mxu0 0.0
      %1736 = vmatpush2.msra.mxu0 0.0
      %1737 = vmatprep.subr.mxu0 0.0
      %1738 = vmatpush2.msra.mxu0 0.0
      %1739 = vmatprep.subr.mxu0 0.0
      %1740 = vmatpush2.msra.mxu0 0.0
      %1741 = vmatprep.subr.mxu0 0.0
      %1742 = vmatpush2.msra.mxu0 0.0
      %1743 = vmatprep.subr.mxu0 0.0
      %1744 = vmatpush2.msra.mxu0 0.0
      %1745 = vmatprep.subr.mxu0 0.0
      %1746 = vmatpush2.msra.mxu0 0.0
      %1747 = vmatprep.subr.mxu0 0.0
      %1748 = vmatpush2.msra.mxu0 0.0
      %1749 = vmatprep.subr.mxu0 0.0
      %1750 = vmatpush2.msra.mxu0 0.0
      %1751 = vmatprep.subr.mxu0 0.0
      %1752 = vmatpush2.msra.mxu0 0.0
      %1753 = vmatprep.subr.mxu0 0.0
      %1754 = vmatpush2.msra.mxu0 0.0
      %1755 = vmatprep.subr.mxu0 0.0
      %1756 = vmatpush2.msra.mxu0 0.0
      %1757 = vmatprep.mubr.f32.mxu0 0.0
      %1758 = vmatmul.mubr.f32.gmra.mxu0 %v225
      %v1759 = vpop.f32.mrf.mxu0
      %v1760 = vadd.f32 0.0, %v1759
      %v1761 = vpop.f32.mrf.mxu0
      %v1762 = vadd.f32 0.0, %v1761
      %1763 = vmatprep.mubr.f32.mxu0 0.0
      %1764 = vmatmul.mubr.f32.gmra.mxu0 %v228
      %v1765 = vpop.f32.mrf.mxu0
      %v1766 = vadd.f32 0.0, %v1765
      %v1767 = vpop.f32.mrf.mxu0
      %v1768 = vadd.f32 0.0, %v1767
      %1769 = vdwg.mxu0
      %1770 = vmatprep.subr.mxu0 0.0
      %1771 = vmatpush1.msra.mxu0 0.0
      %1772 = vmatprep.subr.mxu0 0.0
      %1773 = vmatpush1.msra.mxu0 0.0
      %1774 = vmatprep.subr.mxu0 0.0
      %1775 = vmatpush1.msra.mxu0 0.0
      %1776 = vmatprep.subr.mxu0 0.0
      %1777 = vmatpush1.msra.mxu0 0.0
      %1778 = vmatprep.subr.mxu0 0.0
      %1779 = vmatpush1.msra.mxu0 0.0
      %1780 = vmatprep.subr.mxu0 0.0
      %1781 = vmatpush1.msra.mxu0 0.0
      %1782 = vmatprep.subr.mxu0 0.0
      %1783 = vmatpush1.msra.mxu0 0.0
      %1784 = vmatprep.subr.mxu0 0.0
      %1785 = vmatpush1.msra.mxu0 0.0
      %1786 = vmatprep.subr.mxu0 0.0
      %1787 = vmatpush1.msra.mxu0 0.0
      %1788 = vmatprep.subr.mxu0 0.0
      %1789 = vmatpush1.msra.mxu0 0.0
      %1790 = vmatprep.subr.mxu0 0.0
      %1791 = vmatpush1.msra.mxu0 0.0
      %1792 = vmatprep.subr.mxu0 0.0
      %1793 = vmatpush1.msra.mxu0 0.0
      %1794 = vmatprep.subr.mxu0 0.0
      %1795 = vmatpush1.msra.mxu0 0.0
      %1796 = vmatprep.subr.mxu0 0.0
      %1797 = vmatpush1.msra.mxu0 0.0
      %1798 = vmatprep.subr.mxu0 0.0
      %1799 = vmatpush1.msra.mxu0 0.0
      %1800 = vmatprep.subr.mxu0 %v214
      %1801 = vmatpush1.msra.mxu0 %v213
      %1802 = vmatprep.subr.mxu0 0.0
      %1803 = vmatpush2.msra.mxu0 0.0
      %1804 = vmatprep.subr.mxu0 0.0
      %1805 = vmatpush2.msra.mxu0 0.0
      %1806 = vmatprep.subr.mxu0 0.0
      %1807 = vmatpush2.msra.mxu0 0.0
      %1808 = vmatprep.subr.mxu0 0.0
      %1809 = vmatpush2.msra.mxu0 0.0
      %1810 = vmatprep.subr.mxu0 0.0
      %1811 = vmatpush2.msra.mxu0 0.0
      %1812 = vmatprep.subr.mxu0 0.0
      %1813 = vmatpush2.msra.mxu0 0.0
      %1814 = vmatprep.subr.mxu0 0.0
      %1815 = vmatpush2.msra.mxu0 0.0
      %1816 = vmatprep.subr.mxu0 0.0
      %1817 = vmatpush2.msra.mxu0 0.0
      %1818 = vmatprep.subr.mxu0 0.0
      %1819 = vmatpush2.msra.mxu0 0.0
      %1820 = vmatprep.subr.mxu0 0.0
      %1821 = vmatpush2.msra.mxu0 0.0
      %1822 = vmatprep.subr.mxu0 0.0
      %1823 = vmatpush2.msra.mxu0 0.0
      %1824 = vmatprep.subr.mxu0 0.0
      %1825 = vmatpush2.msra.mxu0 0.0
      %1826 = vmatprep.subr.mxu0 0.0
      %1827 = vmatpush2.msra.mxu0 0.0
      %1828 = vmatprep.subr.mxu0 0.0
      %1829 = vmatpush2.msra.mxu0 0.0
      %1830 = vmatprep.subr.mxu0 0.0
      %1831 = vmatpush2.msra.mxu0 0.0
      %1832 = vmatprep.subr.mxu0 0.0
      %1833 = vmatpush2.msra.mxu0 0.0
      %1834 = vmatprep.mubr.f32.mxu0 0.0
      %1835 = vmatmul.mubr.f32.gmra.mxu0 %v225
      %v1836 = vpop.f32.mrf.mxu0
      %v1837 = vadd.f32 0.0, %v1836
      %v1838 = vpop.f32.mrf.mxu0
      %v1839 = vadd.f32 0.0, %v1838
      %1840 = vmatprep.mubr.f32.mxu0 0.0
      %1841 = vmatmul.mubr.f32.gmra.mxu0 %v228
      %v1842 = vpop.f32.mrf.mxu0
      %v1843 = vadd.f32 0.0, %v1842
      %v1844 = vpop.f32.mrf.mxu0
      %v1845 = vadd.f32 0.0, %v1844
      %1846 = vdwg.mxu0
      %1847 = vmatprep.subr.mxu0 0.0
      %1848 = vmatpush1.msra.mxu0 0.0
      %1849 = vmatprep.subr.mxu0 0.0
      %1850 = vmatpush1.msra.mxu0 0.0
      %1851 = vmatprep.subr.mxu0 0.0
      %1852 = vmatpush1.msra.mxu0 0.0
      %1853 = vmatprep.subr.mxu0 0.0
      %1854 = vmatpush1.msra.mxu0 0.0
      %1855 = vmatprep.subr.mxu0 0.0
      %1856 = vmatpush1.msra.mxu0 0.0
      %1857 = vmatprep.subr.mxu0 0.0
      %1858 = vmatpush1.msra.mxu0 0.0
      %1859 = vmatprep.subr.mxu0 0.0
      %1860 = vmatpush1.msra.mxu0 0.0
      %1861 = vmatprep.subr.mxu0 0.0
      %1862 = vmatpush1.msra.mxu0 0.0
      %1863 = vmatprep.subr.mxu0 0.0
      %1864 = vmatpush1.msra.mxu0 0.0
      %1865 = vmatprep.subr.mxu0 0.0
      %1866 = vmatpush1.msra.mxu0 0.0
      %1867 = vmatprep.subr.mxu0 0.0
      %1868 = vmatpush1.msra.mxu0 0.0
      %1869 = vmatprep.subr.mxu0 0.0
      %1870 = vmatpush1.msra.mxu0 0.0
      %1871 = vmatprep.subr.mxu0 0.0
      %1872 = vmatpush1.msra.mxu0 0.0
      %1873 = vmatprep.subr.mxu0 0.0
      %1874 = vmatpush1.msra.mxu0 0.0
      %1875 = vmatprep.subr.mxu0 0.0
      %1876 = vmatpush1.msra.mxu0 0.0
      %1877 = vmatprep.subr.mxu0 %v216
      %1878 = vmatpush1.msra.mxu0 %v215
      %1879 = vmatprep.subr.mxu0 0.0
      %1880 = vmatpush2.msra.mxu0 0.0
      %1881 = vmatprep.subr.mxu0 0.0
      %1882 = vmatpush2.msra.mxu0 0.0
      %1883 = vmatprep.subr.mxu0 0.0
      %1884 = vmatpush2.msra.mxu0 0.0
      %1885 = vmatprep.subr.mxu0 0.0
      %1886 = vmatpush2.msra.mxu0 0.0
      %1887 = vmatprep.subr.mxu0 0.0
      %1888 = vmatpush2.msra.mxu0 0.0
      %1889 = vmatprep.subr.mxu0 0.0
      %1890 = vmatpush2.msra.mxu0 0.0
      %1891 = vmatprep.subr.mxu0 0.0
      %1892 = vmatpush2.msra.mxu0 0.0
      %1893 = vmatprep.subr.mxu0 0.0
      %1894 = vmatpush2.msra.mxu0 0.0
      %1895 = vmatprep.subr.mxu0 0.0
      %1896 = vmatpush2.msra.mxu0 0.0
      %1897 = vmatprep.subr.mxu0 0.0
      %1898 = vmatpush2.msra.mxu0 0.0
      %1899 = vmatprep.subr.mxu0 0.0
      %1900 = vmatpush2.msra.mxu0 0.0
      %1901 = vmatprep.subr.mxu0 0.0
      %1902 = vmatpush2.msra.mxu0 0.0
      %1903 = vmatprep.subr.mxu0 0.0
      %1904 = vmatpush2.msra.mxu0 0.0
      %1905 = vmatprep.subr.mxu0 0.0
      %1906 = vmatpush2.msra.mxu0 0.0
      %1907 = vmatprep.subr.mxu0 0.0
      %1908 = vmatpush2.msra.mxu0 0.0
      %1909 = vmatprep.subr.mxu0 0.0
      %1910 = vmatpush2.msra.mxu0 0.0
      %1911 = vmatprep.mubr.f32.mxu0 0.0
      %1912 = vmatmul.mubr.f32.gmra.mxu0 %v225
      %v1913 = vpop.f32.mrf.mxu0
      %v1914 = vadd.f32 0.0, %v1913
      %v1915 = vpop.f32.mrf.mxu0
      %v1916 = vadd.f32 0.0, %v1915
      %1917 = vmatprep.mubr.f32.mxu0 0.0
      %1918 = vmatmul.mubr.f32.gmra.mxu0 %v228
      %v1919 = vpop.f32.mrf.mxu0
      %v1920 = vadd.f32 0.0, %v1919
      %v1921 = vpop.f32.mrf.mxu0
      %v1922 = vadd.f32 0.0, %v1921
      %1923 = vdwg.mxu0
      %1924 = vmatprep.subr.mxu0 0.0
      %1925 = vmatpush1.msra.mxu0 0.0
      %1926 = vmatprep.subr.mxu0 0.0
      %1927 = vmatpush1.msra.mxu0 0.0
      %1928 = vmatprep.subr.mxu0 0.0
      %1929 = vmatpush1.msra.mxu0 0.0
      %1930 = vmatprep.subr.mxu0 0.0
      %1931 = vmatpush1.msra.mxu0 0.0
      %1932 = vmatprep.subr.mxu0 0.0
      %1933 = vmatpush1.msra.mxu0 0.0
      %1934 = vmatprep.subr.mxu0 0.0
      %1935 = vmatpush1.msra.mxu0 0.0
      %1936 = vmatprep.subr.mxu0 0.0
      %1937 = vmatpush1.msra.mxu0 0.0
      %1938 = vmatprep.subr.mxu0 0.0
      %1939 = vmatpush1.msra.mxu0 0.0
      %1940 = vmatprep.subr.mxu0 0.0
      %1941 = vmatpush1.msra.mxu0 0.0
      %1942 = vmatprep.subr.mxu0 0.0
      %1943 = vmatpush1.msra.mxu0 0.0
      %1944 = vmatprep.subr.mxu0 0.0
      %1945 = vmatpush1.msra.mxu0 0.0
      %1946 = vmatprep.subr.mxu0 0.0
      %1947 = vmatpush1.msra.mxu0 0.0
      %1948 = vmatprep.subr.mxu0 0.0
      %1949 = vmatpush1.msra.mxu0 0.0
      %1950 = vmatprep.subr.mxu0 0.0
      %1951 = vmatpush1.msra.mxu0 0.0
      %1952 = vmatprep.subr.mxu0 0.0
      %1953 = vmatpush1.msra.mxu0 0.0
      %1954 = vmatprep.subr.mxu0 %v218
      %1955 = vmatpush1.msra.mxu0 %v217
      %1956 = vmatprep.subr.mxu0 0.0
      %1957 = vmatpush2.msra.mxu0 0.0
      %1958 = vmatprep.subr.mxu0 0.0
      %1959 = vmatpush2.msra.mxu0 0.0
      %1960 = vmatprep.subr.mxu0 0.0
      %1961 = vmatpush2.msra.mxu0 0.0
      %1962 = vmatprep.subr.mxu0 0.0
      %1963 = vmatpush2.msra.mxu0 0.0
      %1964 = vmatprep.subr.mxu0 0.0
      %1965 = vmatpush2.msra.mxu0 0.0
      %1966 = vmatprep.subr.mxu0 0.0
      %1967 = vmatpush2.msra.mxu0 0.0
      %1968 = vmatprep.subr.mxu0 0.0
      %1969 = vmatpush2.msra.mxu0 0.0
      %1970 = vmatprep.subr.mxu0 0.0
      %1971 = vmatpush2.msra.mxu0 0.0
      %1972 = vmatprep.subr.mxu0 0.0
      %1973 = vmatpush2.msra.mxu0 0.0
      %1974 = vmatprep.subr.mxu0 0.0
      %1975 = vmatpush2.msra.mxu0 0.0
      %1976 = vmatprep.subr.mxu0 0.0
      %1977 = vmatpush2.msra.mxu0 0.0
      %1978 = vmatprep.subr.mxu0 0.0
      %1979 = vmatpush2.msra.mxu0 0.0
      %1980 = vmatprep.subr.mxu0 0.0
      %1981 = vmatpush2.msra.mxu0 0.0
      %1982 = vmatprep.subr.mxu0 0.0
      %1983 = vmatpush2.msra.mxu0 0.0
      %1984 = vmatprep.subr.mxu0 0.0
      %1985 = vmatpush2.msra.mxu0 0.0
      %1986 = vmatprep.subr.mxu0 0.0
      %1987 = vmatpush2.msra.mxu0 0.0
      %1988 = vmatprep.mubr.f32.mxu0 0.0
      %1989 = vmatmul.mubr.f32.gmra.mxu0 %v225
      %v1990 = vpop.f32.mrf.mxu0
      %v1991 = vadd.f32 0.0, %v1990
      %v1992 = vpop.f32.mrf.mxu0
      %v1993 = vadd.f32 0.0, %v1992
      %1994 = vmatprep.mubr.f32.mxu0 0.0
      %1995 = vmatmul.mubr.f32.gmra.mxu0 %v228
      %v1996 = vpop.f32.mrf.mxu0
      %v1997 = vadd.f32 0.0, %v1996
      %v1998 = vpop.f32.mrf.mxu0
      %v1999 = vadd.f32 0.0, %v1998
      %2000 = vdwg.mxu0
      %2001 = vmatprep.subr.mxu0 0.0
      %2002 = vmatpush1.msra.mxu0 0.0
      %2003 = vmatprep.subr.mxu0 0.0
      %2004 = vmatpush1.msra.mxu0 0.0
      %2005 = vmatprep.subr.mxu0 0.0
      %2006 = vmatpush1.msra.mxu0 0.0
      %2007 = vmatprep.subr.mxu0 0.0
      %2008 = vmatpush1.msra.mxu0 0.0
      %2009 = vmatprep.subr.mxu0 0.0
      %2010 = vmatpush1.msra.mxu0 0.0
      %2011 = vmatprep.subr.mxu0 0.0
      %2012 = vmatpush1.msra.mxu0 0.0
      %2013 = vmatprep.subr.mxu0 0.0
      %2014 = vmatpush1.msra.mxu0 0.0
      %2015 = vmatprep.subr.mxu0 0.0
      %2016 = vmatpush1.msra.mxu0 0.0
      %2017 = vmatprep.subr.mxu0 0.0
      %2018 = vmatpush1.msra.mxu0 0.0
      %2019 = vmatprep.subr.mxu0 0.0
      %2020 = vmatpush1.msra.mxu0 0.0
      %2021 = vmatprep.subr.mxu0 0.0
      %2022 = vmatpush1.msra.mxu0 0.0
      %2023 = vmatprep.subr.mxu0 0.0
      %2024 = vmatpush1.msra.mxu0 0.0
      %2025 = vmatprep.subr.mxu0 0.0
      %2026 = vmatpush1.msra.mxu0 0.0
      %2027 = vmatprep.subr.mxu0 0.0
      %2028 = vmatpush1.msra.mxu0 0.0
      %2029 = vmatprep.subr.mxu0 0.0
      %2030 = vmatpush1.msra.mxu0 0.0
      %2031 = vmatprep.subr.mxu0 %v220
      %2032 = vmatpush1.msra.mxu0 %v219
      %2033 = vmatprep.subr.mxu0 0.0
      %2034 = vmatpush2.msra.mxu0 0.0
      %2035 = vmatprep.subr.mxu0 0.0
      %2036 = vmatpush2.msra.mxu0 0.0
      %2037 = vmatprep.subr.mxu0 0.0
      %2038 = vmatpush2.msra.mxu0 0.0
      %2039 = vmatprep.subr.mxu0 0.0
      %2040 = vmatpush2.msra.mxu0 0.0
      %2041 = vmatprep.subr.mxu0 0.0
      %2042 = vmatpush2.msra.mxu0 0.0
      %2043 = vmatprep.subr.mxu0 0.0
      %2044 = vmatpush2.msra.mxu0 0.0
      %2045 = vmatprep.subr.mxu0 0.0
      %2046 = vmatpush2.msra.mxu0 0.0
      %2047 = vmatprep.subr.mxu0 0.0
      %2048 = vmatpush2.msra.mxu0 0.0
      %2049 = vmatprep.subr.mxu0 0.0
      %2050 = vmatpush2.msra.mxu0 0.0
      %2051 = vmatprep.subr.mxu0 0.0
      %2052 = vmatpush2.msra.mxu0 0.0
      %2053 = vmatprep.subr.mxu0 0.0
      %2054 = vmatpush2.msra.mxu0 0.0
      %2055 = vmatprep.subr.mxu0 0.0
      %2056 = vmatpush2.msra.mxu0 0.0
      %2057 = vmatprep.subr.mxu0 0.0
      %2058 = vmatpush2.msra.mxu0 0.0
      %2059 = vmatprep.subr.mxu0 0.0
      %2060 = vmatpush2.msra.mxu0 0.0
      %2061 = vmatprep.subr.mxu0 0.0
      %2062 = vmatpush2.msra.mxu0 0.0
      %2063 = vmatprep.subr.mxu0 0.0
      %2064 = vmatpush2.msra.mxu0 0.0
      %2065 = vmatprep.mubr.f32.mxu0 0.0
      %2066 = vmatmul.mubr.f32.gmra.mxu0 %v225
      %v2067 = vpop.f32.mrf.mxu0
      %v2068 = vadd.f32 0.0, %v2067
      %v2069 = vpop.f32.mrf.mxu0
      %v2070 = vadd.f32 0.0, %v2069
      %2071 = vmatprep.mubr.f32.mxu0 0.0
      %2072 = vmatmul.mubr.f32.gmra.mxu0 %v228
      %v2073 = vpop.f32.mrf.mxu0
      %v2074 = vadd.f32 0.0, %v2073
      %v2075 = vpop.f32.mrf.mxu0
      %v2076 = vadd.f32 0.0, %v2075
      %2077 = vdwg.mxu0
      %2078 = vmatprep.subr.mxu0 0.0
      %2079 = vmatpush1.msra.mxu0 0.0
      %2080 = vmatprep.subr.mxu0 0.0
      %2081 = vmatpush1.msra.mxu0 0.0
      %2082 = vmatprep.subr.mxu0 0.0
      %2083 = vmatpush1.msra.mxu0 0.0
      %2084 = vmatprep.subr.mxu0 0.0
      %2085 = vmatpush1.msra.mxu0 0.0
      %2086 = vmatprep.subr.mxu0 0.0
      %2087 = vmatpush1.msra.mxu0 0.0
      %2088 = vmatprep.subr.mxu0 0.0
      %2089 = vmatpush1.msra.mxu0 0.0
      %2090 = vmatprep.subr.mxu0 0.0
      %2091 = vmatpush1.msra.mxu0 0.0
      %2092 = vmatprep.subr.mxu0 0.0
      %2093 = vmatpush1.msra.mxu0 0.0
      %2094 = vmatprep.subr.mxu0 0.0
      %2095 = vmatpush1.msra.mxu0 0.0
      %2096 = vmatprep.subr.mxu0 0.0
      %2097 = vmatpush1.msra.mxu0 0.0
      %2098 = vmatprep.subr.mxu0 0.0
      %2099 = vmatpush1.msra.mxu0 0.0
      %2100 = vmatprep.subr.mxu0 0.0
      %2101 = vmatpush1.msra.mxu0 0.0
      %2102 = vmatprep.subr.mxu0 0.0
      %2103 = vmatpush1.msra.mxu0 0.0
      %2104 = vmatprep.subr.mxu0 0.0
      %2105 = vmatpush1.msra.mxu0 0.0
      %2106 = vmatprep.subr.mxu0 0.0
      %2107 = vmatpush1.msra.mxu0 0.0
      %2108 = vmatprep.subr.mxu0 %v222
      %2109 = vmatpush1.msra.mxu0 %v221
      %2110 = vmatprep.subr.mxu0 0.0
      %2111 = vmatpush2.msra.mxu0 0.0
      %2112 = vmatprep.subr.mxu0 0.0
      %2113 = vmatpush2.msra.mxu0 0.0
      %2114 = vmatprep.subr.mxu0 0.0
      %2115 = vmatpush2.msra.mxu0 0.0
      %2116 = vmatprep.subr.mxu0 0.0
      %2117 = vmatpush2.msra.mxu0 0.0
      %2118 = vmatprep.subr.mxu0 0.0
      %2119 = vmatpush2.msra.mxu0 0.0
      %2120 = vmatprep.subr.mxu0 0.0
      %2121 = vmatpush2.msra.mxu0 0.0
      %2122 = vmatprep.subr.mxu0 0.0
      %2123 = vmatpush2.msra.mxu0 0.0
      %2124 = vmatprep.subr.mxu0 0.0
      %2125 = vmatpush2.msra.mxu0 0.0
      %2126 = vmatprep.subr.mxu0 0.0
      %2127 = vmatpush2.msra.mxu0 0.0
      %2128 = vmatprep.subr.mxu0 0.0
      %2129 = vmatpush2.msra.mxu0 0.0
      %2130 = vmatprep.subr.mxu0 0.0
      %2131 = vmatpush2.msra.mxu0 0.0
      %2132 = vmatprep.subr.mxu0 0.0
      %2133 = vmatpush2.msra.mxu0 0.0
      %2134 = vmatprep.subr.mxu0 0.0
      %2135 = vmatpush2.msra.mxu0 0.0
      %2136 = vmatprep.subr.mxu0 0.0
      %2137 = vmatpush2.msra.mxu0 0.0
      %2138 = vmatprep.subr.mxu0 0.0
      %2139 = vmatpush2.msra.mxu0 0.0
      %2140 = vmatprep.subr.mxu0 0.0
      %2141 = vmatpush2.msra.mxu0 0.0
      %2142 = vmatprep.mubr.f32.mxu0 0.0
      %2143 = vmatmul.mubr.f32.gmra.mxu0 %v225
      %v2144 = vpop.f32.mrf.mxu0
      %v2145 = vadd.f32 0.0, %v2144
      %v2146 = vpop.f32.mrf.mxu0
      %v2147 = vadd.f32 0.0, %v2146
      %2148 = vmatprep.mubr.f32.mxu0 0.0
      %2149 = vmatmul.mubr.f32.gmra.mxu0 %v228
      %v2150 = vpop.f32.mrf.mxu0
      %v2151 = vadd.f32 0.0, %v2150
      %v2152 = vpop.f32.mrf.mxu0
      %v2153 = vadd.f32 0.0, %v2152
      %2154 = vdwg.mxu0
      %2155 = vst [vmem:[#allocation2] sm:$0xff] %v297
      %2156 = vst [vmem:[#allocation2 + $0x8] sm:$0xff] %v299
      %2157 = vst [vmem:[#allocation2 + $0x10] sm:$0xff] %v374
      %2158 = vst [vmem:[#allocation2 + $0x18] sm:$0xff] %v376
      %2159 = vst [vmem:[#allocation2 + $0x20] sm:$0xff] %v451
      %2160 = vst [vmem:[#allocation2 + $0x28] sm:$0xff] %v453
      %2161 = vst [vmem:[#allocation2 + $0x30] sm:$0xff] %v528
      %2162 = vst [vmem:[#allocation2 + $0x38] sm:$0xff] %v530
      %2163 = vst [vmem:[#allocation2 + $0x40] sm:$0xff] %v605
      %2164 = vst [vmem:[#allocation2 + $0x48] sm:$0xff] %v607
      %2165 = vst [vmem:[#allocation2 + $0x50] sm:$0xff] %v682
      %2166 = vst [vmem:[#allocation2 + $0x58] sm:$0xff] %v684
      %2167 = vst [vmem:[#allocation2 + $0x60] sm:$0xff] %v759
      %2168 = vst [vmem:[#allocation2 + $0x68] sm:$0xff] %v761
      %2169 = vst [vmem:[#allocation2 + $0x70] sm:$0xff] %v836
      %2170 = vst [vmem:[#allocation2 + $0x78] sm:$0xff] %v838
      %2171 = vst [vmem:[#allocation2 + $0x80] sm:$0xff] %v913
      %2172 = vst [vmem:[#allocation2 + $0x88] sm:$0xff] %v915
      %2173 = vst [vmem:[#allocation2 + $0x90] sm:$0xff] %v990
      %2174 = vst [vmem:[#allocation2 + $0x98] sm:$0xff] %v992
      %2175 = vst [vmem:[#allocation2 + $0xa0] sm:$0xff] %v1067
      %2176 = vst [vmem:[#allocation2 + $0xa8] sm:$0xff] %v1069
      %2177 = vst [vmem:[#allocation2 + $0xb0] sm:$0xff] %v1144
      %2178 = vst [vmem:[#allocation2 + $0xb8] sm:$0xff] %v1146
      %2179 = vst [vmem:[#allocation2 + $0xc0] sm:$0xff] %v1221
      %2180 = vst [vmem:[#allocation2 + $0xc8] sm:$0xff] %v1223
      %2181 = vst [vmem:[#allocation2 + $0xd0] sm:$0xff] %v1298
      %2182 = vst [vmem:[#allocation2 + $0xd8] sm:$0xff] %v1300
      %2183 = vst [vmem:[#allocation2 + $0xe0] sm:$0xff] %v1375
      %2184 = vst [vmem:[#allocation2 + $0xe8] sm:$0xff] %v1377
      %2185 = vst [vmem:[#allocation2 + $0xf0] sm:$0xff] %v1452
      %2186 = vst [vmem:[#allocation2 + $0xf8] sm:$0xff] %v1454
      %2187 = vst [vmem:[#allocation2 + $0x100] sm:$0xff] %v1529
      %2188 = vst [vmem:[#allocation2 + $0x108] sm:$0xff] %v1531
      %2189 = vst [vmem:[#allocation2 + $0x110] sm:$0xff] %v1606
      %2190 = vst [vmem:[#allocation2 + $0x118] sm:$0xff] %v1608
      %2191 = vst [vmem:[#allocation2 + $0x120] sm:$0xff] %v1683
      %2192 = vst [vmem:[#allocation2 + $0x128] sm:$0xff] %v1685
      %2193 = vst [vmem:[#allocation2 + $0x130] sm:$0xff] %v1760
      %2194 = vst [vmem:[#allocation2 + $0x138] sm:$0xff] %v1762
      %2195 = vst [vmem:[#allocation2 + $0x140] sm:$0xff] %v1837
      %2196 = vst [vmem:[#allocation2 + $0x148] sm:$0xff] %v1839
      %2197 = vst [vmem:[#allocation2 + $0x150] sm:$0xff] %v1914
      %2198 = vst [vmem:[#allocation2 + $0x158] sm:$0xff] %v1916
      %2199 = vst [vmem:[#allocation2 + $0x160] sm:$0xff] %v1991
      %2200 = vst [vmem:[#allocation2 + $0x168] sm:$0xff] %v1993
      %2201 = vst [vmem:[#allocation2 + $0x170] sm:$0xff] %v2068
      %2202 = vst [vmem:[#allocation2 + $0x178] sm:$0xff] %v2070
      %2203 = vst [vmem:[#allocation2 + $0x180] sm:$0xff] %v2145
      %2204 = vst [vmem:[#allocation2 + $0x188] sm:$0xff] %v2147
      %2205 = vst [vmem:[#allocation2 + $0x190] sm:$0x1] %v303
      %2206 = vst [vmem:[#allocation2 + $0x198] sm:$0x1] %v305
      %2207 = vst [vmem:[#allocation2 + $0x1a0] sm:$0x1] %v380
      %2208 = vst [vmem:[#allocation2 + $0x1a8] sm:$0x1] %v382
      %2209 = vst [vmem:[#allocation2 + $0x1b0] sm:$0x1] %v457
      %2210 = vst [vmem:[#allocation2 + $0x1b8] sm:$0x1] %v459
      %2211 = vst [vmem:[#allocation2 + $0x1c0] sm:$0x1] %v534
      %2212 = vst [vmem:[#allocation2 + $0x1c8] sm:$0x1] %v536
      %2213 = vst [vmem:[#allocation2 + $0x1d0] sm:$0x1] %v611
      %2214 = vst [vmem:[#allocation2 + $0x1d8] sm:$0x1] %v613
      %2215 = vst [vmem:[#allocation2 + $0x1e0] sm:$0x1] %v688
      %2216 = vst [vmem:[#allocation2 + $0x1e8] sm:$0x1] %v690
      %2217 = vst [vmem:[#allocation2 + $0x1f0] sm:$0x1] %v765
      %2218 = vst [vmem:[#allocation2 + $0x1f8] sm:$0x1] %v767
      %2219 = vst [vmem:[#allocation2 + $0x200] sm:$0x1] %v842
      %2220 = vst [vmem:[#allocation2 + $0x208] sm:$0x1] %v844
      %2221 = vst [vmem:[#allocation2 + $0x210] sm:$0x1] %v919
      %2222 = vst [vmem:[#allocation2 + $0x218] sm:$0x1] %v921
      %2223 = vst [vmem:[#allocation2 + $0x220] sm:$0x1] %v996
      %2224 = vst [vmem:[#allocation2 + $0x228] sm:$0x1] %v998
      %2225 = vst [vmem:[#allocation2 + $0x230] sm:$0x1] %v1073
      %2226 = vst [vmem:[#allocation2 + $0x238] sm:$0x1] %v1075
      %2227 = vst [vmem:[#allocation2 + $0x240] sm:$0x1] %v1150
      %2228 = vst [vmem:[#allocation2 + $0x248] sm:$0x1] %v1152
      %2229 = vst [vmem:[#allocation2 + $0x250] sm:$0x1] %v1227
      %2230 = vst [vmem:[#allocation2 + $0x258] sm:$0x1] %v1229
      %2231 = vst [vmem:[#allocation2 + $0x260] sm:$0x1] %v1304
      %2232 = vst [vmem:[#allocation2 + $0x268] sm:$0x1] %v1306
      %2233 = vst [vmem:[#allocation2 + $0x270] sm:$0x1] %v1381
      %2234 = vst [vmem:[#allocation2 + $0x278] sm:$0x1] %v1383
      %2235 = vst [vmem:[#allocation2 + $0x280] sm:$0x1] %v1458
      %2236 = vst [vmem:[#allocation2 + $0x288] sm:$0x1] %v1460
      %2237 = vst [vmem:[#allocation2 + $0x290] sm:$0x1] %v1535
      %2238 = vst [vmem:[#allocation2 + $0x298] sm:$0x1] %v1537
      %2239 = vst [vmem:[#allocation2 + $0x2a0] sm:$0x1] %v1612
      %2240 = vst [vmem:[#allocation2 + $0x2a8] sm:$0x1] %v1614
      %2241 = vst [vmem:[#allocation2 + $0x2b0] sm:$0x1] %v1689
      %2242 = vst [vmem:[#allocation2 + $0x2b8] sm:$0x1] %v1691
      %2243 = vst [vmem:[#allocation2 + $0x2c0] sm:$0x1] %v1766
      %2244 = vst [vmem:[#allocation2 + $0x2c8] sm:$0x1] %v1768
      %2245 = vst [vmem:[#allocation2 + $0x2d0] sm:$0x1] %v1843
      %2246 = vst [vmem:[#allocation2 + $0x2d8] sm:$0x1] %v1845
      %2247 = vst [vmem:[#allocation2 + $0x2e0] sm:$0x1] %v1920
      %2248 = vst [vmem:[#allocation2 + $0x2e8] sm:$0x1] %v1922
      %2249 = vst [vmem:[#allocation2 + $0x2f0] sm:$0x1] %v1997
      %2250 = vst [vmem:[#allocation2 + $0x2f8] sm:$0x1] %v1999
      %2251 = vst [vmem:[#allocation2 + $0x300] sm:$0x1] %v2074
      %2252 = vst [vmem:[#allocation2 + $0x308] sm:$0x1] %v2076
      %2253 = vst [vmem:[#allocation2 + $0x310] sm:$0x1] %v2151
      %2254 = vst [vmem:[#allocation2 + $0x318] sm:$0x1] %v2153
      %v2255 = vld [vmem:[#allocation3] sm:$0x1]
      %v2256 = vld [vmem:[#allocation2] ss:$8 sm:$0xf]
      %v2257 = vld [vmem:[#allocation2] ss:$8 sm:$0xf0]
      %v2258 = vor.u32 %v2256, %v2257
      %s2259 = scalar_lea.vmem [#allocation2], 64
      %v2260 = vld [vmem:[%s2259] ss:$8 sm:$0xf]
      %v2261 = vld [vmem:[%s2259] ss:$8 sm:$0xf0]
      %v2262 = vor.u32 %v2260, %v2261
      %s2263 = scalar_lea.vmem [#allocation2], 128
      %v2264 = vld [vmem:[%s2263] ss:$8 sm:$0xf]
      %v2265 = vld [vmem:[%s2263] ss:$8 sm:$0xf0]
      %v2266 = vor.u32 %v2264, %v2265
      %s2267 = scalar_lea.vmem [#allocation2], 192
      %v2268 = vld [vmem:[%s2267] ss:$8 sm:$0xf]
      %v2269 = vld [vmem:[%s2267] ss:$8 sm:$0xf0]
      %v2270 = vor.u32 %v2268, %v2269
      %s2271 = scalar_lea.vmem [#allocation2], 256
      %v2272 = vld [vmem:[%s2271] ss:$8 sm:$0xf]
      %v2273 = vld [vmem:[%s2271] ss:$8 sm:$0xf0]
      %v2274 = vor.u32 %v2272, %v2273
      %s2275 = scalar_lea.vmem [#allocation2], 320
      %v2276 = vld [vmem:[%s2275] ss:$8 sm:$0xf]
      %v2277 = vld [vmem:[%s2275] ss:$8 sm:$0xf0]
      %v2278 = vor.u32 %v2276, %v2277
      %s2279 = scalar_lea.vmem [#allocation2], 384
      %v2280 = vld [vmem:[%s2279] ss:$8 sm:$0x3]
      %s2281 = scalar_lea.vmem [#allocation2], 2
      %v2282 = vld [vmem:[%s2281] ss:$8 sm:$0xf]
      %v2283 = vld [vmem:[%s2281] ss:$8 sm:$0xf0]
      %v2284 = vor.u32 %v2282, %v2283
      %s2285 = scalar_lea.vmem [#allocation2], 66
      %v2286 = vld [vmem:[%s2285] ss:$8 sm:$0xf]
      %v2287 = vld [vmem:[%s2285] ss:$8 sm:$0xf0]
      %v2288 = vor.u32 %v2286, %v2287
      %s2289 = scalar_lea.vmem [#allocation2], 130
      %v2290 = vld [vmem:[%s2289] ss:$8 sm:$0xf]
      %v2291 = vld [vmem:[%s2289] ss:$8 sm:$0xf0]
      %v2292 = vor.u32 %v2290, %v2291
      %s2293 = scalar_lea.vmem [#allocation2], 194
      %v2294 = vld [vmem:[%s2293] ss:$8 sm:$0xf]
      %v2295 = vld [vmem:[%s2293] ss:$8 sm:$0xf0]
      %v2296 = vor.u32 %v2294, %v2295
      %s2297 = scalar_lea.vmem [#allocation2], 258
      %v2298 = vld [vmem:[%s2297] ss:$8 sm:$0xf]
      %v2299 = vld [vmem:[%s2297] ss:$8 sm:$0xf0]
      %v2300 = vor.u32 %v2298, %v2299
      %s2301 = scalar_lea.vmem [#allocation2], 322
      %v2302 = vld [vmem:[%s2301] ss:$8 sm:$0xf]
      %v2303 = vld [vmem:[%s2301] ss:$8 sm:$0xf0]
      %v2304 = vor.u32 %v2302, %v2303
      %s2305 = scalar_lea.vmem [#allocation2], 386
      %v2306 = vld [vmem:[%s2305] ss:$8 sm:$0x3]
      %v2314 = vlaneseq
      %v2315 = vshrl.u32 %v2314, 7
      %v2316 = vsub.s32 0, %v2315
      %v2317 = vrot.slane %v2284, %v2316
      %v2318 = vlaneseq
      %v2319 = vshrl.u32 %v2318, 7
      %v2320 = vsub.s32 1, %v2319
      %v2321 = vrot.slane %v2284, %v2320
      %v2322 = vlaneseq
      %v2323 = vshrl.u32 %v2322, 7
      %v2324 = vsub.s32 2, %v2323
      %v2325 = vrot.slane %v2284, %v2324
      %v2326 = vlaneseq
      %v2327 = vshrl.u32 %v2326, 7
      %v2328 = vsub.s32 3, %v2327
      %v2329 = vrot.slane %v2284, %v2328
      %v2330 = vlaneseq
      %v2331 = vshrl.u32 %v2330, 7
      %v2332 = vsub.s32 4, %v2331
      %v2333 = vrot.slane %v2284, %v2332
      %v2334 = vlaneseq
      %v2335 = vshrl.u32 %v2334, 7
      %v2336 = vsub.s32 5, %v2335
      %v2337 = vrot.slane %v2284, %v2336
      %v2338 = vlaneseq
      %v2339 = vshrl.u32 %v2338, 7
      %v2340 = vsub.s32 6, %v2339
      %v2341 = vrot.slane %v2284, %v2340
      %v2342 = vlaneseq
      %v2343 = vshrl.u32 %v2342, 7
      %v2344 = vsub.s32 7, %v2343
      %v2345 = vrot.slane %v2284, %v2344
      %v2346 = vlaneseq
      %v2347 = vshrl.u32 %v2346, 7
      %v2348 = vsub.s32 0, %v2347
      %v2349 = vrot.slane %v2288, %v2348
      %v2350 = vlaneseq
      %v2351 = vshrl.u32 %v2350, 7
      %v2352 = vsub.s32 1, %v2351
      %v2353 = vrot.slane %v2288, %v2352
      %v2354 = vlaneseq
      %v2355 = vshrl.u32 %v2354, 7
      %v2356 = vsub.s32 2, %v2355
      %v2357 = vrot.slane %v2288, %v2356
      %v2358 = vlaneseq
      %v2359 = vshrl.u32 %v2358, 7
      %v2360 = vsub.s32 3, %v2359
      %v2361 = vrot.slane %v2288, %v2360
      %v2362 = vlaneseq
      %v2363 = vshrl.u32 %v2362, 7
      %v2364 = vsub.s32 4, %v2363
      %v2365 = vrot.slane %v2288, %v2364
      %v2366 = vlaneseq
      %v2367 = vshrl.u32 %v2366, 7
      %v2368 = vsub.s32 5, %v2367
      %v2369 = vrot.slane %v2288, %v2368
      %v2370 = vlaneseq
      %v2371 = vshrl.u32 %v2370, 7
      %v2372 = vsub.s32 6, %v2371
      %v2373 = vrot.slane %v2288, %v2372
      %v2374 = vlaneseq
      %v2375 = vshrl.u32 %v2374, 7
      %v2376 = vsub.s32 7, %v2375
      %v2377 = vrot.slane %v2288, %v2376
      %v2378 = vlaneseq
      %v2379 = vshrl.u32 %v2378, 7
      %v2380 = vsub.s32 0, %v2379
      %v2381 = vrot.slane %v2292, %v2380
      %v2382 = vlaneseq
      %v2383 = vshrl.u32 %v2382, 7
      %v2384 = vsub.s32 1, %v2383
      %v2385 = vrot.slane %v2292, %v2384
      %v2386 = vlaneseq
      %v2387 = vshrl.u32 %v2386, 7
      %v2388 = vsub.s32 2, %v2387
      %v2389 = vrot.slane %v2292, %v2388
      %v2390 = vlaneseq
      %v2391 = vshrl.u32 %v2390, 7
      %v2392 = vsub.s32 3, %v2391
      %v2393 = vrot.slane %v2292, %v2392
      %v2394 = vlaneseq
      %v2395 = vshrl.u32 %v2394, 7
      %v2396 = vsub.s32 4, %v2395
      %v2397 = vrot.slane %v2292, %v2396
      %v2398 = vlaneseq
      %v2399 = vshrl.u32 %v2398, 7
      %v2400 = vsub.s32 5, %v2399
      %v2401 = vrot.slane %v2292, %v2400
      %v2402 = vlaneseq
      %v2403 = vshrl.u32 %v2402, 7
      %v2404 = vsub.s32 6, %v2403
      %v2405 = vrot.slane %v2292, %v2404
      %v2406 = vlaneseq
      %v2407 = vshrl.u32 %v2406, 7
      %v2408 = vsub.s32 7, %v2407
      %v2409 = vrot.slane %v2292, %v2408
      %v2410 = vlaneseq
      %v2411 = vshrl.u32 %v2410, 7
      %v2412 = vsub.s32 0, %v2411
      %v2413 = vrot.slane %v2296, %v2412
      %v2414 = vlaneseq
      %v2415 = vshrl.u32 %v2414, 7
      %v2416 = vsub.s32 1, %v2415
      %v2417 = vrot.slane %v2296, %v2416
      %v2418 = vlaneseq
      %v2419 = vshrl.u32 %v2418, 7
      %v2420 = vsub.s32 2, %v2419
      %v2421 = vrot.slane %v2296, %v2420
      %v2422 = vlaneseq
      %v2423 = vshrl.u32 %v2422, 7
      %v2424 = vsub.s32 3, %v2423
      %v2425 = vrot.slane %v2296, %v2424
      %v2426 = vlaneseq
      %v2427 = vshrl.u32 %v2426, 7
      %v2428 = vsub.s32 4, %v2427
      %v2429 = vrot.slane %v2296, %v2428
      %v2430 = vlaneseq
      %v2431 = vshrl.u32 %v2430, 7
      %v2432 = vsub.s32 5, %v2431
      %v2433 = vrot.slane %v2296, %v2432
      %v2434 = vlaneseq
      %v2435 = vshrl.u32 %v2434, 7
      %v2436 = vsub.s32 6, %v2435
      %v2437 = vrot.slane %v2296, %v2436
      %v2438 = vlaneseq
      %v2439 = vshrl.u32 %v2438, 7
      %v2440 = vsub.s32 7, %v2439
      %v2441 = vrot.slane %v2296, %v2440
      %v2442 = vlaneseq
      %v2443 = vshrl.u32 %v2442, 7
      %v2444 = vsub.s32 0, %v2443
      %v2445 = vrot.slane %v2300, %v2444
      %v2446 = vlaneseq
      %v2447 = vshrl.u32 %v2446, 7
      %v2448 = vsub.s32 1, %v2447
      %v2449 = vrot.slane %v2300, %v2448
      %v2450 = vlaneseq
      %v2451 = vshrl.u32 %v2450, 7
      %v2452 = vsub.s32 2, %v2451
      %v2453 = vrot.slane %v2300, %v2452
      %v2454 = vlaneseq
      %v2455 = vshrl.u32 %v2454, 7
      %v2456 = vsub.s32 3, %v2455
      %v2457 = vrot.slane %v2300, %v2456
      %v2458 = vlaneseq
      %v2459 = vshrl.u32 %v2458, 7
      %v2460 = vsub.s32 4, %v2459
      %v2461 = vrot.slane %v2300, %v2460
      %v2462 = vlaneseq
      %v2463 = vshrl.u32 %v2462, 7
      %v2464 = vsub.s32 5, %v2463
      %v2465 = vrot.slane %v2300, %v2464
      %v2466 = vlaneseq
      %v2467 = vshrl.u32 %v2466, 7
      %v2468 = vsub.s32 6, %v2467
      %v2469 = vrot.slane %v2300, %v2468
      %v2470 = vlaneseq
      %v2471 = vshrl.u32 %v2470, 7
      %v2472 = vsub.s32 7, %v2471
      %v2473 = vrot.slane %v2300, %v2472
      %v2474 = vlaneseq
      %v2475 = vshrl.u32 %v2474, 7
      %v2476 = vsub.s32 0, %v2475
      %v2477 = vrot.slane %v2304, %v2476
      %v2478 = vlaneseq
      %v2479 = vshrl.u32 %v2478, 7
      %v2480 = vsub.s32 1, %v2479
      %v2481 = vrot.slane %v2304, %v2480
      %v2482 = vlaneseq
      %v2483 = vshrl.u32 %v2482, 7
      %v2484 = vsub.s32 2, %v2483
      %v2485 = vrot.slane %v2304, %v2484
      %v2486 = vlaneseq
      %v2487 = vshrl.u32 %v2486, 7
      %v2488 = vsub.s32 3, %v2487
      %v2489 = vrot.slane %v2304, %v2488
      %v2490 = vlaneseq
      %v2491 = vshrl.u32 %v2490, 7
      %v2492 = vsub.s32 4, %v2491
      %v2493 = vrot.slane %v2304, %v2492
      %v2494 = vlaneseq
      %v2495 = vshrl.u32 %v2494, 7
      %v2496 = vsub.s32 5, %v2495
      %v2497 = vrot.slane %v2304, %v2496
      %v2498 = vlaneseq
      %v2499 = vshrl.u32 %v2498, 7
      %v2500 = vsub.s32 6, %v2499
      %v2501 = vrot.slane %v2304, %v2500
      %v2502 = vlaneseq
      %v2503 = vshrl.u32 %v2502, 7
      %v2504 = vsub.s32 7, %v2503
      %v2505 = vrot.slane %v2304, %v2504
      %v2506 = vlaneseq
      %v2507 = vshrl.u32 %v2506, 7
      %v2508 = vsub.s32 0, %v2507
      %v2509 = vrot.slane %v2306, %v2508
      %v2510 = vlaneseq
      %v2511 = vshrl.u32 %v2510, 7
      %v2512 = vsub.s32 1, %v2511
      %v2513 = vrot.slane %v2306, %v2512
      %2514 = vrot.lane.b32.xlu0 %v2317, 1
      %v2515 = vpop.permute.xlu0 %2514
      %2516 = vrot.lane.b32.xlu0 %v2321, 1
      %v2517 = vpop.permute.xlu0 %2516
      %2518 = vrot.lane.b32.xlu0 %v2325, 1
      %v2519 = vpop.permute.xlu0 %2518
      %2520 = vrot.lane.b32.xlu0 %v2329, 1
      %v2521 = vpop.permute.xlu0 %2520
      %2522 = vrot.lane.b32.xlu0 %v2333, 1
      %v2523 = vpop.permute.xlu0 %2522
      %2524 = vrot.lane.b32.xlu0 %v2337, 1
      %v2525 = vpop.permute.xlu0 %2524
      %2526 = vrot.lane.b32.xlu0 %v2341, 1
      %v2527 = vpop.permute.xlu0 %2526
      %2528 = vrot.lane.b32.xlu0 %v2345, 1
      %v2529 = vpop.permute.xlu0 %2528
      %2530 = vrot.lane.b32.xlu0 %v2349, 1
      %v2531 = vpop.permute.xlu0 %2530
      %2532 = vrot.lane.b32.xlu0 %v2353, 1
      %v2533 = vpop.permute.xlu0 %2532
      %2534 = vrot.lane.b32.xlu0 %v2357, 1
      %v2535 = vpop.permute.xlu0 %2534
      %2536 = vrot.lane.b32.xlu0 %v2361, 1
      %v2537 = vpop.permute.xlu0 %2536
      %2538 = vrot.lane.b32.xlu0 %v2365, 1
      %v2539 = vpop.permute.xlu0 %2538
      %2540 = vrot.lane.b32.xlu0 %v2369, 1
      %v2541 = vpop.permute.xlu0 %2540
      %2542 = vrot.lane.b32.xlu0 %v2373, 1
      %v2543 = vpop.permute.xlu0 %2542
      %2544 = vrot.lane.b32.xlu0 %v2377, 1
      %v2545 = vpop.permute.xlu0 %2544
      %2546 = vrot.lane.b32.xlu0 %v2381, 1
      %v2547 = vpop.permute.xlu0 %2546
      %2548 = vrot.lane.b32.xlu0 %v2385, 1
      %v2549 = vpop.permute.xlu0 %2548
      %2550 = vrot.lane.b32.xlu0 %v2389, 1
      %v2551 = vpop.permute.xlu0 %2550
      %2552 = vrot.lane.b32.xlu0 %v2393, 1
      %v2553 = vpop.permute.xlu0 %2552
      %2554 = vrot.lane.b32.xlu0 %v2397, 1
      %v2555 = vpop.permute.xlu0 %2554
      %2556 = vrot.lane.b32.xlu0 %v2401, 1
      %v2557 = vpop.permute.xlu0 %2556
      %2558 = vrot.lane.b32.xlu0 %v2405, 1
      %v2559 = vpop.permute.xlu0 %2558
      %2560 = vrot.lane.b32.xlu0 %v2409, 1
      %v2561 = vpop.permute.xlu0 %2560
      %2562 = vrot.lane.b32.xlu0 %v2413, 1
      %v2563 = vpop.permute.xlu0 %2562
      %2564 = vrot.lane.b32.xlu0 %v2417, 1
      %v2565 = vpop.permute.xlu0 %2564
      %2566 = vrot.lane.b32.xlu0 %v2421, 1
      %v2567 = vpop.permute.xlu0 %2566
      %2568 = vrot.lane.b32.xlu0 %v2425, 1
      %v2569 = vpop.permute.xlu0 %2568
      %2570 = vrot.lane.b32.xlu0 %v2429, 1
      %v2571 = vpop.permute.xlu0 %2570
      %2572 = vrot.lane.b32.xlu0 %v2433, 1
      %v2573 = vpop.permute.xlu0 %2572
      %2574 = vrot.lane.b32.xlu0 %v2437, 1
      %v2575 = vpop.permute.xlu0 %2574
      %2576 = vrot.lane.b32.xlu0 %v2441, 1
      %v2577 = vpop.permute.xlu0 %2576
      %2578 = vrot.lane.b32.xlu0 %v2445, 1
      %v2579 = vpop.permute.xlu0 %2578
      %2580 = vrot.lane.b32.xlu0 %v2449, 1
      %v2581 = vpop.permute.xlu0 %2580
      %2582 = vrot.lane.b32.xlu0 %v2453, 1
      %v2583 = vpop.permute.xlu0 %2582
      %2584 = vrot.lane.b32.xlu0 %v2457, 1
      %v2585 = vpop.permute.xlu0 %2584
      %2586 = vrot.lane.b32.xlu0 %v2461, 1
      %v2587 = vpop.permute.xlu0 %2586
      %2588 = vrot.lane.b32.xlu0 %v2465, 1
      %v2589 = vpop.permute.xlu0 %2588
      %2590 = vrot.lane.b32.xlu0 %v2469, 1
      %v2591 = vpop.permute.xlu0 %2590
      %2592 = vrot.lane.b32.xlu0 %v2473, 1
      %v2593 = vpop.permute.xlu0 %2592
      %2594 = vrot.lane.b32.xlu0 %v2477, 1
      %v2595 = vpop.permute.xlu0 %2594
      %2596 = vrot.lane.b32.xlu0 %v2481, 1
      %v2597 = vpop.permute.xlu0 %2596
      %2598 = vrot.lane.b32.xlu0 %v2485, 1
      %v2599 = vpop.permute.xlu0 %2598
      %2600 = vrot.lane.b32.xlu0 %v2489, 1
      %v2601 = vpop.permute.xlu0 %2600
      %2602 = vrot.lane.b32.xlu0 %v2493, 1
      %v2603 = vpop.permute.xlu0 %2602
      %2604 = vrot.lane.b32.xlu0 %v2497, 1
      %v2605 = vpop.permute.xlu0 %2604
      %2606 = vrot.lane.b32.xlu0 %v2501, 1
      %v2607 = vpop.permute.xlu0 %2606
      %2608 = vrot.lane.b32.xlu0 %v2505, 1
      %v2609 = vpop.permute.xlu0 %2608
      %2610 = vrot.lane.b32.xlu0 %v2509, 1
      %v2611 = vpop.permute.xlu0 %2610
      %2612 = vrot.lane.b32.xlu0 %v2513, 1
      %v2613 = vpop.permute.xlu0 %2612
      %vm2614 = vcmask 7168
      %v2615 = vsel %vm2614, %v2515, %v2517
      %v2616 = vsel %vm2614, %v2517, %v2519
      %v2617 = vsel %vm2614, %v2519, %v2521
      %v2618 = vsel %vm2614, %v2521, %v2523
      %v2619 = vsel %vm2614, %v2523, %v2525
      %v2620 = vsel %vm2614, %v2525, %v2527
      %v2621 = vsel %vm2614, %v2527, %v2529
      %v2622 = vsel %vm2614, %v2529, %v2531
      %v2623 = vsel %vm2614, %v2531, %v2533
      %v2624 = vsel %vm2614, %v2533, %v2535
      %v2625 = vsel %vm2614, %v2535, %v2537
      %v2626 = vsel %vm2614, %v2537, %v2539
      %v2627 = vsel %vm2614, %v2539, %v2541
      %v2628 = vsel %vm2614, %v2541, %v2543
      %v2629 = vsel %vm2614, %v2543, %v2545
      %v2630 = vsel %vm2614, %v2545, %v2547
      %v2631 = vsel %vm2614, %v2547, %v2549
      %v2632 = vsel %vm2614, %v2549, %v2551
      %v2633 = vsel %vm2614, %v2551, %v2553
      %v2634 = vsel %vm2614, %v2553, %v2555
      %v2635 = vsel %vm2614, %v2555, %v2557
      %v2636 = vsel %vm2614, %v2557, %v2559
      %v2637 = vsel %vm2614, %v2559, %v2561
      %v2638 = vsel %vm2614, %v2561, %v2563
      %v2639 = vsel %vm2614, %v2563, %v2565
      %v2640 = vsel %vm2614, %v2565, %v2567
      %v2641 = vsel %vm2614, %v2567, %v2569
      %v2642 = vsel %vm2614, %v2569, %v2571
      %v2643 = vsel %vm2614, %v2571, %v2573
      %v2644 = vsel %vm2614, %v2573, %v2575
      %v2645 = vsel %vm2614, %v2575, %v2577
      %v2646 = vsel %vm2614, %v2577, %v2579
      %v2647 = vsel %vm2614, %v2579, %v2581
      %v2648 = vsel %vm2614, %v2581, %v2583
      %v2649 = vsel %vm2614, %v2583, %v2585
      %v2650 = vsel %vm2614, %v2585, %v2587
      %v2651 = vsel %vm2614, %v2587, %v2589
      %v2652 = vsel %vm2614, %v2589, %v2591
      %v2653 = vsel %vm2614, %v2591, %v2593
      %v2654 = vsel %vm2614, %v2593, %v2595
      %v2655 = vsel %vm2614, %v2595, %v2597
      %v2656 = vsel %vm2614, %v2597, %v2599
      %v2657 = vsel %vm2614, %v2599, %v2601
      %v2658 = vsel %vm2614, %v2601, %v2603
      %v2659 = vsel %vm2614, %v2603, %v2605
      %v2660 = vsel %vm2614, %v2605, %v2607
      %v2661 = vsel %vm2614, %v2607, %v2609
      %v2662 = vsel %vm2614, %v2609, %v2611
      %v2663 = vsel %vm2614, %v2611, %v2613
      %v2665 = vsel %vm2614, 0.0, %v2515
      %v2667 = vcombine.low %v2665, %v2615
      %v2668 = vcombine.low %v2616, %v2617
      %v2669 = vcombine.low %v2618, %v2619
      %v2670 = vcombine.low %v2620, %v2621
      %v2672 = vunpack.c.l.s4 1966171168
      %v2673 = vunpack.c.0.s8 %v2672
      %v2674 = vlaneseq
      %v2675 = vshrl.u32 %v2674, 7
      %v2676 = vsub.s32 %v2673, %v2675
      %v2677 = vrot.slane %v2667, %v2676
      %v2679 = vunpack.c.l.s4 1966171168
      %v2680 = vunpack.c.0.s8 %v2679
      %v2681 = vlaneseq
      %v2682 = vshrl.u32 %v2681, 7
      %v2683 = vsub.s32 %v2680, %v2682
      %v2684 = vrot.slane %v2668, %v2683
      %v2686 = vunpack.c.l.s4 1966171168
      %v2687 = vunpack.c.0.s8 %v2686
      %v2688 = vlaneseq
      %v2689 = vshrl.u32 %v2688, 7
      %v2690 = vsub.s32 %v2687, %v2689
      %v2691 = vrot.slane %v2669, %v2690
      %v2693 = vunpack.c.l.s4 1966171168
      %v2694 = vunpack.c.0.s8 %v2693
      %v2695 = vlaneseq
      %v2696 = vshrl.u32 %v2695, 7
      %v2697 = vsub.s32 %v2694, %v2696
      %v2698 = vrot.slane %v2670, %v2697
      %v2699 = vcombine.low %v2677, %v2684
      %v2700 = vcombine.low %v2691, %v2698
      %v2702 = vunpack.c.l.s4 1966171168
      %v2703 = vunpack.c.0.s8 %v2702
      %v2704 = vlaneseq
      %v2705 = vshrl.u32 %v2704, 7
      %v2706 = vsub.s32 %v2703, %v2705
      %v2707 = vrot.slane %v2699, %v2706
      %v2709 = vunpack.c.l.s4 1966171168
      %v2710 = vunpack.c.0.s8 %v2709
      %v2711 = vlaneseq
      %v2712 = vshrl.u32 %v2711, 7
      %v2713 = vsub.s32 %v2710, %v2712
      %v2714 = vrot.slane %v2700, %v2713
      %v2715 = vcombine.low %v2707, %v2714
      %v2716 = vcombine.low %v2622, %v2623
      %v2717 = vcombine.low %v2624, %v2625
      %v2718 = vcombine.low %v2626, %v2627
      %v2719 = vcombine.low %v2628, %v2629
      %v2721 = vunpack.c.l.s4 1966171168
      %v2722 = vunpack.c.0.s8 %v2721
      %v2723 = vlaneseq
      %v2724 = vshrl.u32 %v2723, 7
      %v2725 = vsub.s32 %v2722, %v2724
      %v2726 = vrot.slane %v2716, %v2725
      %v2728 = vunpack.c.l.s4 1966171168
      %v2729 = vunpack.c.0.s8 %v2728
      %v2730 = vlaneseq
      %v2731 = vshrl.u32 %v2730, 7
      %v2732 = vsub.s32 %v2729, %v2731
      %v2733 = vrot.slane %v2717, %v2732
      %v2735 = vunpack.c.l.s4 1966171168
      %v2736 = vunpack.c.0.s8 %v2735
      %v2737 = vlaneseq
      %v2738 = vshrl.u32 %v2737, 7
      %v2739 = vsub.s32 %v2736, %v2738
      %v2740 = vrot.slane %v2718, %v2739
      %v2742 = vunpack.c.l.s4 1966171168
      %v2743 = vunpack.c.0.s8 %v2742
      %v2744 = vlaneseq
      %v2745 = vshrl.u32 %v2744, 7
      %v2746 = vsub.s32 %v2743, %v2745
      %v2747 = vrot.slane %v2719, %v2746
      %v2748 = vcombine.low %v2726, %v2733
      %v2749 = vcombine.low %v2740, %v2747
      %v2751 = vunpack.c.l.s4 1966171168
      %v2752 = vunpack.c.0.s8 %v2751
      %v2753 = vlaneseq
      %v2754 = vshrl.u32 %v2753, 7
      %v2755 = vsub.s32 %v2752, %v2754
      %v2756 = vrot.slane %v2748, %v2755
      %v2758 = vunpack.c.l.s4 1966171168
      %v2759 = vunpack.c.0.s8 %v2758
      %v2760 = vlaneseq
      %v2761 = vshrl.u32 %v2760, 7
      %v2762 = vsub.s32 %v2759, %v2761
      %v2763 = vrot.slane %v2749, %v2762
      %v2764 = vcombine.low %v2756, %v2763
      %v2765 = vcombine.low %v2630, %v2631
      %v2766 = vcombine.low %v2632, %v2633
      %v2767 = vcombine.low %v2634, %v2635
      %v2768 = vcombine.low %v2636, %v2637
      %v2770 = vunpack.c.l.s4 1966171168
      %v2771 = vunpack.c.0.s8 %v2770
      %v2772 = vlaneseq
      %v2773 = vshrl.u32 %v2772, 7
      %v2774 = vsub.s32 %v2771, %v2773
      %v2775 = vrot.slane %v2765, %v2774
      %v2777 = vunpack.c.l.s4 1966171168
      %v2778 = vunpack.c.0.s8 %v2777
      %v2779 = vlaneseq
      %v2780 = vshrl.u32 %v2779, 7
      %v2781 = vsub.s32 %v2778, %v2780
      %v2782 = vrot.slane %v2766, %v2781
      %v2784 = vunpack.c.l.s4 1966171168
      %v2785 = vunpack.c.0.s8 %v2784
      %v2786 = vlaneseq
      %v2787 = vshrl.u32 %v2786, 7
      %v2788 = vsub.s32 %v2785, %v2787
      %v2789 = vrot.slane %v2767, %v2788
      %v2791 = vunpack.c.l.s4 1966171168
      %v2792 = vunpack.c.0.s8 %v2791
      %v2793 = vlaneseq
      %v2794 = vshrl.u32 %v2793, 7
      %v2795 = vsub.s32 %v2792, %v2794
      %v2796 = vrot.slane %v2768, %v2795
      %v2797 = vcombine.low %v2775, %v2782
      %v2798 = vcombine.low %v2789, %v2796
      %v2800 = vunpack.c.l.s4 1966171168
      %v2801 = vunpack.c.0.s8 %v2800
      %v2802 = vlaneseq
      %v2803 = vshrl.u32 %v2802, 7
      %v2804 = vsub.s32 %v2801, %v2803
      %v2805 = vrot.slane %v2797, %v2804
      %v2807 = vunpack.c.l.s4 1966171168
      %v2808 = vunpack.c.0.s8 %v2807
      %v2809 = vlaneseq
      %v2810 = vshrl.u32 %v2809, 7
      %v2811 = vsub.s32 %v2808, %v2810
      %v2812 = vrot.slane %v2798, %v2811
      %v2813 = vcombine.low %v2805, %v2812
      %v2814 = vcombine.low %v2638, %v2639
      %v2815 = vcombine.low %v2640, %v2641
      %v2816 = vcombine.low %v2642, %v2643
      %v2817 = vcombine.low %v2644, %v2645
      %v2819 = vunpack.c.l.s4 1966171168
      %v2820 = vunpack.c.0.s8 %v2819
      %v2821 = vlaneseq
      %v2822 = vshrl.u32 %v2821, 7
      %v2823 = vsub.s32 %v2820, %v2822
      %v2824 = vrot.slane %v2814, %v2823
      %v2826 = vunpack.c.l.s4 1966171168
      %v2827 = vunpack.c.0.s8 %v2826
      %v2828 = vlaneseq
      %v2829 = vshrl.u32 %v2828, 7
      %v2830 = vsub.s32 %v2827, %v2829
      %v2831 = vrot.slane %v2815, %v2830
      %v2833 = vunpack.c.l.s4 1966171168
      %v2834 = vunpack.c.0.s8 %v2833
      %v2835 = vlaneseq
      %v2836 = vshrl.u32 %v2835, 7
      %v2837 = vsub.s32 %v2834, %v2836
      %v2838 = vrot.slane %v2816, %v2837
      %v2840 = vunpack.c.l.s4 1966171168
      %v2841 = vunpack.c.0.s8 %v2840
      %v2842 = vlaneseq
      %v2843 = vshrl.u32 %v2842, 7
      %v2844 = vsub.s32 %v2841, %v2843
      %v2845 = vrot.slane %v2817, %v2844
      %v2846 = vcombine.low %v2824, %v2831
      %v2847 = vcombine.low %v2838, %v2845
      %v2849 = vunpack.c.l.s4 1966171168
      %v2850 = vunpack.c.0.s8 %v2849
      %v2851 = vlaneseq
      %v2852 = vshrl.u32 %v2851, 7
      %v2853 = vsub.s32 %v2850, %v2852
      %v2854 = vrot.slane %v2846, %v2853
      %v2856 = vunpack.c.l.s4 1966171168
      %v2857 = vunpack.c.0.s8 %v2856
      %v2858 = vlaneseq
      %v2859 = vshrl.u32 %v2858, 7
      %v2860 = vsub.s32 %v2857, %v2859
      %v2861 = vrot.slane %v2847, %v2860
      %v2862 = vcombine.low %v2854, %v2861
      %v2863 = vcombine.low %v2646, %v2647
      %v2864 = vcombine.low %v2648, %v2649
      %v2865 = vcombine.low %v2650, %v2651
      %v2866 = vcombine.low %v2652, %v2653
      %v2868 = vunpack.c.l.s4 1966171168
      %v2869 = vunpack.c.0.s8 %v2868
      %v2870 = vlaneseq
      %v2871 = vshrl.u32 %v2870, 7
      %v2872 = vsub.s32 %v2869, %v2871
      %v2873 = vrot.slane %v2863, %v2872
      %v2875 = vunpack.c.l.s4 1966171168
      %v2876 = vunpack.c.0.s8 %v2875
      %v2877 = vlaneseq
      %v2878 = vshrl.u32 %v2877, 7
      %v2879 = vsub.s32 %v2876, %v2878
      %v2880 = vrot.slane %v2864, %v2879
      %v2882 = vunpack.c.l.s4 1966171168
      %v2883 = vunpack.c.0.s8 %v2882
      %v2884 = vlaneseq
      %v2885 = vshrl.u32 %v2884, 7
      %v2886 = vsub.s32 %v2883, %v2885
      %v2887 = vrot.slane %v2865, %v2886
      %v2889 = vunpack.c.l.s4 1966171168
      %v2890 = vunpack.c.0.s8 %v2889
      %v2891 = vlaneseq
      %v2892 = vshrl.u32 %v2891, 7
      %v2893 = vsub.s32 %v2890, %v2892
      %v2894 = vrot.slane %v2866, %v2893
      %v2895 = vcombine.low %v2873, %v2880
      %v2896 = vcombine.low %v2887, %v2894
      %v2898 = vunpack.c.l.s4 1966171168
      %v2899 = vunpack.c.0.s8 %v2898
      %v2900 = vlaneseq
      %v2901 = vshrl.u32 %v2900, 7
      %v2902 = vsub.s32 %v2899, %v2901
      %v2903 = vrot.slane %v2895, %v2902
      %v2905 = vunpack.c.l.s4 1966171168
      %v2906 = vunpack.c.0.s8 %v2905
      %v2907 = vlaneseq
      %v2908 = vshrl.u32 %v2907, 7
      %v2909 = vsub.s32 %v2906, %v2908
      %v2910 = vrot.slane %v2896, %v2909
      %v2911 = vcombine.low %v2903, %v2910
      %v2912 = vcombine.low %v2654, %v2655
      %v2913 = vcombine.low %v2656, %v2657
      %v2914 = vcombine.low %v2658, %v2659
      %v2915 = vcombine.low %v2660, %v2661
      %v2917 = vunpack.c.l.s4 1966171168
      %v2918 = vunpack.c.0.s8 %v2917
      %v2919 = vlaneseq
      %v2920 = vshrl.u32 %v2919, 7
      %v2921 = vsub.s32 %v2918, %v2920
      %v2922 = vrot.slane %v2912, %v2921
      %v2924 = vunpack.c.l.s4 1966171168
      %v2925 = vunpack.c.0.s8 %v2924
      %v2926 = vlaneseq
      %v2927 = vshrl.u32 %v2926, 7
      %v2928 = vsub.s32 %v2925, %v2927
      %v2929 = vrot.slane %v2913, %v2928
      %v2931 = vunpack.c.l.s4 1966171168
      %v2932 = vunpack.c.0.s8 %v2931
      %v2933 = vlaneseq
      %v2934 = vshrl.u32 %v2933, 7
      %v2935 = vsub.s32 %v2932, %v2934
      %v2936 = vrot.slane %v2914, %v2935
      %v2938 = vunpack.c.l.s4 1966171168
      %v2939 = vunpack.c.0.s8 %v2938
      %v2940 = vlaneseq
      %v2941 = vshrl.u32 %v2940, 7
      %v2942 = vsub.s32 %v2939, %v2941
      %v2943 = vrot.slane %v2915, %v2942
      %v2944 = vcombine.low %v2922, %v2929
      %v2945 = vcombine.low %v2936, %v2943
      %v2947 = vunpack.c.l.s4 1966171168
      %v2948 = vunpack.c.0.s8 %v2947
      %v2949 = vlaneseq
      %v2950 = vshrl.u32 %v2949, 7
      %v2951 = vsub.s32 %v2948, %v2950
      %v2952 = vrot.slane %v2944, %v2951
      %v2954 = vunpack.c.l.s4 1966171168
      %v2955 = vunpack.c.0.s8 %v2954
      %v2956 = vlaneseq
      %v2957 = vshrl.u32 %v2956, 7
      %v2958 = vsub.s32 %v2955, %v2957
      %v2959 = vrot.slane %v2945, %v2958
      %v2960 = vcombine.low %v2952, %v2959
      %v2961 = vcombine.low %v2662, %v2663
      %v2963 = vunpack.c.l.s4 1966171168
      %v2964 = vunpack.c.0.s8 %v2963
      %v2965 = vlaneseq
      %v2966 = vshrl.u32 %v2965, 7
      %v2967 = vsub.s32 %v2964, %v2966
      %v2968 = vrot.slane %v2961, %v2967
      %v2970 = vunpack.c.l.s4 1966171168
      %v2971 = vunpack.c.0.s8 %v2970
      %v2972 = vlaneseq
      %v2973 = vshrl.u32 %v2972, 7
      %v2974 = vsub.s32 %v2971, %v2973
      %v2975 = vrot.slane %v2968, %v2974
      %v2983 = vadd.f32 %v2258, %v2715
      %v2984 = vadd.f32 %v2262, %v2764
      %v2985 = vadd.f32 %v2266, %v2813
      %v2986 = vadd.f32 %v2270, %v2862
      %v2987 = vadd.f32 %v2274, %v2911
      %v2988 = vadd.f32 %v2278, %v2960
      %v2989 = vadd.f32 %v2280, %v2975
      %s2990 = scalar_lea.vmem [#allocation2], 6
      %v2991 = vld [vmem:[%s2990] ss:$8 sm:$0xf]
      %v2992 = vld [vmem:[%s2990] ss:$8 sm:$0xf0]
      %v2993 = vor.u32 %v2991, %v2992
      %s2994 = scalar_lea.vmem [#allocation2], 70
      %v2995 = vld [vmem:[%s2994] ss:$8 sm:$0xf]
      %v2996 = vld [vmem:[%s2994] ss:$8 sm:$0xf0]
      %v2997 = vor.u32 %v2995, %v2996
      %s2998 = scalar_lea.vmem [#allocation2], 134
      %v2999 = vld [vmem:[%s2998] ss:$8 sm:$0xf]
      %v3000 = vld [vmem:[%s2998] ss:$8 sm:$0xf0]
      %v3001 = vor.u32 %v2999, %v3000
      %s3002 = scalar_lea.vmem [#allocation2], 198
      %v3003 = vld [vmem:[%s3002] ss:$8 sm:$0xf]
      %v3004 = vld [vmem:[%s3002] ss:$8 sm:$0xf0]
      %v3005 = vor.u32 %v3003, %v3004
      %s3006 = scalar_lea.vmem [#allocation2], 262
      %v3007 = vld [vmem:[%s3006] ss:$8 sm:$0xf]
      %v3008 = vld [vmem:[%s3006] ss:$8 sm:$0xf0]
      %v3009 = vor.u32 %v3007, %v3008
      %s3010 = scalar_lea.vmem [#allocation2], 326
      %v3011 = vld [vmem:[%s3010] ss:$8 sm:$0xf]
      %v3012 = vld [vmem:[%s3010] ss:$8 sm:$0xf0]
      %v3013 = vor.u32 %v3011, %v3012
      %s3014 = scalar_lea.vmem [#allocation2], 390
      %v3015 = vld [vmem:[%s3014] ss:$8 sm:$0x3]
      %v3023 = vlaneseq
      %v3024 = vshrl.u32 %v3023, 7
      %v3025 = vsub.s32 0, %v3024
      %v3026 = vrot.slane %v2993, %v3025
      %v3027 = vlaneseq
      %v3028 = vshrl.u32 %v3027, 7
      %v3029 = vsub.s32 1, %v3028
      %v3030 = vrot.slane %v2993, %v3029
      %v3031 = vlaneseq
      %v3032 = vshrl.u32 %v3031, 7
      %v3033 = vsub.s32 2, %v3032
      %v3034 = vrot.slane %v2993, %v3033
      %v3035 = vlaneseq
      %v3036 = vshrl.u32 %v3035, 7
      %v3037 = vsub.s32 3, %v3036
      %v3038 = vrot.slane %v2993, %v3037
      %v3039 = vlaneseq
      %v3040 = vshrl.u32 %v3039, 7
      %v3041 = vsub.s32 4, %v3040
      %v3042 = vrot.slane %v2993, %v3041
      %v3043 = vlaneseq
      %v3044 = vshrl.u32 %v3043, 7
      %v3045 = vsub.s32 5, %v3044
      %v3046 = vrot.slane %v2993, %v3045
      %v3047 = vlaneseq
      %v3048 = vshrl.u32 %v3047, 7
      %v3049 = vsub.s32 6, %v3048
      %v3050 = vrot.slane %v2993, %v3049
      %v3051 = vlaneseq
      %v3052 = vshrl.u32 %v3051, 7
      %v3053 = vsub.s32 7, %v3052
      %v3054 = vrot.slane %v2993, %v3053
      %v3055 = vlaneseq
      %v3056 = vshrl.u32 %v3055, 7
      %v3057 = vsub.s32 0, %v3056
      %v3058 = vrot.slane %v2997, %v3057
      %v3059 = vlaneseq
      %v3060 = vshrl.u32 %v3059, 7
      %v3061 = vsub.s32 1, %v3060
      %v3062 = vrot.slane %v2997, %v3061
      %v3063 = vlaneseq
      %v3064 = vshrl.u32 %v3063, 7
      %v3065 = vsub.s32 2, %v3064
      %v3066 = vrot.slane %v2997, %v3065
      %v3067 = vlaneseq
      %v3068 = vshrl.u32 %v3067, 7
      %v3069 = vsub.s32 3, %v3068
      %v3070 = vrot.slane %v2997, %v3069
      %v3071 = vlaneseq
      %v3072 = vshrl.u32 %v3071, 7
      %v3073 = vsub.s32 4, %v3072
      %v3074 = vrot.slane %v2997, %v3073
      %v3075 = vlaneseq
      %v3076 = vshrl.u32 %v3075, 7
      %v3077 = vsub.s32 5, %v3076
      %v3078 = vrot.slane %v2997, %v3077
      %v3079 = vlaneseq
      %v3080 = vshrl.u32 %v3079, 7
      %v3081 = vsub.s32 6, %v3080
      %v3082 = vrot.slane %v2997, %v3081
      %v3083 = vlaneseq
      %v3084 = vshrl.u32 %v3083, 7
      %v3085 = vsub.s32 7, %v3084
      %v3086 = vrot.slane %v2997, %v3085
      %v3087 = vlaneseq
      %v3088 = vshrl.u32 %v3087, 7
      %v3089 = vsub.s32 0, %v3088
      %v3090 = vrot.slane %v3001, %v3089
      %v3091 = vlaneseq
      %v3092 = vshrl.u32 %v3091, 7
      %v3093 = vsub.s32 1, %v3092
      %v3094 = vrot.slane %v3001, %v3093
      %v3095 = vlaneseq
      %v3096 = vshrl.u32 %v3095, 7
      %v3097 = vsub.s32 2, %v3096
      %v3098 = vrot.slane %v3001, %v3097
      %v3099 = vlaneseq
      %v3100 = vshrl.u32 %v3099, 7
      %v3101 = vsub.s32 3, %v3100
      %v3102 = vrot.slane %v3001, %v3101
      %v3103 = vlaneseq
      %v3104 = vshrl.u32 %v3103, 7
      %v3105 = vsub.s32 4, %v3104
      %v3106 = vrot.slane %v3001, %v3105
      %v3107 = vlaneseq
      %v3108 = vshrl.u32 %v3107, 7
      %v3109 = vsub.s32 5, %v3108
      %v3110 = vrot.slane %v3001, %v3109
      %v3111 = vlaneseq
      %v3112 = vshrl.u32 %v3111, 7
      %v3113 = vsub.s32 6, %v3112
      %v3114 = vrot.slane %v3001, %v3113
      %v3115 = vlaneseq
      %v3116 = vshrl.u32 %v3115, 7
      %v3117 = vsub.s32 7, %v3116
      %v3118 = vrot.slane %v3001, %v3117
      %v3119 = vlaneseq
      %v3120 = vshrl.u32 %v3119, 7
      %v3121 = vsub.s32 0, %v3120
      %v3122 = vrot.slane %v3005, %v3121
      %v3123 = vlaneseq
      %v3124 = vshrl.u32 %v3123, 7
      %v3125 = vsub.s32 1, %v3124
      %v3126 = vrot.slane %v3005, %v3125
      %v3127 = vlaneseq
      %v3128 = vshrl.u32 %v3127, 7
      %v3129 = vsub.s32 2, %v3128
      %v3130 = vrot.slane %v3005, %v3129
      %v3131 = vlaneseq
      %v3132 = vshrl.u32 %v3131, 7
      %v3133 = vsub.s32 3, %v3132
      %v3134 = vrot.slane %v3005, %v3133
      %v3135 = vlaneseq
      %v3136 = vshrl.u32 %v3135, 7
      %v3137 = vsub.s32 4, %v3136
      %v3138 = vrot.slane %v3005, %v3137
      %v3139 = vlaneseq
      %v3140 = vshrl.u32 %v3139, 7
      %v3141 = vsub.s32 5, %v3140
      %v3142 = vrot.slane %v3005, %v3141
      %v3143 = vlaneseq
      %v3144 = vshrl.u32 %v3143, 7
      %v3145 = vsub.s32 6, %v3144
      %v3146 = vrot.slane %v3005, %v3145
      %v3147 = vlaneseq
      %v3148 = vshrl.u32 %v3147, 7
      %v3149 = vsub.s32 7, %v3148
      %v3150 = vrot.slane %v3005, %v3149
      %v3151 = vlaneseq
      %v3152 = vshrl.u32 %v3151, 7
      %v3153 = vsub.s32 0, %v3152
      %v3154 = vrot.slane %v3009, %v3153
      %v3155 = vlaneseq
      %v3156 = vshrl.u32 %v3155, 7
      %v3157 = vsub.s32 1, %v3156
      %v3158 = vrot.slane %v3009, %v3157
      %v3159 = vlaneseq
      %v3160 = vshrl.u32 %v3159, 7
      %v3161 = vsub.s32 2, %v3160
      %v3162 = vrot.slane %v3009, %v3161
      %v3163 = vlaneseq
      %v3164 = vshrl.u32 %v3163, 7
      %v3165 = vsub.s32 3, %v3164
      %v3166 = vrot.slane %v3009, %v3165
      %v3167 = vlaneseq
      %v3168 = vshrl.u32 %v3167, 7
      %v3169 = vsub.s32 4, %v3168
      %v3170 = vrot.slane %v3009, %v3169
      %v3171 = vlaneseq
      %v3172 = vshrl.u32 %v3171, 7
      %v3173 = vsub.s32 5, %v3172
      %v3174 = vrot.slane %v3009, %v3173
      %v3175 = vlaneseq
      %v3176 = vshrl.u32 %v3175, 7
      %v3177 = vsub.s32 6, %v3176
      %v3178 = vrot.slane %v3009, %v3177
      %v3179 = vlaneseq
      %v3180 = vshrl.u32 %v3179, 7
      %v3181 = vsub.s32 7, %v3180
      %v3182 = vrot.slane %v3009, %v3181
      %v3183 = vlaneseq
      %v3184 = vshrl.u32 %v3183, 7
      %v3185 = vsub.s32 0, %v3184
      %v3186 = vrot.slane %v3013, %v3185
      %v3187 = vlaneseq
      %v3188 = vshrl.u32 %v3187, 7
      %v3189 = vsub.s32 1, %v3188
      %v3190 = vrot.slane %v3013, %v3189
      %v3191 = vlaneseq
      %v3192 = vshrl.u32 %v3191, 7
      %v3193 = vsub.s32 2, %v3192
      %v3194 = vrot.slane %v3013, %v3193
      %v3195 = vlaneseq
      %v3196 = vshrl.u32 %v3195, 7
      %v3197 = vsub.s32 3, %v3196
      %v3198 = vrot.slane %v3013, %v3197
      %v3199 = vlaneseq
      %v3200 = vshrl.u32 %v3199, 7
      %v3201 = vsub.s32 4, %v3200
      %v3202 = vrot.slane %v3013, %v3201
      %v3203 = vlaneseq
      %v3204 = vshrl.u32 %v3203, 7
      %v3205 = vsub.s32 5, %v3204
      %v3206 = vrot.slane %v3013, %v3205
      %v3207 = vlaneseq
      %v3208 = vshrl.u32 %v3207, 7
      %v3209 = vsub.s32 6, %v3208
      %v3210 = vrot.slane %v3013, %v3209
      %v3211 = vlaneseq
      %v3212 = vshrl.u32 %v3211, 7
      %v3213 = vsub.s32 7, %v3212
      %v3214 = vrot.slane %v3013, %v3213
      %v3215 = vlaneseq
      %v3216 = vshrl.u32 %v3215, 7
      %v3217 = vsub.s32 0, %v3216
      %v3218 = vrot.slane %v3015, %v3217
      %v3219 = vlaneseq
      %v3220 = vshrl.u32 %v3219, 7
      %v3221 = vsub.s32 1, %v3220
      %v3222 = vrot.slane %v3015, %v3221
      %3223 = vrot.lane.b32.xlu0 %v3026, 50
      %v3224 = vpop.permute.xlu0 %3223
      %3225 = vrot.lane.b32.xlu0 %v3030, 50
      %v3226 = vpop.permute.xlu0 %3225
      %3227 = vrot.lane.b32.xlu0 %v3034, 50
      %v3228 = vpop.permute.xlu0 %3227
      %3229 = vrot.lane.b32.xlu0 %v3038, 50
      %v3230 = vpop.permute.xlu0 %3229
      %3231 = vrot.lane.b32.xlu0 %v3042, 50
      %v3232 = vpop.permute.xlu0 %3231
      %3233 = vrot.lane.b32.xlu0 %v3046, 50
      %v3234 = vpop.permute.xlu0 %3233
      %3235 = vrot.lane.b32.xlu0 %v3050, 50
      %v3236 = vpop.permute.xlu0 %3235
      %3237 = vrot.lane.b32.xlu0 %v3054, 50
      %v3238 = vpop.permute.xlu0 %3237
      %3239 = vrot.lane.b32.xlu0 %v3058, 50
      %v3240 = vpop.permute.xlu0 %3239
      %3241 = vrot.lane.b32.xlu0 %v3062, 50
      %v3242 = vpop.permute.xlu0 %3241
      %3243 = vrot.lane.b32.xlu0 %v3066, 50
      %v3244 = vpop.permute.xlu0 %3243
      %3245 = vrot.lane.b32.xlu0 %v3070, 50
      %v3246 = vpop.permute.xlu0 %3245
      %3247 = vrot.lane.b32.xlu0 %v3074, 50
      %v3248 = vpop.permute.xlu0 %3247
      %3249 = vrot.lane.b32.xlu0 %v3078, 50
      %v3250 = vpop.permute.xlu0 %3249
      %3251 = vrot.lane.b32.xlu0 %v3082, 50
      %v3252 = vpop.permute.xlu0 %3251
      %3253 = vrot.lane.b32.xlu0 %v3086, 50
      %v3254 = vpop.permute.xlu0 %3253
      %3255 = vrot.lane.b32.xlu0 %v3090, 50
      %v3256 = vpop.permute.xlu0 %3255
      %3257 = vrot.lane.b32.xlu0 %v3094, 50
      %v3258 = vpop.permute.xlu0 %3257
      %3259 = vrot.lane.b32.xlu0 %v3098, 50
      %v3260 = vpop.permute.xlu0 %3259
      %3261 = vrot.lane.b32.xlu0 %v3102, 50
      %v3262 = vpop.permute.xlu0 %3261
      %3263 = vrot.lane.b32.xlu0 %v3106, 50
      %v3264 = vpop.permute.xlu0 %3263
      %3265 = vrot.lane.b32.xlu0 %v3110, 50
      %v3266 = vpop.permute.xlu0 %3265
      %3267 = vrot.lane.b32.xlu0 %v3114, 50
      %v3268 = vpop.permute.xlu0 %3267
      %3269 = vrot.lane.b32.xlu0 %v3118, 50
      %v3270 = vpop.permute.xlu0 %3269
      %3271 = vrot.lane.b32.xlu0 %v3122, 50
      %v3272 = vpop.permute.xlu0 %3271
      %3273 = vrot.lane.b32.xlu0 %v3126, 50
      %v3274 = vpop.permute.xlu0 %3273
      %3275 = vrot.lane.b32.xlu0 %v3130, 50
      %v3276 = vpop.permute.xlu0 %3275
      %3277 = vrot.lane.b32.xlu0 %v3134, 50
      %v3278 = vpop.permute.xlu0 %3277
      %3279 = vrot.lane.b32.xlu0 %v3138, 50
      %v3280 = vpop.permute.xlu0 %3279
      %3281 = vrot.lane.b32.xlu0 %v3142, 50
      %v3282 = vpop.permute.xlu0 %3281
      %3283 = vrot.lane.b32.xlu0 %v3146, 50
      %v3284 = vpop.permute.xlu0 %3283
      %3285 = vrot.lane.b32.xlu0 %v3150, 50
      %v3286 = vpop.permute.xlu0 %3285
      %3287 = vrot.lane.b32.xlu0 %v3154, 50
      %v3288 = vpop.permute.xlu0 %3287
      %3289 = vrot.lane.b32.xlu0 %v3158, 50
      %v3290 = vpop.permute.xlu0 %3289
      %3291 = vrot.lane.b32.xlu0 %v3162, 50
      %v3292 = vpop.permute.xlu0 %3291
      %3293 = vrot.lane.b32.xlu0 %v3166, 50
      %v3294 = vpop.permute.xlu0 %3293
      %3295 = vrot.lane.b32.xlu0 %v3170, 50
      %v3296 = vpop.permute.xlu0 %3295
      %3297 = vrot.lane.b32.xlu0 %v3174, 50
      %v3298 = vpop.permute.xlu0 %3297
      %3299 = vrot.lane.b32.xlu0 %v3178, 50
      %v3300 = vpop.permute.xlu0 %3299
      %3301 = vrot.lane.b32.xlu0 %v3182, 50
      %v3302 = vpop.permute.xlu0 %3301
      %3303 = vrot.lane.b32.xlu0 %v3186, 50
      %v3304 = vpop.permute.xlu0 %3303
      %3305 = vrot.lane.b32.xlu0 %v3190, 50
      %v3306 = vpop.permute.xlu0 %3305
      %3307 = vrot.lane.b32.xlu0 %v3194, 50
      %v3308 = vpop.permute.xlu0 %3307
      %3309 = vrot.lane.b32.xlu0 %v3198, 50
      %v3310 = vpop.permute.xlu0 %3309
      %3311 = vrot.lane.b32.xlu0 %v3202, 50
      %v3312 = vpop.permute.xlu0 %3311
      %3313 = vrot.lane.b32.xlu0 %v3206, 50
      %v3314 = vpop.permute.xlu0 %3313
      %3315 = vrot.lane.b32.xlu0 %v3210, 50
      %v3316 = vpop.permute.xlu0 %3315
      %3317 = vrot.lane.b32.xlu0 %v3214, 50
      %v3318 = vpop.permute.xlu0 %3317
      %3319 = vrot.lane.b32.xlu0 %v3218, 50
      %v3320 = vpop.permute.xlu0 %3319
      %3321 = vrot.lane.b32.xlu0 %v3222, 50
      %v3322 = vpop.permute.xlu0 %3321
      %vm3323 = vcmask 408576
      %v3324 = vsel %vm3323, %v3224, %v3226
      %v3325 = vsel %vm3323, %v3226, %v3228
      %v3326 = vsel %vm3323, %v3228, %v3230
      %v3327 = vsel %vm3323, %v3230, %v3232
      %v3328 = vsel %vm3323, %v3232, %v3234
      %v3329 = vsel %vm3323, %v3234, %v3236
      %v3330 = vsel %vm3323, %v3236, %v3238
      %v3331 = vsel %vm3323, %v3238, %v3240
      %v3332 = vsel %vm3323, %v3240, %v3242
      %v3333 = vsel %vm3323, %v3242, %v3244
      %v3334 = vsel %vm3323, %v3244, %v3246
      %v3335 = vsel %vm3323, %v3246, %v3248
      %v3336 = vsel %vm3323, %v3248, %v3250
      %v3337 = vsel %vm3323, %v3250, %v3252
      %v3338 = vsel %vm3323, %v3252, %v3254
      %v3339 = vsel %vm3323, %v3254, %v3256
      %v3340 = vsel %vm3323, %v3256, %v3258
      %v3341 = vsel %vm3323, %v3258, %v3260
      %v3342 = vsel %vm3323, %v3260, %v3262
      %v3343 = vsel %vm3323, %v3262, %v3264
      %v3344 = vsel %vm3323, %v3264, %v3266
      %v3345 = vsel %vm3323, %v3266, %v3268
      %v3346 = vsel %vm3323, %v3268, %v3270
      %v3347 = vsel %vm3323, %v3270, %v3272
      %v3348 = vsel %vm3323, %v3272, %v3274
      %v3349 = vsel %vm3323, %v3274, %v3276
      %v3350 = vsel %vm3323, %v3276, %v3278
      %v3351 = vsel %vm3323, %v3278, %v3280
      %v3352 = vsel %vm3323, %v3280, %v3282
      %v3353 = vsel %vm3323, %v3282, %v3284
      %v3354 = vsel %vm3323, %v3284, %v3286
      %v3355 = vsel %vm3323, %v3286, %v3288
      %v3356 = vsel %vm3323, %v3288, %v3290
      %v3357 = vsel %vm3323, %v3290, %v3292
      %v3358 = vsel %vm3323, %v3292, %v3294
      %v3359 = vsel %vm3323, %v3294, %v3296
      %v3360 = vsel %vm3323, %v3296, %v3298
      %v3361 = vsel %vm3323, %v3298, %v3300
      %v3362 = vsel %vm3323, %v3300, %v3302
      %v3363 = vsel %vm3323, %v3302, %v3304
      %v3364 = vsel %vm3323, %v3304, %v3306
      %v3365 = vsel %vm3323, %v3306, %v3308
      %v3366 = vsel %vm3323, %v3308, %v3310
      %v3367 = vsel %vm3323, %v3310, %v3312
      %v3368 = vsel %vm3323, %v3312, %v3314
      %v3369 = vsel %vm3323, %v3314, %v3316
      %v3370 = vsel %vm3323, %v3316, %v3318
      %v3371 = vsel %vm3323, %v3318, %v3320
      %v3372 = vsel %vm3323, %v3320, %v3322
      %v3374 = vsel %vm3323, 0.0, %v3224
      %v3376 = vcombine.low %v3374, %v3324
      %v3377 = vcombine.low %v3325, %v3326
      %v3378 = vcombine.low %v3327, %v3328
      %v3379 = vcombine.low %v3329, %v3330
      %v3381 = vunpack.c.l.s4 1966171168
      %v3382 = vunpack.c.0.s8 %v3381
      %v3383 = vlaneseq
      %v3384 = vshrl.u32 %v3383, 7
      %v3385 = vsub.s32 %v3382, %v3384
      %v3386 = vrot.slane %v3376, %v3385
      %v3388 = vunpack.c.l.s4 1966171168
      %v3389 = vunpack.c.0.s8 %v3388
      %v3390 = vlaneseq
      %v3391 = vshrl.u32 %v3390, 7
      %v3392 = vsub.s32 %v3389, %v3391
      %v3393 = vrot.slane %v3377, %v3392
      %v3395 = vunpack.c.l.s4 1966171168
      %v3396 = vunpack.c.0.s8 %v3395
      %v3397 = vlaneseq
      %v3398 = vshrl.u32 %v3397, 7
      %v3399 = vsub.s32 %v3396, %v3398
      %v3400 = vrot.slane %v3378, %v3399
      %v3402 = vunpack.c.l.s4 1966171168
      %v3403 = vunpack.c.0.s8 %v3402
      %v3404 = vlaneseq
      %v3405 = vshrl.u32 %v3404, 7
      %v3406 = vsub.s32 %v3403, %v3405
      %v3407 = vrot.slane %v3379, %v3406
      %v3408 = vcombine.low %v3386, %v3393
      %v3409 = vcombine.low %v3400, %v3407
      %v3411 = vunpack.c.l.s4 1966171168
      %v3412 = vunpack.c.0.s8 %v3411
      %v3413 = vlaneseq
      %v3414 = vshrl.u32 %v3413, 7
      %v3415 = vsub.s32 %v3412, %v3414
      %v3416 = vrot.slane %v3408, %v3415
      %v3418 = vunpack.c.l.s4 1966171168
      %v3419 = vunpack.c.0.s8 %v3418
      %v3420 = vlaneseq
      %v3421 = vshrl.u32 %v3420, 7
      %v3422 = vsub.s32 %v3419, %v3421
      %v3423 = vrot.slane %v3409, %v3422
      %v3424 = vcombine.low %v3416, %v3423
      %v3425 = vcombine.low %v3331, %v3332
      %v3426 = vcombine.low %v3333, %v3334
      %v3427 = vcombine.low %v3335, %v3336
      %v3428 = vcombine.low %v3337, %v3338
      %v3430 = vunpack.c.l.s4 1966171168
      %v3431 = vunpack.c.0.s8 %v3430
      %v3432 = vlaneseq
      %v3433 = vshrl.u32 %v3432, 7
      %v3434 = vsub.s32 %v3431, %v3433
      %v3435 = vrot.slane %v3425, %v3434
      %v3437 = vunpack.c.l.s4 1966171168
      %v3438 = vunpack.c.0.s8 %v3437
      %v3439 = vlaneseq
      %v3440 = vshrl.u32 %v3439, 7
      %v3441 = vsub.s32 %v3438, %v3440
      %v3442 = vrot.slane %v3426, %v3441
      %v3444 = vunpack.c.l.s4 1966171168
      %v3445 = vunpack.c.0.s8 %v3444
      %v3446 = vlaneseq
      %v3447 = vshrl.u32 %v3446, 7
      %v3448 = vsub.s32 %v3445, %v3447
      %v3449 = vrot.slane %v3427, %v3448
      %v3451 = vunpack.c.l.s4 1966171168
      %v3452 = vunpack.c.0.s8 %v3451
      %v3453 = vlaneseq
      %v3454 = vshrl.u32 %v3453, 7
      %v3455 = vsub.s32 %v3452, %v3454
      %v3456 = vrot.slane %v3428, %v3455
      %v3457 = vcombine.low %v3435, %v3442
      %v3458 = vcombine.low %v3449, %v3456
      %v3460 = vunpack.c.l.s4 1966171168
      %v3461 = vunpack.c.0.s8 %v3460
      %v3462 = vlaneseq
      %v3463 = vshrl.u32 %v3462, 7
      %v3464 = vsub.s32 %v3461, %v3463
      %v3465 = vrot.slane %v3457, %v3464
      %v3467 = vunpack.c.l.s4 1966171168
      %v3468 = vunpack.c.0.s8 %v3467
      %v3469 = vlaneseq
      %v3470 = vshrl.u32 %v3469, 7
      %v3471 = vsub.s32 %v3468, %v3470
      %v3472 = vrot.slane %v3458, %v3471
      %v3473 = vcombine.low %v3465, %v3472
      %v3474 = vcombine.low %v3339, %v3340
      %v3475 = vcombine.low %v3341, %v3342
      %v3476 = vcombine.low %v3343, %v3344
      %v3477 = vcombine.low %v3345, %v3346
      %v3479 = vunpack.c.l.s4 1966171168
      %v3480 = vunpack.c.0.s8 %v3479
      %v3481 = vlaneseq
      %v3482 = vshrl.u32 %v3481, 7
      %v3483 = vsub.s32 %v3480, %v3482
      %v3484 = vrot.slane %v3474, %v3483
      %v3486 = vunpack.c.l.s4 1966171168
      %v3487 = vunpack.c.0.s8 %v3486
      %v3488 = vlaneseq
      %v3489 = vshrl.u32 %v3488, 7
      %v3490 = vsub.s32 %v3487, %v3489
      %v3491 = vrot.slane %v3475, %v3490
      %v3493 = vunpack.c.l.s4 1966171168
      %v3494 = vunpack.c.0.s8 %v3493
      %v3495 = vlaneseq
      %v3496 = vshrl.u32 %v3495, 7
      %v3497 = vsub.s32 %v3494, %v3496
      %v3498 = vrot.slane %v3476, %v3497
      %v3500 = vunpack.c.l.s4 1966171168
      %v3501 = vunpack.c.0.s8 %v3500
      %v3502 = vlaneseq
      %v3503 = vshrl.u32 %v3502, 7
      %v3504 = vsub.s32 %v3501, %v3503
      %v3505 = vrot.slane %v3477, %v3504
      %v3506 = vcombine.low %v3484, %v3491
      %v3507 = vcombine.low %v3498, %v3505
      %v3509 = vunpack.c.l.s4 1966171168
      %v3510 = vunpack.c.0.s8 %v3509
      %v3511 = vlaneseq
      %v3512 = vshrl.u32 %v3511, 7
      %v3513 = vsub.s32 %v3510, %v3512
      %v3514 = vrot.slane %v3506, %v3513
      %v3516 = vunpack.c.l.s4 1966171168
      %v3517 = vunpack.c.0.s8 %v3516
      %v3518 = vlaneseq
      %v3519 = vshrl.u32 %v3518, 7
      %v3520 = vsub.s32 %v3517, %v3519
      %v3521 = vrot.slane %v3507, %v3520
      %v3522 = vcombine.low %v3514, %v3521
      %v3523 = vcombine.low %v3347, %v3348
      %v3524 = vcombine.low %v3349, %v3350
      %v3525 = vcombine.low %v3351, %v3352
      %v3526 = vcombine.low %v3353, %v3354
      %v3528 = vunpack.c.l.s4 1966171168
      %v3529 = vunpack.c.0.s8 %v3528
      %v3530 = vlaneseq
      %v3531 = vshrl.u32 %v3530, 7
      %v3532 = vsub.s32 %v3529, %v3531
      %v3533 = vrot.slane %v3523, %v3532
      %v3535 = vunpack.c.l.s4 1966171168
      %v3536 = vunpack.c.0.s8 %v3535
      %v3537 = vlaneseq
      %v3538 = vshrl.u32 %v3537, 7
      %v3539 = vsub.s32 %v3536, %v3538
      %v3540 = vrot.slane %v3524, %v3539
      %v3542 = vunpack.c.l.s4 1966171168
      %v3543 = vunpack.c.0.s8 %v3542
      %v3544 = vlaneseq
      %v3545 = vshrl.u32 %v3544, 7
      %v3546 = vsub.s32 %v3543, %v3545
      %v3547 = vrot.slane %v3525, %v3546
      %v3549 = vunpack.c.l.s4 1966171168
      %v3550 = vunpack.c.0.s8 %v3549
      %v3551 = vlaneseq
      %v3552 = vshrl.u32 %v3551, 7
      %v3553 = vsub.s32 %v3550, %v3552
      %v3554 = vrot.slane %v3526, %v3553
      %v3555 = vcombine.low %v3533, %v3540
      %v3556 = vcombine.low %v3547, %v3554
      %v3558 = vunpack.c.l.s4 1966171168
      %v3559 = vunpack.c.0.s8 %v3558
      %v3560 = vlaneseq
      %v3561 = vshrl.u32 %v3560, 7
      %v3562 = vsub.s32 %v3559, %v3561
      %v3563 = vrot.slane %v3555, %v3562
      %v3565 = vunpack.c.l.s4 1966171168
      %v3566 = vunpack.c.0.s8 %v3565
      %v3567 = vlaneseq
      %v3568 = vshrl.u32 %v3567, 7
      %v3569 = vsub.s32 %v3566, %v3568
      %v3570 = vrot.slane %v3556, %v3569
      %v3571 = vcombine.low %v3563, %v3570
      %v3572 = vcombine.low %v3355, %v3356
      %v3573 = vcombine.low %v3357, %v3358
      %v3574 = vcombine.low %v3359, %v3360
      %v3575 = vcombine.low %v3361, %v3362
      %v3577 = vunpack.c.l.s4 1966171168
      %v3578 = vunpack.c.0.s8 %v3577
      %v3579 = vlaneseq
      %v3580 = vshrl.u32 %v3579, 7
      %v3581 = vsub.s32 %v3578, %v3580
      %v3582 = vrot.slane %v3572, %v3581
      %v3584 = vunpack.c.l.s4 1966171168
      %v3585 = vunpack.c.0.s8 %v3584
      %v3586 = vlaneseq
      %v3587 = vshrl.u32 %v3586, 7
      %v3588 = vsub.s32 %v3585, %v3587
      %v3589 = vrot.slane %v3573, %v3588
      %v3591 = vunpack.c.l.s4 1966171168
      %v3592 = vunpack.c.0.s8 %v3591
      %v3593 = vlaneseq
      %v3594 = vshrl.u32 %v3593, 7
      %v3595 = vsub.s32 %v3592, %v3594
      %v3596 = vrot.slane %v3574, %v3595
      %v3598 = vunpack.c.l.s4 1966171168
      %v3599 = vunpack.c.0.s8 %v3598
      %v3600 = vlaneseq
      %v3601 = vshrl.u32 %v3600, 7
      %v3602 = vsub.s32 %v3599, %v3601
      %v3603 = vrot.slane %v3575, %v3602
      %v3604 = vcombine.low %v3582, %v3589
      %v3605 = vcombine.low %v3596, %v3603
      %v3607 = vunpack.c.l.s4 1966171168
      %v3608 = vunpack.c.0.s8 %v3607
      %v3609 = vlaneseq
      %v3610 = vshrl.u32 %v3609, 7
      %v3611 = vsub.s32 %v3608, %v3610
      %v3612 = vrot.slane %v3604, %v3611
      %v3614 = vunpack.c.l.s4 1966171168
      %v3615 = vunpack.c.0.s8 %v3614
      %v3616 = vlaneseq
      %v3617 = vshrl.u32 %v3616, 7
      %v3618 = vsub.s32 %v3615, %v3617
      %v3619 = vrot.slane %v3605, %v3618
      %v3620 = vcombine.low %v3612, %v3619
      %v3621 = vcombine.low %v3363, %v3364
      %v3622 = vcombine.low %v3365, %v3366
      %v3623 = vcombine.low %v3367, %v3368
      %v3624 = vcombine.low %v3369, %v3370
      %v3626 = vunpack.c.l.s4 1966171168
      %v3627 = vunpack.c.0.s8 %v3626
      %v3628 = vlaneseq
      %v3629 = vshrl.u32 %v3628, 7
      %v3630 = vsub.s32 %v3627, %v3629
      %v3631 = vrot.slane %v3621, %v3630
      %v3633 = vunpack.c.l.s4 1966171168
      %v3634 = vunpack.c.0.s8 %v3633
      %v3635 = vlaneseq
      %v3636 = vshrl.u32 %v3635, 7
      %v3637 = vsub.s32 %v3634, %v3636
      %v3638 = vrot.slane %v3622, %v3637
      %v3640 = vunpack.c.l.s4 1966171168
      %v3641 = vunpack.c.0.s8 %v3640
      %v3642 = vlaneseq
      %v3643 = vshrl.u32 %v3642, 7
      %v3644 = vsub.s32 %v3641, %v3643
      %v3645 = vrot.slane %v3623, %v3644
      %v3647 = vunpack.c.l.s4 1966171168
      %v3648 = vunpack.c.0.s8 %v3647
      %v3649 = vlaneseq
      %v3650 = vshrl.u32 %v3649, 7
      %v3651 = vsub.s32 %v3648, %v3650
      %v3652 = vrot.slane %v3624, %v3651
      %v3653 = vcombine.low %v3631, %v3638
      %v3654 = vcombine.low %v3645, %v3652
      %v3656 = vunpack.c.l.s4 1966171168
      %v3657 = vunpack.c.0.s8 %v3656
      %v3658 = vlaneseq
      %v3659 = vshrl.u32 %v3658, 7
      %v3660 = vsub.s32 %v3657, %v3659
      %v3661 = vrot.slane %v3653, %v3660
      %v3663 = vunpack.c.l.s4 1966171168
      %v3664 = vunpack.c.0.s8 %v3663
      %v3665 = vlaneseq
      %v3666 = vshrl.u32 %v3665, 7
      %v3667 = vsub.s32 %v3664, %v3666
      %v3668 = vrot.slane %v3654, %v3667
      %v3669 = vcombine.low %v3661, %v3668
      %v3670 = vcombine.low %v3371, %v3372
      %v3672 = vunpack.c.l.s4 1966171168
      %v3673 = vunpack.c.0.s8 %v3672
      %v3674 = vlaneseq
      %v3675 = vshrl.u32 %v3674, 7
      %v3676 = vsub.s32 %v3673, %v3675
      %v3677 = vrot.slane %v3670, %v3676
      %v3679 = vunpack.c.l.s4 1966171168
      %v3680 = vunpack.c.0.s8 %v3679
      %v3681 = vlaneseq
      %v3682 = vshrl.u32 %v3681, 7
      %v3683 = vsub.s32 %v3680, %v3682
      %v3684 = vrot.slane %v3677, %v3683
      %v3692 = vadd.f32 %v2983, %v3424
      %v3693 = vadd.f32 %v2984, %v3473
      %v3694 = vadd.f32 %v2985, %v3522
      %v3695 = vadd.f32 %v2986, %v3571
      %v3696 = vadd.f32 %v2987, %v3620
      %v3697 = vadd.f32 %v2988, %v3669
      %v3698 = vadd.f32 %v2989, %v3684
      %s3699 = scalar_lea.vmem [#allocation2], 400
      %v3700 = vld [vmem:[%s3699] ss:$8 sm:$0xf]
      %v3701 = vld [vmem:[%s3699] ss:$8 sm:$0xf0]
      %v3702 = vor.u32 %v3700, %v3701
      %s3703 = scalar_lea.vmem [#allocation2], 464
      %v3704 = vld [vmem:[%s3703] ss:$8 sm:$0xf]
      %v3705 = vld [vmem:[%s3703] ss:$8 sm:$0xf0]
      %v3706 = vor.u32 %v3704, %v3705
      %s3707 = scalar_lea.vmem [#allocation2], 528
      %v3708 = vld [vmem:[%s3707] ss:$8 sm:$0xf]
      %v3709 = vld [vmem:[%s3707] ss:$8 sm:$0xf0]
      %v3710 = vor.u32 %v3708, %v3709
      %s3711 = scalar_lea.vmem [#allocation2], 592
      %v3712 = vld [vmem:[%s3711] ss:$8 sm:$0xf]
      %v3713 = vld [vmem:[%s3711] ss:$8 sm:$0xf0]
      %v3714 = vor.u32 %v3712, %v3713
      %s3715 = scalar_lea.vmem [#allocation2], 656
      %v3716 = vld [vmem:[%s3715] ss:$8 sm:$0xf]
      %v3717 = vld [vmem:[%s3715] ss:$8 sm:$0xf0]
      %v3718 = vor.u32 %v3716, %v3717
      %s3719 = scalar_lea.vmem [#allocation2], 720
      %v3720 = vld [vmem:[%s3719] ss:$8 sm:$0xf]
      %v3721 = vld [vmem:[%s3719] ss:$8 sm:$0xf0]
      %v3722 = vor.u32 %v3720, %v3721
      %s3723 = scalar_lea.vmem [#allocation2], 784
      %v3724 = vld [vmem:[%s3723] ss:$8 sm:$0x3]
      %v3732 = vlaneseq
      %v3733 = vshrl.u32 %v3732, 7
      %v3734 = vsub.s32 0, %v3733
      %v3735 = vrot.slane %v3702, %v3734
      %v3736 = vlaneseq
      %v3737 = vshrl.u32 %v3736, 7
      %v3738 = vsub.s32 1, %v3737
      %v3739 = vrot.slane %v3702, %v3738
      %v3740 = vlaneseq
      %v3741 = vshrl.u32 %v3740, 7
      %v3742 = vsub.s32 2, %v3741
      %v3743 = vrot.slane %v3702, %v3742
      %v3744 = vlaneseq
      %v3745 = vshrl.u32 %v3744, 7
      %v3746 = vsub.s32 3, %v3745
      %v3747 = vrot.slane %v3702, %v3746
      %v3748 = vlaneseq
      %v3749 = vshrl.u32 %v3748, 7
      %v3750 = vsub.s32 4, %v3749
      %v3751 = vrot.slane %v3702, %v3750
      %v3752 = vlaneseq
      %v3753 = vshrl.u32 %v3752, 7
      %v3754 = vsub.s32 5, %v3753
      %v3755 = vrot.slane %v3702, %v3754
      %v3756 = vlaneseq
      %v3757 = vshrl.u32 %v3756, 7
      %v3758 = vsub.s32 6, %v3757
      %v3759 = vrot.slane %v3702, %v3758
      %v3760 = vlaneseq
      %v3761 = vshrl.u32 %v3760, 7
      %v3762 = vsub.s32 7, %v3761
      %v3763 = vrot.slane %v3702, %v3762
      %v3764 = vlaneseq
      %v3765 = vshrl.u32 %v3764, 7
      %v3766 = vsub.s32 0, %v3765
      %v3767 = vrot.slane %v3706, %v3766
      %v3768 = vlaneseq
      %v3769 = vshrl.u32 %v3768, 7
      %v3770 = vsub.s32 1, %v3769
      %v3771 = vrot.slane %v3706, %v3770
      %v3772 = vlaneseq
      %v3773 = vshrl.u32 %v3772, 7
      %v3774 = vsub.s32 2, %v3773
      %v3775 = vrot.slane %v3706, %v3774
      %v3776 = vlaneseq
      %v3777 = vshrl.u32 %v3776, 7
      %v3778 = vsub.s32 3, %v3777
      %v3779 = vrot.slane %v3706, %v3778
      %v3780 = vlaneseq
      %v3781 = vshrl.u32 %v3780, 7
      %v3782 = vsub.s32 4, %v3781
      %v3783 = vrot.slane %v3706, %v3782
      %v3784 = vlaneseq
      %v3785 = vshrl.u32 %v3784, 7
      %v3786 = vsub.s32 5, %v3785
      %v3787 = vrot.slane %v3706, %v3786
      %v3788 = vlaneseq
      %v3789 = vshrl.u32 %v3788, 7
      %v3790 = vsub.s32 6, %v3789
      %v3791 = vrot.slane %v3706, %v3790
      %v3792 = vlaneseq
      %v3793 = vshrl.u32 %v3792, 7
      %v3794 = vsub.s32 7, %v3793
      %v3795 = vrot.slane %v3706, %v3794
      %v3796 = vlaneseq
      %v3797 = vshrl.u32 %v3796, 7
      %v3798 = vsub.s32 0, %v3797
      %v3799 = vrot.slane %v3710, %v3798
      %v3800 = vlaneseq
      %v3801 = vshrl.u32 %v3800, 7
      %v3802 = vsub.s32 1, %v3801
      %v3803 = vrot.slane %v3710, %v3802
      %v3804 = vlaneseq
      %v3805 = vshrl.u32 %v3804, 7
      %v3806 = vsub.s32 2, %v3805
      %v3807 = vrot.slane %v3710, %v3806
      %v3808 = vlaneseq
      %v3809 = vshrl.u32 %v3808, 7
      %v3810 = vsub.s32 3, %v3809
      %v3811 = vrot.slane %v3710, %v3810
      %v3812 = vlaneseq
      %v3813 = vshrl.u32 %v3812, 7
      %v3814 = vsub.s32 4, %v3813
      %v3815 = vrot.slane %v3710, %v3814
      %v3816 = vlaneseq
      %v3817 = vshrl.u32 %v3816, 7
      %v3818 = vsub.s32 5, %v3817
      %v3819 = vrot.slane %v3710, %v3818
      %v3820 = vlaneseq
      %v3821 = vshrl.u32 %v3820, 7
      %v3822 = vsub.s32 6, %v3821
      %v3823 = vrot.slane %v3710, %v3822
      %v3824 = vlaneseq
      %v3825 = vshrl.u32 %v3824, 7
      %v3826 = vsub.s32 7, %v3825
      %v3827 = vrot.slane %v3710, %v3826
      %v3828 = vlaneseq
      %v3829 = vshrl.u32 %v3828, 7
      %v3830 = vsub.s32 0, %v3829
      %v3831 = vrot.slane %v3714, %v3830
      %v3832 = vlaneseq
      %v3833 = vshrl.u32 %v3832, 7
      %v3834 = vsub.s32 1, %v3833
      %v3835 = vrot.slane %v3714, %v3834
      %v3836 = vlaneseq
      %v3837 = vshrl.u32 %v3836, 7
      %v3838 = vsub.s32 2, %v3837
      %v3839 = vrot.slane %v3714, %v3838
      %v3840 = vlaneseq
      %v3841 = vshrl.u32 %v3840, 7
      %v3842 = vsub.s32 3, %v3841
      %v3843 = vrot.slane %v3714, %v3842
      %v3844 = vlaneseq
      %v3845 = vshrl.u32 %v3844, 7
      %v3846 = vsub.s32 4, %v3845
      %v3847 = vrot.slane %v3714, %v3846
      %v3848 = vlaneseq
      %v3849 = vshrl.u32 %v3848, 7
      %v3850 = vsub.s32 5, %v3849
      %v3851 = vrot.slane %v3714, %v3850
      %v3852 = vlaneseq
      %v3853 = vshrl.u32 %v3852, 7
      %v3854 = vsub.s32 6, %v3853
      %v3855 = vrot.slane %v3714, %v3854
      %v3856 = vlaneseq
      %v3857 = vshrl.u32 %v3856, 7
      %v3858 = vsub.s32 7, %v3857
      %v3859 = vrot.slane %v3714, %v3858
      %v3860 = vlaneseq
      %v3861 = vshrl.u32 %v3860, 7
      %v3862 = vsub.s32 0, %v3861
      %v3863 = vrot.slane %v3718, %v3862
      %v3864 = vlaneseq
      %v3865 = vshrl.u32 %v3864, 7
      %v3866 = vsub.s32 1, %v3865
      %v3867 = vrot.slane %v3718, %v3866
      %v3868 = vlaneseq
      %v3869 = vshrl.u32 %v3868, 7
      %v3870 = vsub.s32 2, %v3869
      %v3871 = vrot.slane %v3718, %v3870
      %v3872 = vlaneseq
      %v3873 = vshrl.u32 %v3872, 7
      %v3874 = vsub.s32 3, %v3873
      %v3875 = vrot.slane %v3718, %v3874
      %v3876 = vlaneseq
      %v3877 = vshrl.u32 %v3876, 7
      %v3878 = vsub.s32 4, %v3877
      %v3879 = vrot.slane %v3718, %v3878
      %v3880 = vlaneseq
      %v3881 = vshrl.u32 %v3880, 7
      %v3882 = vsub.s32 5, %v3881
      %v3883 = vrot.slane %v3718, %v3882
      %v3884 = vlaneseq
      %v3885 = vshrl.u32 %v3884, 7
      %v3886 = vsub.s32 6, %v3885
      %v3887 = vrot.slane %v3718, %v3886
      %v3888 = vlaneseq
      %v3889 = vshrl.u32 %v3888, 7
      %v3890 = vsub.s32 7, %v3889
      %v3891 = vrot.slane %v3718, %v3890
      %v3892 = vlaneseq
      %v3893 = vshrl.u32 %v3892, 7
      %v3894 = vsub.s32 0, %v3893
      %v3895 = vrot.slane %v3722, %v3894
      %v3896 = vlaneseq
      %v3897 = vshrl.u32 %v3896, 7
      %v3898 = vsub.s32 1, %v3897
      %v3899 = vrot.slane %v3722, %v3898
      %v3900 = vlaneseq
      %v3901 = vshrl.u32 %v3900, 7
      %v3902 = vsub.s32 2, %v3901
      %v3903 = vrot.slane %v3722, %v3902
      %v3904 = vlaneseq
      %v3905 = vshrl.u32 %v3904, 7
      %v3906 = vsub.s32 3, %v3905
      %v3907 = vrot.slane %v3722, %v3906
      %v3908 = vlaneseq
      %v3909 = vshrl.u32 %v3908, 7
      %v3910 = vsub.s32 4, %v3909
      %v3911 = vrot.slane %v3722, %v3910
      %v3912 = vlaneseq
      %v3913 = vshrl.u32 %v3912, 7
      %v3914 = vsub.s32 5, %v3913
      %v3915 = vrot.slane %v3722, %v3914
      %v3916 = vlaneseq
      %v3917 = vshrl.u32 %v3916, 7
      %v3918 = vsub.s32 6, %v3917
      %v3919 = vrot.slane %v3722, %v3918
      %v3920 = vlaneseq
      %v3921 = vshrl.u32 %v3920, 7
      %v3922 = vsub.s32 7, %v3921
      %v3923 = vrot.slane %v3722, %v3922
      %v3924 = vlaneseq
      %v3925 = vshrl.u32 %v3924, 7
      %v3926 = vsub.s32 0, %v3925
      %v3927 = vrot.slane %v3724, %v3926
      %v3928 = vlaneseq
      %v3929 = vshrl.u32 %v3928, 7
      %v3930 = vsub.s32 1, %v3929
      %v3931 = vrot.slane %v3724, %v3930
      %3932 = vrot.lane.b32.xlu0 %v3735, 51
      %v3933 = vpop.permute.xlu0 %3932
      %3934 = vrot.lane.b32.xlu0 %v3739, 51
      %v3935 = vpop.permute.xlu0 %3934
      %3936 = vrot.lane.b32.xlu0 %v3743, 51
      %v3937 = vpop.permute.xlu0 %3936
      %3938 = vrot.lane.b32.xlu0 %v3747, 51
      %v3939 = vpop.permute.xlu0 %3938
      %3940 = vrot.lane.b32.xlu0 %v3751, 51
      %v3941 = vpop.permute.xlu0 %3940
      %3942 = vrot.lane.b32.xlu0 %v3755, 51
      %v3943 = vpop.permute.xlu0 %3942
      %3944 = vrot.lane.b32.xlu0 %v3759, 51
      %v3945 = vpop.permute.xlu0 %3944
      %3946 = vrot.lane.b32.xlu0 %v3763, 51
      %v3947 = vpop.permute.xlu0 %3946
      %3948 = vrot.lane.b32.xlu0 %v3767, 51
      %v3949 = vpop.permute.xlu0 %3948
      %3950 = vrot.lane.b32.xlu0 %v3771, 51
      %v3951 = vpop.permute.xlu0 %3950
      %3952 = vrot.lane.b32.xlu0 %v3775, 51
      %v3953 = vpop.permute.xlu0 %3952
      %3954 = vrot.lane.b32.xlu0 %v3779, 51
      %v3955 = vpop.permute.xlu0 %3954
      %3956 = vrot.lane.b32.xlu0 %v3783, 51
      %v3957 = vpop.permute.xlu0 %3956
      %3958 = vrot.lane.b32.xlu0 %v3787, 51
      %v3959 = vpop.permute.xlu0 %3958
      %3960 = vrot.lane.b32.xlu0 %v3791, 51
      %v3961 = vpop.permute.xlu0 %3960
      %3962 = vrot.lane.b32.xlu0 %v3795, 51
      %v3963 = vpop.permute.xlu0 %3962
      %3964 = vrot.lane.b32.xlu0 %v3799, 51
      %v3965 = vpop.permute.xlu0 %3964
      %3966 = vrot.lane.b32.xlu0 %v3803, 51
      %v3967 = vpop.permute.xlu0 %3966
      %3968 = vrot.lane.b32.xlu0 %v3807, 51
      %v3969 = vpop.permute.xlu0 %3968
      %3970 = vrot.lane.b32.xlu0 %v3811, 51
      %v3971 = vpop.permute.xlu0 %3970
      %3972 = vrot.lane.b32.xlu0 %v3815, 51
      %v3973 = vpop.permute.xlu0 %3972
      %3974 = vrot.lane.b32.xlu0 %v3819, 51
      %v3975 = vpop.permute.xlu0 %3974
      %3976 = vrot.lane.b32.xlu0 %v3823, 51
      %v3977 = vpop.permute.xlu0 %3976
      %3978 = vrot.lane.b32.xlu0 %v3827, 51
      %v3979 = vpop.permute.xlu0 %3978
      %3980 = vrot.lane.b32.xlu0 %v3831, 51
      %v3981 = vpop.permute.xlu0 %3980
      %3982 = vrot.lane.b32.xlu0 %v3835, 51
      %v3983 = vpop.permute.xlu0 %3982
      %3984 = vrot.lane.b32.xlu0 %v3839, 51
      %v3985 = vpop.permute.xlu0 %3984
      %3986 = vrot.lane.b32.xlu0 %v3843, 51
      %v3987 = vpop.permute.xlu0 %3986
      %3988 = vrot.lane.b32.xlu0 %v3847, 51
      %v3989 = vpop.permute.xlu0 %3988
      %3990 = vrot.lane.b32.xlu0 %v3851, 51
      %v3991 = vpop.permute.xlu0 %3990
      %3992 = vrot.lane.b32.xlu0 %v3855, 51
      %v3993 = vpop.permute.xlu0 %3992
      %3994 = vrot.lane.b32.xlu0 %v3859, 51
      %v3995 = vpop.permute.xlu0 %3994
      %3996 = vrot.lane.b32.xlu0 %v3863, 51
      %v3997 = vpop.permute.xlu0 %3996
      %3998 = vrot.lane.b32.xlu0 %v3867, 51
      %v3999 = vpop.permute.xlu0 %3998
      %4000 = vrot.lane.b32.xlu0 %v3871, 51
      %v4001 = vpop.permute.xlu0 %4000
      %4002 = vrot.lane.b32.xlu0 %v3875, 51
      %v4003 = vpop.permute.xlu0 %4002
      %4004 = vrot.lane.b32.xlu0 %v3879, 51
      %v4005 = vpop.permute.xlu0 %4004
      %4006 = vrot.lane.b32.xlu0 %v3883, 51
      %v4007 = vpop.permute.xlu0 %4006
      %4008 = vrot.lane.b32.xlu0 %v3887, 51
      %v4009 = vpop.permute.xlu0 %4008
      %4010 = vrot.lane.b32.xlu0 %v3891, 51
      %v4011 = vpop.permute.xlu0 %4010
      %4012 = vrot.lane.b32.xlu0 %v3895, 51
      %v4013 = vpop.permute.xlu0 %4012
      %4014 = vrot.lane.b32.xlu0 %v3899, 51
      %v4015 = vpop.permute.xlu0 %4014
      %4016 = vrot.lane.b32.xlu0 %v3903, 51
      %v4017 = vpop.permute.xlu0 %4016
      %4018 = vrot.lane.b32.xlu0 %v3907, 51
      %v4019 = vpop.permute.xlu0 %4018
      %4020 = vrot.lane.b32.xlu0 %v3911, 51
      %v4021 = vpop.permute.xlu0 %4020
      %4022 = vrot.lane.b32.xlu0 %v3915, 51
      %v4023 = vpop.permute.xlu0 %4022
      %4024 = vrot.lane.b32.xlu0 %v3919, 51
      %v4025 = vpop.permute.xlu0 %4024
      %4026 = vrot.lane.b32.xlu0 %v3923, 51
      %v4027 = vpop.permute.xlu0 %4026
      %4028 = vrot.lane.b32.xlu0 %v3927, 51
      %v4029 = vpop.permute.xlu0 %4028
      %4030 = vrot.lane.b32.xlu0 %v3931, 51
      %v4031 = vpop.permute.xlu0 %4030
      %vm4032 = vcmask 416768
      %v4033 = vsel %vm4032, %v3933, %v3935
      %v4034 = vsel %vm4032, %v3935, %v3937
      %v4035 = vsel %vm4032, %v3937, %v3939
      %v4036 = vsel %vm4032, %v3939, %v3941
      %v4037 = vsel %vm4032, %v3941, %v3943
      %v4038 = vsel %vm4032, %v3943, %v3945
      %v4039 = vsel %vm4032, %v3945, %v3947
      %v4040 = vsel %vm4032, %v3947, %v3949
      %v4041 = vsel %vm4032, %v3949, %v3951
      %v4042 = vsel %vm4032, %v3951, %v3953
      %v4043 = vsel %vm4032, %v3953, %v3955
      %v4044 = vsel %vm4032, %v3955, %v3957
      %v4045 = vsel %vm4032, %v3957, %v3959
      %v4046 = vsel %vm4032, %v3959, %v3961
      %v4047 = vsel %vm4032, %v3961, %v3963
      %v4048 = vsel %vm4032, %v3963, %v3965
      %v4049 = vsel %vm4032, %v3965, %v3967
      %v4050 = vsel %vm4032, %v3967, %v3969
      %v4051 = vsel %vm4032, %v3969, %v3971
      %v4052 = vsel %vm4032, %v3971, %v3973
      %v4053 = vsel %vm4032, %v3973, %v3975
      %v4054 = vsel %vm4032, %v3975, %v3977
      %v4055 = vsel %vm4032, %v3977, %v3979
      %v4056 = vsel %vm4032, %v3979, %v3981
      %v4057 = vsel %vm4032, %v3981, %v3983
      %v4058 = vsel %vm4032, %v3983, %v3985
      %v4059 = vsel %vm4032, %v3985, %v3987
      %v4060 = vsel %vm4032, %v3987, %v3989
      %v4061 = vsel %vm4032, %v3989, %v3991
      %v4062 = vsel %vm4032, %v3991, %v3993
      %v4063 = vsel %vm4032, %v3993, %v3995
      %v4064 = vsel %vm4032, %v3995, %v3997
      %v4065 = vsel %vm4032, %v3997, %v3999
      %v4066 = vsel %vm4032, %v3999, %v4001
      %v4067 = vsel %vm4032, %v4001, %v4003
      %v4068 = vsel %vm4032, %v4003, %v4005
      %v4069 = vsel %vm4032, %v4005, %v4007
      %v4070 = vsel %vm4032, %v4007, %v4009
      %v4071 = vsel %vm4032, %v4009, %v4011
      %v4072 = vsel %vm4032, %v4011, %v4013
      %v4073 = vsel %vm4032, %v4013, %v4015
      %v4074 = vsel %vm4032, %v4015, %v4017
      %v4075 = vsel %vm4032, %v4017, %v4019
      %v4076 = vsel %vm4032, %v4019, %v4021
      %v4077 = vsel %vm4032, %v4021, %v4023
      %v4078 = vsel %vm4032, %v4023, %v4025
      %v4079 = vsel %vm4032, %v4025, %v4027
      %v4080 = vsel %vm4032, %v4027, %v4029
      %v4081 = vsel %vm4032, %v4029, %v4031
      %v4083 = vsel %vm4032, 0.0, %v3933
      %v4085 = vcombine.low %v4083, %v4033
      %v4086 = vcombine.low %v4034, %v4035
      %v4087 = vcombine.low %v4036, %v4037
      %v4088 = vcombine.low %v4038, %v4039
      %v4090 = vunpack.c.l.s4 1966171168
      %v4091 = vunpack.c.0.s8 %v4090
      %v4092 = vlaneseq
      %v4093 = vshrl.u32 %v4092, 7
      %v4094 = vsub.s32 %v4091, %v4093
      %v4095 = vrot.slane %v4085, %v4094
      %v4097 = vunpack.c.l.s4 1966171168
      %v4098 = vunpack.c.0.s8 %v4097
      %v4099 = vlaneseq
      %v4100 = vshrl.u32 %v4099, 7
      %v4101 = vsub.s32 %v4098, %v4100
      %v4102 = vrot.slane %v4086, %v4101
      %v4104 = vunpack.c.l.s4 1966171168
      %v4105 = vunpack.c.0.s8 %v4104
      %v4106 = vlaneseq
      %v4107 = vshrl.u32 %v4106, 7
      %v4108 = vsub.s32 %v4105, %v4107
      %v4109 = vrot.slane %v4087, %v4108
      %v4111 = vunpack.c.l.s4 1966171168
      %v4112 = vunpack.c.0.s8 %v4111
      %v4113 = vlaneseq
      %v4114 = vshrl.u32 %v4113, 7
      %v4115 = vsub.s32 %v4112, %v4114
      %v4116 = vrot.slane %v4088, %v4115
      %v4117 = vcombine.low %v4095, %v4102
      %v4118 = vcombine.low %v4109, %v4116
      %v4120 = vunpack.c.l.s4 1966171168
      %v4121 = vunpack.c.0.s8 %v4120
      %v4122 = vlaneseq
      %v4123 = vshrl.u32 %v4122, 7
      %v4124 = vsub.s32 %v4121, %v4123
      %v4125 = vrot.slane %v4117, %v4124
      %v4127 = vunpack.c.l.s4 1966171168
      %v4128 = vunpack.c.0.s8 %v4127
      %v4129 = vlaneseq
      %v4130 = vshrl.u32 %v4129, 7
      %v4131 = vsub.s32 %v4128, %v4130
      %v4132 = vrot.slane %v4118, %v4131
      %v4133 = vcombine.low %v4125, %v4132
      %v4134 = vcombine.low %v4040, %v4041
      %v4135 = vcombine.low %v4042, %v4043
      %v4136 = vcombine.low %v4044, %v4045
      %v4137 = vcombine.low %v4046, %v4047
      %v4139 = vunpack.c.l.s4 1966171168
      %v4140 = vunpack.c.0.s8 %v4139
      %v4141 = vlaneseq
      %v4142 = vshrl.u32 %v4141, 7
      %v4143 = vsub.s32 %v4140, %v4142
      %v4144 = vrot.slane %v4134, %v4143
      %v4146 = vunpack.c.l.s4 1966171168
      %v4147 = vunpack.c.0.s8 %v4146
      %v4148 = vlaneseq
      %v4149 = vshrl.u32 %v4148, 7
      %v4150 = vsub.s32 %v4147, %v4149
      %v4151 = vrot.slane %v4135, %v4150
      %v4153 = vunpack.c.l.s4 1966171168
      %v4154 = vunpack.c.0.s8 %v4153
      %v4155 = vlaneseq
      %v4156 = vshrl.u32 %v4155, 7
      %v4157 = vsub.s32 %v4154, %v4156
      %v4158 = vrot.slane %v4136, %v4157
      %v4160 = vunpack.c.l.s4 1966171168
      %v4161 = vunpack.c.0.s8 %v4160
      %v4162 = vlaneseq
      %v4163 = vshrl.u32 %v4162, 7
      %v4164 = vsub.s32 %v4161, %v4163
      %v4165 = vrot.slane %v4137, %v4164
      %v4166 = vcombine.low %v4144, %v4151
      %v4167 = vcombine.low %v4158, %v4165
      %v4169 = vunpack.c.l.s4 1966171168
      %v4170 = vunpack.c.0.s8 %v4169
      %v4171 = vlaneseq
      %v4172 = vshrl.u32 %v4171, 7
      %v4173 = vsub.s32 %v4170, %v4172
      %v4174 = vrot.slane %v4166, %v4173
      %v4176 = vunpack.c.l.s4 1966171168
      %v4177 = vunpack.c.0.s8 %v4176
      %v4178 = vlaneseq
      %v4179 = vshrl.u32 %v4178, 7
      %v4180 = vsub.s32 %v4177, %v4179
      %v4181 = vrot.slane %v4167, %v4180
      %v4182 = vcombine.low %v4174, %v4181
      %v4183 = vcombine.low %v4048, %v4049
      %v4184 = vcombine.low %v4050, %v4051
      %v4185 = vcombine.low %v4052, %v4053
      %v4186 = vcombine.low %v4054, %v4055
      %v4188 = vunpack.c.l.s4 1966171168
      %v4189 = vunpack.c.0.s8 %v4188
      %v4190 = vlaneseq
      %v4191 = vshrl.u32 %v4190, 7
      %v4192 = vsub.s32 %v4189, %v4191
      %v4193 = vrot.slane %v4183, %v4192
      %v4195 = vunpack.c.l.s4 1966171168
      %v4196 = vunpack.c.0.s8 %v4195
      %v4197 = vlaneseq
      %v4198 = vshrl.u32 %v4197, 7
      %v4199 = vsub.s32 %v4196, %v4198
      %v4200 = vrot.slane %v4184, %v4199
      %v4202 = vunpack.c.l.s4 1966171168
      %v4203 = vunpack.c.0.s8 %v4202
      %v4204 = vlaneseq
      %v4205 = vshrl.u32 %v4204, 7
      %v4206 = vsub.s32 %v4203, %v4205
      %v4207 = vrot.slane %v4185, %v4206
      %v4209 = vunpack.c.l.s4 1966171168
      %v4210 = vunpack.c.0.s8 %v4209
      %v4211 = vlaneseq
      %v4212 = vshrl.u32 %v4211, 7
      %v4213 = vsub.s32 %v4210, %v4212
      %v4214 = vrot.slane %v4186, %v4213
      %v4215 = vcombine.low %v4193, %v4200
      %v4216 = vcombine.low %v4207, %v4214
      %v4218 = vunpack.c.l.s4 1966171168
      %v4219 = vunpack.c.0.s8 %v4218
      %v4220 = vlaneseq
      %v4221 = vshrl.u32 %v4220, 7
      %v4222 = vsub.s32 %v4219, %v4221
      %v4223 = vrot.slane %v4215, %v4222
      %v4225 = vunpack.c.l.s4 1966171168
      %v4226 = vunpack.c.0.s8 %v4225
      %v4227 = vlaneseq
      %v4228 = vshrl.u32 %v4227, 7
      %v4229 = vsub.s32 %v4226, %v4228
      %v4230 = vrot.slane %v4216, %v4229
      %v4231 = vcombine.low %v4223, %v4230
      %v4232 = vcombine.low %v4056, %v4057
      %v4233 = vcombine.low %v4058, %v4059
      %v4234 = vcombine.low %v4060, %v4061
      %v4235 = vcombine.low %v4062, %v4063
      %v4237 = vunpack.c.l.s4 1966171168
      %v4238 = vunpack.c.0.s8 %v4237
      %v4239 = vlaneseq
      %v4240 = vshrl.u32 %v4239, 7
      %v4241 = vsub.s32 %v4238, %v4240
      %v4242 = vrot.slane %v4232, %v4241
      %v4244 = vunpack.c.l.s4 1966171168
      %v4245 = vunpack.c.0.s8 %v4244
      %v4246 = vlaneseq
      %v4247 = vshrl.u32 %v4246, 7
      %v4248 = vsub.s32 %v4245, %v4247
      %v4249 = vrot.slane %v4233, %v4248
      %v4251 = vunpack.c.l.s4 1966171168
      %v4252 = vunpack.c.0.s8 %v4251
      %v4253 = vlaneseq
      %v4254 = vshrl.u32 %v4253, 7
      %v4255 = vsub.s32 %v4252, %v4254
      %v4256 = vrot.slane %v4234, %v4255
      %v4258 = vunpack.c.l.s4 1966171168
      %v4259 = vunpack.c.0.s8 %v4258
      %v4260 = vlaneseq
      %v4261 = vshrl.u32 %v4260, 7
      %v4262 = vsub.s32 %v4259, %v4261
      %v4263 = vrot.slane %v4235, %v4262
      %v4264 = vcombine.low %v4242, %v4249
      %v4265 = vcombine.low %v4256, %v4263
      %v4267 = vunpack.c.l.s4 1966171168
      %v4268 = vunpack.c.0.s8 %v4267
      %v4269 = vlaneseq
      %v4270 = vshrl.u32 %v4269, 7
      %v4271 = vsub.s32 %v4268, %v4270
      %v4272 = vrot.slane %v4264, %v4271
      %v4274 = vunpack.c.l.s4 1966171168
      %v4275 = vunpack.c.0.s8 %v4274
      %v4276 = vlaneseq
      %v4277 = vshrl.u32 %v4276, 7
      %v4278 = vsub.s32 %v4275, %v4277
      %v4279 = vrot.slane %v4265, %v4278
      %v4280 = vcombine.low %v4272, %v4279
      %v4281 = vcombine.low %v4064, %v4065
      %v4282 = vcombine.low %v4066, %v4067
      %v4283 = vcombine.low %v4068, %v4069
      %v4284 = vcombine.low %v4070, %v4071
      %v4286 = vunpack.c.l.s4 1966171168
      %v4287 = vunpack.c.0.s8 %v4286
      %v4288 = vlaneseq
      %v4289 = vshrl.u32 %v4288, 7
      %v4290 = vsub.s32 %v4287, %v4289
      %v4291 = vrot.slane %v4281, %v4290
      %v4293 = vunpack.c.l.s4 1966171168
      %v4294 = vunpack.c.0.s8 %v4293
      %v4295 = vlaneseq
      %v4296 = vshrl.u32 %v4295, 7
      %v4297 = vsub.s32 %v4294, %v4296
      %v4298 = vrot.slane %v4282, %v4297
      %v4300 = vunpack.c.l.s4 1966171168
      %v4301 = vunpack.c.0.s8 %v4300
      %v4302 = vlaneseq
      %v4303 = vshrl.u32 %v4302, 7
      %v4304 = vsub.s32 %v4301, %v4303
      %v4305 = vrot.slane %v4283, %v4304
      %v4307 = vunpack.c.l.s4 1966171168
      %v4308 = vunpack.c.0.s8 %v4307
      %v4309 = vlaneseq
      %v4310 = vshrl.u32 %v4309, 7
      %v4311 = vsub.s32 %v4308, %v4310
      %v4312 = vrot.slane %v4284, %v4311
      %v4313 = vcombine.low %v4291, %v4298
      %v4314 = vcombine.low %v4305, %v4312
      %v4316 = vunpack.c.l.s4 1966171168
      %v4317 = vunpack.c.0.s8 %v4316
      %v4318 = vlaneseq
      %v4319 = vshrl.u32 %v4318, 7
      %v4320 = vsub.s32 %v4317, %v4319
      %v4321 = vrot.slane %v4313, %v4320
      %v4323 = vunpack.c.l.s4 1966171168
      %v4324 = vunpack.c.0.s8 %v4323
      %v4325 = vlaneseq
      %v4326 = vshrl.u32 %v4325, 7
      %v4327 = vsub.s32 %v4324, %v4326
      %v4328 = vrot.slane %v4314, %v4327
      %v4329 = vcombine.low %v4321, %v4328
      %v4330 = vcombine.low %v4072, %v4073
      %v4331 = vcombine.low %v4074, %v4075
      %v4332 = vcombine.low %v4076, %v4077
      %v4333 = vcombine.low %v4078, %v4079
      %v4335 = vunpack.c.l.s4 1966171168
      %v4336 = vunpack.c.0.s8 %v4335
      %v4337 = vlaneseq
      %v4338 = vshrl.u32 %v4337, 7
      %v4339 = vsub.s32 %v4336, %v4338
      %v4340 = vrot.slane %v4330, %v4339
      %v4342 = vunpack.c.l.s4 1966171168
      %v4343 = vunpack.c.0.s8 %v4342
      %v4344 = vlaneseq
      %v4345 = vshrl.u32 %v4344, 7
      %v4346 = vsub.s32 %v4343, %v4345
      %v4347 = vrot.slane %v4331, %v4346
      %v4349 = vunpack.c.l.s4 1966171168
      %v4350 = vunpack.c.0.s8 %v4349
      %v4351 = vlaneseq
      %v4352 = vshrl.u32 %v4351, 7
      %v4353 = vsub.s32 %v4350, %v4352
      %v4354 = vrot.slane %v4332, %v4353
      %v4356 = vunpack.c.l.s4 1966171168
      %v4357 = vunpack.c.0.s8 %v4356
      %v4358 = vlaneseq
      %v4359 = vshrl.u32 %v4358, 7
      %v4360 = vsub.s32 %v4357, %v4359
      %v4361 = vrot.slane %v4333, %v4360
      %v4362 = vcombine.low %v4340, %v4347
      %v4363 = vcombine.low %v4354, %v4361
      %v4365 = vunpack.c.l.s4 1966171168
      %v4366 = vunpack.c.0.s8 %v4365
      %v4367 = vlaneseq
      %v4368 = vshrl.u32 %v4367, 7
      %v4369 = vsub.s32 %v4366, %v4368
      %v4370 = vrot.slane %v4362, %v4369
      %v4372 = vunpack.c.l.s4 1966171168
      %v4373 = vunpack.c.0.s8 %v4372
      %v4374 = vlaneseq
      %v4375 = vshrl.u32 %v4374, 7
      %v4376 = vsub.s32 %v4373, %v4375
      %v4377 = vrot.slane %v4363, %v4376
      %v4378 = vcombine.low %v4370, %v4377
      %v4379 = vcombine.low %v4080, %v4081
      %v4381 = vunpack.c.l.s4 1966171168
      %v4382 = vunpack.c.0.s8 %v4381
      %v4383 = vlaneseq
      %v4384 = vshrl.u32 %v4383, 7
      %v4385 = vsub.s32 %v4382, %v4384
      %v4386 = vrot.slane %v4379, %v4385
      %v4388 = vunpack.c.l.s4 1966171168
      %v4389 = vunpack.c.0.s8 %v4388
      %v4390 = vlaneseq
      %v4391 = vshrl.u32 %v4390, 7
      %v4392 = vsub.s32 %v4389, %v4391
      %v4393 = vrot.slane %v4386, %v4392
      %v4401 = vadd.f32 %v3692, %v4133
      %v4402 = vadd.f32 %v3693, %v4182
      %v4403 = vadd.f32 %v3694, %v4231
      %v4404 = vadd.f32 %v3695, %v4280
      %v4405 = vadd.f32 %v3696, %v4329
      %v4406 = vadd.f32 %v3697, %v4378
      %v4407 = vadd.f32 %v3698, %v4393
      %4409 = vset.pattern.permute.xlu0 0
      %4410 = vperm.xlu0 %4409, %v2255
      %v4411 = vpop.permute.xlu0 %4410
      %v4413 = vlaneseq
      %v4414 = vshrl.u32 %v4413, 7
      %v4415 = vsub.s32 0, %v4414
      %v4416 = vrot.slane %v4411, %v4415
      %v4417 = vadd.f32 %v4401, %v4416
      %v4418 = vadd.f32 %v4402, %v4416
      %v4419 = vadd.f32 %v4403, %v4416
      %v4420 = vadd.f32 %v4404, %v4416
      %v4421 = vadd.f32 %v4405, %v4416
      %v4422 = vadd.f32 %v4406, %v4416
      %v4423 = vadd.f32 %v4407, %v4416
      %4424 = vst [vmem:[%s170] sm:$0xff] %v4417
      %4425 = vst [vmem:[%s170 + $0x8] sm:$0xff] %v4418
      %4426 = vst [vmem:[%s170 + $0x10] sm:$0xff] %v4419
      %4427 = vst [vmem:[%s170 + $0x18] sm:$0xff] %v4420
      %4428 = vst [vmem:[%s170 + $0x20] sm:$0xff] %v4421
      %4429 = vst [vmem:[%s170 + $0x28] sm:$0xff] %v4422
      %v4430 = vlaneseq
      %vm4431 = vcmp.ge.s32.totalorder %v4430, 0
      %vm4432 = vcmp.lt.s32.totalorder %v4430, 256
      %vm4433 = vmand %vm4431, %vm4432
      %4434 = vst.msk [vmem:[%s170 + $0x30] sm:$0x3] %vm4433, %v4423
      %s4435 = scalar_lea.vmem [#allocation2], 1
      %v4436 = vld [vmem:[%s4435] ss:$8 sm:$0xf]
      %v4437 = vld [vmem:[%s4435] ss:$8 sm:$0xf0]
      %v4438 = vor.u32 %v4436, %v4437
      %s4439 = scalar_lea.vmem [#allocation2], 65
      %v4440 = vld [vmem:[%s4439] ss:$8 sm:$0xf]
      %v4441 = vld [vmem:[%s4439] ss:$8 sm:$0xf0]
      %v4442 = vor.u32 %v4440, %v4441
      %s4443 = scalar_lea.vmem [#allocation2], 129
      %v4444 = vld [vmem:[%s4443] ss:$8 sm:$0xf]
      %v4445 = vld [vmem:[%s4443] ss:$8 sm:$0xf0]
      %v4446 = vor.u32 %v4444, %v4445
      %s4447 = scalar_lea.vmem [#allocation2], 193
      %v4448 = vld [vmem:[%s4447] ss:$8 sm:$0xf]
      %v4449 = vld [vmem:[%s4447] ss:$8 sm:$0xf0]
      %v4450 = vor.u32 %v4448, %v4449
      %s4451 = scalar_lea.vmem [#allocation2], 257
      %v4452 = vld [vmem:[%s4451] ss:$8 sm:$0xf]
      %v4453 = vld [vmem:[%s4451] ss:$8 sm:$0xf0]
      %v4454 = vor.u32 %v4452, %v4453
      %s4455 = scalar_lea.vmem [#allocation2], 321
      %v4456 = vld [vmem:[%s4455] ss:$8 sm:$0xf]
      %v4457 = vld [vmem:[%s4455] ss:$8 sm:$0xf0]
      %v4458 = vor.u32 %v4456, %v4457
      %s4459 = scalar_lea.vmem [#allocation2], 385
      %v4460 = vld [vmem:[%s4459] ss:$8 sm:$0x3]
      %s4461 = scalar_lea.vmem [#allocation2], 7
      %v4462 = vld [vmem:[%s4461] ss:$8 sm:$0xf]
      %v4463 = vld [vmem:[%s4461] ss:$8 sm:$0xf0]
      %v4464 = vor.u32 %v4462, %v4463
      %s4465 = scalar_lea.vmem [#allocation2], 71
      %v4466 = vld [vmem:[%s4465] ss:$8 sm:$0xf]
      %v4467 = vld [vmem:[%s4465] ss:$8 sm:$0xf0]
      %v4468 = vor.u32 %v4466, %v4467
      %s4469 = scalar_lea.vmem [#allocation2], 135
      %v4470 = vld [vmem:[%s4469] ss:$8 sm:$0xf]
      %v4471 = vld [vmem:[%s4469] ss:$8 sm:$0xf0]
      %v4472 = vor.u32 %v4470, %v4471
      %s4473 = scalar_lea.vmem [#allocation2], 199
      %v4474 = vld [vmem:[%s4473] ss:$8 sm:$0xf]
      %v4475 = vld [vmem:[%s4473] ss:$8 sm:$0xf0]
      %v4476 = vor.u32 %v4474, %v4475
      %s4477 = scalar_lea.vmem [#allocation2], 263
      %v4478 = vld [vmem:[%s4477] ss:$8 sm:$0xf]
      %v4479 = vld [vmem:[%s4477] ss:$8 sm:$0xf0]
      %v4480 = vor.u32 %v4478, %v4479
      %s4481 = scalar_lea.vmem [#allocation2], 327
      %v4482 = vld [vmem:[%s4481] ss:$8 sm:$0xf]
      %v4483 = vld [vmem:[%s4481] ss:$8 sm:$0xf0]
      %v4484 = vor.u32 %v4482, %v4483
      %s4485 = scalar_lea.vmem [#allocation2], 391
      %v4486 = vld [vmem:[%s4485] ss:$8 sm:$0x3]
      %v4494 = vlaneseq
      %v4495 = vshrl.u32 %v4494, 7
      %v4496 = vsub.s32 0, %v4495
      %v4497 = vrot.slane %v4464, %v4496
      %v4498 = vlaneseq
      %v4499 = vshrl.u32 %v4498, 7
      %v4500 = vsub.s32 1, %v4499
      %v4501 = vrot.slane %v4464, %v4500
      %v4502 = vlaneseq
      %v4503 = vshrl.u32 %v4502, 7
      %v4504 = vsub.s32 2, %v4503
      %v4505 = vrot.slane %v4464, %v4504
      %v4506 = vlaneseq
      %v4507 = vshrl.u32 %v4506, 7
      %v4508 = vsub.s32 3, %v4507
      %v4509 = vrot.slane %v4464, %v4508
      %v4510 = vlaneseq
      %v4511 = vshrl.u32 %v4510, 7
      %v4512 = vsub.s32 4, %v4511
      %v4513 = vrot.slane %v4464, %v4512
      %v4514 = vlaneseq
      %v4515 = vshrl.u32 %v4514, 7
      %v4516 = vsub.s32 5, %v4515
      %v4517 = vrot.slane %v4464, %v4516
      %v4518 = vlaneseq
      %v4519 = vshrl.u32 %v4518, 7
      %v4520 = vsub.s32 6, %v4519
      %v4521 = vrot.slane %v4464, %v4520
      %v4522 = vlaneseq
      %v4523 = vshrl.u32 %v4522, 7
      %v4524 = vsub.s32 7, %v4523
      %v4525 = vrot.slane %v4464, %v4524
      %v4526 = vlaneseq
      %v4527 = vshrl.u32 %v4526, 7
      %v4528 = vsub.s32 0, %v4527
      %v4529 = vrot.slane %v4468, %v4528
      %v4530 = vlaneseq
      %v4531 = vshrl.u32 %v4530, 7
      %v4532 = vsub.s32 1, %v4531
      %v4533 = vrot.slane %v4468, %v4532
      %v4534 = vlaneseq
      %v4535 = vshrl.u32 %v4534, 7
      %v4536 = vsub.s32 2, %v4535
      %v4537 = vrot.slane %v4468, %v4536
      %v4538 = vlaneseq
      %v4539 = vshrl.u32 %v4538, 7
      %v4540 = vsub.s32 3, %v4539
      %v4541 = vrot.slane %v4468, %v4540
      %v4542 = vlaneseq
      %v4543 = vshrl.u32 %v4542, 7
      %v4544 = vsub.s32 4, %v4543
      %v4545 = vrot.slane %v4468, %v4544
      %v4546 = vlaneseq
      %v4547 = vshrl.u32 %v4546, 7
      %v4548 = vsub.s32 5, %v4547
      %v4549 = vrot.slane %v4468, %v4548
      %v4550 = vlaneseq
      %v4551 = vshrl.u32 %v4550, 7
      %v4552 = vsub.s32 6, %v4551
      %v4553 = vrot.slane %v4468, %v4552
      %v4554 = vlaneseq
      %v4555 = vshrl.u32 %v4554, 7
      %v4556 = vsub.s32 7, %v4555
      %v4557 = vrot.slane %v4468, %v4556
      %v4558 = vlaneseq
      %v4559 = vshrl.u32 %v4558, 7
      %v4560 = vsub.s32 0, %v4559
      %v4561 = vrot.slane %v4472, %v4560
      %v4562 = vlaneseq
      %v4563 = vshrl.u32 %v4562, 7
      %v4564 = vsub.s32 1, %v4563
      %v4565 = vrot.slane %v4472, %v4564
      %v4566 = vlaneseq
      %v4567 = vshrl.u32 %v4566, 7
      %v4568 = vsub.s32 2, %v4567
      %v4569 = vrot.slane %v4472, %v4568
      %v4570 = vlaneseq
      %v4571 = vshrl.u32 %v4570, 7
      %v4572 = vsub.s32 3, %v4571
      %v4573 = vrot.slane %v4472, %v4572
      %v4574 = vlaneseq
      %v4575 = vshrl.u32 %v4574, 7
      %v4576 = vsub.s32 4, %v4575
      %v4577 = vrot.slane %v4472, %v4576
      %v4578 = vlaneseq
      %v4579 = vshrl.u32 %v4578, 7
      %v4580 = vsub.s32 5, %v4579
      %v4581 = vrot.slane %v4472, %v4580
      %v4582 = vlaneseq
      %v4583 = vshrl.u32 %v4582, 7
      %v4584 = vsub.s32 6, %v4583
      %v4585 = vrot.slane %v4472, %v4584
      %v4586 = vlaneseq
      %v4587 = vshrl.u32 %v4586, 7
      %v4588 = vsub.s32 7, %v4587
      %v4589 = vrot.slane %v4472, %v4588
      %v4590 = vlaneseq
      %v4591 = vshrl.u32 %v4590, 7
      %v4592 = vsub.s32 0, %v4591
      %v4593 = vrot.slane %v4476, %v4592
      %v4594 = vlaneseq
      %v4595 = vshrl.u32 %v4594, 7
      %v4596 = vsub.s32 1, %v4595
      %v4597 = vrot.slane %v4476, %v4596
      %v4598 = vlaneseq
      %v4599 = vshrl.u32 %v4598, 7
      %v4600 = vsub.s32 2, %v4599
      %v4601 = vrot.slane %v4476, %v4600
      %v4602 = vlaneseq
      %v4603 = vshrl.u32 %v4602, 7
      %v4604 = vsub.s32 3, %v4603
      %v4605 = vrot.slane %v4476, %v4604
      %v4606 = vlaneseq
      %v4607 = vshrl.u32 %v4606, 7
      %v4608 = vsub.s32 4, %v4607
      %v4609 = vrot.slane %v4476, %v4608
      %v4610 = vlaneseq
      %v4611 = vshrl.u32 %v4610, 7
      %v4612 = vsub.s32 5, %v4611
      %v4613 = vrot.slane %v4476, %v4612
      %v4614 = vlaneseq
      %v4615 = vshrl.u32 %v4614, 7
      %v4616 = vsub.s32 6, %v4615
      %v4617 = vrot.slane %v4476, %v4616
      %v4618 = vlaneseq
      %v4619 = vshrl.u32 %v4618, 7
      %v4620 = vsub.s32 7, %v4619
      %v4621 = vrot.slane %v4476, %v4620
      %v4622 = vlaneseq
      %v4623 = vshrl.u32 %v4622, 7
      %v4624 = vsub.s32 0, %v4623
      %v4625 = vrot.slane %v4480, %v4624
      %v4626 = vlaneseq
      %v4627 = vshrl.u32 %v4626, 7
      %v4628 = vsub.s32 1, %v4627
      %v4629 = vrot.slane %v4480, %v4628
      %v4630 = vlaneseq
      %v4631 = vshrl.u32 %v4630, 7
      %v4632 = vsub.s32 2, %v4631
      %v4633 = vrot.slane %v4480, %v4632
      %v4634 = vlaneseq
      %v4635 = vshrl.u32 %v4634, 7
      %v4636 = vsub.s32 3, %v4635
      %v4637 = vrot.slane %v4480, %v4636
      %v4638 = vlaneseq
      %v4639 = vshrl.u32 %v4638, 7
      %v4640 = vsub.s32 4, %v4639
      %v4641 = vrot.slane %v4480, %v4640
      %v4642 = vlaneseq
      %v4643 = vshrl.u32 %v4642, 7
      %v4644 = vsub.s32 5, %v4643
      %v4645 = vrot.slane %v4480, %v4644
      %v4646 = vlaneseq
      %v4647 = vshrl.u32 %v4646, 7
      %v4648 = vsub.s32 6, %v4647
      %v4649 = vrot.slane %v4480, %v4648
      %v4650 = vlaneseq
      %v4651 = vshrl.u32 %v4650, 7
      %v4652 = vsub.s32 7, %v4651
      %v4653 = vrot.slane %v4480, %v4652
      %v4654 = vlaneseq
      %v4655 = vshrl.u32 %v4654, 7
      %v4656 = vsub.s32 0, %v4655
      %v4657 = vrot.slane %v4484, %v4656
      %v4658 = vlaneseq
      %v4659 = vshrl.u32 %v4658, 7
      %v4660 = vsub.s32 1, %v4659
      %v4661 = vrot.slane %v4484, %v4660
      %v4662 = vlaneseq
      %v4663 = vshrl.u32 %v4662, 7
      %v4664 = vsub.s32 2, %v4663
      %v4665 = vrot.slane %v4484, %v4664
      %v4666 = vlaneseq
      %v4667 = vshrl.u32 %v4666, 7
      %v4668 = vsub.s32 3, %v4667
      %v4669 = vrot.slane %v4484, %v4668
      %v4670 = vlaneseq
      %v4671 = vshrl.u32 %v4670, 7
      %v4672 = vsub.s32 4, %v4671
      %v4673 = vrot.slane %v4484, %v4672
      %v4674 = vlaneseq
      %v4675 = vshrl.u32 %v4674, 7
      %v4676 = vsub.s32 5, %v4675
      %v4677 = vrot.slane %v4484, %v4676
      %v4678 = vlaneseq
      %v4679 = vshrl.u32 %v4678, 7
      %v4680 = vsub.s32 6, %v4679
      %v4681 = vrot.slane %v4484, %v4680
      %v4682 = vlaneseq
      %v4683 = vshrl.u32 %v4682, 7
      %v4684 = vsub.s32 7, %v4683
      %v4685 = vrot.slane %v4484, %v4684
      %v4686 = vlaneseq
      %v4687 = vshrl.u32 %v4686, 7
      %v4688 = vsub.s32 0, %v4687
      %v4689 = vrot.slane %v4486, %v4688
      %v4690 = vlaneseq
      %v4691 = vshrl.u32 %v4690, 7
      %v4692 = vsub.s32 1, %v4691
      %v4693 = vrot.slane %v4486, %v4692
      %4694 = vrot.lane.b32.xlu0 %v4497, 50
      %v4695 = vpop.permute.xlu0 %4694
      %4696 = vrot.lane.b32.xlu0 %v4501, 50
      %v4697 = vpop.permute.xlu0 %4696
      %4698 = vrot.lane.b32.xlu0 %v4505, 50
      %v4699 = vpop.permute.xlu0 %4698
      %4700 = vrot.lane.b32.xlu0 %v4509, 50
      %v4701 = vpop.permute.xlu0 %4700
      %4702 = vrot.lane.b32.xlu0 %v4513, 50
      %v4703 = vpop.permute.xlu0 %4702
      %4704 = vrot.lane.b32.xlu0 %v4517, 50
      %v4705 = vpop.permute.xlu0 %4704
      %4706 = vrot.lane.b32.xlu0 %v4521, 50
      %v4707 = vpop.permute.xlu0 %4706
      %4708 = vrot.lane.b32.xlu0 %v4525, 50
      %v4709 = vpop.permute.xlu0 %4708
      %4710 = vrot.lane.b32.xlu0 %v4529, 50
      %v4711 = vpop.permute.xlu0 %4710
      %4712 = vrot.lane.b32.xlu0 %v4533, 50
      %v4713 = vpop.permute.xlu0 %4712
      %4714 = vrot.lane.b32.xlu0 %v4537, 50
      %v4715 = vpop.permute.xlu0 %4714
      %4716 = vrot.lane.b32.xlu0 %v4541, 50
      %v4717 = vpop.permute.xlu0 %4716
      %4718 = vrot.lane.b32.xlu0 %v4545, 50
      %v4719 = vpop.permute.xlu0 %4718
      %4720 = vrot.lane.b32.xlu0 %v4549, 50
      %v4721 = vpop.permute.xlu0 %4720
      %4722 = vrot.lane.b32.xlu0 %v4553, 50
      %v4723 = vpop.permute.xlu0 %4722
      %4724 = vrot.lane.b32.xlu0 %v4557, 50
      %v4725 = vpop.permute.xlu0 %4724
      %4726 = vrot.lane.b32.xlu0 %v4561, 50
      %v4727 = vpop.permute.xlu0 %4726
      %4728 = vrot.lane.b32.xlu0 %v4565, 50
      %v4729 = vpop.permute.xlu0 %4728
      %4730 = vrot.lane.b32.xlu0 %v4569, 50
      %v4731 = vpop.permute.xlu0 %4730
      %4732 = vrot.lane.b32.xlu0 %v4573, 50
      %v4733 = vpop.permute.xlu0 %4732
      %4734 = vrot.lane.b32.xlu0 %v4577, 50
      %v4735 = vpop.permute.xlu0 %4734
      %4736 = vrot.lane.b32.xlu0 %v4581, 50
      %v4737 = vpop.permute.xlu0 %4736
      %4738 = vrot.lane.b32.xlu0 %v4585, 50
      %v4739 = vpop.permute.xlu0 %4738
      %4740 = vrot.lane.b32.xlu0 %v4589, 50
      %v4741 = vpop.permute.xlu0 %4740
      %4742 = vrot.lane.b32.xlu0 %v4593, 50
      %v4743 = vpop.permute.xlu0 %4742
      %4744 = vrot.lane.b32.xlu0 %v4597, 50
      %v4745 = vpop.permute.xlu0 %4744
      %4746 = vrot.lane.b32.xlu0 %v4601, 50
      %v4747 = vpop.permute.xlu0 %4746
      %4748 = vrot.lane.b32.xlu0 %v4605, 50
      %v4749 = vpop.permute.xlu0 %4748
      %4750 = vrot.lane.b32.xlu0 %v4609, 50
      %v4751 = vpop.permute.xlu0 %4750
      %4752 = vrot.lane.b32.xlu0 %v4613, 50
      %v4753 = vpop.permute.xlu0 %4752
      %4754 = vrot.lane.b32.xlu0 %v4617, 50
      %v4755 = vpop.permute.xlu0 %4754
      %4756 = vrot.lane.b32.xlu0 %v4621, 50
      %v4757 = vpop.permute.xlu0 %4756
      %4758 = vrot.lane.b32.xlu0 %v4625, 50
      %v4759 = vpop.permute.xlu0 %4758
      %4760 = vrot.lane.b32.xlu0 %v4629, 50
      %v4761 = vpop.permute.xlu0 %4760
      %4762 = vrot.lane.b32.xlu0 %v4633, 50
      %v4763 = vpop.permute.xlu0 %4762
      %4764 = vrot.lane.b32.xlu0 %v4637, 50
      %v4765 = vpop.permute.xlu0 %4764
      %4766 = vrot.lane.b32.xlu0 %v4641, 50
      %v4767 = vpop.permute.xlu0 %4766
      %4768 = vrot.lane.b32.xlu0 %v4645, 50
      %v4769 = vpop.permute.xlu0 %4768
      %4770 = vrot.lane.b32.xlu0 %v4649, 50
      %v4771 = vpop.permute.xlu0 %4770
      %4772 = vrot.lane.b32.xlu0 %v4653, 50
      %v4773 = vpop.permute.xlu0 %4772
      %4774 = vrot.lane.b32.xlu0 %v4657, 50
      %v4775 = vpop.permute.xlu0 %4774
      %4776 = vrot.lane.b32.xlu0 %v4661, 50
      %v4777 = vpop.permute.xlu0 %4776
      %4778 = vrot.lane.b32.xlu0 %v4665, 50
      %v4779 = vpop.permute.xlu0 %4778
      %4780 = vrot.lane.b32.xlu0 %v4669, 50
      %v4781 = vpop.permute.xlu0 %4780
      %4782 = vrot.lane.b32.xlu0 %v4673, 50
      %v4783 = vpop.permute.xlu0 %4782
      %4784 = vrot.lane.b32.xlu0 %v4677, 50
      %v4785 = vpop.permute.xlu0 %4784
      %4786 = vrot.lane.b32.xlu0 %v4681, 50
      %v4787 = vpop.permute.xlu0 %4786
      %4788 = vrot.lane.b32.xlu0 %v4685, 50
      %v4789 = vpop.permute.xlu0 %4788
      %4790 = vrot.lane.b32.xlu0 %v4689, 50
      %v4791 = vpop.permute.xlu0 %4790
      %4792 = vrot.lane.b32.xlu0 %v4693, 50
      %v4793 = vpop.permute.xlu0 %4792
      %v4794 = vsel %vm3323, %v4695, %v4697
      %v4795 = vsel %vm3323, %v4697, %v4699
      %v4796 = vsel %vm3323, %v4699, %v4701
      %v4797 = vsel %vm3323, %v4701, %v4703
      %v4798 = vsel %vm3323, %v4703, %v4705
      %v4799 = vsel %vm3323, %v4705, %v4707
      %v4800 = vsel %vm3323, %v4707, %v4709
      %v4801 = vsel %vm3323, %v4709, %v4711
      %v4802 = vsel %vm3323, %v4711, %v4713
      %v4803 = vsel %vm3323, %v4713, %v4715
      %v4804 = vsel %vm3323, %v4715, %v4717
      %v4805 = vsel %vm3323, %v4717, %v4719
      %v4806 = vsel %vm3323, %v4719, %v4721
      %v4807 = vsel %vm3323, %v4721, %v4723
      %v4808 = vsel %vm3323, %v4723, %v4725
      %v4809 = vsel %vm3323, %v4725, %v4727
      %v4810 = vsel %vm3323, %v4727, %v4729
      %v4811 = vsel %vm3323, %v4729, %v4731
      %v4812 = vsel %vm3323, %v4731, %v4733
      %v4813 = vsel %vm3323, %v4733, %v4735
      %v4814 = vsel %vm3323, %v4735, %v4737
      %v4815 = vsel %vm3323, %v4737, %v4739
      %v4816 = vsel %vm3323, %v4739, %v4741
      %v4817 = vsel %vm3323, %v4741, %v4743
      %v4818 = vsel %vm3323, %v4743, %v4745
      %v4819 = vsel %vm3323, %v4745, %v4747
      %v4820 = vsel %vm3323, %v4747, %v4749
      %v4821 = vsel %vm3323, %v4749, %v4751
      %v4822 = vsel %vm3323, %v4751, %v4753
      %v4823 = vsel %vm3323, %v4753, %v4755
      %v4824 = vsel %vm3323, %v4755, %v4757
      %v4825 = vsel %vm3323, %v4757, %v4759
      %v4826 = vsel %vm3323, %v4759, %v4761
      %v4827 = vsel %vm3323, %v4761, %v4763
      %v4828 = vsel %vm3323, %v4763, %v4765
      %v4829 = vsel %vm3323, %v4765, %v4767
      %v4830 = vsel %vm3323, %v4767, %v4769
      %v4831 = vsel %vm3323, %v4769, %v4771
      %v4832 = vsel %vm3323, %v4771, %v4773
      %v4833 = vsel %vm3323, %v4773, %v4775
      %v4834 = vsel %vm3323, %v4775, %v4777
      %v4835 = vsel %vm3323, %v4777, %v4779
      %v4836 = vsel %vm3323, %v4779, %v4781
      %v4837 = vsel %vm3323, %v4781, %v4783
      %v4838 = vsel %vm3323, %v4783, %v4785
      %v4839 = vsel %vm3323, %v4785, %v4787
      %v4840 = vsel %vm3323, %v4787, %v4789
      %v4841 = vsel %vm3323, %v4789, %v4791
      %v4842 = vsel %vm3323, %v4791, %v4793
      %v4844 = vsel %vm3323, 0.0, %v4695
      %v4846 = vcombine.low %v4844, %v4794
      %v4847 = vcombine.low %v4795, %v4796
      %v4848 = vcombine.low %v4797, %v4798
      %v4849 = vcombine.low %v4799, %v4800
      %v4851 = vunpack.c.l.s4 1966171168
      %v4852 = vunpack.c.0.s8 %v4851
      %v4853 = vlaneseq
      %v4854 = vshrl.u32 %v4853, 7
      %v4855 = vsub.s32 %v4852, %v4854
      %v4856 = vrot.slane %v4846, %v4855
      %v4858 = vunpack.c.l.s4 1966171168
      %v4859 = vunpack.c.0.s8 %v4858
      %v4860 = vlaneseq
      %v4861 = vshrl.u32 %v4860, 7
      %v4862 = vsub.s32 %v4859, %v4861
      %v4863 = vrot.slane %v4847, %v4862
      %v4865 = vunpack.c.l.s4 1966171168
      %v4866 = vunpack.c.0.s8 %v4865
      %v4867 = vlaneseq
      %v4868 = vshrl.u32 %v4867, 7
      %v4869 = vsub.s32 %v4866, %v4868
      %v4870 = vrot.slane %v4848, %v4869
      %v4872 = vunpack.c.l.s4 1966171168
      %v4873 = vunpack.c.0.s8 %v4872
      %v4874 = vlaneseq
      %v4875 = vshrl.u32 %v4874, 7
      %v4876 = vsub.s32 %v4873, %v4875
      %v4877 = vrot.slane %v4849, %v4876
      %v4878 = vcombine.low %v4856, %v4863
      %v4879 = vcombine.low %v4870, %v4877
      %v4881 = vunpack.c.l.s4 1966171168
      %v4882 = vunpack.c.0.s8 %v4881
      %v4883 = vlaneseq
      %v4884 = vshrl.u32 %v4883, 7
      %v4885 = vsub.s32 %v4882, %v4884
      %v4886 = vrot.slane %v4878, %v4885
      %v4888 = vunpack.c.l.s4 1966171168
      %v4889 = vunpack.c.0.s8 %v4888
      %v4890 = vlaneseq
      %v4891 = vshrl.u32 %v4890, 7
      %v4892 = vsub.s32 %v4889, %v4891
      %v4893 = vrot.slane %v4879, %v4892
      %v4894 = vcombine.low %v4886, %v4893
      %v4895 = vcombine.low %v4801, %v4802
      %v4896 = vcombine.low %v4803, %v4804
      %v4897 = vcombine.low %v4805, %v4806
      %v4898 = vcombine.low %v4807, %v4808
      %v4900 = vunpack.c.l.s4 1966171168
      %v4901 = vunpack.c.0.s8 %v4900
      %v4902 = vlaneseq
      %v4903 = vshrl.u32 %v4902, 7
      %v4904 = vsub.s32 %v4901, %v4903
      %v4905 = vrot.slane %v4895, %v4904
      %v4907 = vunpack.c.l.s4 1966171168
      %v4908 = vunpack.c.0.s8 %v4907
      %v4909 = vlaneseq
      %v4910 = vshrl.u32 %v4909, 7
      %v4911 = vsub.s32 %v4908, %v4910
      %v4912 = vrot.slane %v4896, %v4911
      %v4914 = vunpack.c.l.s4 1966171168
      %v4915 = vunpack.c.0.s8 %v4914
      %v4916 = vlaneseq
      %v4917 = vshrl.u32 %v4916, 7
      %v4918 = vsub.s32 %v4915, %v4917
      %v4919 = vrot.slane %v4897, %v4918
      %v4921 = vunpack.c.l.s4 1966171168
      %v4922 = vunpack.c.0.s8 %v4921
      %v4923 = vlaneseq
      %v4924 = vshrl.u32 %v4923, 7
      %v4925 = vsub.s32 %v4922, %v4924
      %v4926 = vrot.slane %v4898, %v4925
      %v4927 = vcombine.low %v4905, %v4912
      %v4928 = vcombine.low %v4919, %v4926
      %v4930 = vunpack.c.l.s4 1966171168
      %v4931 = vunpack.c.0.s8 %v4930
      %v4932 = vlaneseq
      %v4933 = vshrl.u32 %v4932, 7
      %v4934 = vsub.s32 %v4931, %v4933
      %v4935 = vrot.slane %v4927, %v4934
      %v4937 = vunpack.c.l.s4 1966171168
      %v4938 = vunpack.c.0.s8 %v4937
      %v4939 = vlaneseq
      %v4940 = vshrl.u32 %v4939, 7
      %v4941 = vsub.s32 %v4938, %v4940
      %v4942 = vrot.slane %v4928, %v4941
      %v4943 = vcombine.low %v4935, %v4942
      %v4944 = vcombine.low %v4809, %v4810
      %v4945 = vcombine.low %v4811, %v4812
      %v4946 = vcombine.low %v4813, %v4814
      %v4947 = vcombine.low %v4815, %v4816
      %v4949 = vunpack.c.l.s4 1966171168
      %v4950 = vunpack.c.0.s8 %v4949
      %v4951 = vlaneseq
      %v4952 = vshrl.u32 %v4951, 7
      %v4953 = vsub.s32 %v4950, %v4952
      %v4954 = vrot.slane %v4944, %v4953
      %v4956 = vunpack.c.l.s4 1966171168
      %v4957 = vunpack.c.0.s8 %v4956
      %v4958 = vlaneseq
      %v4959 = vshrl.u32 %v4958, 7
      %v4960 = vsub.s32 %v4957, %v4959
      %v4961 = vrot.slane %v4945, %v4960
      %v4963 = vunpack.c.l.s4 1966171168
      %v4964 = vunpack.c.0.s8 %v4963
      %v4965 = vlaneseq
      %v4966 = vshrl.u32 %v4965, 7
      %v4967 = vsub.s32 %v4964, %v4966
      %v4968 = vrot.slane %v4946, %v4967
      %v4970 = vunpack.c.l.s4 1966171168
      %v4971 = vunpack.c.0.s8 %v4970
      %v4972 = vlaneseq
      %v4973 = vshrl.u32 %v4972, 7
      %v4974 = vsub.s32 %v4971, %v4973
      %v4975 = vrot.slane %v4947, %v4974
      %v4976 = vcombine.low %v4954, %v4961
      %v4977 = vcombine.low %v4968, %v4975
      %v4979 = vunpack.c.l.s4 1966171168
      %v4980 = vunpack.c.0.s8 %v4979
      %v4981 = vlaneseq
      %v4982 = vshrl.u32 %v4981, 7
      %v4983 = vsub.s32 %v4980, %v4982
      %v4984 = vrot.slane %v4976, %v4983
      %v4986 = vunpack.c.l.s4 1966171168
      %v4987 = vunpack.c.0.s8 %v4986
      %v4988 = vlaneseq
      %v4989 = vshrl.u32 %v4988, 7
      %v4990 = vsub.s32 %v4987, %v4989
      %v4991 = vrot.slane %v4977, %v4990
      %v4992 = vcombine.low %v4984, %v4991
      %v4993 = vcombine.low %v4817, %v4818
      %v4994 = vcombine.low %v4819, %v4820
      %v4995 = vcombine.low %v4821, %v4822
      %v4996 = vcombine.low %v4823, %v4824
      %v4998 = vunpack.c.l.s4 1966171168
      %v4999 = vunpack.c.0.s8 %v4998
      %v5000 = vlaneseq
      %v5001 = vshrl.u32 %v5000, 7
      %v5002 = vsub.s32 %v4999, %v5001
      %v5003 = vrot.slane %v4993, %v5002
      %v5005 = vunpack.c.l.s4 1966171168
      %v5006 = vunpack.c.0.s8 %v5005
      %v5007 = vlaneseq
      %v5008 = vshrl.u32 %v5007, 7
      %v5009 = vsub.s32 %v5006, %v5008
      %v5010 = vrot.slane %v4994, %v5009
      %v5012 = vunpack.c.l.s4 1966171168
      %v5013 = vunpack.c.0.s8 %v5012
      %v5014 = vlaneseq
      %v5015 = vshrl.u32 %v5014, 7
      %v5016 = vsub.s32 %v5013, %v5015
      %v5017 = vrot.slane %v4995, %v5016
      %v5019 = vunpack.c.l.s4 1966171168
      %v5020 = vunpack.c.0.s8 %v5019
      %v5021 = vlaneseq
      %v5022 = vshrl.u32 %v5021, 7
      %v5023 = vsub.s32 %v5020, %v5022
      %v5024 = vrot.slane %v4996, %v5023
      %v5025 = vcombine.low %v5003, %v5010
      %v5026 = vcombine.low %v5017, %v5024
      %v5028 = vunpack.c.l.s4 1966171168
      %v5029 = vunpack.c.0.s8 %v5028
      %v5030 = vlaneseq
      %v5031 = vshrl.u32 %v5030, 7
      %v5032 = vsub.s32 %v5029, %v5031
      %v5033 = vrot.slane %v5025, %v5032
      %v5035 = vunpack.c.l.s4 1966171168
      %v5036 = vunpack.c.0.s8 %v5035
      %v5037 = vlaneseq
      %v5038 = vshrl.u32 %v5037, 7
      %v5039 = vsub.s32 %v5036, %v5038
      %v5040 = vrot.slane %v5026, %v5039
      %v5041 = vcombine.low %v5033, %v5040
      %v5042 = vcombine.low %v4825, %v4826
      %v5043 = vcombine.low %v4827, %v4828
      %v5044 = vcombine.low %v4829, %v4830
      %v5045 = vcombine.low %v4831, %v4832
      %v5047 = vunpack.c.l.s4 1966171168
      %v5048 = vunpack.c.0.s8 %v5047
      %v5049 = vlaneseq
      %v5050 = vshrl.u32 %v5049, 7
      %v5051 = vsub.s32 %v5048, %v5050
      %v5052 = vrot.slane %v5042, %v5051
      %v5054 = vunpack.c.l.s4 1966171168
      %v5055 = vunpack.c.0.s8 %v5054
      %v5056 = vlaneseq
      %v5057 = vshrl.u32 %v5056, 7
      %v5058 = vsub.s32 %v5055, %v5057
      %v5059 = vrot.slane %v5043, %v5058
      %v5061 = vunpack.c.l.s4 1966171168
      %v5062 = vunpack.c.0.s8 %v5061
      %v5063 = vlaneseq
      %v5064 = vshrl.u32 %v5063, 7
      %v5065 = vsub.s32 %v5062, %v5064
      %v5066 = vrot.slane %v5044, %v5065
      %v5068 = vunpack.c.l.s4 1966171168
      %v5069 = vunpack.c.0.s8 %v5068
      %v5070 = vlaneseq
      %v5071 = vshrl.u32 %v5070, 7
      %v5072 = vsub.s32 %v5069, %v5071
      %v5073 = vrot.slane %v5045, %v5072
      %v5074 = vcombine.low %v5052, %v5059
      %v5075 = vcombine.low %v5066, %v5073
      %v5077 = vunpack.c.l.s4 1966171168
      %v5078 = vunpack.c.0.s8 %v5077
      %v5079 = vlaneseq
      %v5080 = vshrl.u32 %v5079, 7
      %v5081 = vsub.s32 %v5078, %v5080
      %v5082 = vrot.slane %v5074, %v5081
      %v5084 = vunpack.c.l.s4 1966171168
      %v5085 = vunpack.c.0.s8 %v5084
      %v5086 = vlaneseq
      %v5087 = vshrl.u32 %v5086, 7
      %v5088 = vsub.s32 %v5085, %v5087
      %v5089 = vrot.slane %v5075, %v5088
      %v5090 = vcombine.low %v5082, %v5089
      %v5091 = vcombine.low %v4833, %v4834
      %v5092 = vcombine.low %v4835, %v4836
      %v5093 = vcombine.low %v4837, %v4838
      %v5094 = vcombine.low %v4839, %v4840
      %v5096 = vunpack.c.l.s4 1966171168
      %v5097 = vunpack.c.0.s8 %v5096
      %v5098 = vlaneseq
      %v5099 = vshrl.u32 %v5098, 7
      %v5100 = vsub.s32 %v5097, %v5099
      %v5101 = vrot.slane %v5091, %v5100
      %v5103 = vunpack.c.l.s4 1966171168
      %v5104 = vunpack.c.0.s8 %v5103
      %v5105 = vlaneseq
      %v5106 = vshrl.u32 %v5105, 7
      %v5107 = vsub.s32 %v5104, %v5106
      %v5108 = vrot.slane %v5092, %v5107
      %v5110 = vunpack.c.l.s4 1966171168
      %v5111 = vunpack.c.0.s8 %v5110
      %v5112 = vlaneseq
      %v5113 = vshrl.u32 %v5112, 7
      %v5114 = vsub.s32 %v5111, %v5113
      %v5115 = vrot.slane %v5093, %v5114
      %v5117 = vunpack.c.l.s4 1966171168
      %v5118 = vunpack.c.0.s8 %v5117
      %v5119 = vlaneseq
      %v5120 = vshrl.u32 %v5119, 7
      %v5121 = vsub.s32 %v5118, %v5120
      %v5122 = vrot.slane %v5094, %v5121
      %v5123 = vcombine.low %v5101, %v5108
      %v5124 = vcombine.low %v5115, %v5122
      %v5126 = vunpack.c.l.s4 1966171168
      %v5127 = vunpack.c.0.s8 %v5126
      %v5128 = vlaneseq
      %v5129 = vshrl.u32 %v5128, 7
      %v5130 = vsub.s32 %v5127, %v5129
      %v5131 = vrot.slane %v5123, %v5130
      %v5133 = vunpack.c.l.s4 1966171168
      %v5134 = vunpack.c.0.s8 %v5133
      %v5135 = vlaneseq
      %v5136 = vshrl.u32 %v5135, 7
      %v5137 = vsub.s32 %v5134, %v5136
      %v5138 = vrot.slane %v5124, %v5137
      %v5139 = vcombine.low %v5131, %v5138
      %v5140 = vcombine.low %v4841, %v4842
      %v5142 = vunpack.c.l.s4 1966171168
      %v5143 = vunpack.c.0.s8 %v5142
      %v5144 = vlaneseq
      %v5145 = vshrl.u32 %v5144, 7
      %v5146 = vsub.s32 %v5143, %v5145
      %v5147 = vrot.slane %v5140, %v5146
      %v5149 = vunpack.c.l.s4 1966171168
      %v5150 = vunpack.c.0.s8 %v5149
      %v5151 = vlaneseq
      %v5152 = vshrl.u32 %v5151, 7
      %v5153 = vsub.s32 %v5150, %v5152
      %v5154 = vrot.slane %v5147, %v5153
      %v5162 = vadd.f32 %v4438, %v4894
      %v5163 = vadd.f32 %v4442, %v4943
      %v5164 = vadd.f32 %v4446, %v4992
      %v5165 = vadd.f32 %v4450, %v5041
      %v5166 = vadd.f32 %v4454, %v5090
      %v5167 = vadd.f32 %v4458, %v5139
      %v5168 = vadd.f32 %v4460, %v5154
      %v5169 = vadd.f32 %v5162, %v4416
      %v5170 = vadd.f32 %v5163, %v4416
      %v5171 = vadd.f32 %v5164, %v4416
      %v5172 = vadd.f32 %v5165, %v4416
      %v5173 = vadd.f32 %v5166, %v4416
      %v5174 = vadd.f32 %v5167, %v4416
      %v5175 = vadd.f32 %v5168, %v4416
      %s5176 = scalar_lea.vmem %s170, 50
      %5177 = vst [vmem:[%s5176] sm:$0xff] %v5169
      %5178 = vst [vmem:[%s5176 + $0x8] sm:$0xff] %v5170
      %5179 = vst [vmem:[%s5176 + $0x10] sm:$0xff] %v5171
      %5180 = vst [vmem:[%s5176 + $0x18] sm:$0xff] %v5172
      %5181 = vst [vmem:[%s5176 + $0x20] sm:$0xff] %v5173
      %5182 = vst [vmem:[%s5176 + $0x28] sm:$0xff] %v5174
      %5183 = vst.msk [vmem:[%s5176 + $0x30] sm:$0x3] %vm4433, %v5175
      %s5184 = scalar_lea.vmem [#allocation2], 3
      %v5185 = vld [vmem:[%s5184] ss:$8 sm:$0xf]
      %v5186 = vld [vmem:[%s5184] ss:$8 sm:$0xf0]
      %v5187 = vor.u32 %v5185, %v5186
      %s5188 = scalar_lea.vmem [#allocation2], 67
      %v5189 = vld [vmem:[%s5188] ss:$8 sm:$0xf]
      %v5190 = vld [vmem:[%s5188] ss:$8 sm:$0xf0]
      %v5191 = vor.u32 %v5189, %v5190
      %s5192 = scalar_lea.vmem [#allocation2], 131
      %v5193 = vld [vmem:[%s5192] ss:$8 sm:$0xf]
      %v5194 = vld [vmem:[%s5192] ss:$8 sm:$0xf0]
      %v5195 = vor.u32 %v5193, %v5194
      %s5196 = scalar_lea.vmem [#allocation2], 195
      %v5197 = vld [vmem:[%s5196] ss:$8 sm:$0xf]
      %v5198 = vld [vmem:[%s5196] ss:$8 sm:$0xf0]
      %v5199 = vor.u32 %v5197, %v5198
      %s5200 = scalar_lea.vmem [#allocation2], 259
      %v5201 = vld [vmem:[%s5200] ss:$8 sm:$0xf]
      %v5202 = vld [vmem:[%s5200] ss:$8 sm:$0xf0]
      %v5203 = vor.u32 %v5201, %v5202
      %s5204 = scalar_lea.vmem [#allocation2], 323
      %v5205 = vld [vmem:[%s5204] ss:$8 sm:$0xf]
      %v5206 = vld [vmem:[%s5204] ss:$8 sm:$0xf0]
      %v5207 = vor.u32 %v5205, %v5206
      %s5208 = scalar_lea.vmem [#allocation2], 387
      %v5209 = vld [vmem:[%s5208] ss:$8 sm:$0x3]
      %s5210 = scalar_lea.vmem [#allocation2], 5
      %v5211 = vld [vmem:[%s5210] ss:$8 sm:$0xf]
      %v5212 = vld [vmem:[%s5210] ss:$8 sm:$0xf0]
      %v5213 = vor.u32 %v5211, %v5212
      %s5214 = scalar_lea.vmem [#allocation2], 69
      %v5215 = vld [vmem:[%s5214] ss:$8 sm:$0xf]
      %v5216 = vld [vmem:[%s5214] ss:$8 sm:$0xf0]
      %v5217 = vor.u32 %v5215, %v5216
      %s5218 = scalar_lea.vmem [#allocation2], 133
      %v5219 = vld [vmem:[%s5218] ss:$8 sm:$0xf]
      %v5220 = vld [vmem:[%s5218] ss:$8 sm:$0xf0]
      %v5221 = vor.u32 %v5219, %v5220
      %s5222 = scalar_lea.vmem [#allocation2], 197
      %v5223 = vld [vmem:[%s5222] ss:$8 sm:$0xf]
      %v5224 = vld [vmem:[%s5222] ss:$8 sm:$0xf0]
      %v5225 = vor.u32 %v5223, %v5224
      %s5226 = scalar_lea.vmem [#allocation2], 261
      %v5227 = vld [vmem:[%s5226] ss:$8 sm:$0xf]
      %v5228 = vld [vmem:[%s5226] ss:$8 sm:$0xf0]
      %v5229 = vor.u32 %v5227, %v5228
      %s5230 = scalar_lea.vmem [#allocation2], 325
      %v5231 = vld [vmem:[%s5230] ss:$8 sm:$0xf]
      %v5232 = vld [vmem:[%s5230] ss:$8 sm:$0xf0]
      %v5233 = vor.u32 %v5231, %v5232
      %s5234 = scalar_lea.vmem [#allocation2], 389
      %v5235 = vld [vmem:[%s5234] ss:$8 sm:$0x3]
      %v5243 = vlaneseq
      %v5244 = vshrl.u32 %v5243, 7
      %v5245 = vsub.s32 0, %v5244
      %v5246 = vrot.slane %v5213, %v5245
      %v5247 = vlaneseq
      %v5248 = vshrl.u32 %v5247, 7
      %v5249 = vsub.s32 1, %v5248
      %v5250 = vrot.slane %v5213, %v5249
      %v5251 = vlaneseq
      %v5252 = vshrl.u32 %v5251, 7
      %v5253 = vsub.s32 2, %v5252
      %v5254 = vrot.slane %v5213, %v5253
      %v5255 = vlaneseq
      %v5256 = vshrl.u32 %v5255, 7
      %v5257 = vsub.s32 3, %v5256
      %v5258 = vrot.slane %v5213, %v5257
      %v5259 = vlaneseq
      %v5260 = vshrl.u32 %v5259, 7
      %v5261 = vsub.s32 4, %v5260
      %v5262 = vrot.slane %v5213, %v5261
      %v5263 = vlaneseq
      %v5264 = vshrl.u32 %v5263, 7
      %v5265 = vsub.s32 5, %v5264
      %v5266 = vrot.slane %v5213, %v5265
      %v5267 = vlaneseq
      %v5268 = vshrl.u32 %v5267, 7
      %v5269 = vsub.s32 6, %v5268
      %v5270 = vrot.slane %v5213, %v5269
      %v5271 = vlaneseq
      %v5272 = vshrl.u32 %v5271, 7
      %v5273 = vsub.s32 7, %v5272
      %v5274 = vrot.slane %v5213, %v5273
      %v5275 = vlaneseq
      %v5276 = vshrl.u32 %v5275, 7
      %v5277 = vsub.s32 0, %v5276
      %v5278 = vrot.slane %v5217, %v5277
      %v5279 = vlaneseq
      %v5280 = vshrl.u32 %v5279, 7
      %v5281 = vsub.s32 1, %v5280
      %v5282 = vrot.slane %v5217, %v5281
      %v5283 = vlaneseq
      %v5284 = vshrl.u32 %v5283, 7
      %v5285 = vsub.s32 2, %v5284
      %v5286 = vrot.slane %v5217, %v5285
      %v5287 = vlaneseq
      %v5288 = vshrl.u32 %v5287, 7
      %v5289 = vsub.s32 3, %v5288
      %v5290 = vrot.slane %v5217, %v5289
      %v5291 = vlaneseq
      %v5292 = vshrl.u32 %v5291, 7
      %v5293 = vsub.s32 4, %v5292
      %v5294 = vrot.slane %v5217, %v5293
      %v5295 = vlaneseq
      %v5296 = vshrl.u32 %v5295, 7
      %v5297 = vsub.s32 5, %v5296
      %v5298 = vrot.slane %v5217, %v5297
      %v5299 = vlaneseq
      %v5300 = vshrl.u32 %v5299, 7
      %v5301 = vsub.s32 6, %v5300
      %v5302 = vrot.slane %v5217, %v5301
      %v5303 = vlaneseq
      %v5304 = vshrl.u32 %v5303, 7
      %v5305 = vsub.s32 7, %v5304
      %v5306 = vrot.slane %v5217, %v5305
      %v5307 = vlaneseq
      %v5308 = vshrl.u32 %v5307, 7
      %v5309 = vsub.s32 0, %v5308
      %v5310 = vrot.slane %v5221, %v5309
      %v5311 = vlaneseq
      %v5312 = vshrl.u32 %v5311, 7
      %v5313 = vsub.s32 1, %v5312
      %v5314 = vrot.slane %v5221, %v5313
      %v5315 = vlaneseq
      %v5316 = vshrl.u32 %v5315, 7
      %v5317 = vsub.s32 2, %v5316
      %v5318 = vrot.slane %v5221, %v5317
      %v5319 = vlaneseq
      %v5320 = vshrl.u32 %v5319, 7
      %v5321 = vsub.s32 3, %v5320
      %v5322 = vrot.slane %v5221, %v5321
      %v5323 = vlaneseq
      %v5324 = vshrl.u32 %v5323, 7
      %v5325 = vsub.s32 4, %v5324
      %v5326 = vrot.slane %v5221, %v5325
      %v5327 = vlaneseq
      %v5328 = vshrl.u32 %v5327, 7
      %v5329 = vsub.s32 5, %v5328
      %v5330 = vrot.slane %v5221, %v5329
      %v5331 = vlaneseq
      %v5332 = vshrl.u32 %v5331, 7
      %v5333 = vsub.s32 6, %v5332
      %v5334 = vrot.slane %v5221, %v5333
      %v5335 = vlaneseq
      %v5336 = vshrl.u32 %v5335, 7
      %v5337 = vsub.s32 7, %v5336
      %v5338 = vrot.slane %v5221, %v5337
      %v5339 = vlaneseq
      %v5340 = vshrl.u32 %v5339, 7
      %v5341 = vsub.s32 0, %v5340
      %v5342 = vrot.slane %v5225, %v5341
      %v5343 = vlaneseq
      %v5344 = vshrl.u32 %v5343, 7
      %v5345 = vsub.s32 1, %v5344
      %v5346 = vrot.slane %v5225, %v5345
      %v5347 = vlaneseq
      %v5348 = vshrl.u32 %v5347, 7
      %v5349 = vsub.s32 2, %v5348
      %v5350 = vrot.slane %v5225, %v5349
      %v5351 = vlaneseq
      %v5352 = vshrl.u32 %v5351, 7
      %v5353 = vsub.s32 3, %v5352
      %v5354 = vrot.slane %v5225, %v5353
      %v5355 = vlaneseq
      %v5356 = vshrl.u32 %v5355, 7
      %v5357 = vsub.s32 4, %v5356
      %v5358 = vrot.slane %v5225, %v5357
      %v5359 = vlaneseq
      %v5360 = vshrl.u32 %v5359, 7
      %v5361 = vsub.s32 5, %v5360
      %v5362 = vrot.slane %v5225, %v5361
      %v5363 = vlaneseq
      %v5364 = vshrl.u32 %v5363, 7
      %v5365 = vsub.s32 6, %v5364
      %v5366 = vrot.slane %v5225, %v5365
      %v5367 = vlaneseq
      %v5368 = vshrl.u32 %v5367, 7
      %v5369 = vsub.s32 7, %v5368
      %v5370 = vrot.slane %v5225, %v5369
      %v5371 = vlaneseq
      %v5372 = vshrl.u32 %v5371, 7
      %v5373 = vsub.s32 0, %v5372
      %v5374 = vrot.slane %v5229, %v5373
      %v5375 = vlaneseq
      %v5376 = vshrl.u32 %v5375, 7
      %v5377 = vsub.s32 1, %v5376
      %v5378 = vrot.slane %v5229, %v5377
      %v5379 = vlaneseq
      %v5380 = vshrl.u32 %v5379, 7
      %v5381 = vsub.s32 2, %v5380
      %v5382 = vrot.slane %v5229, %v5381
      %v5383 = vlaneseq
      %v5384 = vshrl.u32 %v5383, 7
      %v5385 = vsub.s32 3, %v5384
      %v5386 = vrot.slane %v5229, %v5385
      %v5387 = vlaneseq
      %v5388 = vshrl.u32 %v5387, 7
      %v5389 = vsub.s32 4, %v5388
      %v5390 = vrot.slane %v5229, %v5389
      %v5391 = vlaneseq
      %v5392 = vshrl.u32 %v5391, 7
      %v5393 = vsub.s32 5, %v5392
      %v5394 = vrot.slane %v5229, %v5393
      %v5395 = vlaneseq
      %v5396 = vshrl.u32 %v5395, 7
      %v5397 = vsub.s32 6, %v5396
      %v5398 = vrot.slane %v5229, %v5397
      %v5399 = vlaneseq
      %v5400 = vshrl.u32 %v5399, 7
      %v5401 = vsub.s32 7, %v5400
      %v5402 = vrot.slane %v5229, %v5401
      %v5403 = vlaneseq
      %v5404 = vshrl.u32 %v5403, 7
      %v5405 = vsub.s32 0, %v5404
      %v5406 = vrot.slane %v5233, %v5405
      %v5407 = vlaneseq
      %v5408 = vshrl.u32 %v5407, 7
      %v5409 = vsub.s32 1, %v5408
      %v5410 = vrot.slane %v5233, %v5409
      %v5411 = vlaneseq
      %v5412 = vshrl.u32 %v5411, 7
      %v5413 = vsub.s32 2, %v5412
      %v5414 = vrot.slane %v5233, %v5413
      %v5415 = vlaneseq
      %v5416 = vshrl.u32 %v5415, 7
      %v5417 = vsub.s32 3, %v5416
      %v5418 = vrot.slane %v5233, %v5417
      %v5419 = vlaneseq
      %v5420 = vshrl.u32 %v5419, 7
      %v5421 = vsub.s32 4, %v5420
      %v5422 = vrot.slane %v5233, %v5421
      %v5423 = vlaneseq
      %v5424 = vshrl.u32 %v5423, 7
      %v5425 = vsub.s32 5, %v5424
      %v5426 = vrot.slane %v5233, %v5425
      %v5427 = vlaneseq
      %v5428 = vshrl.u32 %v5427, 7
      %v5429 = vsub.s32 6, %v5428
      %v5430 = vrot.slane %v5233, %v5429
      %v5431 = vlaneseq
      %v5432 = vshrl.u32 %v5431, 7
      %v5433 = vsub.s32 7, %v5432
      %v5434 = vrot.slane %v5233, %v5433
      %v5435 = vlaneseq
      %v5436 = vshrl.u32 %v5435, 7
      %v5437 = vsub.s32 0, %v5436
      %v5438 = vrot.slane %v5235, %v5437
      %v5439 = vlaneseq
      %v5440 = vshrl.u32 %v5439, 7
      %v5441 = vsub.s32 1, %v5440
      %v5442 = vrot.slane %v5235, %v5441
      %5443 = vrot.lane.b32.xlu0 %v5246, 1
      %v5444 = vpop.permute.xlu0 %5443
      %5445 = vrot.lane.b32.xlu0 %v5250, 1
      %v5446 = vpop.permute.xlu0 %5445
      %5447 = vrot.lane.b32.xlu0 %v5254, 1
      %v5448 = vpop.permute.xlu0 %5447
      %5449 = vrot.lane.b32.xlu0 %v5258, 1
      %v5450 = vpop.permute.xlu0 %5449
      %5451 = vrot.lane.b32.xlu0 %v5262, 1
      %v5452 = vpop.permute.xlu0 %5451
      %5453 = vrot.lane.b32.xlu0 %v5266, 1
      %v5454 = vpop.permute.xlu0 %5453
      %5455 = vrot.lane.b32.xlu0 %v5270, 1
      %v5456 = vpop.permute.xlu0 %5455
      %5457 = vrot.lane.b32.xlu0 %v5274, 1
      %v5458 = vpop.permute.xlu0 %5457
      %5459 = vrot.lane.b32.xlu0 %v5278, 1
      %v5460 = vpop.permute.xlu0 %5459
      %5461 = vrot.lane.b32.xlu0 %v5282, 1
      %v5462 = vpop.permute.xlu0 %5461
      %5463 = vrot.lane.b32.xlu0 %v5286, 1
      %v5464 = vpop.permute.xlu0 %5463
      %5465 = vrot.lane.b32.xlu0 %v5290, 1
      %v5466 = vpop.permute.xlu0 %5465
      %5467 = vrot.lane.b32.xlu0 %v5294, 1
      %v5468 = vpop.permute.xlu0 %5467
      %5469 = vrot.lane.b32.xlu0 %v5298, 1
      %v5470 = vpop.permute.xlu0 %5469
      %5471 = vrot.lane.b32.xlu0 %v5302, 1
      %v5472 = vpop.permute.xlu0 %5471
      %5473 = vrot.lane.b32.xlu0 %v5306, 1
      %v5474 = vpop.permute.xlu0 %5473
      %5475 = vrot.lane.b32.xlu0 %v5310, 1
      %v5476 = vpop.permute.xlu0 %5475
      %5477 = vrot.lane.b32.xlu0 %v5314, 1
      %v5478 = vpop.permute.xlu0 %5477
      %5479 = vrot.lane.b32.xlu0 %v5318, 1
      %v5480 = vpop.permute.xlu0 %5479
      %5481 = vrot.lane.b32.xlu0 %v5322, 1
      %v5482 = vpop.permute.xlu0 %5481
      %5483 = vrot.lane.b32.xlu0 %v5326, 1
      %v5484 = vpop.permute.xlu0 %5483
      %5485 = vrot.lane.b32.xlu0 %v5330, 1
      %v5486 = vpop.permute.xlu0 %5485
      %5487 = vrot.lane.b32.xlu0 %v5334, 1
      %v5488 = vpop.permute.xlu0 %5487
      %5489 = vrot.lane.b32.xlu0 %v5338, 1
      %v5490 = vpop.permute.xlu0 %5489
      %5491 = vrot.lane.b32.xlu0 %v5342, 1
      %v5492 = vpop.permute.xlu0 %5491
      %5493 = vrot.lane.b32.xlu0 %v5346, 1
      %v5494 = vpop.permute.xlu0 %5493
      %5495 = vrot.lane.b32.xlu0 %v5350, 1
      %v5496 = vpop.permute.xlu0 %5495
      %5497 = vrot.lane.b32.xlu0 %v5354, 1
      %v5498 = vpop.permute.xlu0 %5497
      %5499 = vrot.lane.b32.xlu0 %v5358, 1
      %v5500 = vpop.permute.xlu0 %5499
      %5501 = vrot.lane.b32.xlu0 %v5362, 1
      %v5502 = vpop.permute.xlu0 %5501
      %5503 = vrot.lane.b32.xlu0 %v5366, 1
      %v5504 = vpop.permute.xlu0 %5503
      %5505 = vrot.lane.b32.xlu0 %v5370, 1
      %v5506 = vpop.permute.xlu0 %5505
      %5507 = vrot.lane.b32.xlu0 %v5374, 1
      %v5508 = vpop.permute.xlu0 %5507
      %5509 = vrot.lane.b32.xlu0 %v5378, 1
      %v5510 = vpop.permute.xlu0 %5509
      %5511 = vrot.lane.b32.xlu0 %v5382, 1
      %v5512 = vpop.permute.xlu0 %5511
      %5513 = vrot.lane.b32.xlu0 %v5386, 1
      %v5514 = vpop.permute.xlu0 %5513
      %5515 = vrot.lane.b32.xlu0 %v5390, 1
      %v5516 = vpop.permute.xlu0 %5515
      %5517 = vrot.lane.b32.xlu0 %v5394, 1
      %v5518 = vpop.permute.xlu0 %5517
      %5519 = vrot.lane.b32.xlu0 %v5398, 1
      %v5520 = vpop.permute.xlu0 %5519
      %5521 = vrot.lane.b32.xlu0 %v5402, 1
      %v5522 = vpop.permute.xlu0 %5521
      %5523 = vrot.lane.b32.xlu0 %v5406, 1
      %v5524 = vpop.permute.xlu0 %5523
      %5525 = vrot.lane.b32.xlu0 %v5410, 1
      %v5526 = vpop.permute.xlu0 %5525
      %5527 = vrot.lane.b32.xlu0 %v5414, 1
      %v5528 = vpop.permute.xlu0 %5527
      %5529 = vrot.lane.b32.xlu0 %v5418, 1
      %v5530 = vpop.permute.xlu0 %5529
      %5531 = vrot.lane.b32.xlu0 %v5422, 1
      %v5532 = vpop.permute.xlu0 %5531
      %5533 = vrot.lane.b32.xlu0 %v5426, 1
      %v5534 = vpop.permute.xlu0 %5533
      %5535 = vrot.lane.b32.xlu0 %v5430, 1
      %v5536 = vpop.permute.xlu0 %5535
      %5537 = vrot.lane.b32.xlu0 %v5434, 1
      %v5538 = vpop.permute.xlu0 %5537
      %5539 = vrot.lane.b32.xlu0 %v5438, 1
      %v5540 = vpop.permute.xlu0 %5539
      %5541 = vrot.lane.b32.xlu0 %v5442, 1
      %v5542 = vpop.permute.xlu0 %5541
      %v5543 = vsel %vm2614, %v5444, %v5446
      %v5544 = vsel %vm2614, %v5446, %v5448
      %v5545 = vsel %vm2614, %v5448, %v5450
      %v5546 = vsel %vm2614, %v5450, %v5452
      %v5547 = vsel %vm2614, %v5452, %v5454
      %v5548 = vsel %vm2614, %v5454, %v5456
      %v5549 = vsel %vm2614, %v5456, %v5458
      %v5550 = vsel %vm2614, %v5458, %v5460
      %v5551 = vsel %vm2614, %v5460, %v5462
      %v5552 = vsel %vm2614, %v5462, %v5464
      %v5553 = vsel %vm2614, %v5464, %v5466
      %v5554 = vsel %vm2614, %v5466, %v5468
      %v5555 = vsel %vm2614, %v5468, %v5470
      %v5556 = vsel %vm2614, %v5470, %v5472
      %v5557 = vsel %vm2614, %v5472, %v5474
      %v5558 = vsel %vm2614, %v5474, %v5476
      %v5559 = vsel %vm2614, %v5476, %v5478
      %v5560 = vsel %vm2614, %v5478, %v5480
      %v5561 = vsel %vm2614, %v5480, %v5482
      %v5562 = vsel %vm2614, %v5482, %v5484
      %v5563 = vsel %vm2614, %v5484, %v5486
      %v5564 = vsel %vm2614, %v5486, %v5488
      %v5565 = vsel %vm2614, %v5488, %v5490
      %v5566 = vsel %vm2614, %v5490, %v5492
      %v5567 = vsel %vm2614, %v5492, %v5494
      %v5568 = vsel %vm2614, %v5494, %v5496
      %v5569 = vsel %vm2614, %v5496, %v5498
      %v5570 = vsel %vm2614, %v5498, %v5500
      %v5571 = vsel %vm2614, %v5500, %v5502
      %v5572 = vsel %vm2614, %v5502, %v5504
      %v5573 = vsel %vm2614, %v5504, %v5506
      %v5574 = vsel %vm2614, %v5506, %v5508
      %v5575 = vsel %vm2614, %v5508, %v5510
      %v5576 = vsel %vm2614, %v5510, %v5512
      %v5577 = vsel %vm2614, %v5512, %v5514
      %v5578 = vsel %vm2614, %v5514, %v5516
      %v5579 = vsel %vm2614, %v5516, %v5518
      %v5580 = vsel %vm2614, %v5518, %v5520
      %v5581 = vsel %vm2614, %v5520, %v5522
      %v5582 = vsel %vm2614, %v5522, %v5524
      %v5583 = vsel %vm2614, %v5524, %v5526
      %v5584 = vsel %vm2614, %v5526, %v5528
      %v5585 = vsel %vm2614, %v5528, %v5530
      %v5586 = vsel %vm2614, %v5530, %v5532
      %v5587 = vsel %vm2614, %v5532, %v5534
      %v5588 = vsel %vm2614, %v5534, %v5536
      %v5589 = vsel %vm2614, %v5536, %v5538
      %v5590 = vsel %vm2614, %v5538, %v5540
      %v5591 = vsel %vm2614, %v5540, %v5542
      %v5593 = vsel %vm2614, 0.0, %v5444
      %v5595 = vcombine.low %v5593, %v5543
      %v5596 = vcombine.low %v5544, %v5545
      %v5597 = vcombine.low %v5546, %v5547
      %v5598 = vcombine.low %v5548, %v5549
      %v5600 = vunpack.c.l.s4 1966171168
      %v5601 = vunpack.c.0.s8 %v5600
      %v5602 = vlaneseq
      %v5603 = vshrl.u32 %v5602, 7
      %v5604 = vsub.s32 %v5601, %v5603
      %v5605 = vrot.slane %v5595, %v5604
      %v5607 = vunpack.c.l.s4 1966171168
      %v5608 = vunpack.c.0.s8 %v5607
      %v5609 = vlaneseq
      %v5610 = vshrl.u32 %v5609, 7
      %v5611 = vsub.s32 %v5608, %v5610
      %v5612 = vrot.slane %v5596, %v5611
      %v5614 = vunpack.c.l.s4 1966171168
      %v5615 = vunpack.c.0.s8 %v5614
      %v5616 = vlaneseq
      %v5617 = vshrl.u32 %v5616, 7
      %v5618 = vsub.s32 %v5615, %v5617
      %v5619 = vrot.slane %v5597, %v5618
      %v5621 = vunpack.c.l.s4 1966171168
      %v5622 = vunpack.c.0.s8 %v5621
      %v5623 = vlaneseq
      %v5624 = vshrl.u32 %v5623, 7
      %v5625 = vsub.s32 %v5622, %v5624
      %v5626 = vrot.slane %v5598, %v5625
      %v5627 = vcombine.low %v5605, %v5612
      %v5628 = vcombine.low %v5619, %v5626
      %v5630 = vunpack.c.l.s4 1966171168
      %v5631 = vunpack.c.0.s8 %v5630
      %v5632 = vlaneseq
      %v5633 = vshrl.u32 %v5632, 7
      %v5634 = vsub.s32 %v5631, %v5633
      %v5635 = vrot.slane %v5627, %v5634
      %v5637 = vunpack.c.l.s4 1966171168
      %v5638 = vunpack.c.0.s8 %v5637
      %v5639 = vlaneseq
      %v5640 = vshrl.u32 %v5639, 7
      %v5641 = vsub.s32 %v5638, %v5640
      %v5642 = vrot.slane %v5628, %v5641
      %v5643 = vcombine.low %v5635, %v5642
      %v5644 = vcombine.low %v5550, %v5551
      %v5645 = vcombine.low %v5552, %v5553
      %v5646 = vcombine.low %v5554, %v5555
      %v5647 = vcombine.low %v5556, %v5557
      %v5649 = vunpack.c.l.s4 1966171168
      %v5650 = vunpack.c.0.s8 %v5649
      %v5651 = vlaneseq
      %v5652 = vshrl.u32 %v5651, 7
      %v5653 = vsub.s32 %v5650, %v5652
      %v5654 = vrot.slane %v5644, %v5653
      %v5656 = vunpack.c.l.s4 1966171168
      %v5657 = vunpack.c.0.s8 %v5656
      %v5658 = vlaneseq
      %v5659 = vshrl.u32 %v5658, 7
      %v5660 = vsub.s32 %v5657, %v5659
      %v5661 = vrot.slane %v5645, %v5660
      %v5663 = vunpack.c.l.s4 1966171168
      %v5664 = vunpack.c.0.s8 %v5663
      %v5665 = vlaneseq
      %v5666 = vshrl.u32 %v5665, 7
      %v5667 = vsub.s32 %v5664, %v5666
      %v5668 = vrot.slane %v5646, %v5667
      %v5670 = vunpack.c.l.s4 1966171168
      %v5671 = vunpack.c.0.s8 %v5670
      %v5672 = vlaneseq
      %v5673 = vshrl.u32 %v5672, 7
      %v5674 = vsub.s32 %v5671, %v5673
      %v5675 = vrot.slane %v5647, %v5674
      %v5676 = vcombine.low %v5654, %v5661
      %v5677 = vcombine.low %v5668, %v5675
      %v5679 = vunpack.c.l.s4 1966171168
      %v5680 = vunpack.c.0.s8 %v5679
      %v5681 = vlaneseq
      %v5682 = vshrl.u32 %v5681, 7
      %v5683 = vsub.s32 %v5680, %v5682
      %v5684 = vrot.slane %v5676, %v5683
      %v5686 = vunpack.c.l.s4 1966171168
      %v5687 = vunpack.c.0.s8 %v5686
      %v5688 = vlaneseq
      %v5689 = vshrl.u32 %v5688, 7
      %v5690 = vsub.s32 %v5687, %v5689
      %v5691 = vrot.slane %v5677, %v5690
      %v5692 = vcombine.low %v5684, %v5691
      %v5693 = vcombine.low %v5558, %v5559
      %v5694 = vcombine.low %v5560, %v5561
      %v5695 = vcombine.low %v5562, %v5563
      %v5696 = vcombine.low %v5564, %v5565
      %v5698 = vunpack.c.l.s4 1966171168
      %v5699 = vunpack.c.0.s8 %v5698
      %v5700 = vlaneseq
      %v5701 = vshrl.u32 %v5700, 7
      %v5702 = vsub.s32 %v5699, %v5701
      %v5703 = vrot.slane %v5693, %v5702
      %v5705 = vunpack.c.l.s4 1966171168
      %v5706 = vunpack.c.0.s8 %v5705
      %v5707 = vlaneseq
      %v5708 = vshrl.u32 %v5707, 7
      %v5709 = vsub.s32 %v5706, %v5708
      %v5710 = vrot.slane %v5694, %v5709
      %v5712 = vunpack.c.l.s4 1966171168
      %v5713 = vunpack.c.0.s8 %v5712
      %v5714 = vlaneseq
      %v5715 = vshrl.u32 %v5714, 7
      %v5716 = vsub.s32 %v5713, %v5715
      %v5717 = vrot.slane %v5695, %v5716
      %v5719 = vunpack.c.l.s4 1966171168
      %v5720 = vunpack.c.0.s8 %v5719
      %v5721 = vlaneseq
      %v5722 = vshrl.u32 %v5721, 7
      %v5723 = vsub.s32 %v5720, %v5722
      %v5724 = vrot.slane %v5696, %v5723
      %v5725 = vcombine.low %v5703, %v5710
      %v5726 = vcombine.low %v5717, %v5724
      %v5728 = vunpack.c.l.s4 1966171168
      %v5729 = vunpack.c.0.s8 %v5728
      %v5730 = vlaneseq
      %v5731 = vshrl.u32 %v5730, 7
      %v5732 = vsub.s32 %v5729, %v5731
      %v5733 = vrot.slane %v5725, %v5732
      %v5735 = vunpack.c.l.s4 1966171168
      %v5736 = vunpack.c.0.s8 %v5735
      %v5737 = vlaneseq
      %v5738 = vshrl.u32 %v5737, 7
      %v5739 = vsub.s32 %v5736, %v5738
      %v5740 = vrot.slane %v5726, %v5739
      %v5741 = vcombine.low %v5733, %v5740
      %v5742 = vcombine.low %v5566, %v5567
      %v5743 = vcombine.low %v5568, %v5569
      %v5744 = vcombine.low %v5570, %v5571
      %v5745 = vcombine.low %v5572, %v5573
      %v5747 = vunpack.c.l.s4 1966171168
      %v5748 = vunpack.c.0.s8 %v5747
      %v5749 = vlaneseq
      %v5750 = vshrl.u32 %v5749, 7
      %v5751 = vsub.s32 %v5748, %v5750
      %v5752 = vrot.slane %v5742, %v5751
      %v5754 = vunpack.c.l.s4 1966171168
      %v5755 = vunpack.c.0.s8 %v5754
      %v5756 = vlaneseq
      %v5757 = vshrl.u32 %v5756, 7
      %v5758 = vsub.s32 %v5755, %v5757
      %v5759 = vrot.slane %v5743, %v5758
      %v5761 = vunpack.c.l.s4 1966171168
      %v5762 = vunpack.c.0.s8 %v5761
      %v5763 = vlaneseq
      %v5764 = vshrl.u32 %v5763, 7
      %v5765 = vsub.s32 %v5762, %v5764
      %v5766 = vrot.slane %v5744, %v5765
      %v5768 = vunpack.c.l.s4 1966171168
      %v5769 = vunpack.c.0.s8 %v5768
      %v5770 = vlaneseq
      %v5771 = vshrl.u32 %v5770, 7
      %v5772 = vsub.s32 %v5769, %v5771
      %v5773 = vrot.slane %v5745, %v5772
      %v5774 = vcombine.low %v5752, %v5759
      %v5775 = vcombine.low %v5766, %v5773
      %v5777 = vunpack.c.l.s4 1966171168
      %v5778 = vunpack.c.0.s8 %v5777
      %v5779 = vlaneseq
      %v5780 = vshrl.u32 %v5779, 7
      %v5781 = vsub.s32 %v5778, %v5780
      %v5782 = vrot.slane %v5774, %v5781
      %v5784 = vunpack.c.l.s4 1966171168
      %v5785 = vunpack.c.0.s8 %v5784
      %v5786 = vlaneseq
      %v5787 = vshrl.u32 %v5786, 7
      %v5788 = vsub.s32 %v5785, %v5787
      %v5789 = vrot.slane %v5775, %v5788
      %v5790 = vcombine.low %v5782, %v5789
      %v5791 = vcombine.low %v5574, %v5575
      %v5792 = vcombine.low %v5576, %v5577
      %v5793 = vcombine.low %v5578, %v5579
      %v5794 = vcombine.low %v5580, %v5581
      %v5796 = vunpack.c.l.s4 1966171168
      %v5797 = vunpack.c.0.s8 %v5796
      %v5798 = vlaneseq
      %v5799 = vshrl.u32 %v5798, 7
      %v5800 = vsub.s32 %v5797, %v5799
      %v5801 = vrot.slane %v5791, %v5800
      %v5803 = vunpack.c.l.s4 1966171168
      %v5804 = vunpack.c.0.s8 %v5803
      %v5805 = vlaneseq
      %v5806 = vshrl.u32 %v5805, 7
      %v5807 = vsub.s32 %v5804, %v5806
      %v5808 = vrot.slane %v5792, %v5807
      %v5810 = vunpack.c.l.s4 1966171168
      %v5811 = vunpack.c.0.s8 %v5810
      %v5812 = vlaneseq
      %v5813 = vshrl.u32 %v5812, 7
      %v5814 = vsub.s32 %v5811, %v5813
      %v5815 = vrot.slane %v5793, %v5814
      %v5817 = vunpack.c.l.s4 1966171168
      %v5818 = vunpack.c.0.s8 %v5817
      %v5819 = vlaneseq
      %v5820 = vshrl.u32 %v5819, 7
      %v5821 = vsub.s32 %v5818, %v5820
      %v5822 = vrot.slane %v5794, %v5821
      %v5823 = vcombine.low %v5801, %v5808
      %v5824 = vcombine.low %v5815, %v5822
      %v5826 = vunpack.c.l.s4 1966171168
      %v5827 = vunpack.c.0.s8 %v5826
      %v5828 = vlaneseq
      %v5829 = vshrl.u32 %v5828, 7
      %v5830 = vsub.s32 %v5827, %v5829
      %v5831 = vrot.slane %v5823, %v5830
      %v5833 = vunpack.c.l.s4 1966171168
      %v5834 = vunpack.c.0.s8 %v5833
      %v5835 = vlaneseq
      %v5836 = vshrl.u32 %v5835, 7
      %v5837 = vsub.s32 %v5834, %v5836
      %v5838 = vrot.slane %v5824, %v5837
      %v5839 = vcombine.low %v5831, %v5838
      %v5840 = vcombine.low %v5582, %v5583
      %v5841 = vcombine.low %v5584, %v5585
      %v5842 = vcombine.low %v5586, %v5587
      %v5843 = vcombine.low %v5588, %v5589
      %v5845 = vunpack.c.l.s4 1966171168
      %v5846 = vunpack.c.0.s8 %v5845
      %v5847 = vlaneseq
      %v5848 = vshrl.u32 %v5847, 7
      %v5849 = vsub.s32 %v5846, %v5848
      %v5850 = vrot.slane %v5840, %v5849
      %v5852 = vunpack.c.l.s4 1966171168
      %v5853 = vunpack.c.0.s8 %v5852
      %v5854 = vlaneseq
      %v5855 = vshrl.u32 %v5854, 7
      %v5856 = vsub.s32 %v5853, %v5855
      %v5857 = vrot.slane %v5841, %v5856
      %v5859 = vunpack.c.l.s4 1966171168
      %v5860 = vunpack.c.0.s8 %v5859
      %v5861 = vlaneseq
      %v5862 = vshrl.u32 %v5861, 7
      %v5863 = vsub.s32 %v5860, %v5862
      %v5864 = vrot.slane %v5842, %v5863
      %v5866 = vunpack.c.l.s4 1966171168
      %v5867 = vunpack.c.0.s8 %v5866
      %v5868 = vlaneseq
      %v5869 = vshrl.u32 %v5868, 7
      %v5870 = vsub.s32 %v5867, %v5869
      %v5871 = vrot.slane %v5843, %v5870
      %v5872 = vcombine.low %v5850, %v5857
      %v5873 = vcombine.low %v5864, %v5871
      %v5875 = vunpack.c.l.s4 1966171168
      %v5876 = vunpack.c.0.s8 %v5875
      %v5877 = vlaneseq
      %v5878 = vshrl.u32 %v5877, 7
      %v5879 = vsub.s32 %v5876, %v5878
      %v5880 = vrot.slane %v5872, %v5879
      %v5882 = vunpack.c.l.s4 1966171168
      %v5883 = vunpack.c.0.s8 %v5882
      %v5884 = vlaneseq
      %v5885 = vshrl.u32 %v5884, 7
      %v5886 = vsub.s32 %v5883, %v5885
      %v5887 = vrot.slane %v5873, %v5886
      %v5888 = vcombine.low %v5880, %v5887
      %v5889 = vcombine.low %v5590, %v5591
      %v5891 = vunpack.c.l.s4 1966171168
      %v5892 = vunpack.c.0.s8 %v5891
      %v5893 = vlaneseq
      %v5894 = vshrl.u32 %v5893, 7
      %v5895 = vsub.s32 %v5892, %v5894
      %v5896 = vrot.slane %v5889, %v5895
      %v5898 = vunpack.c.l.s4 1966171168
      %v5899 = vunpack.c.0.s8 %v5898
      %v5900 = vlaneseq
      %v5901 = vshrl.u32 %v5900, 7
      %v5902 = vsub.s32 %v5899, %v5901
      %v5903 = vrot.slane %v5896, %v5902
      %v5911 = vadd.f32 %v5187, %v5643
      %v5912 = vadd.f32 %v5191, %v5692
      %v5913 = vadd.f32 %v5195, %v5741
      %v5914 = vadd.f32 %v5199, %v5790
      %v5915 = vadd.f32 %v5203, %v5839
      %v5916 = vadd.f32 %v5207, %v5888
      %v5917 = vadd.f32 %v5209, %v5903
      %v5918 = vadd.f32 %v5911, %v4416
      %v5919 = vadd.f32 %v5912, %v4416
      %v5920 = vadd.f32 %v5913, %v4416
      %v5921 = vadd.f32 %v5914, %v4416
      %v5922 = vadd.f32 %v5915, %v4416
      %v5923 = vadd.f32 %v5916, %v4416
      %v5924 = vadd.f32 %v5917, %v4416
      %s5925 = scalar_lea.vmem %s170, 100
      %5926 = vst [vmem:[%s5925] sm:$0xff] %v5918
      %5927 = vst [vmem:[%s5925 + $0x8] sm:$0xff] %v5919
      %5928 = vst [vmem:[%s5925 + $0x10] sm:$0xff] %v5920
      %5929 = vst [vmem:[%s5925 + $0x18] sm:$0xff] %v5921
      %5930 = vst [vmem:[%s5925 + $0x20] sm:$0xff] %v5922
      %5931 = vst [vmem:[%s5925 + $0x28] sm:$0xff] %v5923
      %5932 = vst.msk [vmem:[%s5925 + $0x30] sm:$0x3] %vm4433, %v5924
      %s5933 = scalar_lea.vmem [#allocation2], 4
      %v5934 = vld [vmem:[%s5933] ss:$8 sm:$0xf]
      %v5935 = vld [vmem:[%s5933] ss:$8 sm:$0xf0]
      %v5936 = vor.u32 %v5934, %v5935
      %s5937 = scalar_lea.vmem [#allocation2], 68
      %v5938 = vld [vmem:[%s5937] ss:$8 sm:$0xf]
      %v5939 = vld [vmem:[%s5937] ss:$8 sm:$0xf0]
      %v5940 = vor.u32 %v5938, %v5939
      %s5941 = scalar_lea.vmem [#allocation2], 132
      %v5942 = vld [vmem:[%s5941] ss:$8 sm:$0xf]
      %v5943 = vld [vmem:[%s5941] ss:$8 sm:$0xf0]
      %v5944 = vor.u32 %v5942, %v5943
      %s5945 = scalar_lea.vmem [#allocation2], 196
      %v5946 = vld [vmem:[%s5945] ss:$8 sm:$0xf]
      %v5947 = vld [vmem:[%s5945] ss:$8 sm:$0xf0]
      %v5948 = vor.u32 %v5946, %v5947
      %s5949 = scalar_lea.vmem [#allocation2], 260
      %v5950 = vld [vmem:[%s5949] ss:$8 sm:$0xf]
      %v5951 = vld [vmem:[%s5949] ss:$8 sm:$0xf0]
      %v5952 = vor.u32 %v5950, %v5951
      %s5953 = scalar_lea.vmem [#allocation2], 324
      %v5954 = vld [vmem:[%s5953] ss:$8 sm:$0xf]
      %v5955 = vld [vmem:[%s5953] ss:$8 sm:$0xf0]
      %v5956 = vor.u32 %v5954, %v5955
      %s5957 = scalar_lea.vmem [#allocation2], 388
      %v5958 = vld [vmem:[%s5957] ss:$8 sm:$0x3]
      %v5959 = vadd.f32 %v5936, %v4416
      %v5960 = vadd.f32 %v5940, %v4416
      %v5961 = vadd.f32 %v5944, %v4416
      %v5962 = vadd.f32 %v5948, %v4416
      %v5963 = vadd.f32 %v5952, %v4416
      %v5964 = vadd.f32 %v5956, %v4416
      %v5965 = vadd.f32 %v5958, %v4416
      %s5966 = scalar_lea.vmem %s170, 150
      %5967 = vst [vmem:[%s5966] sm:$0xff] %v5959
      %5968 = vst [vmem:[%s5966 + $0x8] sm:$0xff] %v5960
      %5969 = vst [vmem:[%s5966 + $0x10] sm:$0xff] %v5961
      %5970 = vst [vmem:[%s5966 + $0x18] sm:$0xff] %v5962
      %5971 = vst [vmem:[%s5966 + $0x20] sm:$0xff] %v5963
      %5972 = vst [vmem:[%s5966 + $0x28] sm:$0xff] %v5964
      %5973 = vst.msk [vmem:[%s5966 + $0x30] sm:$0x3] %vm4433, %v5965
      %p5974 = scmp.lt.s32.totalorder %s16, 1
      %s5975 = scalar_select %p5974, %s16, 1
      %s5976 = smul.addr %s5975, 200
      %s5977 = scalar_lea.vmem %s3, %s5976
      // Predicated region
      $region33: #{decoder_forward.5} parent=31 // pred_check
        %p5978 = pneg %p102
      $region34: #{decoder_forward.5} parent=31 // pred_check_branch
        %5980 = sbr.rel (%p5978) target = $region36
      $region35: #{decoder_forward.5} parent=31 // pred_region
        _
      $region36: #{decoder_forward.5} parent=31 // pred_fallthru
        _
    $region32: #{decoder_forward.5} parent=5 // pred_fallthru
      _
    %p5981 = scmp.le.s32.totalorder 2, %s11
    // Predicated region
    $region37: #{decoder_forward.5} parent=5 // pred_check
      %p5982 = pneg %p5981
    $region38: #{decoder_forward.5} parent=5 // pred_check_branch
      %5984 = sbr.rel (%p5982) target = $region40
    $region39: #{decoder_forward.5} parent=5 // pred_region
      %s5985 = ssub.s32 %s11, 2
      // Predicated region
      $region41: #{decoder_forward.5} parent=39 // pred_check
        %p5986 = pneg %p108
      $region42: #{decoder_forward.5} parent=39 // pred_check_branch
        %5988 = sbr.rel (%p5986) target = $region44
      $region43: #{decoder_forward.5} parent=39 // pred_region
        %p5989 = scmp.lt.s32.totalorder %s17, 1
        %s5990 = scalar_select %p5989, %s17, 1
        %s5991 = smul.addr %s5990, 200
        %s5992 = scalar_lea.vmem %s3, %s5991
      $region44: #{decoder_forward.5} parent=39 // pred_fallthru
        _
    $region40: #{decoder_forward.5} parent=5 // pred_fallthru
      _
  $region6: #{decoder_forward.5} parent=0 // loop_footer
    %s15 = sadd.s32 1, %s11
  $region7: #{decoder_forward.5} parent=0 // loop_footer_branch
    %10 = sbr.rel target = $region3
  $region8: #{decoder_forward.5} parent=0 // loop_exit
    _

</llo_original>
